<compile_context>
chip_gen: v7x
topology: tpu7x:2x2x1
jax: 0.10.0
libtpu: 0.0.40
codegen_flags: <defaults>
</compile_context>

<pallas_src>
import functools

import jax
import jax.numpy as jnp
from jax import lax
from jax.experimental import pallas as pl
from jax.experimental.pallas import tpu as pltpu


# ----------------------------------------------------------------------------
# Fused Pallas kernel (one batch element per grid step)
# ----------------------------------------------------------------------------

def _imd_kernel(x_ref, mask_ref,
                c1_w, c1_b, l1a_w, l1a_b, l1b_w, l1b_b,
                c2_w, c2_b, l2_w, l2_b,
                c3_w, c3_b, l3_w, l3_b,
                c4_w, c4_b, l4_w, l4_b,
                se1_wT, se2_wT, sa_w, sa_b, c5_wT, c5_b,
                o_ref, *, H, W, C, dc, Wp, HWL, SL):
    f32 = jnp.float32
    x = x_ref[0].astype(f32)                 # (C, HWL)  zero-ring padded, lane-dense
    mask = mask_ref[...].astype(f32)         # (1, HWL)  1 on original pixels
    inv_hw = 1.0 / float(H * W)

    def conv(fmap, w_ref, b_ref, K, slope):
        """KxK 'same' conv of a zero-ring feature map as a single matmul.

        fmap: (Cin, HWL); w_ref: (Cout, K*K*Cin); b_ref: (Cout, 1).
        Returns (Cout, HWL) with the pad ring (and lane tail) re-zeroed so it
        can serve as the zero halo of the next conv.
        """
        cin = fmap.shape[0]
        p = K // 2
        if K == 1:
            cols = fmap
        else:
            z = jnp.zeros((cin, SL), f32)
            ext = jnp.concatenate([z, fmap, z], axis=1)      # (Cin, SL+HWL+SL)
            taps = []
            for dy in range(K):
                for dx in range(K):
                    s = SL + (dy - p) * Wp + (dx - p)        # static offsets
                    taps.append(ext[:, s:s + HWL])
            cols = jnp.concatenate(taps, axis=0)             # (K*K*Cin, HWL)
        y = lax.dot_general(
            w_ref[...].astype(f32), cols,
            dimension_numbers=(((1,), (0,)), ((), ())),
            preferred_element_type=f32)                      # (Cout, HWL)
        y = y + b_ref[...].astype(f32)
        if slope is not None:
            y = jnp.where(y >= 0, y, slope * y)
        return y * mask

    # ---- information multi-distillation chain (c_k + local_k, fused) ----
    out_c1 = conv(x, c1_w, c1_b, 3, 0.05)                    # (C, HWL)
    f1 = conv(conv(out_c1[:dc], l1a_w, l1a_b, 3, 0.1), l1b_w, l1b_b, 5, 0.1)
    out_c2 = conv(out_c1[dc:], c2_w, c2_b, 3, 0.05)
    f2 = conv(out_c2[:dc], l2_w, l2_b, 5, 0.1)
    out_c3 = conv(out_c2[dc:], c3_w, c3_b, 3, 0.05)
    f3 = conv(out_c3[:dc], l3_w, l3_b, 3, 0.1)
    out_c4 = conv(out_c3[dc:], c4_w, c4_b, 3, None)          # c4: no activation
    f4 = conv(out_c4, l4_w, l4_b, 1, 0.1)
    out = jnp.concatenate([f1, f2, f3, f4], axis=0)          # (C, HWL)

    # ---- CBAM channel attention (single pass: sum & sum-of-squares) ----
    mean = jnp.sum(out, axis=1, keepdims=True) * inv_hw              # (C, 1)
    ex2 = jnp.sum(out * out, axis=1, keepdims=True) * inv_hw
    std = jnp.sqrt(jnp.maximum(ex2 - mean * mean, 0.0))
    s = mean + std                                                   # (C, 1)
    hidden = jnp.maximum(
        jnp.sum(se1_wT[...].astype(f32) * s, axis=0, keepdims=True), 0.0)   # (1, cr)
    a = jnp.sum(se2_wT[...].astype(f32) * hidden, axis=1, keepdims=True)    # (C, 1)
    xca = out * jax.nn.sigmoid(a)                                    # (C, HWL)

    # ---- CBAM spatial attention (7x7 conv over [max_c, mean_c]) ----
    cmap = jnp.concatenate(
        [jnp.max(xca, axis=0, keepdims=True),
         jnp.sum(xca, axis=0, keepdims=True) * (1.0 / C)], axis=0)   # (2, HWL)
    sa = jax.nn.sigmoid(conv(cmap, sa_w, sa_b, 7, None))             # (1, HWL)
    y = xca * sa                                                     # (C, HWL)

    # ---- c5 (1x1 conv) + residual ----
    z = lax.dot_general(
        c5_wT[...].astype(f32), y,
        dimension_numbers=(((1,), (0,)), ((), ())),
        preferred_element_type=f32)                                  # (C, HWL)
    z = z + c5_b[...].astype(f32) + x
    o_ref[0] = z.astype(o_ref.dtype)


# ----------------------------------------------------------------------------
# Wrapper: layout prep (one pad of the input), weight packing, pallas_call
# ----------------------------------------------------------------------------

def imd_forward(x_nchw, p, *, C):
    B, _, H, W = x_nchw.shape
    dc = C // 4
    rc = C - dc
    PMAX = 3                                    # max halo needed (7x7 SA conv)
    Hp, Wp = H + 2 * PMAX, W + 2 * PMAX
    HWp = Hp * Wp
    HWL = ((HWp + 127) // 128) * 128            # lane-pad flat spatial to x128
    SL = PMAX * Wp + PMAX                       # slack so every tap slice is in-bounds

    # Boundary pads (tiny, fused by XLA) -> lane-dense (B, C, HWL) blocks.
    xp = jnp.pad(x_nchw, ((0, 0), (0, 0), (PMAX, PMAX), (PMAX, PMAX)))
    xflat = xp.reshape(B, C, HWp).astype(jnp.float32)
    xflat = jnp.pad(xflat, ((0, 0), (0, 0), (0, HWL - HWp)))

    # Interior mask: 1 on original pixels, 0 on pad ring and lane tail.
    mrow = (jnp.arange(Hp) >= PMAX) & (jnp.arange(Hp) < PMAX + H)
    mcol = (jnp.arange(Wp) >= PMAX) & (jnp.arange(Wp) < PMAX + W)
    mask = (mrow[:, None] & mcol[None, :]).astype(jnp.float32).reshape(1, HWp)
    mask = jnp.pad(mask, ((0, 0), (0, HWL - HWp)))

    def wmat(name, K, cin, cout):               # (Cout, K*K*Cin), tap-major rows
        return p[name].reshape(K * K * cin, cout).T

    args = [
        xflat, mask,
        wmat('c1_w', 3, C, C),    p['c1_b'].reshape(C, 1),
        wmat('l1a_w', 3, dc, dc), p['l1a_b'].reshape(dc, 1),
        wmat('l1b_w', 5, dc, dc), p['l1b_b'].reshape(dc, 1),
        wmat('c2_w', 3, rc, C),   p['c2_b'].reshape(C, 1),
        wmat('l2_w', 5, dc, dc),  p['l2_b'].reshape(dc, 1),
        wmat('c3_w', 3, rc, C),   p['c3_b'].reshape(C, 1),
        wmat('l3_w', 3, dc, dc),  p['l3_b'].reshape(dc, 1),
        wmat('c4_w', 3, rc, dc),  p['c4_b'].reshape(dc, 1),
        wmat('l4_w', 1, dc, dc),  p['l4_b'].reshape(dc, 1),
        p['se1_w'].T,             p['se2_w'].T,          # (C, cr) each
        wmat('sa_w', 7, 2, 1),    p['sa_b'].reshape(1, 1),
        p['c5_w'].T,              p['c5_b'].reshape(C, 1),
    ]

    kernel = functools.partial(_imd_kernel, H=H, W=W, C=C, dc=dc,
                               Wp=Wp, HWL=HWL, SL=SL)
    in_specs = [pl.BlockSpec((1, C, HWL), lambda b: (b, 0, 0))]
    in_specs += [pl.BlockSpec(a.shape, lambda b: (0, 0)) for a in args[1:]]

    out = pl.pallas_call(
        kernel,
        out_shape=jax.ShapeDtypeStruct((B, C, HWL), jnp.float32),
        grid=(B,),
        in_specs=in_specs,
        out_specs=pl.BlockSpec((1, C, HWL), lambda b: (b, 0, 0)),
        compiler_params=pltpu.CompilerParams(
            dimension_semantics=("parallel",),
            vmem_limit_bytes=32 * 1024 * 1024),
    )(*args)

    out = out[:, :, :HWp].reshape(B, C, Hp, Wp)[:, :, PMAX:PMAX + H, PMAX:PMAX + W]
    return out


# ----------------------------------------------------------------------------
# Parameter init (matches the torch module's shapes; HWIO conv weights)
# ----------------------------------------------------------------------------

def init_params(key, C=16, reduction=16):
    dc = C // 4
    rc = C - dc
    cr = C // reduction
    assert cr >= 1, "channel attention requires C >= reduction"
    shapes = {
        'c1_w': (3, 3, C, C), 'c1_b': (C,),
        'l1a_w': (3, 3, dc, dc), 'l1a_b': (dc,),
        'l1b_w': (5, 5, dc, dc), 'l1b_b': (dc,),
        'c2_w': (3, 3, rc, C), 'c2_b': (C,),
        'l2_w': (5, 5, dc, dc), 'l2_b': (dc,),
        'c3_w': (3, 3, rc, C), 'c3_b': (C,),
        'l3_w': (3, 3, dc, dc), 'l3_b': (dc,),
        'c4_w': (3, 3, rc, dc), 'c4_b': (dc,),
        'l4_w': (1, 1, dc, dc), 'l4_b': (dc,),
        'se1_w': (cr, C), 'se2_w': (cr, C),        # CA SE convs (bias=False)
        'sa_w': (7, 7, 2, 1), 'sa_b': (1,),        # spatial-attention conv
        'c5_w': (C, C), 'c5_b': (C,),              # c5 1x1 conv as matrix
    }
    params = {}
    names = sorted(shapes)
    keys = jax.random.split(key, len(names))
    for k, name in zip(keys, names):
        shp = shapes[name]
        if name.endswith('_w'):
            fan_in = 1
            for d in shp[:-1]:
                fan_in *= d
            scale = 1.0 / (fan_in ** 0.5)
        else:
            scale = 0.05
        params[name] = scale * jax.random.normal(k, shp, jnp.float32)
    return params


# ----------------------------------------------------------------------------
# Pure-JAX reference (correctness check only)
# ----------------------------------------------------------------------------

def _ref_conv(x, w, b, slope):
    K = w.shape[0]
    pad = (K - 1) // 2
    y = lax.conv_general_dilated(
        x, w, (1, 1), [(pad, pad), (pad, pad)],
        dimension_numbers=('NHWC', 'HWIO', 'NHWC'))
    y = y + b.reshape(1, 1, 1, -1)
    if slope is not None:
        y = jnp.where(y >= 0, y, slope * y)
    return y


def ref_forward(x_nchw, p, *, C):
    dc = C // 4
    x = jnp.transpose(x_nchw, (0, 2, 3, 1))
    out_c1 = _ref_conv(x, p['c1_w'], p['c1_b'], 0.05)
    d1, r1 = out_c1[..., :dc], out_c1[..., dc:]
    f1 = _ref_conv(_ref_conv(d1, p['l1a_w'], p['l1a_b'], 0.1),
                   p['l1b_w'], p['l1b_b'], 0.1)
    out_c2 = _ref_conv(r1, p['c2_w'], p['c2_b'], 0.05)
    d2, r2 = out_c2[..., :dc], out_c2[..., dc:]
    f2 = _ref_conv(d2, p['l2_w'], p['l2_b'], 0.1)
    out_c3 = _ref_conv(r2, p['c3_w'], p['c3_b'], 0.05)
    d3, r3 = out_c3[..., :dc], out_c3[..., dc:]
    f3 = _ref_conv(d3, p['l3_w'], p['l3_b'], 0.1)
    out_c4 = _ref_conv(r3, p['c4_w'], p['c4_b'], None)
    f4 = _ref_conv(out_c4, p['l4_w'], p['l4_b'], 0.1)
    out = jnp.concatenate([f1, f2, f3, f4], axis=-1)

    mean = jnp.mean(out, axis=(1, 2), keepdims=True)
    std = jnp.sqrt(jnp.mean((out - mean) ** 2, axis=(1, 2), keepdims=True))
    s = mean + std
    h = jnp.maximum(jnp.einsum('bijc,rc->bijr', s, p['se1_w']), 0.0)
    a = jnp.einsum('bijr,rc->bijc', h, p['se2_w'])
    xca = out * jax.nn.sigmoid(a)
    mx = jnp.max(xca, axis=-1, keepdims=True)
    mn = jnp.mean(xca, axis=-1, keepdims=True)
    cmap = jnp.concatenate([mx, mn], axis=-1)
    sa = _ref_conv(cmap, p['sa_w'], p['sa_b'], None)
    y = xca * jax.nn.sigmoid(sa)
    z = jnp.einsum('bhwc,cd->bhwd', y, p['c5_w']) + p['c5_b'].reshape(1, 1, 1, -1) + x
    return jnp.transpose(z, (0, 3, 1, 2))


# ----------------------------------------------------------------------------

if __name__ == "__main__":
    B, C, H, W = 2, 16, 16, 16          # in_channels=16 -> distilled=4, remaining=12
    key = jax.random.PRNGKey(0)
    kx, kp = jax.random.split(key)
    x = jax.random.normal(kx, (B, C, H, W), jnp.float32)     # NCHW like the torch module
    params = init_params(kp, C=C, reduction=16)

    fwd = jax.jit(functools.partial(imd_forward, p=params, C=C))
    out = fwd(x)
    jax.block_until_ready(out)
    assert out.shape == (B, C, H, W), out.shape

    ref = ref_forward(x, params, C=C)
    assert jnp.allclose(out, ref, atol=1e-3, rtol=1e-3), \
        float(jnp.max(jnp.abs(out - ref)))

    print("KERNEL_OK")
</pallas_src>

<mosaic_0001>
module attributes {stable_mosaic.version = 11 : i64} {
  func.func @_imd_kernel(%arg0: i32, %arg1: memref<1x16x512xf32, #tpu.memory_space<vmem>>, %arg2: memref<1x512xf32, #tpu.memory_space<vmem>>, %arg3: memref<16x144xf32, #tpu.memory_space<vmem>>, %arg4: memref<16x1xf32, #tpu.memory_space<vmem>>, %arg5: memref<4x36xf32, #tpu.memory_space<vmem>>, %arg6: memref<4x1xf32, #tpu.memory_space<vmem>>, %arg7: memref<4x100xf32, #tpu.memory_space<vmem>>, %arg8: memref<4x1xf32, #tpu.memory_space<vmem>>, %arg9: memref<16x108xf32, #tpu.memory_space<vmem>>, %arg10: memref<16x1xf32, #tpu.memory_space<vmem>>, %arg11: memref<4x100xf32, #tpu.memory_space<vmem>>, %arg12: memref<4x1xf32, #tpu.memory_space<vmem>>, %arg13: memref<16x108xf32, #tpu.memory_space<vmem>>, %arg14: memref<16x1xf32, #tpu.memory_space<vmem>>, %arg15: memref<4x36xf32, #tpu.memory_space<vmem>>, %arg16: memref<4x1xf32, #tpu.memory_space<vmem>>, %arg17: memref<4x108xf32, #tpu.memory_space<vmem>>, %arg18: memref<4x1xf32, #tpu.memory_space<vmem>>, %arg19: memref<4x4xf32, #tpu.memory_space<vmem>>, %arg20: memref<4x1xf32, #tpu.memory_space<vmem>>, %arg21: memref<16x1xf32, #tpu.memory_space<vmem>>, %arg22: memref<16x1xf32, #tpu.memory_space<vmem>>, %arg23: memref<1x98xf32, #tpu.memory_space<vmem>>, %arg24: memref<1x1xf32, #tpu.memory_space<vmem>>, %arg25: memref<16x16xf32, #tpu.memory_space<vmem>>, %arg26: memref<16x1xf32, #tpu.memory_space<vmem>>, %arg27: memref<1x16x512xf32, #tpu.memory_space<vmem>>) attributes {dimension_semantics = [#tpu.dimension_semantics<parallel>], iteration_bounds = array<i64: 2>, scalar_prefetch = 0 : i64, scratch_operands = 0 : i64, tpu.core_type = #tpu.core_type<tc>, window_params = [{transform_indices = @transform_0, window_bounds = array<i64: 1, 16, 512>}, {pipeline_mode = #tpu.pipeline_mode<synchronous>, transform_indices = @transform_1, window_bounds = array<i64: 1, 512>}, {pipeline_mode = #tpu.pipeline_mode<synchronous>, transform_indices = @transform_2, window_bounds = array<i64: 16, 144>}, {pipeline_mode = #tpu.pipeline_mode<synchronous>, transform_indices = @transform_3, window_bounds = array<i64: 16, 1>}, {pipeline_mode = #tpu.pipeline_mode<synchronous>, transform_indices = @transform_4, window_bounds = array<i64: 4, 36>}, {pipeline_mode = #tpu.pipeline_mode<synchronous>, transform_indices = @transform_5, window_bounds = array<i64: 4, 1>}, {pipeline_mode = #tpu.pipeline_mode<synchronous>, transform_indices = @transform_6, window_bounds = array<i64: 4, 100>}, {pipeline_mode = #tpu.pipeline_mode<synchronous>, transform_indices = @transform_7, window_bounds = array<i64: 4, 1>}, {pipeline_mode = #tpu.pipeline_mode<synchronous>, transform_indices = @transform_8, window_bounds = array<i64: 16, 108>}, {pipeline_mode = #tpu.pipeline_mode<synchronous>, transform_indices = @transform_9, window_bounds = array<i64: 16, 1>}, {pipeline_mode = #tpu.pipeline_mode<synchronous>, transform_indices = @transform_10, window_bounds = array<i64: 4, 100>}, {pipeline_mode = #tpu.pipeline_mode<synchronous>, transform_indices = @transform_11, window_bounds = array<i64: 4, 1>}, {pipeline_mode = #tpu.pipeline_mode<synchronous>, transform_indices = @transform_12, window_bounds = array<i64: 16, 108>}, {pipeline_mode = #tpu.pipeline_mode<synchronous>, transform_indices = @transform_13, window_bounds = array<i64: 16, 1>}, {pipeline_mode = #tpu.pipeline_mode<synchronous>, transform_indices = @transform_14, window_bounds = array<i64: 4, 36>}, {pipeline_mode = #tpu.pipeline_mode<synchronous>, transform_indices = @transform_15, window_bounds = array<i64: 4, 1>}, {pipeline_mode = #tpu.pipeline_mode<synchronous>, transform_indices = @transform_16, window_bounds = array<i64: 4, 108>}, {pipeline_mode = #tpu.pipeline_mode<synchronous>, transform_indices = @transform_17, window_bounds = array<i64: 4, 1>}, {pipeline_mode = #tpu.pipeline_mode<synchronous>, transform_indices = @transform_18, window_bounds = array<i64: 4, 4>}, {pipeline_mode = #tpu.pipeline_mode<synchronous>, transform_indices = @transform_19, window_bounds = array<i64: 4, 1>}, {pipeline_mode = #tpu.pipeline_mode<synchronous>, transform_indices = @transform_20, window_bounds = array<i64: 16, 1>}, {pipeline_mode = #tpu.pipeline_mode<synchronous>, transform_indices = @transform_21, window_bounds = array<i64: 16, 1>}, {pipeline_mode = #tpu.pipeline_mode<synchronous>, transform_indices = @transform_22, window_bounds = array<i64: 1, 98>}, {pipeline_mode = #tpu.pipeline_mode<synchronous>, transform_indices = @transform_23, window_bounds = array<i64: 1, 1>}, {pipeline_mode = #tpu.pipeline_mode<synchronous>, transform_indices = @transform_24, window_bounds = array<i64: 16, 16>}, {pipeline_mode = #tpu.pipeline_mode<synchronous>, transform_indices = @transform_25, window_bounds = array<i64: 16, 1>}, {transform_indices = @transform_26, window_bounds = array<i64: 1, 16, 512>}]} {
    %c0 = arith.constant 0 : index
    %c0_0 = arith.constant 0 : index
    %c0_1 = arith.constant 0 : index
    %0 = vector.load %arg1[%c0, %c0_0, %c0_1] : memref<1x16x512xf32, #tpu.memory_space<vmem>>, vector<1x16x512xf32>
    %1 = vector.shape_cast %0 : vector<1x16x512xf32> to vector<16x512xf32>
    %c0_2 = arith.constant 0 : index
    %c0_3 = arith.constant 0 : index
    %2 = vector.load %arg2[%c0_2, %c0_3] : memref<1x512xf32, #tpu.memory_space<vmem>>, vector<1x512xf32>
    %cst = arith.constant 0.000000e+00 : f32
    %3 = vector.broadcast %cst : f32 to vector<16x69xf32>
    %4 = tpu.concatenate %3, %1, %3 in 1 : vector<16x69xf32>, vector<16x512xf32>, vector<16x69xf32> -> vector<16x650xf32>
    %5 = vector.extract_strided_slice %4 {offsets = [0, 46], sizes = [16, 512], strides = [1, 1]} : vector<16x650xf32> to vector<16x512xf32>
    %6 = vector.extract_strided_slice %4 {offsets = [0, 47], sizes = [16, 512], strides = [1, 1]} : vector<16x650xf32> to vector<16x512xf32>
    %7 = vector.extract_strided_slice %4 {offsets = [0, 48], sizes = [16, 512], strides = [1, 1]} : vector<16x650xf32> to vector<16x512xf32>
    %8 = vector.extract_strided_slice %4 {offsets = [0, 68], sizes = [16, 512], strides = [1, 1]} : vector<16x650xf32> to vector<16x512xf32>
    %9 = vector.extract_strided_slice %4 {offsets = [0, 69], sizes = [16, 512], strides = [1, 1]} : vector<16x650xf32> to vector<16x512xf32>
    %10 = vector.extract_strided_slice %4 {offsets = [0, 70], sizes = [16, 512], strides = [1, 1]} : vector<16x650xf32> to vector<16x512xf32>
    %11 = vector.extract_strided_slice %4 {offsets = [0, 90], sizes = [16, 512], strides = [1, 1]} : vector<16x650xf32> to vector<16x512xf32>
    %12 = vector.extract_strided_slice %4 {offsets = [0, 91], sizes = [16, 512], strides = [1, 1]} : vector<16x650xf32> to vector<16x512xf32>
    %13 = vector.extract_strided_slice %4 {offsets = [0, 92], sizes = [16, 512], strides = [1, 1]} : vector<16x650xf32> to vector<16x512xf32>
    %14 = tpu.concatenate %5, %6, %7, %8, %9, %10, %11, %12, %13 in 0 : vector<16x512xf32>, vector<16x512xf32>, vector<16x512xf32>, vector<16x512xf32>, vector<16x512xf32>, vector<16x512xf32>, vector<16x512xf32>, vector<16x512xf32>, vector<16x512xf32> -> vector<144x512xf32>
    %c0_4 = arith.constant 0 : index
    %c0_5 = arith.constant 0 : index
    %15 = vector.load %arg3[%c0_4, %c0_5] : memref<16x144xf32, #tpu.memory_space<vmem>>, vector<16x144xf32>
    %cst_6 = arith.constant dense<0.000000e+00> : vector<16x512xf32>
    %16 = tpu.matmul %15, %14, %cst_6 {dimension_numbers = #tpu.dot_dimension_numbers<[1], [0], [0], [1], [0, 0, 1, 1], [], []>} : vector<16x144xf32>, vector<144x512xf32>, vector<16x512xf32> -> vector<16x512xf32>
    %c0_7 = arith.constant 0 : index
    %c0_8 = arith.constant 0 : index
    %17 = vector.load %arg4[%c0_7, %c0_8] : memref<16x1xf32, #tpu.memory_space<vmem>>, vector<16x1xf32>
    %18 = vector.broadcast %17 : vector<16x1xf32> to vector<16x512xf32>
    %19 = arith.addf %16, %18 : vector<16x512xf32>
    %cst_9 = arith.constant 0.000000e+00 : f32
    %20 = vector.broadcast %cst_9 : f32 to vector<16x512xf32>
    %21 = arith.cmpf oge, %19, %20 : vector<16x512xf32>
    %cst_10 = arith.constant 5.000000e-02 : f32
    %22 = vector.broadcast %cst_10 : f32 to vector<16x512xf32>
    %23 = arith.mulf %22, %19 : vector<16x512xf32>
    %24 = arith.select %21, %19, %23 : vector<16x512xi1>, vector<16x512xf32>
    %25 = vector.broadcast %2 : vector<1x512xf32> to vector<16x512xf32>
    %26 = arith.mulf %24, %25 : vector<16x512xf32>
    %27 = vector.extract_strided_slice %26 {offsets = [0, 0], sizes = [4, 512], strides = [1, 1]} : vector<16x512xf32> to vector<4x512xf32>
    %cst_11 = arith.constant 0.000000e+00 : f32
    %28 = vector.broadcast %cst_11 : f32 to vector<4x69xf32>
    %29 = tpu.concatenate %28, %27, %28 in 1 : vector<4x69xf32>, vector<4x512xf32>, vector<4x69xf32> -> vector<4x650xf32>
    %30 = vector.extract_strided_slice %29 {offsets = [0, 46], sizes = [4, 512], strides = [1, 1]} : vector<4x650xf32> to vector<4x512xf32>
    %31 = vector.extract_strided_slice %29 {offsets = [0, 47], sizes = [4, 512], strides = [1, 1]} : vector<4x650xf32> to vector<4x512xf32>
    %32 = vector.extract_strided_slice %29 {offsets = [0, 48], sizes = [4, 512], strides = [1, 1]} : vector<4x650xf32> to vector<4x512xf32>
    %33 = vector.extract_strided_slice %29 {offsets = [0, 68], sizes = [4, 512], strides = [1, 1]} : vector<4x650xf32> to vector<4x512xf32>
    %34 = vector.extract_strided_slice %29 {offsets = [0, 69], sizes = [4, 512], strides = [1, 1]} : vector<4x650xf32> to vector<4x512xf32>
    %35 = vector.extract_strided_slice %29 {offsets = [0, 70], sizes = [4, 512], strides = [1, 1]} : vector<4x650xf32> to vector<4x512xf32>
    %36 = vector.extract_strided_slice %29 {offsets = [0, 90], sizes = [4, 512], strides = [1, 1]} : vector<4x650xf32> to vector<4x512xf32>
    %37 = vector.extract_strided_slice %29 {offsets = [0, 91], sizes = [4, 512], strides = [1, 1]} : vector<4x650xf32> to vector<4x512xf32>
    %38 = vector.extract_strided_slice %29 {offsets = [0, 92], sizes = [4, 512], strides = [1, 1]} : vector<4x650xf32> to vector<4x512xf32>
    %39 = tpu.concatenate %30, %31, %32, %33, %34, %35, %36, %37, %38 in 0 : vector<4x512xf32>, vector<4x512xf32>, vector<4x512xf32>, vector<4x512xf32>, vector<4x512xf32>, vector<4x512xf32>, vector<4x512xf32>, vector<4x512xf32>, vector<4x512xf32> -> vector<36x512xf32>
    %c0_12 = arith.constant 0 : index
    %c0_13 = arith.constant 0 : index
    %40 = vector.load %arg5[%c0_12, %c0_13] : memref<4x36xf32, #tpu.memory_space<vmem>>, vector<4x36xf32>
    %cst_14 = arith.constant dense<0.000000e+00> : vector<4x512xf32>
    %41 = tpu.matmul %40, %39, %cst_14 {dimension_numbers = #tpu.dot_dimension_numbers<[1], [0], [0], [1], [0, 0, 1, 1], [], []>} : vector<4x36xf32>, vector<36x512xf32>, vector<4x512xf32> -> vector<4x512xf32>
    %c0_15 = arith.constant 0 : index
    %c0_16 = arith.constant 0 : index
    %42 = vector.load %arg6[%c0_15, %c0_16] : memref<4x1xf32, #tpu.memory_space<vmem>>, vector<4x1xf32>
    %43 = vector.broadcast %42 : vector<4x1xf32> to vector<4x512xf32>
    %44 = arith.addf %41, %43 : vector<4x512xf32>
    %cst_17 = arith.constant 0.000000e+00 : f32
    %45 = vector.broadcast %cst_17 : f32 to vector<4x512xf32>
    %46 = arith.cmpf oge, %44, %45 : vector<4x512xf32>
    %cst_18 = arith.constant 1.000000e-01 : f32
    %47 = vector.broadcast %cst_18 : f32 to vector<4x512xf32>
    %48 = arith.mulf %47, %44 : vector<4x512xf32>
    %49 = arith.select %46, %44, %48 : vector<4x512xi1>, vector<4x512xf32>
    %50 = vector.broadcast %2 : vector<1x512xf32> to vector<4x512xf32>
    %51 = arith.mulf %49, %50 : vector<4x512xf32>
    %cst_19 = arith.constant 0.000000e+00 : f32
    %52 = vector.broadcast %cst_19 : f32 to vector<4x69xf32>
    %53 = tpu.concatenate %52, %51, %52 in 1 : vector<4x69xf32>, vector<4x512xf32>, vector<4x69xf32> -> vector<4x650xf32>
    %54 = vector.extract_strided_slice %53 {offsets = [0, 23], sizes = [4, 512], strides = [1, 1]} : vector<4x650xf32> to vector<4x512xf32>
    %55 = vector.extract_strided_slice %53 {offsets = [0, 24], sizes = [4, 512], strides = [1, 1]} : vector<4x650xf32> to vector<4x512xf32>
    %56 = vector.extract_strided_slice %53 {offsets = [0, 25], sizes = [4, 512], strides = [1, 1]} : vector<4x650xf32> to vector<4x512xf32>
    %57 = vector.extract_strided_slice %53 {offsets = [0, 26], sizes = [4, 512], strides = [1, 1]} : vector<4x650xf32> to vector<4x512xf32>
    %58 = vector.extract_strided_slice %53 {offsets = [0, 27], sizes = [4, 512], strides = [1, 1]} : vector<4x650xf32> to vector<4x512xf32>
    %59 = vector.extract_strided_slice %53 {offsets = [0, 45], sizes = [4, 512], strides = [1, 1]} : vector<4x650xf32> to vector<4x512xf32>
    %60 = vector.extract_strided_slice %53 {offsets = [0, 46], sizes = [4, 512], strides = [1, 1]} : vector<4x650xf32> to vector<4x512xf32>
    %61 = vector.extract_strided_slice %53 {offsets = [0, 47], sizes = [4, 512], strides = [1, 1]} : vector<4x650xf32> to vector<4x512xf32>
    %62 = vector.extract_strided_slice %53 {offsets = [0, 48], sizes = [4, 512], strides = [1, 1]} : vector<4x650xf32> to vector<4x512xf32>
    %63 = vector.extract_strided_slice %53 {offsets = [0, 49], sizes = [4, 512], strides = [1, 1]} : vector<4x650xf32> to vector<4x512xf32>
    %64 = vector.extract_strided_slice %53 {offsets = [0, 67], sizes = [4, 512], strides = [1, 1]} : vector<4x650xf32> to vector<4x512xf32>
    %65 = vector.extract_strided_slice %53 {offsets = [0, 68], sizes = [4, 512], strides = [1, 1]} : vector<4x650xf32> to vector<4x512xf32>
    %66 = vector.extract_strided_slice %53 {offsets = [0, 69], sizes = [4, 512], strides = [1, 1]} : vector<4x650xf32> to vector<4x512xf32>
    %67 = vector.extract_strided_slice %53 {offsets = [0, 70], sizes = [4, 512], strides = [1, 1]} : vector<4x650xf32> to vector<4x512xf32>
    %68 = vector.extract_strided_slice %53 {offsets = [0, 71], sizes = [4, 512], strides = [1, 1]} : vector<4x650xf32> to vector<4x512xf32>
    %69 = vector.extract_strided_slice %53 {offsets = [0, 89], sizes = [4, 512], strides = [1, 1]} : vector<4x650xf32> to vector<4x512xf32>
    %70 = vector.extract_strided_slice %53 {offsets = [0, 90], sizes = [4, 512], strides = [1, 1]} : vector<4x650xf32> to vector<4x512xf32>
    %71 = vector.extract_strided_slice %53 {offsets = [0, 91], sizes = [4, 512], strides = [1, 1]} : vector<4x650xf32> to vector<4x512xf32>
    %72 = vector.extract_strided_slice %53 {offsets = [0, 92], sizes = [4, 512], strides = [1, 1]} : vector<4x650xf32> to vector<4x512xf32>
    %73 = vector.extract_strided_slice %53 {offsets = [0, 93], sizes = [4, 512], strides = [1, 1]} : vector<4x650xf32> to vector<4x512xf32>
    %74 = vector.extract_strided_slice %53 {offsets = [0, 111], sizes = [4, 512], strides = [1, 1]} : vector<4x650xf32> to vector<4x512xf32>
    %75 = vector.extract_strided_slice %53 {offsets = [0, 112], sizes = [4, 512], strides = [1, 1]} : vector<4x650xf32> to vector<4x512xf32>
    %76 = vector.extract_strided_slice %53 {offsets = [0, 113], sizes = [4, 512], strides = [1, 1]} : vector<4x650xf32> to vector<4x512xf32>
    %77 = vector.extract_strided_slice %53 {offsets = [0, 114], sizes = [4, 512], strides = [1, 1]} : vector<4x650xf32> to vector<4x512xf32>
    %78 = vector.extract_strided_slice %53 {offsets = [0, 115], sizes = [4, 512], strides = [1, 1]} : vector<4x650xf32> to vector<4x512xf32>
    %79 = tpu.concatenate %54, %55, %56, %57, %58, %59, %60, %61, %62, %63, %64, %65, %66, %67, %68, %69 in 0 : vector<4x512xf32>, vector<4x512xf32>, vector<4x512xf32>, vector<4x512xf32>, vector<4x512xf32>, vector<4x512xf32>, vector<4x512xf32>, vector<4x512xf32>, vector<4x512xf32>, vector<4x512xf32>, vector<4x512xf32>, vector<4x512xf32>, vector<4x512xf32>, vector<4x512xf32>, vector<4x512xf32>, vector<4x512xf32> -> vector<64x512xf32>
    %80 = tpu.concatenate %70, %71, %72, %73, %74, %75, %76, %77, %78 in 0 : vector<4x512xf32>, vector<4x512xf32>, vector<4x512xf32>, vector<4x512xf32>, vector<4x512xf32>, vector<4x512xf32>, vector<4x512xf32>, vector<4x512xf32>, vector<4x512xf32> -> vector<36x512xf32>
    %81 = tpu.concatenate %79, %80 in 0 : vector<64x512xf32>, vector<36x512xf32> -> vector<100x512xf32>
    %c0_20 = arith.constant 0 : index
    %c0_21 = arith.constant 0 : index
    %82 = vector.load %arg7[%c0_20, %c0_21] : memref<4x100xf32, #tpu.memory_space<vmem>>, vector<4x100xf32>
    %cst_22 = arith.constant dense<0.000000e+00> : vector<4x512xf32>
    %83 = tpu.matmul %82, %81, %cst_22 {dimension_numbers = #tpu.dot_dimension_numbers<[1], [0], [0], [1], [0, 0, 1, 1], [], []>} : vector<4x100xf32>, vector<100x512xf32>, vector<4x512xf32> -> vector<4x512xf32>
    %c0_23 = arith.constant 0 : index
    %c0_24 = arith.constant 0 : index
    %84 = vector.load %arg8[%c0_23, %c0_24] : memref<4x1xf32, #tpu.memory_space<vmem>>, vector<4x1xf32>
    %85 = vector.broadcast %84 : vector<4x1xf32> to vector<4x512xf32>
    %86 = arith.addf %83, %85 : vector<4x512xf32>
    %cst_25 = arith.constant 0.000000e+00 : f32
    %87 = vector.broadcast %cst_25 : f32 to vector<4x512xf32>
    %88 = arith.cmpf oge, %86, %87 : vector<4x512xf32>
    %cst_26 = arith.constant 1.000000e-01 : f32
    %89 = vector.broadcast %cst_26 : f32 to vector<4x512xf32>
    %90 = arith.mulf %89, %86 : vector<4x512xf32>
    %91 = arith.select %88, %86, %90 : vector<4x512xi1>, vector<4x512xf32>
    %92 = vector.broadcast %2 : vector<1x512xf32> to vector<4x512xf32>
    %93 = arith.mulf %91, %92 : vector<4x512xf32>
    %94 = vector.extract_strided_slice %26 {offsets = [4, 0], sizes = [12, 512], strides = [1, 1]} : vector<16x512xf32> to vector<12x512xf32>
    %cst_27 = arith.constant 0.000000e+00 : f32
    %95 = vector.broadcast %cst_27 : f32 to vector<12x69xf32>
    %96 = tpu.concatenate %95, %94, %95 in 1 : vector<12x69xf32>, vector<12x512xf32>, vector<12x69xf32> -> vector<12x650xf32>
    %97 = vector.extract_strided_slice %96 {offsets = [0, 46], sizes = [12, 512], strides = [1, 1]} : vector<12x650xf32> to vector<12x512xf32>
    %98 = vector.extract_strided_slice %96 {offsets = [0, 47], sizes = [12, 512], strides = [1, 1]} : vector<12x650xf32> to vector<12x512xf32>
    %99 = vector.extract_strided_slice %96 {offsets = [0, 48], sizes = [12, 512], strides = [1, 1]} : vector<12x650xf32> to vector<12x512xf32>
    %100 = vector.extract_strided_slice %96 {offsets = [0, 68], sizes = [12, 512], strides = [1, 1]} : vector<12x650xf32> to vector<12x512xf32>
    %101 = vector.extract_strided_slice %96 {offsets = [0, 69], sizes = [12, 512], strides = [1, 1]} : vector<12x650xf32> to vector<12x512xf32>
    %102 = vector.extract_strided_slice %96 {offsets = [0, 70], sizes = [12, 512], strides = [1, 1]} : vector<12x650xf32> to vector<12x512xf32>
    %103 = vector.extract_strided_slice %96 {offsets = [0, 90], sizes = [12, 512], strides = [1, 1]} : vector<12x650xf32> to vector<12x512xf32>
    %104 = vector.extract_strided_slice %96 {offsets = [0, 91], sizes = [12, 512], strides = [1, 1]} : vector<12x650xf32> to vector<12x512xf32>
    %105 = vector.extract_strided_slice %96 {offsets = [0, 92], sizes = [12, 512], strides = [1, 1]} : vector<12x650xf32> to vector<12x512xf32>
    %106 = tpu.concatenate %97, %98, %99, %100, %101, %102, %103, %104, %105 in 0 : vector<12x512xf32>, vector<12x512xf32>, vector<12x512xf32>, vector<12x512xf32>, vector<12x512xf32>, vector<12x512xf32>, vector<12x512xf32>, vector<12x512xf32>, vector<12x512xf32> -> vector<108x512xf32>
    %c0_28 = arith.constant 0 : index
    %c0_29 = arith.constant 0 : index
    %107 = vector.load %arg9[%c0_28, %c0_29] : memref<16x108xf32, #tpu.memory_space<vmem>>, vector<16x108xf32>
    %cst_30 = arith.constant dense<0.000000e+00> : vector<16x512xf32>
    %108 = tpu.matmul %107, %106, %cst_30 {dimension_numbers = #tpu.dot_dimension_numbers<[1], [0], [0], [1], [0, 0, 1, 1], [], []>} : vector<16x108xf32>, vector<108x512xf32>, vector<16x512xf32> -> vector<16x512xf32>
    %c0_31 = arith.constant 0 : index
    %c0_32 = arith.constant 0 : index
    %109 = vector.load %arg10[%c0_31, %c0_32] : memref<16x1xf32, #tpu.memory_space<vmem>>, vector<16x1xf32>
    %110 = vector.broadcast %109 : vector<16x1xf32> to vector<16x512xf32>
    %111 = arith.addf %108, %110 : vector<16x512xf32>
    %cst_33 = arith.constant 0.000000e+00 : f32
    %112 = vector.broadcast %cst_33 : f32 to vector<16x512xf32>
    %113 = arith.cmpf oge, %111, %112 : vector<16x512xf32>
    %cst_34 = arith.constant 5.000000e-02 : f32
    %114 = vector.broadcast %cst_34 : f32 to vector<16x512xf32>
    %115 = arith.mulf %114, %111 : vector<16x512xf32>
    %116 = arith.select %113, %111, %115 : vector<16x512xi1>, vector<16x512xf32>
    %117 = vector.broadcast %2 : vector<1x512xf32> to vector<16x512xf32>
    %118 = arith.mulf %116, %117 : vector<16x512xf32>
    %119 = vector.extract_strided_slice %118 {offsets = [0, 0], sizes = [4, 512], strides = [1, 1]} : vector<16x512xf32> to vector<4x512xf32>
    %cst_35 = arith.constant 0.000000e+00 : f32
    %120 = vector.broadcast %cst_35 : f32 to vector<4x69xf32>
    %121 = tpu.concatenate %120, %119, %120 in 1 : vector<4x69xf32>, vector<4x512xf32>, vector<4x69xf32> -> vector<4x650xf32>
    %122 = vector.extract_strided_slice %121 {offsets = [0, 23], sizes = [4, 512], strides = [1, 1]} : vector<4x650xf32> to vector<4x512xf32>
    %123 = vector.extract_strided_slice %121 {offsets = [0, 24], sizes = [4, 512], strides = [1, 1]} : vector<4x650xf32> to vector<4x512xf32>
    %124 = vector.extract_strided_slice %121 {offsets = [0, 25], sizes = [4, 512], strides = [1, 1]} : vector<4x650xf32> to vector<4x512xf32>
    %125 = vector.extract_strided_slice %121 {offsets = [0, 26], sizes = [4, 512], strides = [1, 1]} : vector<4x650xf32> to vector<4x512xf32>
    %126 = vector.extract_strided_slice %121 {offsets = [0, 27], sizes = [4, 512], strides = [1, 1]} : vector<4x650xf32> to vector<4x512xf32>
    %127 = vector.extract_strided_slice %121 {offsets = [0, 45], sizes = [4, 512], strides = [1, 1]} : vector<4x650xf32> to vector<4x512xf32>
    %128 = vector.extract_strided_slice %121 {offsets = [0, 46], sizes = [4, 512], strides = [1, 1]} : vector<4x650xf32> to vector<4x512xf32>
    %129 = vector.extract_strided_slice %121 {offsets = [0, 47], sizes = [4, 512], strides = [1, 1]} : vector<4x650xf32> to vector<4x512xf32>
    %130 = vector.extract_strided_slice %121 {offsets = [0, 48], sizes = [4, 512], strides = [1, 1]} : vector<4x650xf32> to vector<4x512xf32>
    %131 = vector.extract_strided_slice %121 {offsets = [0, 49], sizes = [4, 512], strides = [1, 1]} : vector<4x650xf32> to vector<4x512xf32>
    %132 = vector.extract_strided_slice %121 {offsets = [0, 67], sizes = [4, 512], strides = [1, 1]} : vector<4x650xf32> to vector<4x512xf32>
    %133 = vector.extract_strided_slice %121 {offsets = [0, 68], sizes = [4, 512], strides = [1, 1]} : vector<4x650xf32> to vector<4x512xf32>
    %134 = vector.extract_strided_slice %121 {offsets = [0, 69], sizes = [4, 512], strides = [1, 1]} : vector<4x650xf32> to vector<4x512xf32>
    %135 = vector.extract_strided_slice %121 {offsets = [0, 70], sizes = [4, 512], strides = [1, 1]} : vector<4x650xf32> to vector<4x512xf32>
    %136 = vector.extract_strided_slice %121 {offsets = [0, 71], sizes = [4, 512], strides = [1, 1]} : vector<4x650xf32> to vector<4x512xf32>
    %137 = vector.extract_strided_slice %121 {offsets = [0, 89], sizes = [4, 512], strides = [1, 1]} : vector<4x650xf32> to vector<4x512xf32>
    %138 = vector.extract_strided_slice %121 {offsets = [0, 90], sizes = [4, 512], strides = [1, 1]} : vector<4x650xf32> to vector<4x512xf32>
    %139 = vector.extract_strided_slice %121 {offsets = [0, 91], sizes = [4, 512], strides = [1, 1]} : vector<4x650xf32> to vector<4x512xf32>
    %140 = vector.extract_strided_slice %121 {offsets = [0, 92], sizes = [4, 512], strides = [1, 1]} : vector<4x650xf32> to vector<4x512xf32>
    %141 = vector.extract_strided_slice %121 {offsets = [0, 93], sizes = [4, 512], strides = [1, 1]} : vector<4x650xf32> to vector<4x512xf32>
    %142 = vector.extract_strided_slice %121 {offsets = [0, 111], sizes = [4, 512], strides = [1, 1]} : vector<4x650xf32> to vector<4x512xf32>
    %143 = vector.extract_strided_slice %121 {offsets = [0, 112], sizes = [4, 512], strides = [1, 1]} : vector<4x650xf32> to vector<4x512xf32>
    %144 = vector.extract_strided_slice %121 {offsets = [0, 113], sizes = [4, 512], strides = [1, 1]} : vector<4x650xf32> to vector<4x512xf32>
    %145 = vector.extract_strided_slice %121 {offsets = [0, 114], sizes = [4, 512], strides = [1, 1]} : vector<4x650xf32> to vector<4x512xf32>
    %146 = vector.extract_strided_slice %121 {offsets = [0, 115], sizes = [4, 512], strides = [1, 1]} : vector<4x650xf32> to vector<4x512xf32>
    %147 = tpu.concatenate %122, %123, %124, %125, %126, %127, %128, %129, %130, %131, %132, %133, %134, %135, %136, %137 in 0 : vector<4x512xf32>, vector<4x512xf32>, vector<4x512xf32>, vector<4x512xf32>, vector<4x512xf32>, vector<4x512xf32>, vector<4x512xf32>, vector<4x512xf32>, vector<4x512xf32>, vector<4x512xf32>, vector<4x512xf32>, vector<4x512xf32>, vector<4x512xf32>, vector<4x512xf32>, vector<4x512xf32>, vector<4x512xf32> -> vector<64x512xf32>
    %148 = tpu.concatenate %138, %139, %140, %141, %142, %143, %144, %145, %146 in 0 : vector<4x512xf32>, vector<4x512xf32>, vector<4x512xf32>, vector<4x512xf32>, vector<4x512xf32>, vector<4x512xf32>, vector<4x512xf32>, vector<4x512xf32>, vector<4x512xf32> -> vector<36x512xf32>
    %149 = tpu.concatenate %147, %148 in 0 : vector<64x512xf32>, vector<36x512xf32> -> vector<100x512xf32>
    %c0_36 = arith.constant 0 : index
    %c0_37 = arith.constant 0 : index
    %150 = vector.load %arg11[%c0_36, %c0_37] : memref<4x100xf32, #tpu.memory_space<vmem>>, vector<4x100xf32>
    %cst_38 = arith.constant dense<0.000000e+00> : vector<4x512xf32>
    %151 = tpu.matmul %150, %149, %cst_38 {dimension_numbers = #tpu.dot_dimension_numbers<[1], [0], [0], [1], [0, 0, 1, 1], [], []>} : vector<4x100xf32>, vector<100x512xf32>, vector<4x512xf32> -> vector<4x512xf32>
    %c0_39 = arith.constant 0 : index
    %c0_40 = arith.constant 0 : index
    %152 = vector.load %arg12[%c0_39, %c0_40] : memref<4x1xf32, #tpu.memory_space<vmem>>, vector<4x1xf32>
    %153 = vector.broadcast %152 : vector<4x1xf32> to vector<4x512xf32>
    %154 = arith.addf %151, %153 : vector<4x512xf32>
    %cst_41 = arith.constant 0.000000e+00 : f32
    %155 = vector.broadcast %cst_41 : f32 to vector<4x512xf32>
    %156 = arith.cmpf oge, %154, %155 : vector<4x512xf32>
    %cst_42 = arith.constant 1.000000e-01 : f32
    %157 = vector.broadcast %cst_42 : f32 to vector<4x512xf32>
    %158 = arith.mulf %157, %154 : vector<4x512xf32>
    %159 = arith.select %156, %154, %158 : vector<4x512xi1>, vector<4x512xf32>
    %160 = vector.broadcast %2 : vector<1x512xf32> to vector<4x512xf32>
    %161 = arith.mulf %159, %160 : vector<4x512xf32>
    %162 = vector.extract_strided_slice %118 {offsets = [4, 0], sizes = [12, 512], strides = [1, 1]} : vector<16x512xf32> to vector<12x512xf32>
    %cst_43 = arith.constant 0.000000e+00 : f32
    %163 = vector.broadcast %cst_43 : f32 to vector<12x69xf32>
    %164 = tpu.concatenate %163, %162, %163 in 1 : vector<12x69xf32>, vector<12x512xf32>, vector<12x69xf32> -> vector<12x650xf32>
    %165 = vector.extract_strided_slice %164 {offsets = [0, 46], sizes = [12, 512], strides = [1, 1]} : vector<12x650xf32> to vector<12x512xf32>
    %166 = vector.extract_strided_slice %164 {offsets = [0, 47], sizes = [12, 512], strides = [1, 1]} : vector<12x650xf32> to vector<12x512xf32>
    %167 = vector.extract_strided_slice %164 {offsets = [0, 48], sizes = [12, 512], strides = [1, 1]} : vector<12x650xf32> to vector<12x512xf32>
    %168 = vector.extract_strided_slice %164 {offsets = [0, 68], sizes = [12, 512], strides = [1, 1]} : vector<12x650xf32> to vector<12x512xf32>
    %169 = vector.extract_strided_slice %164 {offsets = [0, 69], sizes = [12, 512], strides = [1, 1]} : vector<12x650xf32> to vector<12x512xf32>
    %170 = vector.extract_strided_slice %164 {offsets = [0, 70], sizes = [12, 512], strides = [1, 1]} : vector<12x650xf32> to vector<12x512xf32>
    %171 = vector.extract_strided_slice %164 {offsets = [0, 90], sizes = [12, 512], strides = [1, 1]} : vector<12x650xf32> to vector<12x512xf32>
    %172 = vector.extract_strided_slice %164 {offsets = [0, 91], sizes = [12, 512], strides = [1, 1]} : vector<12x650xf32> to vector<12x512xf32>
    %173 = vector.extract_strided_slice %164 {offsets = [0, 92], sizes = [12, 512], strides = [1, 1]} : vector<12x650xf32> to vector<12x512xf32>
    %174 = tpu.concatenate %165, %166, %167, %168, %169, %170, %171, %172, %173 in 0 : vector<12x512xf32>, vector<12x512xf32>, vector<12x512xf32>, vector<12x512xf32>, vector<12x512xf32>, vector<12x512xf32>, vector<12x512xf32>, vector<12x512xf32>, vector<12x512xf32> -> vector<108x512xf32>
    %c0_44 = arith.constant 0 : index
    %c0_45 = arith.constant 0 : index
    %175 = vector.load %arg13[%c0_44, %c0_45] : memref<16x108xf32, #tpu.memory_space<vmem>>, vector<16x108xf32>
    %cst_46 = arith.constant dense<0.000000e+00> : vector<16x512xf32>
    %176 = tpu.matmul %175, %174, %cst_46 {dimension_numbers = #tpu.dot_dimension_numbers<[1], [0], [0], [1], [0, 0, 1, 1], [], []>} : vector<16x108xf32>, vector<108x512xf32>, vector<16x512xf32> -> vector<16x512xf32>
    %c0_47 = arith.constant 0 : index
    %c0_48 = arith.constant 0 : index
    %177 = vector.load %arg14[%c0_47, %c0_48] : memref<16x1xf32, #tpu.memory_space<vmem>>, vector<16x1xf32>
    %178 = vector.broadcast %177 : vector<16x1xf32> to vector<16x512xf32>
    %179 = arith.addf %176, %178 : vector<16x512xf32>
    %cst_49 = arith.constant 0.000000e+00 : f32
    %180 = vector.broadcast %cst_49 : f32 to vector<16x512xf32>
    %181 = arith.cmpf oge, %179, %180 : vector<16x512xf32>
    %cst_50 = arith.constant 5.000000e-02 : f32
    %182 = vector.broadcast %cst_50 : f32 to vector<16x512xf32>
    %183 = arith.mulf %182, %179 : vector<16x512xf32>
    %184 = arith.select %181, %179, %183 : vector<16x512xi1>, vector<16x512xf32>
    %185 = vector.broadcast %2 : vector<1x512xf32> to vector<16x512xf32>
    %186 = arith.mulf %184, %185 : vector<16x512xf32>
    %187 = vector.extract_strided_slice %186 {offsets = [0, 0], sizes = [4, 512], strides = [1, 1]} : vector<16x512xf32> to vector<4x512xf32>
    %cst_51 = arith.constant 0.000000e+00 : f32
    %188 = vector.broadcast %cst_51 : f32 to vector<4x69xf32>
    %189 = tpu.concatenate %188, %187, %188 in 1 : vector<4x69xf32>, vector<4x512xf32>, vector<4x69xf32> -> vector<4x650xf32>
    %190 = vector.extract_strided_slice %189 {offsets = [0, 46], sizes = [4, 512], strides = [1, 1]} : vector<4x650xf32> to vector<4x512xf32>
    %191 = vector.extract_strided_slice %189 {offsets = [0, 47], sizes = [4, 512], strides = [1, 1]} : vector<4x650xf32> to vector<4x512xf32>
    %192 = vector.extract_strided_slice %189 {offsets = [0, 48], sizes = [4, 512], strides = [1, 1]} : vector<4x650xf32> to vector<4x512xf32>
    %193 = vector.extract_strided_slice %189 {offsets = [0, 68], sizes = [4, 512], strides = [1, 1]} : vector<4x650xf32> to vector<4x512xf32>
    %194 = vector.extract_strided_slice %189 {offsets = [0, 69], sizes = [4, 512], strides = [1, 1]} : vector<4x650xf32> to vector<4x512xf32>
    %195 = vector.extract_strided_slice %189 {offsets = [0, 70], sizes = [4, 512], strides = [1, 1]} : vector<4x650xf32> to vector<4x512xf32>
    %196 = vector.extract_strided_slice %189 {offsets = [0, 90], sizes = [4, 512], strides = [1, 1]} : vector<4x650xf32> to vector<4x512xf32>
    %197 = vector.extract_strided_slice %189 {offsets = [0, 91], sizes = [4, 512], strides = [1, 1]} : vector<4x650xf32> to vector<4x512xf32>
    %198 = vector.extract_strided_slice %189 {offsets = [0, 92], sizes = [4, 512], strides = [1, 1]} : vector<4x650xf32> to vector<4x512xf32>
    %199 = tpu.concatenate %190, %191, %192, %193, %194, %195, %196, %197, %198 in 0 : vector<4x512xf32>, vector<4x512xf32>, vector<4x512xf32>, vector<4x512xf32>, vector<4x512xf32>, vector<4x512xf32>, vector<4x512xf32>, vector<4x512xf32>, vector<4x512xf32> -> vector<36x512xf32>
    %c0_52 = arith.constant 0 : index
    %c0_53 = arith.constant 0 : index
    %200 = vector.load %arg15[%c0_52, %c0_53] : memref<4x36xf32, #tpu.memory_space<vmem>>, vector<4x36xf32>
    %cst_54 = arith.constant dense<0.000000e+00> : vector<4x512xf32>
    %201 = tpu.matmul %200, %199, %cst_54 {dimension_numbers = #tpu.dot_dimension_numbers<[1], [0], [0], [1], [0, 0, 1, 1], [], []>} : vector<4x36xf32>, vector<36x512xf32>, vector<4x512xf32> -> vector<4x512xf32>
    %c0_55 = arith.constant 0 : index
    %c0_56 = arith.constant 0 : index
    %202 = vector.load %arg16[%c0_55, %c0_56] : memref<4x1xf32, #tpu.memory_space<vmem>>, vector<4x1xf32>
    %203 = vector.broadcast %202 : vector<4x1xf32> to vector<4x512xf32>
    %204 = arith.addf %201, %203 : vector<4x512xf32>
    %cst_57 = arith.constant 0.000000e+00 : f32
    %205 = vector.broadcast %cst_57 : f32 to vector<4x512xf32>
    %206 = arith.cmpf oge, %204, %205 : vector<4x512xf32>
    %cst_58 = arith.constant 1.000000e-01 : f32
    %207 = vector.broadcast %cst_58 : f32 to vector<4x512xf32>
    %208 = arith.mulf %207, %204 : vector<4x512xf32>
    %209 = arith.select %206, %204, %208 : vector<4x512xi1>, vector<4x512xf32>
    %210 = vector.broadcast %2 : vector<1x512xf32> to vector<4x512xf32>
    %211 = arith.mulf %209, %210 : vector<4x512xf32>
    %212 = vector.extract_strided_slice %186 {offsets = [4, 0], sizes = [12, 512], strides = [1, 1]} : vector<16x512xf32> to vector<12x512xf32>
    %cst_59 = arith.constant 0.000000e+00 : f32
    %213 = vector.broadcast %cst_59 : f32 to vector<12x69xf32>
    %214 = tpu.concatenate %213, %212, %213 in 1 : vector<12x69xf32>, vector<12x512xf32>, vector<12x69xf32> -> vector<12x650xf32>
    %215 = vector.extract_strided_slice %214 {offsets = [0, 46], sizes = [12, 512], strides = [1, 1]} : vector<12x650xf32> to vector<12x512xf32>
    %216 = vector.extract_strided_slice %214 {offsets = [0, 47], sizes = [12, 512], strides = [1, 1]} : vector<12x650xf32> to vector<12x512xf32>
    %217 = vector.extract_strided_slice %214 {offsets = [0, 48], sizes = [12, 512], strides = [1, 1]} : vector<12x650xf32> to vector<12x512xf32>
    %218 = vector.extract_strided_slice %214 {offsets = [0, 68], sizes = [12, 512], strides = [1, 1]} : vector<12x650xf32> to vector<12x512xf32>
    %219 = vector.extract_strided_slice %214 {offsets = [0, 69], sizes = [12, 512], strides = [1, 1]} : vector<12x650xf32> to vector<12x512xf32>
    %220 = vector.extract_strided_slice %214 {offsets = [0, 70], sizes = [12, 512], strides = [1, 1]} : vector<12x650xf32> to vector<12x512xf32>
    %221 = vector.extract_strided_slice %214 {offsets = [0, 90], sizes = [12, 512], strides = [1, 1]} : vector<12x650xf32> to vector<12x512xf32>
    %222 = vector.extract_strided_slice %214 {offsets = [0, 91], sizes = [12, 512], strides = [1, 1]} : vector<12x650xf32> to vector<12x512xf32>
    %223 = vector.extract_strided_slice %214 {offsets = [0, 92], sizes = [12, 512], strides = [1, 1]} : vector<12x650xf32> to vector<12x512xf32>
    %224 = tpu.concatenate %215, %216, %217, %218, %219, %220, %221, %222, %223 in 0 : vector<12x512xf32>, vector<12x512xf32>, vector<12x512xf32>, vector<12x512xf32>, vector<12x512xf32>, vector<12x512xf32>, vector<12x512xf32>, vector<12x512xf32>, vector<12x512xf32> -> vector<108x512xf32>
    %c0_60 = arith.constant 0 : index
    %c0_61 = arith.constant 0 : index
    %225 = vector.load %arg17[%c0_60, %c0_61] : memref<4x108xf32, #tpu.memory_space<vmem>>, vector<4x108xf32>
    %cst_62 = arith.constant dense<0.000000e+00> : vector<4x512xf32>
    %226 = tpu.matmul %225, %224, %cst_62 {dimension_numbers = #tpu.dot_dimension_numbers<[1], [0], [0], [1], [0, 0, 1, 1], [], []>} : vector<4x108xf32>, vector<108x512xf32>, vector<4x512xf32> -> vector<4x512xf32>
    %c0_63 = arith.constant 0 : index
    %c0_64 = arith.constant 0 : index
    %227 = vector.load %arg18[%c0_63, %c0_64] : memref<4x1xf32, #tpu.memory_space<vmem>>, vector<4x1xf32>
    %228 = vector.broadcast %227 : vector<4x1xf32> to vector<4x512xf32>
    %229 = arith.addf %226, %228 : vector<4x512xf32>
    %230 = vector.broadcast %2 : vector<1x512xf32> to vector<4x512xf32>
    %231 = arith.mulf %229, %230 : vector<4x512xf32>
    %c0_65 = arith.constant 0 : index
    %c0_66 = arith.constant 0 : index
    %232 = vector.load %arg19[%c0_65, %c0_66] : memref<4x4xf32, #tpu.memory_space<vmem>>, vector<4x4xf32>
    %cst_67 = arith.constant dense<0.000000e+00> : vector<4x512xf32>
    %233 = tpu.matmul %232, %231, %cst_67 {dimension_numbers = #tpu.dot_dimension_numbers<[1], [0], [0], [1], [0, 0, 1, 1], [], []>} : vector<4x4xf32>, vector<4x512xf32>, vector<4x512xf32> -> vector<4x512xf32>
    %c0_68 = arith.constant 0 : index
    %c0_69 = arith.constant 0 : index
    %234 = vector.load %arg20[%c0_68, %c0_69] : memref<4x1xf32, #tpu.memory_space<vmem>>, vector<4x1xf32>
    %235 = vector.broadcast %234 : vector<4x1xf32> to vector<4x512xf32>
    %236 = arith.addf %233, %235 : vector<4x512xf32>
    %cst_70 = arith.constant 0.000000e+00 : f32
    %237 = vector.broadcast %cst_70 : f32 to vector<4x512xf32>
    %238 = arith.cmpf oge, %236, %237 : vector<4x512xf32>
    %cst_71 = arith.constant 1.000000e-01 : f32
    %239 = vector.broadcast %cst_71 : f32 to vector<4x512xf32>
    %240 = arith.mulf %239, %236 : vector<4x512xf32>
    %241 = arith.select %238, %236, %240 : vector<4x512xi1>, vector<4x512xf32>
    %242 = vector.broadcast %2 : vector<1x512xf32> to vector<4x512xf32>
    %243 = arith.mulf %241, %242 : vector<4x512xf32>
    %244 = tpu.concatenate %93, %161, %211, %243 in 0 : vector<4x512xf32>, vector<4x512xf32>, vector<4x512xf32>, vector<4x512xf32> -> vector<16x512xf32>
    %cst_72 = arith.constant dense<0.000000e+00> : vector<16xf32>
    %245 = vector.multi_reduction <add>, %244, %cst_72 [1] : vector<16x512xf32> to vector<16xf32>
    %246 = vector.shape_cast %245 : vector<16xf32> to vector<16x1xf32>
    %cst_73 = arith.constant 3.906250e-03 : f32
    %247 = vector.broadcast %cst_73 : f32 to vector<16x1xf32>
    %248 = arith.mulf %246, %247 : vector<16x1xf32>
    %249 = arith.mulf %244, %244 : vector<16x512xf32>
    %cst_74 = arith.constant dense<0.000000e+00> : vector<16xf32>
    %250 = vector.multi_reduction <add>, %249, %cst_74 [1] : vector<16x512xf32> to vector<16xf32>
    %251 = vector.shape_cast %250 : vector<16xf32> to vector<16x1xf32>
    %cst_75 = arith.constant 3.906250e-03 : f32
    %252 = vector.broadcast %cst_75 : f32 to vector<16x1xf32>
    %253 = arith.mulf %251, %252 : vector<16x1xf32>
    %254 = arith.mulf %248, %248 : vector<16x1xf32>
    %255 = arith.subf %253, %254 : vector<16x1xf32>
    %cst_76 = arith.constant 0.000000e+00 : f32
    %256 = vector.broadcast %cst_76 : f32 to vector<16x1xf32>
    %257 = arith.maximumf %255, %256 : vector<16x1xf32>
    %258 = math.sqrt %257 : vector<16x1xf32>
    %259 = arith.addf %248, %258 : vector<16x1xf32>
    %c0_77 = arith.constant 0 : index
    %c0_78 = arith.constant 0 : index
    %260 = vector.load %arg21[%c0_77, %c0_78] : memref<16x1xf32, #tpu.memory_space<vmem>>, vector<16x1xf32>
    %261 = arith.mulf %260, %259 : vector<16x1xf32>
    %cst_79 = arith.constant dense<0.000000e+00> : vector<1xf32>
    %262 = vector.multi_reduction <add>, %261, %cst_79 [0] : vector<16x1xf32> to vector<1xf32>
    %263 = vector.shape_cast %262 : vector<1xf32> to vector<1x1xf32>
    %cst_80 = arith.constant 0.000000e+00 : f32
    %264 = vector.broadcast %cst_80 : f32 to vector<1x1xf32>
    %265 = arith.maximumf %263, %264 : vector<1x1xf32>
    %c0_81 = arith.constant 0 : index
    %c0_82 = arith.constant 0 : index
    %266 = vector.load %arg22[%c0_81, %c0_82] : memref<16x1xf32, #tpu.memory_space<vmem>>, vector<16x1xf32>
    %267 = vector.broadcast %265 : vector<1x1xf32> to vector<16x1xf32>
    %268 = arith.mulf %266, %267 : vector<16x1xf32>
    %cst_83 = arith.constant dense<0.000000e+00> : vector<16xf32>
    %269 = vector.multi_reduction <add>, %268, %cst_83 [1] : vector<16x1xf32> to vector<16xf32>
    %270 = vector.shape_cast %269 : vector<16xf32> to vector<16x1xf32>
    %271 = arith.negf %270 : vector<16x1xf32>
    %272 = math.exp %271 : vector<16x1xf32>
    %cst_84 = arith.constant 1.000000e+00 : f32
    %273 = vector.broadcast %cst_84 : f32 to vector<16x1xf32>
    %274 = arith.addf %273, %272 : vector<16x1xf32>
    %275 = arith.divf %273, %274 : vector<16x1xf32>
    %276 = vector.broadcast %275 : vector<16x1xf32> to vector<16x512xf32>
    %277 = arith.mulf %244, %276 : vector<16x512xf32>
    %cst_85 = arith.constant dense<0xFF800000> : vector<512xf32>
    %278 = vector.multi_reduction <maximumf>, %277, %cst_85 [0] : vector<16x512xf32> to vector<512xf32>
    %279 = vector.shape_cast %278 : vector<512xf32> to vector<1x512xf32>
    %cst_86 = arith.constant dense<0.000000e+00> : vector<512xf32>
    %280 = vector.multi_reduction <add>, %277, %cst_86 [0] : vector<16x512xf32> to vector<512xf32>
    %281 = vector.shape_cast %280 : vector<512xf32> to vector<1x512xf32>
    %cst_87 = arith.constant 6.250000e-02 : f32
    %282 = vector.broadcast %cst_87 : f32 to vector<1x512xf32>
    %283 = arith.mulf %281, %282 : vector<1x512xf32>
    %284 = tpu.concatenate %279, %283 in 0 : vector<1x512xf32>, vector<1x512xf32> -> vector<2x512xf32>
    %cst_88 = arith.constant 0.000000e+00 : f32
    %285 = vector.broadcast %cst_88 : f32 to vector<2x69xf32>
    %286 = tpu.concatenate %285, %284, %285 in 1 : vector<2x69xf32>, vector<2x512xf32>, vector<2x69xf32> -> vector<2x650xf32>
    %287 = vector.extract_strided_slice %286 {offsets = [0, 0], sizes = [2, 512], strides = [1, 1]} : vector<2x650xf32> to vector<2x512xf32>
    %288 = vector.extract_strided_slice %286 {offsets = [0, 1], sizes = [2, 512], strides = [1, 1]} : vector<2x650xf32> to vector<2x512xf32>
    %289 = vector.extract_strided_slice %286 {offsets = [0, 2], sizes = [2, 512], strides = [1, 1]} : vector<2x650xf32> to vector<2x512xf32>
    %290 = vector.extract_strided_slice %286 {offsets = [0, 3], sizes = [2, 512], strides = [1, 1]} : vector<2x650xf32> to vector<2x512xf32>
    %291 = vector.extract_strided_slice %286 {offsets = [0, 4], sizes = [2, 512], strides = [1, 1]} : vector<2x650xf32> to vector<2x512xf32>
    %292 = vector.extract_strided_slice %286 {offsets = [0, 5], sizes = [2, 512], strides = [1, 1]} : vector<2x650xf32> to vector<2x512xf32>
    %293 = vector.extract_strided_slice %286 {offsets = [0, 6], sizes = [2, 512], strides = [1, 1]} : vector<2x650xf32> to vector<2x512xf32>
    %294 = vector.extract_strided_slice %286 {offsets = [0, 22], sizes = [2, 512], strides = [1, 1]} : vector<2x650xf32> to vector<2x512xf32>
    %295 = vector.extract_strided_slice %286 {offsets = [0, 23], sizes = [2, 512], strides = [1, 1]} : vector<2x650xf32> to vector<2x512xf32>
    %296 = vector.extract_strided_slice %286 {offsets = [0, 24], sizes = [2, 512], strides = [1, 1]} : vector<2x650xf32> to vector<2x512xf32>
    %297 = vector.extract_strided_slice %286 {offsets = [0, 25], sizes = [2, 512], strides = [1, 1]} : vector<2x650xf32> to vector<2x512xf32>
    %298 = vector.extract_strided_slice %286 {offsets = [0, 26], sizes = [2, 512], strides = [1, 1]} : vector<2x650xf32> to vector<2x512xf32>
    %299 = vector.extract_strided_slice %286 {offsets = [0, 27], sizes = [2, 512], strides = [1, 1]} : vector<2x650xf32> to vector<2x512xf32>
    %300 = vector.extract_strided_slice %286 {offsets = [0, 28], sizes = [2, 512], strides = [1, 1]} : vector<2x650xf32> to vector<2x512xf32>
    %301 = vector.extract_strided_slice %286 {offsets = [0, 44], sizes = [2, 512], strides = [1, 1]} : vector<2x650xf32> to vector<2x512xf32>
    %302 = vector.extract_strided_slice %286 {offsets = [0, 45], sizes = [2, 512], strides = [1, 1]} : vector<2x650xf32> to vector<2x512xf32>
    %303 = vector.extract_strided_slice %286 {offsets = [0, 46], sizes = [2, 512], strides = [1, 1]} : vector<2x650xf32> to vector<2x512xf32>
    %304 = vector.extract_strided_slice %286 {offsets = [0, 47], sizes = [2, 512], strides = [1, 1]} : vector<2x650xf32> to vector<2x512xf32>
    %305 = vector.extract_strided_slice %286 {offsets = [0, 48], sizes = [2, 512], strides = [1, 1]} : vector<2x650xf32> to vector<2x512xf32>
    %306 = vector.extract_strided_slice %286 {offsets = [0, 49], sizes = [2, 512], strides = [1, 1]} : vector<2x650xf32> to vector<2x512xf32>
    %307 = vector.extract_strided_slice %286 {offsets = [0, 50], sizes = [2, 512], strides = [1, 1]} : vector<2x650xf32> to vector<2x512xf32>
    %308 = vector.extract_strided_slice %286 {offsets = [0, 66], sizes = [2, 512], strides = [1, 1]} : vector<2x650xf32> to vector<2x512xf32>
    %309 = vector.extract_strided_slice %286 {offsets = [0, 67], sizes = [2, 512], strides = [1, 1]} : vector<2x650xf32> to vector<2x512xf32>
    %310 = vector.extract_strided_slice %286 {offsets = [0, 68], sizes = [2, 512], strides = [1, 1]} : vector<2x650xf32> to vector<2x512xf32>
    %311 = vector.extract_strided_slice %286 {offsets = [0, 69], sizes = [2, 512], strides = [1, 1]} : vector<2x650xf32> to vector<2x512xf32>
    %312 = vector.extract_strided_slice %286 {offsets = [0, 70], sizes = [2, 512], strides = [1, 1]} : vector<2x650xf32> to vector<2x512xf32>
    %313 = vector.extract_strided_slice %286 {offsets = [0, 71], sizes = [2, 512], strides = [1, 1]} : vector<2x650xf32> to vector<2x512xf32>
    %314 = vector.extract_strided_slice %286 {offsets = [0, 72], sizes = [2, 512], strides = [1, 1]} : vector<2x650xf32> to vector<2x512xf32>
    %315 = vector.extract_strided_slice %286 {offsets = [0, 88], sizes = [2, 512], strides = [1, 1]} : vector<2x650xf32> to vector<2x512xf32>
    %316 = vector.extract_strided_slice %286 {offsets = [0, 89], sizes = [2, 512], strides = [1, 1]} : vector<2x650xf32> to vector<2x512xf32>
    %317 = vector.extract_strided_slice %286 {offsets = [0, 90], sizes = [2, 512], strides = [1, 1]} : vector<2x650xf32> to vector<2x512xf32>
    %318 = vector.extract_strided_slice %286 {offsets = [0, 91], sizes = [2, 512], strides = [1, 1]} : vector<2x650xf32> to vector<2x512xf32>
    %319 = vector.extract_strided_slice %286 {offsets = [0, 92], sizes = [2, 512], strides = [1, 1]} : vector<2x650xf32> to vector<2x512xf32>
    %320 = vector.extract_strided_slice %286 {offsets = [0, 93], sizes = [2, 512], strides = [1, 1]} : vector<2x650xf32> to vector<2x512xf32>
    %321 = vector.extract_strided_slice %286 {offsets = [0, 94], sizes = [2, 512], strides = [1, 1]} : vector<2x650xf32> to vector<2x512xf32>
    %322 = vector.extract_strided_slice %286 {offsets = [0, 110], sizes = [2, 512], strides = [1, 1]} : vector<2x650xf32> to vector<2x512xf32>
    %323 = vector.extract_strided_slice %286 {offsets = [0, 111], sizes = [2, 512], strides = [1, 1]} : vector<2x650xf32> to vector<2x512xf32>
    %324 = vector.extract_strided_slice %286 {offsets = [0, 112], sizes = [2, 512], strides = [1, 1]} : vector<2x650xf32> to vector<2x512xf32>
    %325 = vector.extract_strided_slice %286 {offsets = [0, 113], sizes = [2, 512], strides = [1, 1]} : vector<2x650xf32> to vector<2x512xf32>
    %326 = vector.extract_strided_slice %286 {offsets = [0, 114], sizes = [2, 512], strides = [1, 1]} : vector<2x650xf32> to vector<2x512xf32>
    %327 = vector.extract_strided_slice %286 {offsets = [0, 115], sizes = [2, 512], strides = [1, 1]} : vector<2x650xf32> to vector<2x512xf32>
    %328 = vector.extract_strided_slice %286 {offsets = [0, 116], sizes = [2, 512], strides = [1, 1]} : vector<2x650xf32> to vector<2x512xf32>
    %329 = vector.extract_strided_slice %286 {offsets = [0, 132], sizes = [2, 512], strides = [1, 1]} : vector<2x650xf32> to vector<2x512xf32>
    %330 = vector.extract_strided_slice %286 {offsets = [0, 133], sizes = [2, 512], strides = [1, 1]} : vector<2x650xf32> to vector<2x512xf32>
    %331 = vector.extract_strided_slice %286 {offsets = [0, 134], sizes = [2, 512], strides = [1, 1]} : vector<2x650xf32> to vector<2x512xf32>
    %332 = vector.extract_strided_slice %286 {offsets = [0, 135], sizes = [2, 512], strides = [1, 1]} : vector<2x650xf32> to vector<2x512xf32>
    %333 = vector.extract_strided_slice %286 {offsets = [0, 136], sizes = [2, 512], strides = [1, 1]} : vector<2x650xf32> to vector<2x512xf32>
    %334 = vector.extract_strided_slice %286 {offsets = [0, 137], sizes = [2, 512], strides = [1, 1]} : vector<2x650xf32> to vector<2x512xf32>
    %335 = vector.extract_strided_slice %286 {offsets = [0, 138], sizes = [2, 512], strides = [1, 1]} : vector<2x650xf32> to vector<2x512xf32>
    %336 = tpu.concatenate %287, %288, %289, %290, %291, %292, %293, %294, %295, %296, %297, %298, %299, %300, %301, %302 in 0 : vector<2x512xf32>, vector<2x512xf32>, vector<2x512xf32>, vector<2x512xf32>, vector<2x512xf32>, vector<2x512xf32>, vector<2x512xf32>, vector<2x512xf32>, vector<2x512xf32>, vector<2x512xf32>, vector<2x512xf32>, vector<2x512xf32>, vector<2x512xf32>, vector<2x512xf32>, vector<2x512xf32>, vector<2x512xf32> -> vector<32x512xf32>
    %337 = tpu.concatenate %303, %304, %305, %306, %307, %308, %309, %310, %311, %312, %313, %314, %315, %316, %317, %318 in 0 : vector<2x512xf32>, vector<2x512xf32>, vector<2x512xf32>, vector<2x512xf32>, vector<2x512xf32>, vector<2x512xf32>, vector<2x512xf32>, vector<2x512xf32>, vector<2x512xf32>, vector<2x512xf32>, vector<2x512xf32>, vector<2x512xf32>, vector<2x512xf32>, vector<2x512xf32>, vector<2x512xf32>, vector<2x512xf32> -> vector<32x512xf32>
    %338 = tpu.concatenate %319, %320, %321, %322, %323, %324, %325, %326, %327, %328, %329, %330, %331, %332, %333, %334 in 0 : vector<2x512xf32>, vector<2x512xf32>, vector<2x512xf32>, vector<2x512xf32>, vector<2x512xf32>, vector<2x512xf32>, vector<2x512xf32>, vector<2x512xf32>, vector<2x512xf32>, vector<2x512xf32>, vector<2x512xf32>, vector<2x512xf32>, vector<2x512xf32>, vector<2x512xf32>, vector<2x512xf32>, vector<2x512xf32> -> vector<32x512xf32>
    %339 = tpu.concatenate %336, %337, %338, %335 in 0 : vector<32x512xf32>, vector<32x512xf32>, vector<32x512xf32>, vector<2x512xf32> -> vector<98x512xf32>
    %c0_89 = arith.constant 0 : index
    %c0_90 = arith.constant 0 : index
    %340 = vector.load %arg23[%c0_89, %c0_90] : memref<1x98xf32, #tpu.memory_space<vmem>>, vector<1x98xf32>
    %cst_91 = arith.constant dense<0.000000e+00> : vector<1x512xf32>
    %341 = tpu.matmul %340, %339, %cst_91 {dimension_numbers = #tpu.dot_dimension_numbers<[1], [0], [0], [1], [0, 0, 1, 1], [], []>} : vector<1x98xf32>, vector<98x512xf32>, vector<1x512xf32> -> vector<1x512xf32>
    %c0_92 = arith.constant 0 : index
    %c0_93 = arith.constant 0 : index
    %342 = vector.load %arg24[%c0_92, %c0_93] : memref<1x1xf32, #tpu.memory_space<vmem>>, vector<1x1xf32>
    %343 = vector.broadcast %342 : vector<1x1xf32> to vector<1x512xf32>
    %344 = arith.addf %341, %343 : vector<1x512xf32>
    %345 = arith.mulf %344, %2 : vector<1x512xf32>
    %346 = arith.negf %345 : vector<1x512xf32>
    %347 = math.exp %346 : vector<1x512xf32>
    %cst_94 = arith.constant 1.000000e+00 : f32
    %348 = vector.broadcast %cst_94 : f32 to vector<1x512xf32>
    %349 = arith.addf %348, %347 : vector<1x512xf32>
    %350 = arith.divf %348, %349 : vector<1x512xf32>
    %351 = vector.broadcast %350 : vector<1x512xf32> to vector<16x512xf32>
    %352 = arith.mulf %277, %351 : vector<16x512xf32>
    %c0_95 = arith.constant 0 : index
    %c0_96 = arith.constant 0 : index
    %353 = vector.load %arg25[%c0_95, %c0_96] : memref<16x16xf32, #tpu.memory_space<vmem>>, vector<16x16xf32>
    %cst_97 = arith.constant dense<0.000000e+00> : vector<16x512xf32>
    %354 = tpu.matmul %353, %352, %cst_97 {dimension_numbers = #tpu.dot_dimension_numbers<[1], [0], [0], [1], [0, 0, 1, 1], [], []>} : vector<16x16xf32>, vector<16x512xf32>, vector<16x512xf32> -> vector<16x512xf32>
    %c0_98 = arith.constant 0 : index
    %c0_99 = arith.constant 0 : index
    %355 = vector.load %arg26[%c0_98, %c0_99] : memref<16x1xf32, #tpu.memory_space<vmem>>, vector<16x1xf32>
    %356 = vector.broadcast %355 : vector<16x1xf32> to vector<16x512xf32>
    %357 = arith.addf %354, %356 : vector<16x512xf32>
    %358 = arith.addf %357, %1 : vector<16x512xf32>
    %c0_100 = arith.constant 0 : index
    %c0_101 = arith.constant 0 : index
    %c0_102 = arith.constant 0 : index
    %359 = vector.load %arg27[%c0_100, %c0_101, %c0_102] : memref<1x16x512xf32, #tpu.memory_space<vmem>>, vector<1x16x512xf32>
    %360 = vector.shape_cast %359 : vector<1x16x512xf32> to vector<16x512xf32>
    %361 = vector.shape_cast %358 : vector<16x512xf32> to vector<1x16x512xf32>
    tpu.vector_store %arg27[%c0_100, %c0_101, %c0_102], %361 {strides = array<i32>} : memref<1x16x512xf32, #tpu.memory_space<vmem>>, vector<1x16x512xf32>,
    return
  }
  func.func @transform_0(%arg0: i32) -> (i32, i32, i32) {
    %c0_i32 = arith.constant 0 : i32
    %c0_i32_0 = arith.constant 0 : i32
    %c0_i32_1 = arith.constant 0 : i32
    return %arg0, %c0_i32, %c0_i32_0 : i32, i32, i32
  }
  func.func @transform_1(%arg0: i32) -> (i32, i32) {
    %c0_i32 = arith.constant 0 : i32
    %c0_i32_0 = arith.constant 0 : i32
    %c0_i32_1 = arith.constant 0 : i32
    return %c0_i32, %c0_i32_0 : i32, i32
  }
  func.func @transform_2(%arg0: i32) -> (i32, i32) {
    %c0_i32 = arith.constant 0 : i32
    %c0_i32_0 = arith.constant 0 : i32
    %c0_i32_1 = arith.constant 0 : i32
    return %c0_i32, %c0_i32_0 : i32, i32
  }
  func.func @transform_3(%arg0: i32) -> (i32, i32) {
    %c0_i32 = arith.constant 0 : i32
    %c0_i32_0 = arith.constant 0 : i32
    %c0_i32_1 = arith.constant 0 : i32
    return %c0_i32, %c0_i32_0 : i32, i32
  }
  func.func @transform_4(%arg0: i32) -> (i32, i32) {
    %c0_i32 = arith.constant 0 : i32
    %c0_i32_0 = arith.constant 0 : i32
    %c0_i32_1 = arith.constant 0 : i32
    return %c0_i32, %c0_i32_0 : i32, i32
  }
  func.func @transform_5(%arg0: i32) -> (i32, i32) {
    %c0_i32 = arith.constant 0 : i32
    %c0_i32_0 = arith.constant 0 : i32
    %c0_i32_1 = arith.constant 0 : i32
    return %c0_i32, %c0_i32_0 : i32, i32
  }
  func.func @transform_6(%arg0: i32) -> (i32, i32) {
    %c0_i32 = arith.constant 0 : i32
    %c0_i32_0 = arith.constant 0 : i32
    %c0_i32_1 = arith.constant 0 : i32
    return %c0_i32, %c0_i32_0 : i32, i32
  }
  func.func @transform_7(%arg0: i32) -> (i32, i32) {
    %c0_i32 = arith.constant 0 : i32
    %c0_i32_0 = arith.constant 0 : i32
    %c0_i32_1 = arith.constant 0 : i32
    return %c0_i32, %c0_i32_0 : i32, i32
  }
  func.func @transform_8(%arg0: i32) -> (i32, i32) {
    %c0_i32 = arith.constant 0 : i32
    %c0_i32_0 = arith.constant 0 : i32
    %c0_i32_1 = arith.constant 0 : i32
    return %c0_i32, %c0_i32_0 : i32, i32
  }
  func.func @transform_9(%arg0: i32) -> (i32, i32) {
    %c0_i32 = arith.constant 0 : i32
    %c0_i32_0 = arith.constant 0 : i32
    %c0_i32_1 = arith.constant 0 : i32
    return %c0_i32, %c0_i32_0 : i32, i32
  }
  func.func @transform_10(%arg0: i32) -> (i32, i32) {
    %c0_i32 = arith.constant 0 : i32
    %c0_i32_0 = arith.constant 0 : i32
    %c0_i32_1 = arith.constant 0 : i32
    return %c0_i32, %c0_i32_0 : i32, i32
  }
  func.func @transform_11(%arg0: i32) -> (i32, i32) {
    %c0_i32 = arith.constant 0 : i32
    %c0_i32_0 = arith.constant 0 : i32
    %c0_i32_1 = arith.constant 0 : i32
    return %c0_i32, %c0_i32_0 : i32, i32
  }
  func.func @transform_12(%arg0: i32) -> (i32, i32) {
    %c0_i32 = arith.constant 0 : i32
    %c0_i32_0 = arith.constant 0 : i32
    %c0_i32_1 = arith.constant 0 : i32
    return %c0_i32, %c0_i32_0 : i32, i32
  }
  func.func @transform_13(%arg0: i32) -> (i32, i32) {
    %c0_i32 = arith.constant 0 : i32
    %c0_i32_0 = arith.constant 0 : i32
    %c0_i32_1 = arith.constant 0 : i32
    return %c0_i32, %c0_i32_0 : i32, i32
  }
  func.func @transform_14(%arg0: i32) -> (i32, i32) {
    %c0_i32 = arith.constant 0 : i32
    %c0_i32_0 = arith.constant 0 : i32
    %c0_i32_1 = arith.constant 0 : i32
    return %c0_i32, %c0_i32_0 : i32, i32
  }
  func.func @transform_15(%arg0: i32) -> (i32, i32) {
    %c0_i32 = arith.constant 0 : i32
    %c0_i32_0 = arith.constant 0 : i32
    %c0_i32_1 = arith.constant 0 : i32
    return %c0_i32, %c0_i32_0 : i32, i32
  }
  func.func @transform_16(%arg0: i32) -> (i32, i32) {
    %c0_i32 = arith.constant 0 : i32
    %c0_i32_0 = arith.constant 0 : i32
    %c0_i32_1 = arith.constant 0 : i32
    return %c0_i32, %c0_i32_0 : i32, i32
  }
  func.func @transform_17(%arg0: i32) -> (i32, i32) {
    %c0_i32 = arith.constant 0 : i32
    %c0_i32_0 = arith.constant 0 : i32
    %c0_i32_1 = arith.constant 0 : i32
    return %c0_i32, %c0_i32_0 : i32, i32
  }
  func.func @transform_18(%arg0: i32) -> (i32, i32) {
    %c0_i32 = arith.constant 0 : i32
    %c0_i32_0 = arith.constant 0 : i32
    %c0_i32_1 = arith.constant 0 : i32
    return %c0_i32, %c0_i32_0 : i32, i32
  }
  func.func @transform_19(%arg0: i32) -> (i32, i32) {
    %c0_i32 = arith.constant 0 : i32
    %c0_i32_0 = arith.constant 0 : i32
    %c0_i32_1 = arith.constant 0 : i32
    return %c0_i32, %c0_i32_0 : i32, i32
  }
  func.func @transform_20(%arg0: i32) -> (i32, i32) {
    %c0_i32 = arith.constant 0 : i32
    %c0_i32_0 = arith.constant 0 : i32
    %c0_i32_1 = arith.constant 0 : i32
    return %c0_i32, %c0_i32_0 : i32, i32
  }
  func.func @transform_21(%arg0: i32) -> (i32, i32) {
    %c0_i32 = arith.constant 0 : i32
    %c0_i32_0 = arith.constant 0 : i32
    %c0_i32_1 = arith.constant 0 : i32
    return %c0_i32, %c0_i32_0 : i32, i32
  }
  func.func @transform_22(%arg0: i32) -> (i32, i32) {
    %c0_i32 = arith.constant 0 : i32
    %c0_i32_0 = arith.constant 0 : i32
    %c0_i32_1 = arith.constant 0 : i32
    return %c0_i32, %c0_i32_0 : i32, i32
  }
  func.func @transform_23(%arg0: i32) -> (i32, i32) {
    %c0_i32 = arith.constant 0 : i32
    %c0_i32_0 = arith.constant 0 : i32
    %c0_i32_1 = arith.constant 0 : i32
    return %c0_i32, %c0_i32_0 : i32, i32
  }
  func.func @transform_24(%arg0: i32) -> (i32, i32) {
    %c0_i32 = arith.constant 0 : i32
    %c0_i32_0 = arith.constant 0 : i32
    %c0_i32_1 = arith.constant 0 : i32
    return %c0_i32, %c0_i32_0 : i32, i32
  }
  func.func @transform_25(%arg0: i32) -> (i32, i32) {
    %c0_i32 = arith.constant 0 : i32
    %c0_i32_0 = arith.constant 0 : i32
    %c0_i32_1 = arith.constant 0 : i32
    return %c0_i32, %c0_i32_0 : i32, i32
  }
  func.func @transform_26(%arg0: i32) -> (i32, i32, i32) {
    %c0_i32 = arith.constant 0 : i32
    %c0_i32_0 = arith.constant 0 : i32
    %c0_i32_1 = arith.constant 0 : i32
    return %arg0, %c0_i32, %c0_i32_0 : i32, i32, i32
  }
}

</mosaic_0001>

<llo_original>
// kernel: imd_forward.1
$region0: #{imd_forward.1}
  #allocation0 [shape = 'u32[]', space=smem, size = 0x4, offset = 0x4, fixed_abs, tag = 'smem constant byte address 0x4 - core index']
  #allocation1 [shape = 'u32[144,128]{1,0:T(1,128)}', space=vmem, size = 0x12000, scoped, tag = 'internal scratch']
  #allocation2 [shape = 'f32[1,1]{1,0:T(1,128)S(1)}', space=vmem, size = 0x200, scoped, tag = 'scoped memory for imd_forward.1']
  %s0 = inlined_call_operand.vmem [shape: f32[2,16,512], index: 0, kind: input, shape index: {}]
  %s1 = inlined_call_operand.vmem [shape: f32[1,512], index: 1, kind: input, shape index: {}]
  %s2 = inlined_call_operand.vmem [shape: f32[16,144], index: 2, kind: input, shape index: {}]
  %s3 = inlined_call_operand.vmem [shape: f32[16,1], index: 3, kind: input, shape index: {}]
  %s4 = inlined_call_operand.vmem [shape: f32[4,36], index: 4, kind: input, shape index: {}]
  %s5 = inlined_call_operand.vmem [shape: f32[4,1], index: 5, kind: input, shape index: {}]
  %s6 = inlined_call_operand.vmem [shape: f32[4,100], index: 6, kind: input, shape index: {}]
  %s7 = inlined_call_operand.vmem [shape: f32[4,1], index: 7, kind: input, shape index: {}]
  %s8 = inlined_call_operand.vmem [shape: f32[16,108], index: 8, kind: input, shape index: {}]
  %s9 = inlined_call_operand.vmem [shape: f32[16,1], index: 9, kind: input, shape index: {}]
  %s10 = inlined_call_operand.vmem [shape: f32[4,100], index: 10, kind: input, shape index: {}]
  %s11 = inlined_call_operand.vmem [shape: f32[4,1], index: 11, kind: input, shape index: {}]
  %s12 = inlined_call_operand.vmem [shape: f32[16,108], index: 12, kind: input, shape index: {}]
  %s13 = inlined_call_operand.vmem [shape: f32[16,1], index: 13, kind: input, shape index: {}]
  %s14 = inlined_call_operand.vmem [shape: f32[4,36], index: 14, kind: input, shape index: {}]
  %s15 = inlined_call_operand.vmem [shape: f32[4,1], index: 15, kind: input, shape index: {}]
  %s16 = inlined_call_operand.vmem [shape: f32[4,108], index: 16, kind: input, shape index: {}]
  %s17 = inlined_call_operand.vmem [shape: f32[4,1], index: 17, kind: input, shape index: {}]
  %s18 = inlined_call_operand.vmem [shape: f32[4,4], index: 18, kind: input, shape index: {}]
  %s19 = inlined_call_operand.vmem [shape: f32[4,1], index: 19, kind: input, shape index: {}]
  %s20 = inlined_call_operand.vmem [shape: f32[16,1], index: 20, kind: input, shape index: {}]
  %s21 = inlined_call_operand.vmem [shape: f32[16,1], index: 21, kind: input, shape index: {}]
  %s22 = inlined_call_operand.vmem [shape: f32[1,98], index: 22, kind: input, shape index: {}]
  %s23 = inlined_call_operand.<no memory space> [shape: f32[1,1], index: 23, kind: input, shape index: {}]
  %s24 = inlined_call_operand.vmem [shape: f32[16,16], index: 24, kind: input, shape index: {}]
  %s25 = inlined_call_operand.vmem [shape: f32[16,1], index: 25, kind: input, shape index: {}]
  %s26 = inlined_call_operand.vmem [shape: f32[2,16,512], index: 26, kind: output, shape index: {}]
  %s27 = sld [smem:[#allocation0]]
  $region137: #{imd_forward.1} parent=0
    _
  %s29 = ssub.s32 1, %s27
  %s30 = scalar_select 0, %s29, %s27
  %v31 = vstv %s23
  %32 = vst [vmem:[#allocation2] sm:$0x1] %v31
  loop: start=0, step=1, limit=4
  $region2: #{imd_forward.1} parent=0 // loop_pre_header
    _
  $region3: #{imd_forward.1} parent=0 // loop_header
    %s34 = sphi 0, %s38
    %p35 = scmp.ge.s32.totalorder %s34, 4
    %s44 = sphi 0, %s46
    %s47 = sphi 0, %s44
    %s48 = sphi 0, %s47
    %s64 = sphi 0, %s48
    %s68 = sphi 0, %s68
    %s70 = sphi 0, %s68
    %s71 = sphi 0, %s70
    %s85 = sphi 0, %s71
    %s89 = sphi 0, %s89
    %s91 = sphi 0, %s89
    %s92 = sphi 0, %s91
    %s106 = sphi 0, %s92
    %s110 = sphi 0, %s110
    %s112 = sphi 0, %s110
    %s113 = sphi 0, %s112
    %s127 = sphi 0, %s113
    %s131 = sphi 0, %s131
    %s133 = sphi 0, %s131
    %s134 = sphi 0, %s133
    %s148 = sphi 0, %s134
    %s152 = sphi 0, %s152
    %s154 = sphi 0, %s152
    %s155 = sphi 0, %s154
    %s169 = sphi 0, %s155
    %s173 = sphi 0, %s173
    %s175 = sphi 0, %s173
    %s176 = sphi 0, %s175
    %s190 = sphi 0, %s176
    %s194 = sphi 0, %s194
    %s196 = sphi 0, %s194
    %s197 = sphi 0, %s196
    %s211 = sphi 0, %s197
    %s215 = sphi 0, %s215
    %s217 = sphi 0, %s215
    %s218 = sphi 0, %s217
    %s232 = sphi 0, %s218
    %s236 = sphi 0, %s236
    %s238 = sphi 0, %s236
    %s239 = sphi 0, %s238
    %s253 = sphi 0, %s239
    %s257 = sphi 0, %s257
    %s259 = sphi 0, %s257
    %s260 = sphi 0, %s259
    %s274 = sphi 0, %s260
    %s278 = sphi 0, %s278
    %s280 = sphi 0, %s278
    %s281 = sphi 0, %s280
    %s295 = sphi 0, %s281
    %s299 = sphi 0, %s299
    %s301 = sphi 0, %s299
    %s302 = sphi 0, %s301
    %s316 = sphi 0, %s302
    %s320 = sphi 0, %s320
    %s322 = sphi 0, %s320
    %s323 = sphi 0, %s322
    %s337 = sphi 0, %s323
    %s341 = sphi 0, %s341
    %s343 = sphi 0, %s341
    %s344 = sphi 0, %s343
    %s358 = sphi 0, %s344
    %s362 = sphi 0, %s362
    %s364 = sphi 0, %s362
    %s365 = sphi 0, %s364
    %s379 = sphi 0, %s365
    %s383 = sphi 0, %s383
    %s385 = sphi 0, %s383
    %s386 = sphi 0, %s385
    %s400 = sphi 0, %s386
    %s404 = sphi 0, %s404
    %s406 = sphi 0, %s404
    %s407 = sphi 0, %s406
    %s421 = sphi 0, %s407
    %s425 = sphi 0, %s425
    %s427 = sphi 0, %s425
    %s428 = sphi 0, %s427
    %s442 = sphi 0, %s428
    %s446 = sphi 0, %s446
    %s448 = sphi 0, %s446
    %s449 = sphi 0, %s448
    %s463 = sphi 0, %s449
    %s467 = sphi 0, %s467
    %s469 = sphi 0, %s467
    %s470 = sphi 0, %s469
    %s484 = sphi 0, %s470
    %s488 = sphi 0, %s488
    %s490 = sphi 0, %s488
    %s491 = sphi 0, %s490
    %s505 = sphi 0, %s491
    %s509 = sphi 0, %s509
    %s511 = sphi 0, %s509
    %s512 = sphi 0, %s511
    %s526 = sphi 0, %s512
    %s530 = sphi 0, %s530
    %s532 = sphi 0, %s530
    %s533 = sphi 0, %s532
    %s547 = sphi 0, %s533
    %s551 = sphi 0, %s551
    %s553 = sphi 0, %s551
    %s554 = sphi 0, %s553
    %s568 = sphi 0, %s554
    %s572 = sphi 0, %s572
    %s574 = sphi 0, %s572
    %s575 = sphi 0, %s574
    %s589 = sphi 0, %s575
    %s595 = sphi 0, %s597
    %s598 = sphi 0, %s595
    %s599 = sphi 0, %s598
    %s615 = sphi 0, %s599
  $region4: #{imd_forward.1} parent=0 // loop_header_branch
    %37 = sbr.rel (%p35) target = $region8
  $region5: #{imd_forward.1} parent=0 // loop_body
    %s39 = ssub.s32 %s34, 1
    %s40 = ssub.s32 %s34, 2
    %s41 = sadd.s32 %s34, 1
    %s42 = ssub.s32 %s34, %s41
    %p43 = scmp.eq.s32.totalorder %s42, 0
    %s45 = sadd.s32 %s44, 1
    %s46 = scalar_select %p43, %s44, %s45
    %p49 = pneg %p43
    %p50 = scmp.eq.s32.totalorder %s34, 1
    %p51 = por %p49, %p50
    %p52 = scmp.ne.s32.totalorder %s44, %s47
    %p53 = scmp.eq.s32.totalorder %s34, 0
    %p54 = por %p52, %p53
    %p55 = scmp.ne.s32.totalorder %s44, %s47
    %p56 = scmp.eq.s32.totalorder %s39, 1
    %p57 = por %p55, %p56
    %p58 = scmp.ne.s32.totalorder %s47, %s48
    %p59 = scmp.eq.s32.totalorder %s39, 0
    %p60 = por %p58, %p59
    %p61 = scmp.ne.s32.totalorder %s47, %s48
    %p62 = scmp.eq.s32.totalorder %s40, 1
    %p63 = por %p61, %p62
    %p65 = scmp.ne.s32.totalorder %s48, %s64
    %p66 = scmp.eq.s32.totalorder %s40, 0
    %p67 = por %p65, %p66
    %s69 = sadd.s32 %s68, 1
    %p72 = scmp.eq.s32.totalorder %s34, 1
    %p73 = scmp.ne.s32.totalorder %s68, %s70
    %p74 = scmp.eq.s32.totalorder %s34, 0
    %p75 = por %p73, %p74
    %p76 = scmp.ne.s32.totalorder %s68, %s70
    %p77 = scmp.eq.s32.totalorder %s39, 1
    %p78 = por %p76, %p77
    %p79 = scmp.ne.s32.totalorder %s70, %s71
    %p80 = scmp.eq.s32.totalorder %s39, 0
    %p81 = por %p79, %p80
    %p82 = scmp.ne.s32.totalorder %s70, %s71
    %p83 = scmp.eq.s32.totalorder %s40, 1
    %p84 = por %p82, %p83
    %p86 = scmp.ne.s32.totalorder %s71, %s85
    %p87 = scmp.eq.s32.totalorder %s40, 0
    %p88 = por %p86, %p87
    %s90 = sadd.s32 %s89, 1
    %p93 = scmp.eq.s32.totalorder %s34, 1
    %p94 = scmp.ne.s32.totalorder %s89, %s91
    %p95 = scmp.eq.s32.totalorder %s34, 0
    %p96 = por %p94, %p95
    %p97 = scmp.ne.s32.totalorder %s89, %s91
    %p98 = scmp.eq.s32.totalorder %s39, 1
    %p99 = por %p97, %p98
    %p100 = scmp.ne.s32.totalorder %s91, %s92
    %p101 = scmp.eq.s32.totalorder %s39, 0
    %p102 = por %p100, %p101
    %p103 = scmp.ne.s32.totalorder %s91, %s92
    %p104 = scmp.eq.s32.totalorder %s40, 1
    %p105 = por %p103, %p104
    %p107 = scmp.ne.s32.totalorder %s92, %s106
    %p108 = scmp.eq.s32.totalorder %s40, 0
    %p109 = por %p107, %p108
    %s111 = sadd.s32 %s110, 1
    %p114 = scmp.eq.s32.totalorder %s34, 1
    %p115 = scmp.ne.s32.totalorder %s110, %s112
    %p116 = scmp.eq.s32.totalorder %s34, 0
    %p117 = por %p115, %p116
    %p118 = scmp.ne.s32.totalorder %s110, %s112
    %p119 = scmp.eq.s32.totalorder %s39, 1
    %p120 = por %p118, %p119
    %p121 = scmp.ne.s32.totalorder %s112, %s113
    %p122 = scmp.eq.s32.totalorder %s39, 0
    %p123 = por %p121, %p122
    %p124 = scmp.ne.s32.totalorder %s112, %s113
    %p125 = scmp.eq.s32.totalorder %s40, 1
    %p126 = por %p124, %p125
    %p128 = scmp.ne.s32.totalorder %s113, %s127
    %p129 = scmp.eq.s32.totalorder %s40, 0
    %p130 = por %p128, %p129
    %s132 = sadd.s32 %s131, 1
    %p135 = scmp.eq.s32.totalorder %s34, 1
    %p136 = scmp.ne.s32.totalorder %s131, %s133
    %p137 = scmp.eq.s32.totalorder %s34, 0
    %p138 = por %p136, %p137
    %p139 = scmp.ne.s32.totalorder %s131, %s133
    %p140 = scmp.eq.s32.totalorder %s39, 1
    %p141 = por %p139, %p140
    %p142 = scmp.ne.s32.totalorder %s133, %s134
    %p143 = scmp.eq.s32.totalorder %s39, 0
    %p144 = por %p142, %p143
    %p145 = scmp.ne.s32.totalorder %s133, %s134
    %p146 = scmp.eq.s32.totalorder %s40, 1
    %p147 = por %p145, %p146
    %p149 = scmp.ne.s32.totalorder %s134, %s148
    %p150 = scmp.eq.s32.totalorder %s40, 0
    %p151 = por %p149, %p150
    %s153 = sadd.s32 %s152, 1
    %p156 = scmp.eq.s32.totalorder %s34, 1
    %p157 = scmp.ne.s32.totalorder %s152, %s154
    %p158 = scmp.eq.s32.totalorder %s34, 0
    %p159 = por %p157, %p158
    %p160 = scmp.ne.s32.totalorder %s152, %s154
    %p161 = scmp.eq.s32.totalorder %s39, 1
    %p162 = por %p160, %p161
    %p163 = scmp.ne.s32.totalorder %s154, %s155
    %p164 = scmp.eq.s32.totalorder %s39, 0
    %p165 = por %p163, %p164
    %p166 = scmp.ne.s32.totalorder %s154, %s155
    %p167 = scmp.eq.s32.totalorder %s40, 1
    %p168 = por %p166, %p167
    %p170 = scmp.ne.s32.totalorder %s155, %s169
    %p171 = scmp.eq.s32.totalorder %s40, 0
    %p172 = por %p170, %p171
    %s174 = sadd.s32 %s173, 1
    %p177 = scmp.eq.s32.totalorder %s34, 1
    %p178 = scmp.ne.s32.totalorder %s173, %s175
    %p179 = scmp.eq.s32.totalorder %s34, 0
    %p180 = por %p178, %p179
    %p181 = scmp.ne.s32.totalorder %s173, %s175
    %p182 = scmp.eq.s32.totalorder %s39, 1
    %p183 = por %p181, %p182
    %p184 = scmp.ne.s32.totalorder %s175, %s176
    %p185 = scmp.eq.s32.totalorder %s39, 0
    %p186 = por %p184, %p185
    %p187 = scmp.ne.s32.totalorder %s175, %s176
    %p188 = scmp.eq.s32.totalorder %s40, 1
    %p189 = por %p187, %p188
    %p191 = scmp.ne.s32.totalorder %s176, %s190
    %p192 = scmp.eq.s32.totalorder %s40, 0
    %p193 = por %p191, %p192
    %s195 = sadd.s32 %s194, 1
    %p198 = scmp.eq.s32.totalorder %s34, 1
    %p199 = scmp.ne.s32.totalorder %s194, %s196
    %p200 = scmp.eq.s32.totalorder %s34, 0
    %p201 = por %p199, %p200
    %p202 = scmp.ne.s32.totalorder %s194, %s196
    %p203 = scmp.eq.s32.totalorder %s39, 1
    %p204 = por %p202, %p203
    %p205 = scmp.ne.s32.totalorder %s196, %s197
    %p206 = scmp.eq.s32.totalorder %s39, 0
    %p207 = por %p205, %p206
    %p208 = scmp.ne.s32.totalorder %s196, %s197
    %p209 = scmp.eq.s32.totalorder %s40, 1
    %p210 = por %p208, %p209
    %p212 = scmp.ne.s32.totalorder %s197, %s211
    %p213 = scmp.eq.s32.totalorder %s40, 0
    %p214 = por %p212, %p213
    %s216 = sadd.s32 %s215, 1
    %p219 = scmp.eq.s32.totalorder %s34, 1
    %p220 = scmp.ne.s32.totalorder %s215, %s217
    %p221 = scmp.eq.s32.totalorder %s34, 0
    %p222 = por %p220, %p221
    %p223 = scmp.ne.s32.totalorder %s215, %s217
    %p224 = scmp.eq.s32.totalorder %s39, 1
    %p225 = por %p223, %p224
    %p226 = scmp.ne.s32.totalorder %s217, %s218
    %p227 = scmp.eq.s32.totalorder %s39, 0
    %p228 = por %p226, %p227
    %p229 = scmp.ne.s32.totalorder %s217, %s218
    %p230 = scmp.eq.s32.totalorder %s40, 1
    %p231 = por %p229, %p230
    %p233 = scmp.ne.s32.totalorder %s218, %s232
    %p234 = scmp.eq.s32.totalorder %s40, 0
    %p235 = por %p233, %p234
    %s237 = sadd.s32 %s236, 1
    %p240 = scmp.eq.s32.totalorder %s34, 1
    %p241 = scmp.ne.s32.totalorder %s236, %s238
    %p242 = scmp.eq.s32.totalorder %s34, 0
    %p243 = por %p241, %p242
    %p244 = scmp.ne.s32.totalorder %s236, %s238
    %p245 = scmp.eq.s32.totalorder %s39, 1
    %p246 = por %p244, %p245
    %p247 = scmp.ne.s32.totalorder %s238, %s239
    %p248 = scmp.eq.s32.totalorder %s39, 0
    %p249 = por %p247, %p248
    %p250 = scmp.ne.s32.totalorder %s238, %s239
    %p251 = scmp.eq.s32.totalorder %s40, 1
    %p252 = por %p250, %p251
    %p254 = scmp.ne.s32.totalorder %s239, %s253
    %p255 = scmp.eq.s32.totalorder %s40, 0
    %p256 = por %p254, %p255
    %s258 = sadd.s32 %s257, 1
    %p261 = scmp.eq.s32.totalorder %s34, 1
    %p262 = scmp.ne.s32.totalorder %s257, %s259
    %p263 = scmp.eq.s32.totalorder %s34, 0
    %p264 = por %p262, %p263
    %p265 = scmp.ne.s32.totalorder %s257, %s259
    %p266 = scmp.eq.s32.totalorder %s39, 1
    %p267 = por %p265, %p266
    %p268 = scmp.ne.s32.totalorder %s259, %s260
    %p269 = scmp.eq.s32.totalorder %s39, 0
    %p270 = por %p268, %p269
    %p271 = scmp.ne.s32.totalorder %s259, %s260
    %p272 = scmp.eq.s32.totalorder %s40, 1
    %p273 = por %p271, %p272
    %p275 = scmp.ne.s32.totalorder %s260, %s274
    %p276 = scmp.eq.s32.totalorder %s40, 0
    %p277 = por %p275, %p276
    %s279 = sadd.s32 %s278, 1
    %p282 = scmp.eq.s32.totalorder %s34, 1
    %p283 = scmp.ne.s32.totalorder %s278, %s280
    %p284 = scmp.eq.s32.totalorder %s34, 0
    %p285 = por %p283, %p284
    %p286 = scmp.ne.s32.totalorder %s278, %s280
    %p287 = scmp.eq.s32.totalorder %s39, 1
    %p288 = por %p286, %p287
    %p289 = scmp.ne.s32.totalorder %s280, %s281
    %p290 = scmp.eq.s32.totalorder %s39, 0
    %p291 = por %p289, %p290
    %p292 = scmp.ne.s32.totalorder %s280, %s281
    %p293 = scmp.eq.s32.totalorder %s40, 1
    %p294 = por %p292, %p293
    %p296 = scmp.ne.s32.totalorder %s281, %s295
    %p297 = scmp.eq.s32.totalorder %s40, 0
    %p298 = por %p296, %p297
    %s300 = sadd.s32 %s299, 1
    %p303 = scmp.eq.s32.totalorder %s34, 1
    %p304 = scmp.ne.s32.totalorder %s299, %s301
    %p305 = scmp.eq.s32.totalorder %s34, 0
    %p306 = por %p304, %p305
    %p307 = scmp.ne.s32.totalorder %s299, %s301
    %p308 = scmp.eq.s32.totalorder %s39, 1
    %p309 = por %p307, %p308
    %p310 = scmp.ne.s32.totalorder %s301, %s302
    %p311 = scmp.eq.s32.totalorder %s39, 0
    %p312 = por %p310, %p311
    %p313 = scmp.ne.s32.totalorder %s301, %s302
    %p314 = scmp.eq.s32.totalorder %s40, 1
    %p315 = por %p313, %p314
    %p317 = scmp.ne.s32.totalorder %s302, %s316
    %p318 = scmp.eq.s32.totalorder %s40, 0
    %p319 = por %p317, %p318
    %s321 = sadd.s32 %s320, 1
    %p324 = scmp.eq.s32.totalorder %s34, 1
    %p325 = scmp.ne.s32.totalorder %s320, %s322
    %p326 = scmp.eq.s32.totalorder %s34, 0
    %p327 = por %p325, %p326
    %p328 = scmp.ne.s32.totalorder %s320, %s322
    %p329 = scmp.eq.s32.totalorder %s39, 1
    %p330 = por %p328, %p329
    %p331 = scmp.ne.s32.totalorder %s322, %s323
    %p332 = scmp.eq.s32.totalorder %s39, 0
    %p333 = por %p331, %p332
    %p334 = scmp.ne.s32.totalorder %s322, %s323
    %p335 = scmp.eq.s32.totalorder %s40, 1
    %p336 = por %p334, %p335
    %p338 = scmp.ne.s32.totalorder %s323, %s337
    %p339 = scmp.eq.s32.totalorder %s40, 0
    %p340 = por %p338, %p339
    %s342 = sadd.s32 %s341, 1
    %p345 = scmp.eq.s32.totalorder %s34, 1
    %p346 = scmp.ne.s32.totalorder %s341, %s343
    %p347 = scmp.eq.s32.totalorder %s34, 0
    %p348 = por %p346, %p347
    %p349 = scmp.ne.s32.totalorder %s341, %s343
    %p350 = scmp.eq.s32.totalorder %s39, 1
    %p351 = por %p349, %p350
    %p352 = scmp.ne.s32.totalorder %s343, %s344
    %p353 = scmp.eq.s32.totalorder %s39, 0
    %p354 = por %p352, %p353
    %p355 = scmp.ne.s32.totalorder %s343, %s344
    %p356 = scmp.eq.s32.totalorder %s40, 1
    %p357 = por %p355, %p356
    %p359 = scmp.ne.s32.totalorder %s344, %s358
    %p360 = scmp.eq.s32.totalorder %s40, 0
    %p361 = por %p359, %p360
    %s363 = sadd.s32 %s362, 1
    %p366 = scmp.eq.s32.totalorder %s34, 1
    %p367 = scmp.ne.s32.totalorder %s362, %s364
    %p368 = scmp.eq.s32.totalorder %s34, 0
    %p369 = por %p367, %p368
    %p370 = scmp.ne.s32.totalorder %s362, %s364
    %p371 = scmp.eq.s32.totalorder %s39, 1
    %p372 = por %p370, %p371
    %p373 = scmp.ne.s32.totalorder %s364, %s365
    %p374 = scmp.eq.s32.totalorder %s39, 0
    %p375 = por %p373, %p374
    %p376 = scmp.ne.s32.totalorder %s364, %s365
    %p377 = scmp.eq.s32.totalorder %s40, 1
    %p378 = por %p376, %p377
    %p380 = scmp.ne.s32.totalorder %s365, %s379
    %p381 = scmp.eq.s32.totalorder %s40, 0
    %p382 = por %p380, %p381
    %s384 = sadd.s32 %s383, 1
    %p387 = scmp.eq.s32.totalorder %s34, 1
    %p388 = scmp.ne.s32.totalorder %s383, %s385
    %p389 = scmp.eq.s32.totalorder %s34, 0
    %p390 = por %p388, %p389
    %p391 = scmp.ne.s32.totalorder %s383, %s385
    %p392 = scmp.eq.s32.totalorder %s39, 1
    %p393 = por %p391, %p392
    %p394 = scmp.ne.s32.totalorder %s385, %s386
    %p395 = scmp.eq.s32.totalorder %s39, 0
    %p396 = por %p394, %p395
    %p397 = scmp.ne.s32.totalorder %s385, %s386
    %p398 = scmp.eq.s32.totalorder %s40, 1
    %p399 = por %p397, %p398
    %p401 = scmp.ne.s32.totalorder %s386, %s400
    %p402 = scmp.eq.s32.totalorder %s40, 0
    %p403 = por %p401, %p402
    %s405 = sadd.s32 %s404, 1
    %p408 = scmp.eq.s32.totalorder %s34, 1
    %p409 = scmp.ne.s32.totalorder %s404, %s406
    %p410 = scmp.eq.s32.totalorder %s34, 0
    %p411 = por %p409, %p410
    %p412 = scmp.ne.s32.totalorder %s404, %s406
    %p413 = scmp.eq.s32.totalorder %s39, 1
    %p414 = por %p412, %p413
    %p415 = scmp.ne.s32.totalorder %s406, %s407
    %p416 = scmp.eq.s32.totalorder %s39, 0
    %p417 = por %p415, %p416
    %p418 = scmp.ne.s32.totalorder %s406, %s407
    %p419 = scmp.eq.s32.totalorder %s40, 1
    %p420 = por %p418, %p419
    %p422 = scmp.ne.s32.totalorder %s407, %s421
    %p423 = scmp.eq.s32.totalorder %s40, 0
    %p424 = por %p422, %p423
    %s426 = sadd.s32 %s425, 1
    %p429 = scmp.eq.s32.totalorder %s34, 1
    %p430 = scmp.ne.s32.totalorder %s425, %s427
    %p431 = scmp.eq.s32.totalorder %s34, 0
    %p432 = por %p430, %p431
    %p433 = scmp.ne.s32.totalorder %s425, %s427
    %p434 = scmp.eq.s32.totalorder %s39, 1
    %p435 = por %p433, %p434
    %p436 = scmp.ne.s32.totalorder %s427, %s428
    %p437 = scmp.eq.s32.totalorder %s39, 0
    %p438 = por %p436, %p437
    %p439 = scmp.ne.s32.totalorder %s427, %s428
    %p440 = scmp.eq.s32.totalorder %s40, 1
    %p441 = por %p439, %p440
    %p443 = scmp.ne.s32.totalorder %s428, %s442
    %p444 = scmp.eq.s32.totalorder %s40, 0
    %p445 = por %p443, %p444
    %s447 = sadd.s32 %s446, 1
    %p450 = scmp.eq.s32.totalorder %s34, 1
    %p451 = scmp.ne.s32.totalorder %s446, %s448
    %p452 = scmp.eq.s32.totalorder %s34, 0
    %p453 = por %p451, %p452
    %p454 = scmp.ne.s32.totalorder %s446, %s448
    %p455 = scmp.eq.s32.totalorder %s39, 1
    %p456 = por %p454, %p455
    %p457 = scmp.ne.s32.totalorder %s448, %s449
    %p458 = scmp.eq.s32.totalorder %s39, 0
    %p459 = por %p457, %p458
    %p460 = scmp.ne.s32.totalorder %s448, %s449
    %p461 = scmp.eq.s32.totalorder %s40, 1
    %p462 = por %p460, %p461
    %p464 = scmp.ne.s32.totalorder %s449, %s463
    %p465 = scmp.eq.s32.totalorder %s40, 0
    %p466 = por %p464, %p465
    %s468 = sadd.s32 %s467, 1
    %p471 = scmp.eq.s32.totalorder %s34, 1
    %p472 = scmp.ne.s32.totalorder %s467, %s469
    %p473 = scmp.eq.s32.totalorder %s34, 0
    %p474 = por %p472, %p473
    %p475 = scmp.ne.s32.totalorder %s467, %s469
    %p476 = scmp.eq.s32.totalorder %s39, 1
    %p477 = por %p475, %p476
    %p478 = scmp.ne.s32.totalorder %s469, %s470
    %p479 = scmp.eq.s32.totalorder %s39, 0
    %p480 = por %p478, %p479
    %p481 = scmp.ne.s32.totalorder %s469, %s470
    %p482 = scmp.eq.s32.totalorder %s40, 1
    %p483 = por %p481, %p482
    %p485 = scmp.ne.s32.totalorder %s470, %s484
    %p486 = scmp.eq.s32.totalorder %s40, 0
    %p487 = por %p485, %p486
    %s489 = sadd.s32 %s488, 1
    %p492 = scmp.eq.s32.totalorder %s34, 1
    %p493 = scmp.ne.s32.totalorder %s488, %s490
    %p494 = scmp.eq.s32.totalorder %s34, 0
    %p495 = por %p493, %p494
    %p496 = scmp.ne.s32.totalorder %s488, %s490
    %p497 = scmp.eq.s32.totalorder %s39, 1
    %p498 = por %p496, %p497
    %p499 = scmp.ne.s32.totalorder %s490, %s491
    %p500 = scmp.eq.s32.totalorder %s39, 0
    %p501 = por %p499, %p500
    %p502 = scmp.ne.s32.totalorder %s490, %s491
    %p503 = scmp.eq.s32.totalorder %s40, 1
    %p504 = por %p502, %p503
    %p506 = scmp.ne.s32.totalorder %s491, %s505
    %p507 = scmp.eq.s32.totalorder %s40, 0
    %p508 = por %p506, %p507
    %s510 = sadd.s32 %s509, 1
    %p513 = scmp.eq.s32.totalorder %s34, 1
    %p514 = scmp.ne.s32.totalorder %s509, %s511
    %p515 = scmp.eq.s32.totalorder %s34, 0
    %p516 = por %p514, %p515
    %p517 = scmp.ne.s32.totalorder %s509, %s511
    %p518 = scmp.eq.s32.totalorder %s39, 1
    %p519 = por %p517, %p518
    %p520 = scmp.ne.s32.totalorder %s511, %s512
    %p521 = scmp.eq.s32.totalorder %s39, 0
    %p522 = por %p520, %p521
    %p523 = scmp.ne.s32.totalorder %s511, %s512
    %p524 = scmp.eq.s32.totalorder %s40, 1
    %p525 = por %p523, %p524
    %p527 = scmp.ne.s32.totalorder %s512, %s526
    %p528 = scmp.eq.s32.totalorder %s40, 0
    %p529 = por %p527, %p528
    %s531 = sadd.s32 %s530, 1
    %p534 = scmp.eq.s32.totalorder %s34, 1
    %p535 = scmp.ne.s32.totalorder %s530, %s532
    %p536 = scmp.eq.s32.totalorder %s34, 0
    %p537 = por %p535, %p536
    %p538 = scmp.ne.s32.totalorder %s530, %s532
    %p539 = scmp.eq.s32.totalorder %s39, 1
    %p540 = por %p538, %p539
    %p541 = scmp.ne.s32.totalorder %s532, %s533
    %p542 = scmp.eq.s32.totalorder %s39, 0
    %p543 = por %p541, %p542
    %p544 = scmp.ne.s32.totalorder %s532, %s533
    %p545 = scmp.eq.s32.totalorder %s40, 1
    %p546 = por %p544, %p545
    %p548 = scmp.ne.s32.totalorder %s533, %s547
    %p549 = scmp.eq.s32.totalorder %s40, 0
    %p550 = por %p548, %p549
    %s552 = sadd.s32 %s551, 1
    %p555 = scmp.eq.s32.totalorder %s34, 1
    %p556 = scmp.ne.s32.totalorder %s551, %s553
    %p557 = scmp.eq.s32.totalorder %s34, 0
    %p558 = por %p556, %p557
    %p559 = scmp.ne.s32.totalorder %s551, %s553
    %p560 = scmp.eq.s32.totalorder %s39, 1
    %p561 = por %p559, %p560
    %p562 = scmp.ne.s32.totalorder %s553, %s554
    %p563 = scmp.eq.s32.totalorder %s39, 0
    %p564 = por %p562, %p563
    %p565 = scmp.ne.s32.totalorder %s553, %s554
    %p566 = scmp.eq.s32.totalorder %s40, 1
    %p567 = por %p565, %p566
    %p569 = scmp.ne.s32.totalorder %s554, %s568
    %p570 = scmp.eq.s32.totalorder %s40, 0
    %p571 = por %p569, %p570
    %s573 = sadd.s32 %s572, 1
    %p576 = scmp.eq.s32.totalorder %s34, 1
    %p577 = scmp.ne.s32.totalorder %s572, %s574
    %p578 = scmp.eq.s32.totalorder %s34, 0
    %p579 = por %p577, %p578
    %p580 = scmp.ne.s32.totalorder %s572, %s574
    %p581 = scmp.eq.s32.totalorder %s39, 1
    %p582 = por %p580, %p581
    %p583 = scmp.ne.s32.totalorder %s574, %s575
    %p584 = scmp.eq.s32.totalorder %s39, 0
    %p585 = por %p583, %p584
    %p586 = scmp.ne.s32.totalorder %s574, %s575
    %p587 = scmp.eq.s32.totalorder %s40, 1
    %p588 = por %p586, %p587
    %p590 = scmp.ne.s32.totalorder %s575, %s589
    %p591 = scmp.eq.s32.totalorder %s40, 0
    %p592 = por %p590, %p591
    %s593 = ssub.s32 %s34, %s41
    %p594 = scmp.eq.s32.totalorder %s593, 0
    %s596 = sadd.s32 %s595, 1
    %s597 = scalar_select %p594, %s595, %s596
    %p600 = pneg %p594
    %p601 = scmp.eq.s32.totalorder %s34, 1
    %p602 = por %p600, %p601
    %p603 = scmp.ne.s32.totalorder %s595, %s598
    %p604 = scmp.eq.s32.totalorder %s34, 0
    %p605 = por %p603, %p604
    %p606 = scmp.ne.s32.totalorder %s595, %s598
    %p607 = scmp.eq.s32.totalorder %s39, 1
    %p608 = por %p606, %p607
    %p609 = scmp.ne.s32.totalorder %s598, %s599
    %p610 = scmp.eq.s32.totalorder %s39, 0
    %p611 = por %p609, %p610
    %p612 = scmp.ne.s32.totalorder %s598, %s599
    %p613 = scmp.eq.s32.totalorder %s40, 1
    %p614 = por %p612, %p613
    %p616 = scmp.ne.s32.totalorder %s599, %s615
    %p617 = scmp.eq.s32.totalorder %s40, 0
    %p618 = por %p616, %p617
    %p619 = scmp.le.s32.totalorder 1, %s34
    %p620 = scmp.lt.s32.totalorder %s34, 3
    %p621 = pnand %p619, %p620
    %p622 = pneg %p621
    // Predicated region
    $region9: #{imd_forward.1} parent=5 // pred_check
      _
    $region10: #{imd_forward.1} parent=5 // pred_check_branch
      %624 = sbr.rel (%p621) target = $region12
    $region11: #{imd_forward.1} parent=5 // pred_region
      %s625 = ssub.s32 %s34, 1
      // Predicated region
      $region13: #{imd_forward.1} parent=11 // pred_check
        %p626 = pneg %p81
      $region14: #{imd_forward.1} parent=11 // pred_check_branch
        %628 = sbr.rel (%p626) target = $region16
      $region15: #{imd_forward.1} parent=11 // pred_region
        _
      $region16: #{imd_forward.1} parent=11 // pred_fallthru
        _
      // Predicated region
      $region17: #{imd_forward.1} parent=11 // pred_check
        %p629 = pneg %p102
      $region18: #{imd_forward.1} parent=11 // pred_check_branch
        %631 = sbr.rel (%p629) target = $region20
      $region19: #{imd_forward.1} parent=11 // pred_region
        _
      $region20: #{imd_forward.1} parent=11 // pred_fallthru
        _
      // Predicated region
      $region21: #{imd_forward.1} parent=11 // pred_check
        %p632 = pneg %p123
      $region22: #{imd_forward.1} parent=11 // pred_check_branch
        %634 = sbr.rel (%p632) target = $region24
      $region23: #{imd_forward.1} parent=11 // pred_region
        _
      $region24: #{imd_forward.1} parent=11 // pred_fallthru
        _
      // Predicated region
      $region25: #{imd_forward.1} parent=11 // pred_check
        %p635 = pneg %p144
      $region26: #{imd_forward.1} parent=11 // pred_check_branch
        %637 = sbr.rel (%p635) target = $region28
      $region27: #{imd_forward.1} parent=11 // pred_region
        _
      $region28: #{imd_forward.1} parent=11 // pred_fallthru
        _
      // Predicated region
      $region29: #{imd_forward.1} parent=11 // pred_check
        %p638 = pneg %p165
      $region30: #{imd_forward.1} parent=11 // pred_check_branch
        %640 = sbr.rel (%p638) target = $region32
      $region31: #{imd_forward.1} parent=11 // pred_region
        _
      $region32: #{imd_forward.1} parent=11 // pred_fallthru
        _
      // Predicated region
      $region33: #{imd_forward.1} parent=11 // pred_check
        %p641 = pneg %p186
      $region34: #{imd_forward.1} parent=11 // pred_check_branch
        %643 = sbr.rel (%p641) target = $region36
      $region35: #{imd_forward.1} parent=11 // pred_region
        _
      $region36: #{imd_forward.1} parent=11 // pred_fallthru
        _
      // Predicated region
      $region37: #{imd_forward.1} parent=11 // pred_check
        %p644 = pneg %p207
      $region38: #{imd_forward.1} parent=11 // pred_check_branch
        %646 = sbr.rel (%p644) target = $region40
      $region39: #{imd_forward.1} parent=11 // pred_region
        _
      $region40: #{imd_forward.1} parent=11 // pred_fallthru
        _
      // Predicated region
      $region41: #{imd_forward.1} parent=11 // pred_check
        %p647 = pneg %p228
      $region42: #{imd_forward.1} parent=11 // pred_check_branch
        %649 = sbr.rel (%p647) target = $region44
      $region43: #{imd_forward.1} parent=11 // pred_region
        _
      $region44: #{imd_forward.1} parent=11 // pred_fallthru
        _
      // Predicated region
      $region45: #{imd_forward.1} parent=11 // pred_check
        %p650 = pneg %p249
      $region46: #{imd_forward.1} parent=11 // pred_check_branch
        %652 = sbr.rel (%p650) target = $region48
      $region47: #{imd_forward.1} parent=11 // pred_region
        _
      $region48: #{imd_forward.1} parent=11 // pred_fallthru
        _
      // Predicated region
      $region49: #{imd_forward.1} parent=11 // pred_check
        %p653 = pneg %p270
      $region50: #{imd_forward.1} parent=11 // pred_check_branch
        %655 = sbr.rel (%p653) target = $region52
      $region51: #{imd_forward.1} parent=11 // pred_region
        _
      $region52: #{imd_forward.1} parent=11 // pred_fallthru
        _
      // Predicated region
      $region53: #{imd_forward.1} parent=11 // pred_check
        %p656 = pneg %p291
      $region54: #{imd_forward.1} parent=11 // pred_check_branch
        %658 = sbr.rel (%p656) target = $region56
      $region55: #{imd_forward.1} parent=11 // pred_region
        _
      $region56: #{imd_forward.1} parent=11 // pred_fallthru
        _
      // Predicated region
      $region57: #{imd_forward.1} parent=11 // pred_check
        %p659 = pneg %p312
      $region58: #{imd_forward.1} parent=11 // pred_check_branch
        %661 = sbr.rel (%p659) target = $region60
      $region59: #{imd_forward.1} parent=11 // pred_region
        _
      $region60: #{imd_forward.1} parent=11 // pred_fallthru
        _
      // Predicated region
      $region61: #{imd_forward.1} parent=11 // pred_check
        %p662 = pneg %p333
      $region62: #{imd_forward.1} parent=11 // pred_check_branch
        %664 = sbr.rel (%p662) target = $region64
      $region63: #{imd_forward.1} parent=11 // pred_region
        _
      $region64: #{imd_forward.1} parent=11 // pred_fallthru
        _
      // Predicated region
      $region65: #{imd_forward.1} parent=11 // pred_check
        %p665 = pneg %p354
      $region66: #{imd_forward.1} parent=11 // pred_check_branch
        %667 = sbr.rel (%p665) target = $region68
      $region67: #{imd_forward.1} parent=11 // pred_region
        _
      $region68: #{imd_forward.1} parent=11 // pred_fallthru
        _
      // Predicated region
      $region69: #{imd_forward.1} parent=11 // pred_check
        %p668 = pneg %p375
      $region70: #{imd_forward.1} parent=11 // pred_check_branch
        %670 = sbr.rel (%p668) target = $region72
      $region71: #{imd_forward.1} parent=11 // pred_region
        _
      $region72: #{imd_forward.1} parent=11 // pred_fallthru
        _
      // Predicated region
      $region73: #{imd_forward.1} parent=11 // pred_check
        %p671 = pneg %p396
      $region74: #{imd_forward.1} parent=11 // pred_check_branch
        %673 = sbr.rel (%p671) target = $region76
      $region75: #{imd_forward.1} parent=11 // pred_region
        _
      $region76: #{imd_forward.1} parent=11 // pred_fallthru
        _
      // Predicated region
      $region77: #{imd_forward.1} parent=11 // pred_check
        %p674 = pneg %p417
      $region78: #{imd_forward.1} parent=11 // pred_check_branch
        %676 = sbr.rel (%p674) target = $region80
      $region79: #{imd_forward.1} parent=11 // pred_region
        _
      $region80: #{imd_forward.1} parent=11 // pred_fallthru
        _
      // Predicated region
      $region81: #{imd_forward.1} parent=11 // pred_check
        %p677 = pneg %p438
      $region82: #{imd_forward.1} parent=11 // pred_check_branch
        %679 = sbr.rel (%p677) target = $region84
      $region83: #{imd_forward.1} parent=11 // pred_region
        _
      $region84: #{imd_forward.1} parent=11 // pred_fallthru
        _
      // Predicated region
      $region85: #{imd_forward.1} parent=11 // pred_check
        %p680 = pneg %p459
      $region86: #{imd_forward.1} parent=11 // pred_check_branch
        %682 = sbr.rel (%p680) target = $region88
      $region87: #{imd_forward.1} parent=11 // pred_region
        _
      $region88: #{imd_forward.1} parent=11 // pred_fallthru
        _
      // Predicated region
      $region89: #{imd_forward.1} parent=11 // pred_check
        %p683 = pneg %p480
      $region90: #{imd_forward.1} parent=11 // pred_check_branch
        %685 = sbr.rel (%p683) target = $region92
      $region91: #{imd_forward.1} parent=11 // pred_region
        _
      $region92: #{imd_forward.1} parent=11 // pred_fallthru
        _
      // Predicated region
      $region93: #{imd_forward.1} parent=11 // pred_check
        %p686 = pneg %p501
      $region94: #{imd_forward.1} parent=11 // pred_check_branch
        %688 = sbr.rel (%p686) target = $region96
      $region95: #{imd_forward.1} parent=11 // pred_region
        _
      $region96: #{imd_forward.1} parent=11 // pred_fallthru
        _
      // Predicated region
      $region97: #{imd_forward.1} parent=11 // pred_check
        %p689 = pneg %p522
      $region98: #{imd_forward.1} parent=11 // pred_check_branch
        %691 = sbr.rel (%p689) target = $region100
      $region99: #{imd_forward.1} parent=11 // pred_region
        _
      $region100: #{imd_forward.1} parent=11 // pred_fallthru
        _
      // Predicated region
      $region101: #{imd_forward.1} parent=11 // pred_check
        %p692 = pneg %p543
      $region102: #{imd_forward.1} parent=11 // pred_check_branch
        %694 = sbr.rel (%p692) target = $region104
      $region103: #{imd_forward.1} parent=11 // pred_region
        _
      $region104: #{imd_forward.1} parent=11 // pred_fallthru
        _
      // Predicated region
      $region105: #{imd_forward.1} parent=11 // pred_check
        %p695 = pneg %p564
      $region106: #{imd_forward.1} parent=11 // pred_check_branch
        %697 = sbr.rel (%p695) target = $region108
      $region107: #{imd_forward.1} parent=11 // pred_region
        _
      $region108: #{imd_forward.1} parent=11 // pred_fallthru
        _
      // Predicated region
      $region109: #{imd_forward.1} parent=11 // pred_check
        %p698 = pneg %p585
      $region110: #{imd_forward.1} parent=11 // pred_check_branch
        %700 = sbr.rel (%p698) target = $region112
      $region111: #{imd_forward.1} parent=11 // pred_region
        _
      $region112: #{imd_forward.1} parent=11 // pred_fallthru
        _
    $region12: #{imd_forward.1} parent=5 // pred_fallthru
      _
    %p701 = scmp.lt.s32.totalorder %s34, 2
    // Predicated region
    $region113: #{imd_forward.1} parent=5 // pred_check
      %p702 = pneg %p701
    $region114: #{imd_forward.1} parent=5 // pred_check_branch
      %704 = sbr.rel (%p702) target = $region116
    $region115: #{imd_forward.1} parent=5 // pred_region
      // Predicated region
      $region117: #{imd_forward.1} parent=115 // pred_check
        %p705 = pneg %p54
      $region118: #{imd_forward.1} parent=115 // pred_check_branch
        %707 = sbr.rel (%p705) target = $region120
      $region119: #{imd_forward.1} parent=115 // pred_region
        %p708 = scmp.lt.s32.totalorder %s34, 1
        %s709 = scalar_select %p708, %s34, 1
        %s710 = smul.addr %s709, 8
        %s711 = smul.addr %s710, 8
        %s712 = scalar_lea.vmem %s0, %s711
      $region120: #{imd_forward.1} parent=115 // pred_fallthru
        _
    $region116: #{imd_forward.1} parent=5 // pred_fallthru
      _
    %p713 = scmp.le.s32.totalorder 1, %s34
    %p714 = scmp.lt.s32.totalorder %s34, 3
    %p715 = pnand %p713, %p714
    %p716 = pneg %p715
    // Predicated region
    $region121: #{imd_forward.1} parent=5 // pred_check
      _
    $region122: #{imd_forward.1} parent=5 // pred_check_branch
      %718 = sbr.rel (%p715) target = $region124
    $region123: #{imd_forward.1} parent=5 // pred_region
      %s719 = ssub.s32 %s34, 1
      %p720 = scmp.lt.s32.totalorder %s39, 1
      %s721 = scalar_select %p720, %s39, 1
      %s722 = smul.addr %s721, 8
      %s723 = smul.addr %s722, 8
      %s724 = scalar_lea.vmem %s0, %s723
      %p725 = pneg %p60
      %p726 = pneg %p57
      %p727 = pneg %p81
      %p728 = pneg %p78
      %p729 = pneg %p102
      %p730 = pneg %p99
      %p731 = pneg %p123
      %p732 = pneg %p120
      %p733 = pneg %p144
      %p734 = pneg %p141
      %p735 = pneg %p165
      %p736 = pneg %p162
      %p737 = pneg %p186
      %p738 = pneg %p183
      %p739 = pneg %p207
      %p740 = pneg %p204
      %p741 = pneg %p228
      %p742 = pneg %p225
      %p743 = pneg %p249
      %p744 = pneg %p246
      %p745 = pneg %p270
      %p746 = pneg %p267
      %p747 = pneg %p291
      %p748 = pneg %p288
      %p749 = pneg %p312
      %p750 = pneg %p309
      %p751 = pneg %p333
      %p752 = pneg %p330
      %p753 = pneg %p354
      %p754 = pneg %p351
      %p755 = pneg %p375
      %p756 = pneg %p372
      %p757 = pneg %p396
      %p758 = pneg %p393
      %p759 = pneg %p417
      %p760 = pneg %p414
      %p761 = pneg %p438
      %p762 = pneg %p435
      %p763 = pneg %p459
      %p764 = pneg %p456
      %p765 = pneg %p480
      %p766 = pneg %p477
      %p767 = pneg %p501
      %p768 = pneg %p498
      %p769 = pneg %p522
      %p770 = pneg %p519
      %p771 = pneg %p543
      %p772 = pneg %p540
      %p773 = pneg %p564
      %p774 = pneg %p561
      %p775 = pneg %p585
      %p776 = pneg %p582
      %p777 = pneg %p611
      %p778 = pneg %p608
      %p779 = scmp.lt.s32.totalorder %s39, 1
      %s780 = scalar_select %p779, %s39, 1
      %s781 = smul.addr %s780, 8
      %s782 = smul.addr %s781, 8
      %s783 = scalar_lea.vmem %s26, %s782
      %p784 = scmp.lt.s32.totalorder %s39, 1
      %s785 = scalar_select %p784, %s39, 1
      %s786 = smul.addr %s785, 8
      %s787 = smul.addr %s786, 8
      %s788 = scalar_lea.vmem %s0, %s787
      %p789 = scmp.lt.s32.totalorder %s39, 1
      %s790 = scalar_select %p789, %s39, 1
      %s791 = smul.addr %s790, 8
      %s792 = smul.addr %s791, 8
      %s793 = scalar_lea.vmem %s26, %s792
      %v794 = vld [vmem:[%s788] sm:$0xff]
      %v795 = vld [vmem:[%s788 + $0x8] sm:$0xff]
      %v796 = vld [vmem:[%s788 + $0x10] sm:$0xff]
      %v797 = vld [vmem:[%s788 + $0x18] sm:$0xff]
      %v798 = vld [vmem:[%s788 + $0x20] sm:$0xff]
      %v799 = vld [vmem:[%s788 + $0x28] sm:$0xff]
      %v800 = vld [vmem:[%s788 + $0x30] sm:$0xff]
      %v801 = vld [vmem:[%s788 + $0x38] sm:$0xff]
      %v802 = vld [vmem:[%s1] sm:$0xf]
      %811 = vrot.lane.b32.xlu0 %v794, 69
      %v812 = vpop.permute.xlu0 %811
      %813 = vrot.lane.b32.xlu0 %v795, 69
      %v814 = vpop.permute.xlu0 %813
      %815 = vrot.lane.b32.xlu0 %v796, 69
      %v816 = vpop.permute.xlu0 %815
      %817 = vrot.lane.b32.xlu0 %v797, 69
      %v818 = vpop.permute.xlu0 %817
      %819 = vrot.lane.b32.xlu0 %v798, 69
      %v820 = vpop.permute.xlu0 %819
      %821 = vrot.lane.b32.xlu0 %v799, 69
      %v822 = vpop.permute.xlu0 %821
      %823 = vrot.lane.b32.xlu0 %v800, 69
      %v824 = vpop.permute.xlu0 %823
      %825 = vrot.lane.b32.xlu0 %v801, 69
      %v826 = vpop.permute.xlu0 %825
      %vm827 = vcmask 564224
      %v828 = vsel %vm827, %v812, %v814
      %v829 = vsel %vm827, %v814, %v816
      %v830 = vsel %vm827, %v816, %v818
      %v831 = vsel %vm827, %v820, %v822
      %v832 = vsel %vm827, %v822, %v824
      %v833 = vsel %vm827, %v824, %v826
      %v838 = vsel %vm827, 0.0, %v812
      %v839 = vsel %vm827, 0.0, %v820
      %v840 = vsel %vm827, %v818, 0.0
      %v841 = vsel %vm827, %v826, 0.0
      %846 = vrot.lane.b32.xlu0 %v838, 127
      %v847 = vpop.permute.xlu0 %846
      %848 = vrot.lane.b32.xlu0 %v828, 127
      %v849 = vpop.permute.xlu0 %848
      %850 = vrot.lane.b32.xlu0 %v829, 127
      %v851 = vpop.permute.xlu0 %850
      %852 = vrot.lane.b32.xlu0 %v830, 127
      %v853 = vpop.permute.xlu0 %852
      %854 = vrot.lane.b32.xlu0 %v840, 127
      %v855 = vpop.permute.xlu0 %854
      %856 = vrot.lane.b32.xlu0 %v839, 127
      %v857 = vpop.permute.xlu0 %856
      %858 = vrot.lane.b32.xlu0 %v831, 127
      %v859 = vpop.permute.xlu0 %858
      %860 = vrot.lane.b32.xlu0 %v832, 127
      %v861 = vpop.permute.xlu0 %860
      %862 = vrot.lane.b32.xlu0 %v833, 127
      %v863 = vpop.permute.xlu0 %862
      %864 = vrot.lane.b32.xlu0 %v841, 127
      %v865 = vpop.permute.xlu0 %864
      %vm866 = vcmask 1039360
      %v867 = vsel %vm866, %v847, %v849
      %v868 = vsel %vm866, %v849, %v851
      %v869 = vsel %vm866, %v851, %v853
      %v870 = vsel %vm866, %v853, %v855
      %v871 = vsel %vm866, %v857, %v859
      %v872 = vsel %vm866, %v859, %v861
      %v873 = vsel %vm866, %v861, %v863
      %v874 = vsel %vm866, %v863, %v865
      %875 = vrot.lane.b32.xlu0 %v838, 126
      %v876 = vpop.permute.xlu0 %875
      %877 = vrot.lane.b32.xlu0 %v828, 126
      %v878 = vpop.permute.xlu0 %877
      %879 = vrot.lane.b32.xlu0 %v829, 126
      %v880 = vpop.permute.xlu0 %879
      %881 = vrot.lane.b32.xlu0 %v830, 126
      %v882 = vpop.permute.xlu0 %881
      %883 = vrot.lane.b32.xlu0 %v840, 126
      %v884 = vpop.permute.xlu0 %883
      %885 = vrot.lane.b32.xlu0 %v839, 126
      %v886 = vpop.permute.xlu0 %885
      %887 = vrot.lane.b32.xlu0 %v831, 126
      %v888 = vpop.permute.xlu0 %887
      %889 = vrot.lane.b32.xlu0 %v832, 126
      %v890 = vpop.permute.xlu0 %889
      %891 = vrot.lane.b32.xlu0 %v833, 126
      %v892 = vpop.permute.xlu0 %891
      %893 = vrot.lane.b32.xlu0 %v841, 126
      %v894 = vpop.permute.xlu0 %893
      %vm895 = vcmask 1031168
      %v896 = vsel %vm895, %v876, %v878
      %v897 = vsel %vm895, %v878, %v880
      %v898 = vsel %vm895, %v880, %v882
      %v899 = vsel %vm895, %v882, %v884
      %v900 = vsel %vm895, %v886, %v888
      %v901 = vsel %vm895, %v888, %v890
      %v902 = vsel %vm895, %v890, %v892
      %v903 = vsel %vm895, %v892, %v894
      %904 = vrot.lane.b32.xlu0 %v838, 106
      %v905 = vpop.permute.xlu0 %904
      %906 = vrot.lane.b32.xlu0 %v828, 106
      %v907 = vpop.permute.xlu0 %906
      %908 = vrot.lane.b32.xlu0 %v829, 106
      %v909 = vpop.permute.xlu0 %908
      %910 = vrot.lane.b32.xlu0 %v830, 106
      %v911 = vpop.permute.xlu0 %910
      %912 = vrot.lane.b32.xlu0 %v840, 106
      %v913 = vpop.permute.xlu0 %912
      %914 = vrot.lane.b32.xlu0 %v839, 106
      %v915 = vpop.permute.xlu0 %914
      %916 = vrot.lane.b32.xlu0 %v831, 106
      %v917 = vpop.permute.xlu0 %916
      %918 = vrot.lane.b32.xlu0 %v832, 106
      %v919 = vpop.permute.xlu0 %918
      %920 = vrot.lane.b32.xlu0 %v833, 106
      %v921 = vpop.permute.xlu0 %920
      %922 = vrot.lane.b32.xlu0 %v841, 106
      %v923 = vpop.permute.xlu0 %922
      %vm924 = vcmask 867328
      %v925 = vsel %vm924, %v905, %v907
      %v926 = vsel %vm924, %v907, %v909
      %v927 = vsel %vm924, %v909, %v911
      %v928 = vsel %vm924, %v911, %v913
      %v929 = vsel %vm924, %v915, %v917
      %v930 = vsel %vm924, %v917, %v919
      %v931 = vsel %vm924, %v919, %v921
      %v932 = vsel %vm924, %v921, %v923
      %933 = vrot.lane.b32.xlu0 %v838, 105
      %v934 = vpop.permute.xlu0 %933
      %935 = vrot.lane.b32.xlu0 %v828, 105
      %v936 = vpop.permute.xlu0 %935
      %937 = vrot.lane.b32.xlu0 %v829, 105
      %v938 = vpop.permute.xlu0 %937
      %939 = vrot.lane.b32.xlu0 %v830, 105
      %v940 = vpop.permute.xlu0 %939
      %941 = vrot.lane.b32.xlu0 %v840, 105
      %v942 = vpop.permute.xlu0 %941
      %943 = vrot.lane.b32.xlu0 %v839, 105
      %v944 = vpop.permute.xlu0 %943
      %945 = vrot.lane.b32.xlu0 %v831, 105
      %v946 = vpop.permute.xlu0 %945
      %947 = vrot.lane.b32.xlu0 %v832, 105
      %v948 = vpop.permute.xlu0 %947
      %949 = vrot.lane.b32.xlu0 %v833, 105
      %v950 = vpop.permute.xlu0 %949
      %951 = vrot.lane.b32.xlu0 %v841, 105
      %v952 = vpop.permute.xlu0 %951
      %vm953 = vcmask 859136
      %v954 = vsel %vm953, %v934, %v936
      %v955 = vsel %vm953, %v936, %v938
      %v956 = vsel %vm953, %v938, %v940
      %v957 = vsel %vm953, %v940, %v942
      %v958 = vsel %vm953, %v944, %v946
      %v959 = vsel %vm953, %v946, %v948
      %v960 = vsel %vm953, %v948, %v950
      %v961 = vsel %vm953, %v950, %v952
      %962 = vrot.lane.b32.xlu0 %v838, 104
      %v963 = vpop.permute.xlu0 %962
      %964 = vrot.lane.b32.xlu0 %v828, 104
      %v965 = vpop.permute.xlu0 %964
      %966 = vrot.lane.b32.xlu0 %v829, 104
      %v967 = vpop.permute.xlu0 %966
      %968 = vrot.lane.b32.xlu0 %v830, 104
      %v969 = vpop.permute.xlu0 %968
      %970 = vrot.lane.b32.xlu0 %v840, 104
      %v971 = vpop.permute.xlu0 %970
      %972 = vrot.lane.b32.xlu0 %v839, 104
      %v973 = vpop.permute.xlu0 %972
      %974 = vrot.lane.b32.xlu0 %v831, 104
      %v975 = vpop.permute.xlu0 %974
      %976 = vrot.lane.b32.xlu0 %v832, 104
      %v977 = vpop.permute.xlu0 %976
      %978 = vrot.lane.b32.xlu0 %v833, 104
      %v979 = vpop.permute.xlu0 %978
      %980 = vrot.lane.b32.xlu0 %v841, 104
      %v981 = vpop.permute.xlu0 %980
      %vm982 = vcmask 850944
      %v983 = vsel %vm982, %v963, %v965
      %v984 = vsel %vm982, %v965, %v967
      %v985 = vsel %vm982, %v967, %v969
      %v986 = vsel %vm982, %v969, %v971
      %v987 = vsel %vm982, %v973, %v975
      %v988 = vsel %vm982, %v975, %v977
      %v989 = vsel %vm982, %v977, %v979
      %v990 = vsel %vm982, %v979, %v981
      %991 = vrot.lane.b32.xlu0 %v838, 84
      %v992 = vpop.permute.xlu0 %991
      %993 = vrot.lane.b32.xlu0 %v828, 84
      %v994 = vpop.permute.xlu0 %993
      %995 = vrot.lane.b32.xlu0 %v829, 84
      %v996 = vpop.permute.xlu0 %995
      %997 = vrot.lane.b32.xlu0 %v830, 84
      %v998 = vpop.permute.xlu0 %997
      %999 = vrot.lane.b32.xlu0 %v840, 84
      %v1000 = vpop.permute.xlu0 %999
      %1001 = vrot.lane.b32.xlu0 %v839, 84
      %v1002 = vpop.permute.xlu0 %1001
      %1003 = vrot.lane.b32.xlu0 %v831, 84
      %v1004 = vpop.permute.xlu0 %1003
      %1005 = vrot.lane.b32.xlu0 %v832, 84
      %v1006 = vpop.permute.xlu0 %1005
      %1007 = vrot.lane.b32.xlu0 %v833, 84
      %v1008 = vpop.permute.xlu0 %1007
      %1009 = vrot.lane.b32.xlu0 %v841, 84
      %v1010 = vpop.permute.xlu0 %1009
      %vm1011 = vcmask 687104
      %v1012 = vsel %vm1011, %v992, %v994
      %v1013 = vsel %vm1011, %v994, %v996
      %v1014 = vsel %vm1011, %v996, %v998
      %v1015 = vsel %vm1011, %v998, %v1000
      %v1016 = vsel %vm1011, %v1002, %v1004
      %v1017 = vsel %vm1011, %v1004, %v1006
      %v1018 = vsel %vm1011, %v1006, %v1008
      %v1019 = vsel %vm1011, %v1008, %v1010
      %1020 = vrot.lane.b32.xlu0 %v838, 83
      %v1021 = vpop.permute.xlu0 %1020
      %1022 = vrot.lane.b32.xlu0 %v828, 83
      %v1023 = vpop.permute.xlu0 %1022
      %1024 = vrot.lane.b32.xlu0 %v829, 83
      %v1025 = vpop.permute.xlu0 %1024
      %1026 = vrot.lane.b32.xlu0 %v830, 83
      %v1027 = vpop.permute.xlu0 %1026
      %1028 = vrot.lane.b32.xlu0 %v840, 83
      %v1029 = vpop.permute.xlu0 %1028
      %1030 = vrot.lane.b32.xlu0 %v839, 83
      %v1031 = vpop.permute.xlu0 %1030
      %1032 = vrot.lane.b32.xlu0 %v831, 83
      %v1033 = vpop.permute.xlu0 %1032
      %1034 = vrot.lane.b32.xlu0 %v832, 83
      %v1035 = vpop.permute.xlu0 %1034
      %1036 = vrot.lane.b32.xlu0 %v833, 83
      %v1037 = vpop.permute.xlu0 %1036
      %1038 = vrot.lane.b32.xlu0 %v841, 83
      %v1039 = vpop.permute.xlu0 %1038
      %vm1040 = vcmask 678912
      %v1041 = vsel %vm1040, %v1021, %v1023
      %v1042 = vsel %vm1040, %v1023, %v1025
      %v1043 = vsel %vm1040, %v1025, %v1027
      %v1044 = vsel %vm1040, %v1027, %v1029
      %v1045 = vsel %vm1040, %v1031, %v1033
      %v1046 = vsel %vm1040, %v1033, %v1035
      %v1047 = vsel %vm1040, %v1035, %v1037
      %v1048 = vsel %vm1040, %v1037, %v1039
      %1049 = vrot.lane.b32.xlu0 %v838, 82
      %v1050 = vpop.permute.xlu0 %1049
      %1051 = vrot.lane.b32.xlu0 %v828, 82
      %v1052 = vpop.permute.xlu0 %1051
      %1053 = vrot.lane.b32.xlu0 %v829, 82
      %v1054 = vpop.permute.xlu0 %1053
      %1055 = vrot.lane.b32.xlu0 %v830, 82
      %v1056 = vpop.permute.xlu0 %1055
      %1057 = vrot.lane.b32.xlu0 %v840, 82
      %v1058 = vpop.permute.xlu0 %1057
      %1059 = vrot.lane.b32.xlu0 %v839, 82
      %v1060 = vpop.permute.xlu0 %1059
      %1061 = vrot.lane.b32.xlu0 %v831, 82
      %v1062 = vpop.permute.xlu0 %1061
      %1063 = vrot.lane.b32.xlu0 %v832, 82
      %v1064 = vpop.permute.xlu0 %1063
      %1065 = vrot.lane.b32.xlu0 %v833, 82
      %v1066 = vpop.permute.xlu0 %1065
      %1067 = vrot.lane.b32.xlu0 %v841, 82
      %v1068 = vpop.permute.xlu0 %1067
      %vm1069 = vcmask 670720
      %v1070 = vsel %vm1069, %v1050, %v1052
      %v1071 = vsel %vm1069, %v1052, %v1054
      %v1072 = vsel %vm1069, %v1054, %v1056
      %v1073 = vsel %vm1069, %v1056, %v1058
      %v1074 = vsel %vm1069, %v1060, %v1062
      %v1075 = vsel %vm1069, %v1062, %v1064
      %v1076 = vsel %vm1069, %v1064, %v1066
      %v1077 = vsel %vm1069, %v1066, %v1068
      %v1078 = vld [vmem:[%s2] sm:$0xff]
      %v1079 = vld [vmem:[%s2 + $0x8] sm:$0xff]
      %v1080 = vld [vmem:[%s2 + $0x10] sm:$0xff]
      %v1081 = vld [vmem:[%s2 + $0x18] sm:$0xff]
      %v1082 = vld [vmem:[%s3] sm:$0xff]
      %v1083 = vld [vmem:[%s3 + $0x8] sm:$0xff]
      %1085 = vset.pattern.permute.xlu0 0
      %1086 = vperm.xlu0 %1085, %v1082
      %v1087 = vpop.permute.xlu0 %1086
      %1090 = vset.pattern.permute.xlu0 0
      %1091 = vperm.xlu0 %1090, %v1083
      %v1092 = vpop.permute.xlu0 %1091
      %1094 = vrot.lane.b32.xlu0 %v867, 82
      %v1095 = vpop.permute.xlu0 %1094
      %1096 = vrot.lane.b32.xlu0 %v868, 82
      %v1097 = vpop.permute.xlu0 %1096
      %1098 = vrot.lane.b32.xlu0 %v869, 82
      %v1099 = vpop.permute.xlu0 %1098
      %1100 = vrot.lane.b32.xlu0 %v870, 82
      %v1101 = vpop.permute.xlu0 %1100
      %1102 = vrot.lane.b32.xlu0 %v855, 82
      %v1103 = vpop.permute.xlu0 %1102
      %1104 = vrot.lane.b32.xlu0 %v871, 82
      %v1105 = vpop.permute.xlu0 %1104
      %1106 = vrot.lane.b32.xlu0 %v872, 82
      %v1107 = vpop.permute.xlu0 %1106
      %1108 = vrot.lane.b32.xlu0 %v873, 82
      %v1109 = vpop.permute.xlu0 %1108
      %1110 = vrot.lane.b32.xlu0 %v874, 82
      %v1111 = vpop.permute.xlu0 %1110
      %1112 = vrot.lane.b32.xlu0 %v865, 82
      %v1113 = vpop.permute.xlu0 %1112
      %1114 = vrot.lane.b32.xlu0 %v896, 82
      %v1115 = vpop.permute.xlu0 %1114
      %1116 = vrot.lane.b32.xlu0 %v897, 82
      %v1117 = vpop.permute.xlu0 %1116
      %1118 = vrot.lane.b32.xlu0 %v898, 82
      %v1119 = vpop.permute.xlu0 %1118
      %1120 = vrot.lane.b32.xlu0 %v899, 82
      %v1121 = vpop.permute.xlu0 %1120
      %1122 = vrot.lane.b32.xlu0 %v884, 82
      %v1123 = vpop.permute.xlu0 %1122
      %1124 = vrot.lane.b32.xlu0 %v900, 82
      %v1125 = vpop.permute.xlu0 %1124
      %1126 = vrot.lane.b32.xlu0 %v901, 82
      %v1127 = vpop.permute.xlu0 %1126
      %1128 = vrot.lane.b32.xlu0 %v902, 82
      %v1129 = vpop.permute.xlu0 %1128
      %1130 = vrot.lane.b32.xlu0 %v903, 82
      %v1131 = vpop.permute.xlu0 %1130
      %1132 = vrot.lane.b32.xlu0 %v894, 82
      %v1133 = vpop.permute.xlu0 %1132
      %1134 = vrot.lane.b32.xlu0 %v925, 82
      %v1135 = vpop.permute.xlu0 %1134
      %1136 = vrot.lane.b32.xlu0 %v926, 82
      %v1137 = vpop.permute.xlu0 %1136
      %1138 = vrot.lane.b32.xlu0 %v927, 82
      %v1139 = vpop.permute.xlu0 %1138
      %1140 = vrot.lane.b32.xlu0 %v928, 82
      %v1141 = vpop.permute.xlu0 %1140
      %1142 = vrot.lane.b32.xlu0 %v913, 82
      %v1143 = vpop.permute.xlu0 %1142
      %1144 = vrot.lane.b32.xlu0 %v929, 82
      %v1145 = vpop.permute.xlu0 %1144
      %1146 = vrot.lane.b32.xlu0 %v930, 82
      %v1147 = vpop.permute.xlu0 %1146
      %1148 = vrot.lane.b32.xlu0 %v931, 82
      %v1149 = vpop.permute.xlu0 %1148
      %1150 = vrot.lane.b32.xlu0 %v932, 82
      %v1151 = vpop.permute.xlu0 %1150
      %1152 = vrot.lane.b32.xlu0 %v923, 82
      %v1153 = vpop.permute.xlu0 %1152
      %1154 = vrot.lane.b32.xlu0 %v954, 82
      %v1155 = vpop.permute.xlu0 %1154
      %1156 = vrot.lane.b32.xlu0 %v955, 82
      %v1157 = vpop.permute.xlu0 %1156
      %1158 = vrot.lane.b32.xlu0 %v956, 82
      %v1159 = vpop.permute.xlu0 %1158
      %1160 = vrot.lane.b32.xlu0 %v957, 82
      %v1161 = vpop.permute.xlu0 %1160
      %1162 = vrot.lane.b32.xlu0 %v942, 82
      %v1163 = vpop.permute.xlu0 %1162
      %1164 = vrot.lane.b32.xlu0 %v958, 82
      %v1165 = vpop.permute.xlu0 %1164
      %1166 = vrot.lane.b32.xlu0 %v959, 82
      %v1167 = vpop.permute.xlu0 %1166
      %1168 = vrot.lane.b32.xlu0 %v960, 82
      %v1169 = vpop.permute.xlu0 %1168
      %1170 = vrot.lane.b32.xlu0 %v961, 82
      %v1171 = vpop.permute.xlu0 %1170
      %1172 = vrot.lane.b32.xlu0 %v952, 82
      %v1173 = vpop.permute.xlu0 %1172
      %1174 = vrot.lane.b32.xlu0 %v983, 82
      %v1175 = vpop.permute.xlu0 %1174
      %1176 = vrot.lane.b32.xlu0 %v984, 82
      %v1177 = vpop.permute.xlu0 %1176
      %1178 = vrot.lane.b32.xlu0 %v985, 82
      %v1179 = vpop.permute.xlu0 %1178
      %1180 = vrot.lane.b32.xlu0 %v986, 82
      %v1181 = vpop.permute.xlu0 %1180
      %1182 = vrot.lane.b32.xlu0 %v971, 82
      %v1183 = vpop.permute.xlu0 %1182
      %1184 = vrot.lane.b32.xlu0 %v987, 82
      %v1185 = vpop.permute.xlu0 %1184
      %1186 = vrot.lane.b32.xlu0 %v988, 82
      %v1187 = vpop.permute.xlu0 %1186
      %1188 = vrot.lane.b32.xlu0 %v989, 82
      %v1189 = vpop.permute.xlu0 %1188
      %1190 = vrot.lane.b32.xlu0 %v990, 82
      %v1191 = vpop.permute.xlu0 %1190
      %1192 = vrot.lane.b32.xlu0 %v981, 82
      %v1193 = vpop.permute.xlu0 %1192
      %1194 = vrot.lane.b32.xlu0 %v1012, 82
      %v1195 = vpop.permute.xlu0 %1194
      %1196 = vrot.lane.b32.xlu0 %v1013, 82
      %v1197 = vpop.permute.xlu0 %1196
      %1198 = vrot.lane.b32.xlu0 %v1014, 82
      %v1199 = vpop.permute.xlu0 %1198
      %1200 = vrot.lane.b32.xlu0 %v1015, 82
      %v1201 = vpop.permute.xlu0 %1200
      %1202 = vrot.lane.b32.xlu0 %v1000, 82
      %v1203 = vpop.permute.xlu0 %1202
      %1204 = vrot.lane.b32.xlu0 %v1016, 82
      %v1205 = vpop.permute.xlu0 %1204
      %1206 = vrot.lane.b32.xlu0 %v1017, 82
      %v1207 = vpop.permute.xlu0 %1206
      %1208 = vrot.lane.b32.xlu0 %v1018, 82
      %v1209 = vpop.permute.xlu0 %1208
      %1210 = vrot.lane.b32.xlu0 %v1019, 82
      %v1211 = vpop.permute.xlu0 %1210
      %1212 = vrot.lane.b32.xlu0 %v1010, 82
      %v1213 = vpop.permute.xlu0 %1212
      %1214 = vrot.lane.b32.xlu0 %v1041, 82
      %v1215 = vpop.permute.xlu0 %1214
      %1216 = vrot.lane.b32.xlu0 %v1042, 82
      %v1217 = vpop.permute.xlu0 %1216
      %1218 = vrot.lane.b32.xlu0 %v1043, 82
      %v1219 = vpop.permute.xlu0 %1218
      %1220 = vrot.lane.b32.xlu0 %v1044, 82
      %v1221 = vpop.permute.xlu0 %1220
      %1222 = vrot.lane.b32.xlu0 %v1029, 82
      %v1223 = vpop.permute.xlu0 %1222
      %1224 = vrot.lane.b32.xlu0 %v1045, 82
      %v1225 = vpop.permute.xlu0 %1224
      %1226 = vrot.lane.b32.xlu0 %v1046, 82
      %v1227 = vpop.permute.xlu0 %1226
      %1228 = vrot.lane.b32.xlu0 %v1047, 82
      %v1229 = vpop.permute.xlu0 %1228
      %1230 = vrot.lane.b32.xlu0 %v1048, 82
      %v1231 = vpop.permute.xlu0 %1230
      %1232 = vrot.lane.b32.xlu0 %v1039, 82
      %v1233 = vpop.permute.xlu0 %1232
      %1234 = vrot.lane.b32.xlu0 %v1070, 82
      %v1235 = vpop.permute.xlu0 %1234
      %1236 = vrot.lane.b32.xlu0 %v1071, 82
      %v1237 = vpop.permute.xlu0 %1236
      %1238 = vrot.lane.b32.xlu0 %v1072, 82
      %v1239 = vpop.permute.xlu0 %1238
      %1240 = vrot.lane.b32.xlu0 %v1073, 82
      %v1241 = vpop.permute.xlu0 %1240
      %1242 = vrot.lane.b32.xlu0 %v1058, 82
      %v1243 = vpop.permute.xlu0 %1242
      %1244 = vrot.lane.b32.xlu0 %v1074, 82
      %v1245 = vpop.permute.xlu0 %1244
      %1246 = vrot.lane.b32.xlu0 %v1075, 82
      %v1247 = vpop.permute.xlu0 %1246
      %1248 = vrot.lane.b32.xlu0 %v1076, 82
      %v1249 = vpop.permute.xlu0 %1248
      %1250 = vrot.lane.b32.xlu0 %v1077, 82
      %v1251 = vpop.permute.xlu0 %1250
      %1252 = vrot.lane.b32.xlu0 %v1068, 82
      %v1253 = vpop.permute.xlu0 %1252
      %v1254 = vsel %vm1069, %v1095, %v1097
      %v1255 = vsel %vm1069, %v1097, %v1099
      %v1256 = vsel %vm1069, %v1099, %v1101
      %v1257 = vsel %vm1069, %v1101, %v1103
      %v1258 = vsel %vm1069, %v1105, %v1107
      %v1259 = vsel %vm1069, %v1107, %v1109
      %v1260 = vsel %vm1069, %v1109, %v1111
      %v1261 = vsel %vm1069, %v1111, %v1113
      %v1262 = vsel %vm1069, %v1115, %v1117
      %v1263 = vsel %vm1069, %v1117, %v1119
      %v1264 = vsel %vm1069, %v1119, %v1121
      %v1265 = vsel %vm1069, %v1121, %v1123
      %v1266 = vsel %vm1069, %v1125, %v1127
      %v1267 = vsel %vm1069, %v1127, %v1129
      %v1268 = vsel %vm1069, %v1129, %v1131
      %v1269 = vsel %vm1069, %v1131, %v1133
      %v1270 = vsel %vm1069, %v1135, %v1137
      %v1271 = vsel %vm1069, %v1137, %v1139
      %v1272 = vsel %vm1069, %v1139, %v1141
      %v1273 = vsel %vm1069, %v1141, %v1143
      %v1274 = vsel %vm1069, %v1145, %v1147
      %v1275 = vsel %vm1069, %v1147, %v1149
      %v1276 = vsel %vm1069, %v1149, %v1151
      %v1277 = vsel %vm1069, %v1151, %v1153
      %v1278 = vsel %vm1069, %v1155, %v1157
      %v1279 = vsel %vm1069, %v1157, %v1159
      %v1280 = vsel %vm1069, %v1159, %v1161
      %v1281 = vsel %vm1069, %v1161, %v1163
      %v1282 = vsel %vm1069, %v1165, %v1167
      %v1283 = vsel %vm1069, %v1167, %v1169
      %v1284 = vsel %vm1069, %v1169, %v1171
      %v1285 = vsel %vm1069, %v1171, %v1173
      %v1286 = vsel %vm1069, %v1175, %v1177
      %v1287 = vsel %vm1069, %v1177, %v1179
      %v1288 = vsel %vm1069, %v1179, %v1181
      %v1289 = vsel %vm1069, %v1181, %v1183
      %v1290 = vsel %vm1069, %v1185, %v1187
      %v1291 = vsel %vm1069, %v1187, %v1189
      %v1292 = vsel %vm1069, %v1189, %v1191
      %v1293 = vsel %vm1069, %v1191, %v1193
      %v1294 = vsel %vm1069, %v1195, %v1197
      %v1295 = vsel %vm1069, %v1197, %v1199
      %v1296 = vsel %vm1069, %v1199, %v1201
      %v1297 = vsel %vm1069, %v1201, %v1203
      %v1298 = vsel %vm1069, %v1205, %v1207
      %v1299 = vsel %vm1069, %v1207, %v1209
      %v1300 = vsel %vm1069, %v1209, %v1211
      %v1301 = vsel %vm1069, %v1211, %v1213
      %v1302 = vsel %vm1069, %v1215, %v1217
      %v1303 = vsel %vm1069, %v1217, %v1219
      %v1304 = vsel %vm1069, %v1219, %v1221
      %v1305 = vsel %vm1069, %v1221, %v1223
      %v1306 = vsel %vm1069, %v1225, %v1227
      %v1307 = vsel %vm1069, %v1227, %v1229
      %v1308 = vsel %vm1069, %v1229, %v1231
      %v1309 = vsel %vm1069, %v1231, %v1233
      %v1310 = vsel %vm1069, %v1235, %v1237
      %v1311 = vsel %vm1069, %v1237, %v1239
      %v1312 = vsel %vm1069, %v1239, %v1241
      %v1313 = vsel %vm1069, %v1241, %v1243
      %v1314 = vsel %vm1069, %v1245, %v1247
      %v1315 = vsel %vm1069, %v1247, %v1249
      %v1316 = vsel %vm1069, %v1249, %v1251
      %v1317 = vsel %vm1069, %v1251, %v1253
      %vm1390 = vcmask 130048
      %v1392 = vsel %vm1390, %v1079, 0
      %v1395 = vsel %vm1390, %v1081, 0
      %1397 = vmatprep.subr.mxu0 %v1071
      %1398 = vmatpush1.msra.mxu0 %v1070
      %1399 = vmatprep.subr.mxu0 %v1075
      %1400 = vmatpush1.msra.mxu0 %v1074
      %1401 = vmatprep.subr.mxu0 %v1255
      %1402 = vmatpush1.msra.mxu0 %v1254
      %1403 = vmatprep.subr.mxu0 %v1259
      %1404 = vmatpush1.msra.mxu0 %v1258
      %1405 = vmatprep.subr.mxu0 %v1263
      %1406 = vmatpush1.msra.mxu0 %v1262
      %1407 = vmatprep.subr.mxu0 %v1267
      %1408 = vmatpush1.msra.mxu0 %v1266
      %1409 = vmatprep.subr.mxu0 %v1271
      %1410 = vmatpush1.msra.mxu0 %v1270
      %1411 = vmatprep.subr.mxu0 %v1275
      %1412 = vmatpush1.msra.mxu0 %v1274
      %1413 = vmatprep.subr.mxu0 %v1279
      %1414 = vmatpush1.msra.mxu0 %v1278
      %1415 = vmatprep.subr.mxu0 %v1283
      %1416 = vmatpush1.msra.mxu0 %v1282
      %1417 = vmatprep.subr.mxu0 %v1287
      %1418 = vmatpush1.msra.mxu0 %v1286
      %1419 = vmatprep.subr.mxu0 %v1291
      %1420 = vmatpush1.msra.mxu0 %v1290
      %1421 = vmatprep.subr.mxu0 %v1295
      %1422 = vmatpush1.msra.mxu0 %v1294
      %1423 = vmatprep.subr.mxu0 %v1299
      %1424 = vmatpush1.msra.mxu0 %v1298
      %1425 = vmatprep.subr.mxu0 %v1303
      %1426 = vmatpush1.msra.mxu0 %v1302
      %1427 = vmatprep.subr.mxu0 %v1307
      %1428 = vmatpush1.msra.mxu0 %v1306
      %1429 = vmatprep.subr.mxu0 %v1311
      %1430 = vmatpush1.msra.mxu0 %v1310
      %1431 = vmatprep.subr.mxu0 %v1315
      %1432 = vmatpush1.msra.mxu0 %v1314
      %1433 = vmatprep.subr.mxu0 0.0
      %1434 = vmatpush1.msra.mxu0 0.0
      %1435 = vmatprep.subr.mxu0 0.0
      %1436 = vmatpush1.msra.mxu0 0.0
      %1437 = vmatprep.subr.mxu0 0.0
      %1438 = vmatpush1.msra.mxu0 0.0
      %1439 = vmatprep.subr.mxu0 0.0
      %1440 = vmatpush1.msra.mxu0 0.0
      %1441 = vmatprep.subr.mxu0 0.0
      %1442 = vmatpush1.msra.mxu0 0.0
      %1443 = vmatprep.subr.mxu0 0.0
      %1444 = vmatpush1.msra.mxu0 0.0
      %1445 = vmatprep.subr.mxu0 0.0
      %1446 = vmatpush1.msra.mxu0 0.0
      %1447 = vmatprep.subr.mxu0 0.0
      %1448 = vmatpush1.msra.mxu0 0.0
      %1449 = vmatprep.subr.mxu0 0.0
      %1450 = vmatpush1.msra.mxu0 0.0
      %1451 = vmatprep.subr.mxu0 0.0
      %1452 = vmatpush1.msra.mxu0 0.0
      %1453 = vmatprep.subr.mxu0 0.0
      %1454 = vmatpush1.msra.mxu0 0.0
      %1455 = vmatprep.subr.mxu0 0.0
      %1456 = vmatpush1.msra.mxu0 0.0
      %1457 = vmatprep.subr.mxu0 0.0
      %1458 = vmatpush1.msra.mxu0 0.0
      %1459 = vmatprep.subr.mxu0 0.0
      %1460 = vmatpush1.msra.mxu0 0.0
      %1461 = vmatprep.mubr.f32.mxu0 %v1392
      %1462 = vmatmul.mubr.f32.gmra.mrb[0].mxu0 %v1078
      %v1463 = vpop.f32.mrb[0].mxu0
      %v1464 = vadd.f32 %v1087, %v1463
      %v1465 = vpop.f32.mrb[0].mxu0
      %v1466 = vadd.f32 %v1087, %v1465
      %1467 = vmatprep.mubr.f32.mxu0 %v1395
      %1468 = vmatmul.mubr.f32.gmra.mrb[0].mxu0 %v1080
      %v1469 = vpop.f32.mrb[0].mxu0
      %v1470 = vadd.f32 %v1092, %v1469
      %v1471 = vpop.f32.mrb[0].mxu0
      %v1472 = vadd.f32 %v1092, %v1471
      %1473 = vdwg.mxu0
      %1474 = vmatprep.subr.mxu0 %v1073
      %1475 = vmatpush1.msra.mxu0 %v1072
      %1476 = vmatprep.subr.mxu0 %v1077
      %1477 = vmatpush1.msra.mxu0 %v1076
      %1478 = vmatprep.subr.mxu0 %v1257
      %1479 = vmatpush1.msra.mxu0 %v1256
      %1480 = vmatprep.subr.mxu0 %v1261
      %1481 = vmatpush1.msra.mxu0 %v1260
      %1482 = vmatprep.subr.mxu0 %v1265
      %1483 = vmatpush1.msra.mxu0 %v1264
      %1484 = vmatprep.subr.mxu0 %v1269
      %1485 = vmatpush1.msra.mxu0 %v1268
      %1486 = vmatprep.subr.mxu0 %v1273
      %1487 = vmatpush1.msra.mxu0 %v1272
      %1488 = vmatprep.subr.mxu0 %v1277
      %1489 = vmatpush1.msra.mxu0 %v1276
      %1490 = vmatprep.subr.mxu0 %v1281
      %1491 = vmatpush1.msra.mxu0 %v1280
      %1492 = vmatprep.subr.mxu0 %v1285
      %1493 = vmatpush1.msra.mxu0 %v1284
      %1494 = vmatprep.subr.mxu0 %v1289
      %1495 = vmatpush1.msra.mxu0 %v1288
      %1496 = vmatprep.subr.mxu0 %v1293
      %1497 = vmatpush1.msra.mxu0 %v1292
      %1498 = vmatprep.subr.mxu0 %v1297
      %1499 = vmatpush1.msra.mxu0 %v1296
      %1500 = vmatprep.subr.mxu0 %v1301
      %1501 = vmatpush1.msra.mxu0 %v1300
      %1502 = vmatprep.subr.mxu0 %v1305
      %1503 = vmatpush1.msra.mxu0 %v1304
      %1504 = vmatprep.subr.mxu0 %v1309
      %1505 = vmatpush1.msra.mxu0 %v1308
      %1506 = vmatprep.subr.mxu0 %v1313
      %1507 = vmatpush1.msra.mxu0 %v1312
      %1508 = vmatprep.subr.mxu0 %v1317
      %1509 = vmatpush1.msra.mxu0 %v1316
      %1510 = vmatprep.subr.mxu0 0.0
      %1511 = vmatpush1.msra.mxu0 0.0
      %1512 = vmatprep.subr.mxu0 0.0
      %1513 = vmatpush1.msra.mxu0 0.0
      %1514 = vmatprep.subr.mxu0 0.0
      %1515 = vmatpush1.msra.mxu0 0.0
      %1516 = vmatprep.subr.mxu0 0.0
      %1517 = vmatpush1.msra.mxu0 0.0
      %1518 = vmatprep.subr.mxu0 0.0
      %1519 = vmatpush1.msra.mxu0 0.0
      %1520 = vmatprep.subr.mxu0 0.0
      %1521 = vmatpush1.msra.mxu0 0.0
      %1522 = vmatprep.subr.mxu0 0.0
      %1523 = vmatpush1.msra.mxu0 0.0
      %1524 = vmatprep.subr.mxu0 0.0
      %1525 = vmatpush1.msra.mxu0 0.0
      %1526 = vmatprep.subr.mxu0 0.0
      %1527 = vmatpush1.msra.mxu0 0.0
      %1528 = vmatprep.subr.mxu0 0.0
      %1529 = vmatpush1.msra.mxu0 0.0
      %1530 = vmatprep.subr.mxu0 0.0
      %1531 = vmatpush1.msra.mxu0 0.0
      %1532 = vmatprep.subr.mxu0 0.0
      %1533 = vmatpush1.msra.mxu0 0.0
      %1534 = vmatprep.subr.mxu0 0.0
      %1535 = vmatpush1.msra.mxu0 0.0
      %1536 = vmatprep.subr.mxu0 0.0
      %1537 = vmatpush1.msra.mxu0 0.0
      %1538 = vmatprep.mubr.f32.mxu0 %v1392
      %1539 = vmatmul.mubr.f32.gmra.mrb[0].mxu0 %v1078
      %v1540 = vpop.f32.mrb[0].mxu0
      %v1541 = vadd.f32 %v1087, %v1540
      %v1542 = vpop.f32.mrb[0].mxu0
      %v1543 = vadd.f32 %v1087, %v1542
      %1544 = vmatprep.mubr.f32.mxu0 %v1395
      %1545 = vmatmul.mubr.f32.gmra.mrb[0].mxu0 %v1080
      %v1546 = vpop.f32.mrb[0].mxu0
      %v1547 = vadd.f32 %v1092, %v1546
      %v1548 = vpop.f32.mrb[0].mxu0
      %v1549 = vadd.f32 %v1092, %v1548
      %1550 = vdwg.mxu0
      %vm1551 = vcmp.ge.f32.partialorder %v1464, 0.0
      %vm1552 = vcmp.ge.f32.partialorder %v1466, 0.0
      %vm1553 = vcmp.ge.f32.partialorder %v1541, 0.0
      %vm1554 = vcmp.ge.f32.partialorder %v1543, 0.0
      %vm1555 = vcmp.ge.f32.partialorder %v1470, 0.0
      %vm1556 = vcmp.ge.f32.partialorder %v1472, 0.0
      %vm1557 = vcmp.ge.f32.partialorder %v1547, 0.0
      %vm1558 = vcmp.ge.f32.partialorder %v1549, 0.0
      %v1559 = vmul.f32 %v1464, 0.05
      %v1560 = vmul.f32 %v1466, 0.05
      %v1561 = vmul.f32 %v1541, 0.05
      %v1562 = vmul.f32 %v1543, 0.05
      %v1563 = vmul.f32 %v1470, 0.05
      %v1564 = vmul.f32 %v1472, 0.05
      %v1565 = vmul.f32 %v1547, 0.05
      %v1566 = vmul.f32 %v1549, 0.05
      %v1567 = vsel %vm1551, %v1464, %v1559
      %v1568 = vsel %vm1552, %v1466, %v1560
      %v1569 = vsel %vm1553, %v1541, %v1561
      %v1570 = vsel %vm1554, %v1543, %v1562
      %v1571 = vsel %vm1555, %v1470, %v1563
      %v1572 = vsel %vm1556, %v1472, %v1564
      %v1573 = vsel %vm1557, %v1547, %v1565
      %v1574 = vsel %vm1558, %v1549, %v1566
      %v1576 = vlaneseq
      %v1577 = vshrl.u32 %v1576, 7
      %v1578 = vsub.s32 0, %v1577
      %v1579 = vrot.slane %v802, %v1578
      %v1580 = vlaneseq
      %v1581 = vshrl.u32 %v1580, 7
      %v1582 = vsub.s32 1, %v1581
      %v1583 = vrot.slane %v802, %v1582
      %v1584 = vlaneseq
      %v1585 = vshrl.u32 %v1584, 7
      %v1586 = vsub.s32 2, %v1585
      %v1587 = vrot.slane %v802, %v1586
      %v1588 = vlaneseq
      %v1589 = vshrl.u32 %v1588, 7
      %v1590 = vsub.s32 3, %v1589
      %v1591 = vrot.slane %v802, %v1590
      %v1596 = vmul.f32 %v1567, %v1579
      %v1597 = vmul.f32 %v1568, %v1583
      %v1598 = vmul.f32 %v1569, %v1587
      %v1599 = vmul.f32 %v1570, %v1591
      %v1600 = vmul.f32 %v1571, %v1579
      %v1601 = vmul.f32 %v1572, %v1583
      %v1602 = vmul.f32 %v1573, %v1587
      %v1603 = vmul.f32 %v1574, %v1591
      %1608 = vrot.lane.b32.xlu0 %v1596, 69
      %v1609 = vpop.permute.xlu0 %1608
      %1610 = vrot.lane.b32.xlu0 %v1597, 69
      %v1611 = vpop.permute.xlu0 %1610
      %1612 = vrot.lane.b32.xlu0 %v1598, 69
      %v1613 = vpop.permute.xlu0 %1612
      %1614 = vrot.lane.b32.xlu0 %v1599, 69
      %v1615 = vpop.permute.xlu0 %1614
      %v1616 = vsel %vm827, %v1609, %v1611
      %v1617 = vsel %vm827, %v1611, %v1613
      %v1618 = vsel %vm827, %v1613, %v1615
      %v1624 = vsel %vm827, 0.0, %v1609
      %v1625 = vsel %vm827, %v1615, 0.0
      %v1628 = vrot.slane %v1624, 4
      %v1629 = vrot.slane %v1616, 4
      %v1630 = vrot.slane %v1617, 4
      %v1631 = vrot.slane %v1618, 4
      %v1632 = vrot.slane %v1625, 4
      %1633 = vrot.lane.b32.xlu0 %v1628, 127
      %v1634 = vpop.permute.xlu0 %1633
      %1635 = vrot.lane.b32.xlu0 %v1629, 127
      %v1636 = vpop.permute.xlu0 %1635
      %1637 = vrot.lane.b32.xlu0 %v1630, 127
      %v1638 = vpop.permute.xlu0 %1637
      %1639 = vrot.lane.b32.xlu0 %v1631, 127
      %v1640 = vpop.permute.xlu0 %1639
      %1641 = vrot.lane.b32.xlu0 %v1632, 127
      %v1642 = vpop.permute.xlu0 %1641
      %v1643 = vsel %vm866, %v1634, %v1636
      %v1644 = vsel %vm866, %v1636, %v1638
      %v1645 = vsel %vm866, %v1638, %v1640
      %v1646 = vsel %vm866, %v1640, %v1642
      %1652 = vrot.lane.b32.xlu0 %v1624, 126
      %v1653 = vpop.permute.xlu0 %1652
      %1654 = vrot.lane.b32.xlu0 %v1616, 126
      %v1655 = vpop.permute.xlu0 %1654
      %1656 = vrot.lane.b32.xlu0 %v1617, 126
      %v1657 = vpop.permute.xlu0 %1656
      %1658 = vrot.lane.b32.xlu0 %v1618, 126
      %v1659 = vpop.permute.xlu0 %1658
      %1660 = vrot.lane.b32.xlu0 %v1625, 126
      %v1661 = vpop.permute.xlu0 %1660
      %v1662 = vsel %vm895, %v1653, %v1655
      %v1663 = vsel %vm895, %v1655, %v1657
      %v1664 = vsel %vm895, %v1657, %v1659
      %v1665 = vsel %vm895, %v1659, %v1661
      %1671 = vrot.lane.b32.xlu0 %v1628, 106
      %v1672 = vpop.permute.xlu0 %1671
      %1673 = vrot.lane.b32.xlu0 %v1629, 106
      %v1674 = vpop.permute.xlu0 %1673
      %1675 = vrot.lane.b32.xlu0 %v1630, 106
      %v1676 = vpop.permute.xlu0 %1675
      %1677 = vrot.lane.b32.xlu0 %v1631, 106
      %v1678 = vpop.permute.xlu0 %1677
      %1679 = vrot.lane.b32.xlu0 %v1632, 106
      %v1680 = vpop.permute.xlu0 %1679
      %v1681 = vsel %vm924, %v1672, %v1674
      %v1682 = vsel %vm924, %v1674, %v1676
      %v1683 = vsel %vm924, %v1676, %v1678
      %v1684 = vsel %vm924, %v1678, %v1680
      %1690 = vrot.lane.b32.xlu0 %v1624, 105
      %v1691 = vpop.permute.xlu0 %1690
      %1692 = vrot.lane.b32.xlu0 %v1616, 105
      %v1693 = vpop.permute.xlu0 %1692
      %1694 = vrot.lane.b32.xlu0 %v1617, 105
      %v1695 = vpop.permute.xlu0 %1694
      %1696 = vrot.lane.b32.xlu0 %v1618, 105
      %v1697 = vpop.permute.xlu0 %1696
      %1698 = vrot.lane.b32.xlu0 %v1625, 105
      %v1699 = vpop.permute.xlu0 %1698
      %v1700 = vsel %vm953, %v1691, %v1693
      %v1701 = vsel %vm953, %v1693, %v1695
      %v1702 = vsel %vm953, %v1695, %v1697
      %v1703 = vsel %vm953, %v1697, %v1699
      %1709 = vrot.lane.b32.xlu0 %v1628, 104
      %v1710 = vpop.permute.xlu0 %1709
      %1711 = vrot.lane.b32.xlu0 %v1629, 104
      %v1712 = vpop.permute.xlu0 %1711
      %1713 = vrot.lane.b32.xlu0 %v1630, 104
      %v1714 = vpop.permute.xlu0 %1713
      %1715 = vrot.lane.b32.xlu0 %v1631, 104
      %v1716 = vpop.permute.xlu0 %1715
      %1717 = vrot.lane.b32.xlu0 %v1632, 104
      %v1718 = vpop.permute.xlu0 %1717
      %v1719 = vsel %vm982, %v1710, %v1712
      %v1720 = vsel %vm982, %v1712, %v1714
      %v1721 = vsel %vm982, %v1714, %v1716
      %v1722 = vsel %vm982, %v1716, %v1718
      %1728 = vrot.lane.b32.xlu0 %v1624, 84
      %v1729 = vpop.permute.xlu0 %1728
      %1730 = vrot.lane.b32.xlu0 %v1616, 84
      %v1731 = vpop.permute.xlu0 %1730
      %1732 = vrot.lane.b32.xlu0 %v1617, 84
      %v1733 = vpop.permute.xlu0 %1732
      %1734 = vrot.lane.b32.xlu0 %v1618, 84
      %v1735 = vpop.permute.xlu0 %1734
      %1736 = vrot.lane.b32.xlu0 %v1625, 84
      %v1737 = vpop.permute.xlu0 %1736
      %v1738 = vsel %vm1011, %v1729, %v1731
      %v1739 = vsel %vm1011, %v1731, %v1733
      %v1740 = vsel %vm1011, %v1733, %v1735
      %v1741 = vsel %vm1011, %v1735, %v1737
      %1747 = vrot.lane.b32.xlu0 %v1628, 83
      %v1748 = vpop.permute.xlu0 %1747
      %1749 = vrot.lane.b32.xlu0 %v1629, 83
      %v1750 = vpop.permute.xlu0 %1749
      %1751 = vrot.lane.b32.xlu0 %v1630, 83
      %v1752 = vpop.permute.xlu0 %1751
      %1753 = vrot.lane.b32.xlu0 %v1631, 83
      %v1754 = vpop.permute.xlu0 %1753
      %1755 = vrot.lane.b32.xlu0 %v1632, 83
      %v1756 = vpop.permute.xlu0 %1755
      %v1757 = vsel %vm1040, %v1748, %v1750
      %v1758 = vsel %vm1040, %v1750, %v1752
      %v1759 = vsel %vm1040, %v1752, %v1754
      %v1760 = vsel %vm1040, %v1754, %v1756
      %1766 = vrot.lane.b32.xlu0 %v1624, 82
      %v1767 = vpop.permute.xlu0 %1766
      %1768 = vrot.lane.b32.xlu0 %v1616, 82
      %v1769 = vpop.permute.xlu0 %1768
      %1770 = vrot.lane.b32.xlu0 %v1617, 82
      %v1771 = vpop.permute.xlu0 %1770
      %1772 = vrot.lane.b32.xlu0 %v1618, 82
      %v1773 = vpop.permute.xlu0 %1772
      %1774 = vrot.lane.b32.xlu0 %v1625, 82
      %v1775 = vpop.permute.xlu0 %1774
      %v1776 = vsel %vm1069, %v1767, %v1769
      %v1777 = vsel %vm1069, %v1769, %v1771
      %v1778 = vsel %vm1069, %v1771, %v1773
      %v1779 = vsel %vm1069, %v1773, %v1775
      %vm1780 = vcmask 1043456
      %v1781 = vsel %vm1780, %v1624, %v1643
      %v1782 = vsel %vm1780, %v1616, %v1644
      %v1783 = vsel %vm1780, %v1617, %v1645
      %v1784 = vsel %vm1780, %v1618, %v1646
      %v1785 = vsel %vm1780, %v1625, %v1642
      %v1786 = vsel %vm1780, %v1662, %v1681
      %v1787 = vsel %vm1780, %v1663, %v1682
      %v1788 = vsel %vm1780, %v1664, %v1683
      %v1789 = vsel %vm1780, %v1665, %v1684
      %v1790 = vsel %vm1780, %v1661, %v1680
      %v1791 = vsel %vm1780, %v1700, %v1719
      %v1792 = vsel %vm1780, %v1701, %v1720
      %v1793 = vsel %vm1780, %v1702, %v1721
      %v1794 = vsel %vm1780, %v1703, %v1722
      %v1795 = vsel %vm1780, %v1699, %v1718
      %v1796 = vsel %vm1780, %v1738, %v1757
      %v1797 = vsel %vm1780, %v1739, %v1758
      %v1798 = vsel %vm1780, %v1740, %v1759
      %v1799 = vsel %vm1780, %v1741, %v1760
      %v1800 = vsel %vm1780, %v1737, %v1756
      %v1801 = vld [vmem:[%s4] sm:$0xf]
      %v1802 = vld [vmem:[%s5] sm:$0xf]
      %1804 = vset.pattern.permute.xlu0 0
      %1805 = vperm.xlu0 %1804, %v1802
      %v1806 = vpop.permute.xlu0 %1805
      %1828 = vrot.lane.b32.xlu0 %v1781, 82
      %v1829 = vpop.permute.xlu0 %1828
      %1830 = vrot.lane.b32.xlu0 %v1782, 82
      %v1831 = vpop.permute.xlu0 %1830
      %1832 = vrot.lane.b32.xlu0 %v1783, 82
      %v1833 = vpop.permute.xlu0 %1832
      %1834 = vrot.lane.b32.xlu0 %v1784, 82
      %v1835 = vpop.permute.xlu0 %1834
      %1836 = vrot.lane.b32.xlu0 %v1785, 82
      %v1837 = vpop.permute.xlu0 %1836
      %1838 = vrot.lane.b32.xlu0 %v1786, 82
      %v1839 = vpop.permute.xlu0 %1838
      %1840 = vrot.lane.b32.xlu0 %v1787, 82
      %v1841 = vpop.permute.xlu0 %1840
      %1842 = vrot.lane.b32.xlu0 %v1788, 82
      %v1843 = vpop.permute.xlu0 %1842
      %1844 = vrot.lane.b32.xlu0 %v1789, 82
      %v1845 = vpop.permute.xlu0 %1844
      %1846 = vrot.lane.b32.xlu0 %v1790, 82
      %v1847 = vpop.permute.xlu0 %1846
      %1848 = vrot.lane.b32.xlu0 %v1791, 82
      %v1849 = vpop.permute.xlu0 %1848
      %1850 = vrot.lane.b32.xlu0 %v1792, 82
      %v1851 = vpop.permute.xlu0 %1850
      %1852 = vrot.lane.b32.xlu0 %v1793, 82
      %v1853 = vpop.permute.xlu0 %1852
      %1854 = vrot.lane.b32.xlu0 %v1794, 82
      %v1855 = vpop.permute.xlu0 %1854
      %1856 = vrot.lane.b32.xlu0 %v1795, 82
      %v1857 = vpop.permute.xlu0 %1856
      %1858 = vrot.lane.b32.xlu0 %v1796, 82
      %v1859 = vpop.permute.xlu0 %1858
      %1860 = vrot.lane.b32.xlu0 %v1797, 82
      %v1861 = vpop.permute.xlu0 %1860
      %1862 = vrot.lane.b32.xlu0 %v1798, 82
      %v1863 = vpop.permute.xlu0 %1862
      %1864 = vrot.lane.b32.xlu0 %v1799, 82
      %v1865 = vpop.permute.xlu0 %1864
      %1866 = vrot.lane.b32.xlu0 %v1800, 82
      %v1867 = vpop.permute.xlu0 %1866
      %1868 = vrot.lane.b32.xlu0 %v1776, 82
      %v1869 = vpop.permute.xlu0 %1868
      %1870 = vrot.lane.b32.xlu0 %v1777, 82
      %v1871 = vpop.permute.xlu0 %1870
      %1872 = vrot.lane.b32.xlu0 %v1778, 82
      %v1873 = vpop.permute.xlu0 %1872
      %1874 = vrot.lane.b32.xlu0 %v1779, 82
      %v1875 = vpop.permute.xlu0 %1874
      %1876 = vrot.lane.b32.xlu0 %v1775, 82
      %v1877 = vpop.permute.xlu0 %1876
      %v1878 = vsel %vm1069, %v1829, %v1831
      %v1879 = vsel %vm1069, %v1831, %v1833
      %v1880 = vsel %vm1069, %v1833, %v1835
      %v1881 = vsel %vm1069, %v1835, %v1837
      %v1882 = vsel %vm1069, %v1839, %v1841
      %v1883 = vsel %vm1069, %v1841, %v1843
      %v1884 = vsel %vm1069, %v1843, %v1845
      %v1885 = vsel %vm1069, %v1845, %v1847
      %v1886 = vsel %vm1069, %v1849, %v1851
      %v1887 = vsel %vm1069, %v1851, %v1853
      %v1888 = vsel %vm1069, %v1853, %v1855
      %v1889 = vsel %vm1069, %v1855, %v1857
      %v1890 = vsel %vm1069, %v1859, %v1861
      %v1891 = vsel %vm1069, %v1861, %v1863
      %v1892 = vsel %vm1069, %v1863, %v1865
      %v1893 = vsel %vm1069, %v1865, %v1867
      %v1894 = vsel %vm1069, %v1869, %v1871
      %v1895 = vsel %vm1069, %v1871, %v1873
      %v1896 = vsel %vm1069, %v1873, %v1875
      %v1897 = vsel %vm1069, %v1875, %v1877
      %vm1914 = vcmask 293888
      %v1916 = vsel %vm1914, %v1801, 0
      %v1918 = vsel %vm1780, %v1894, 0
      %v1920 = vsel %vm1780, %v1895, 0
      %v1922 = vsel %vm1780, %v1896, 0
      %v1924 = vsel %vm1780, %v1897, 0
      %1926 = vmatprep.subr.mxu0 %v1879
      %1927 = vmatpush1.msra.mxu0 %v1878
      %1928 = vmatprep.subr.mxu0 %v1883
      %1929 = vmatpush1.msra.mxu0 %v1882
      %1930 = vmatprep.subr.mxu0 %v1887
      %1931 = vmatpush1.msra.mxu0 %v1886
      %1932 = vmatprep.subr.mxu0 %v1891
      %1933 = vmatpush1.msra.mxu0 %v1890
      %1934 = vmatprep.subr.mxu0 %v1920
      %1935 = vmatpush1.msra.mxu0 %v1918
      %1936 = vmatprep.subr.mxu0 0.0
      %1937 = vmatpush1.msra.mxu0 0.0
      %1938 = vmatprep.subr.mxu0 0.0
      %1939 = vmatpush1.msra.mxu0 0.0
      %1940 = vmatprep.subr.mxu0 0.0
      %1941 = vmatpush1.msra.mxu0 0.0
      %1942 = vmatprep.subr.mxu0 0.0
      %1943 = vmatpush1.msra.mxu0 0.0
      %1944 = vmatprep.subr.mxu0 0.0
      %1945 = vmatpush1.msra.mxu0 0.0
      %1946 = vmatprep.subr.mxu0 0.0
      %1947 = vmatpush1.msra.mxu0 0.0
      %1948 = vmatprep.subr.mxu0 0.0
      %1949 = vmatpush1.msra.mxu0 0.0
      %1950 = vmatprep.subr.mxu0 0.0
      %1951 = vmatpush1.msra.mxu0 0.0
      %1952 = vmatprep.subr.mxu0 0.0
      %1953 = vmatpush1.msra.mxu0 0.0
      %1954 = vmatprep.subr.mxu0 0.0
      %1955 = vmatpush1.msra.mxu0 0.0
      %1956 = vmatprep.subr.mxu0 0.0
      %1957 = vmatpush1.msra.mxu0 0.0
      %1958 = vmatprep.subr.mxu0 0.0
      %1959 = vmatpush1.msra.mxu0 0.0
      %1960 = vmatprep.subr.mxu0 0.0
      %1961 = vmatpush1.msra.mxu0 0.0
      %1962 = vmatprep.subr.mxu0 0.0
      %1963 = vmatpush1.msra.mxu0 0.0
      %1964 = vmatprep.subr.mxu0 0.0
      %1965 = vmatpush1.msra.mxu0 0.0
      %1966 = vmatprep.subr.mxu0 0.0
      %1967 = vmatpush1.msra.mxu0 0.0
      %1968 = vmatprep.subr.mxu0 0.0
      %1969 = vmatpush1.msra.mxu0 0.0
      %1970 = vmatprep.subr.mxu0 0.0
      %1971 = vmatpush1.msra.mxu0 0.0
      %1972 = vmatprep.subr.mxu0 0.0
      %1973 = vmatpush1.msra.mxu0 0.0
      %1974 = vmatprep.subr.mxu0 0.0
      %1975 = vmatpush1.msra.mxu0 0.0
      %1976 = vmatprep.subr.mxu0 0.0
      %1977 = vmatpush1.msra.mxu0 0.0
      %1978 = vmatprep.subr.mxu0 0.0
      %1979 = vmatpush1.msra.mxu0 0.0
      %1980 = vmatprep.subr.mxu0 0.0
      %1981 = vmatpush1.msra.mxu0 0.0
      %1982 = vmatprep.subr.mxu0 0.0
      %1983 = vmatpush1.msra.mxu0 0.0
      %1984 = vmatprep.subr.mxu0 0.0
      %1985 = vmatpush1.msra.mxu0 0.0
      %1986 = vmatprep.subr.mxu0 0.0
      %1987 = vmatpush1.msra.mxu0 0.0
      %1988 = vmatprep.subr.mxu0 0.0
      %1989 = vmatpush1.msra.mxu0 0.0
      %1990 = vmatprep.mubr.f32.mxu0 0.0
      %1991 = vmatmul.mubr.f32.gmra.mrb[0].mxu0 %v1916
      %v1992 = vpop.f32.mrb[0].mxu0
      %v1993 = vadd.f32 %v1806, %v1992
      %v1994 = vpop.f32.mrb[0].mxu0
      %v1995 = vadd.f32 %v1806, %v1994
      %1996 = vdwg.mxu0
      %1997 = vmatprep.subr.mxu0 %v1881
      %1998 = vmatpush1.msra.mxu0 %v1880
      %1999 = vmatprep.subr.mxu0 %v1885
      %2000 = vmatpush1.msra.mxu0 %v1884
      %2001 = vmatprep.subr.mxu0 %v1889
      %2002 = vmatpush1.msra.mxu0 %v1888
      %2003 = vmatprep.subr.mxu0 %v1893
      %2004 = vmatpush1.msra.mxu0 %v1892
      %2005 = vmatprep.subr.mxu0 %v1924
      %2006 = vmatpush1.msra.mxu0 %v1922
      %2007 = vmatprep.subr.mxu0 0.0
      %2008 = vmatpush1.msra.mxu0 0.0
      %2009 = vmatprep.subr.mxu0 0.0
      %2010 = vmatpush1.msra.mxu0 0.0
      %2011 = vmatprep.subr.mxu0 0.0
      %2012 = vmatpush1.msra.mxu0 0.0
      %2013 = vmatprep.subr.mxu0 0.0
      %2014 = vmatpush1.msra.mxu0 0.0
      %2015 = vmatprep.subr.mxu0 0.0
      %2016 = vmatpush1.msra.mxu0 0.0
      %2017 = vmatprep.subr.mxu0 0.0
      %2018 = vmatpush1.msra.mxu0 0.0
      %2019 = vmatprep.subr.mxu0 0.0
      %2020 = vmatpush1.msra.mxu0 0.0
      %2021 = vmatprep.subr.mxu0 0.0
      %2022 = vmatpush1.msra.mxu0 0.0
      %2023 = vmatprep.subr.mxu0 0.0
      %2024 = vmatpush1.msra.mxu0 0.0
      %2025 = vmatprep.subr.mxu0 0.0
      %2026 = vmatpush1.msra.mxu0 0.0
      %2027 = vmatprep.subr.mxu0 0.0
      %2028 = vmatpush1.msra.mxu0 0.0
      %2029 = vmatprep.subr.mxu0 0.0
      %2030 = vmatpush1.msra.mxu0 0.0
      %2031 = vmatprep.subr.mxu0 0.0
      %2032 = vmatpush1.msra.mxu0 0.0
      %2033 = vmatprep.subr.mxu0 0.0
      %2034 = vmatpush1.msra.mxu0 0.0
      %2035 = vmatprep.subr.mxu0 0.0
      %2036 = vmatpush1.msra.mxu0 0.0
      %2037 = vmatprep.subr.mxu0 0.0
      %2038 = vmatpush1.msra.mxu0 0.0
      %2039 = vmatprep.subr.mxu0 0.0
      %2040 = vmatpush1.msra.mxu0 0.0
      %2041 = vmatprep.subr.mxu0 0.0
      %2042 = vmatpush1.msra.mxu0 0.0
      %2043 = vmatprep.subr.mxu0 0.0
      %2044 = vmatpush1.msra.mxu0 0.0
      %2045 = vmatprep.subr.mxu0 0.0
      %2046 = vmatpush1.msra.mxu0 0.0
      %2047 = vmatprep.subr.mxu0 0.0
      %2048 = vmatpush1.msra.mxu0 0.0
      %2049 = vmatprep.subr.mxu0 0.0
      %2050 = vmatpush1.msra.mxu0 0.0
      %2051 = vmatprep.subr.mxu0 0.0
      %2052 = vmatpush1.msra.mxu0 0.0
      %2053 = vmatprep.subr.mxu0 0.0
      %2054 = vmatpush1.msra.mxu0 0.0
      %2055 = vmatprep.subr.mxu0 0.0
      %2056 = vmatpush1.msra.mxu0 0.0
      %2057 = vmatprep.subr.mxu0 0.0
      %2058 = vmatpush1.msra.mxu0 0.0
      %2059 = vmatprep.subr.mxu0 0.0
      %2060 = vmatpush1.msra.mxu0 0.0
      %2061 = vmatprep.mubr.f32.mxu0 0.0
      %2062 = vmatmul.mubr.f32.gmra.mrb[0].mxu0 %v1916
      %v2063 = vpop.f32.mrb[0].mxu0
      %v2064 = vadd.f32 %v1806, %v2063
      %v2065 = vpop.f32.mrb[0].mxu0
      %v2066 = vadd.f32 %v1806, %v2065
      %2067 = vdwg.mxu0
      %vm2068 = vcmp.ge.f32.partialorder %v1993, 0.0
      %vm2069 = vcmp.ge.f32.partialorder %v1995, 0.0
      %vm2070 = vcmp.ge.f32.partialorder %v2064, 0.0
      %vm2071 = vcmp.ge.f32.partialorder %v2066, 0.0
      %v2072 = vmul.f32 %v1993, 0.1
      %v2073 = vmul.f32 %v1995, 0.1
      %v2074 = vmul.f32 %v2064, 0.1
      %v2075 = vmul.f32 %v2066, 0.1
      %v2076 = vsel %vm2068, %v1993, %v2072
      %v2077 = vsel %vm2069, %v1995, %v2073
      %v2078 = vsel %vm2070, %v2064, %v2074
      %v2079 = vsel %vm2071, %v2066, %v2075
      %v2080 = vmul.f32 %v2076, %v1579
      %v2081 = vmul.f32 %v2077, %v1583
      %v2082 = vmul.f32 %v2078, %v1587
      %v2083 = vmul.f32 %v2079, %v1591
      %2088 = vrot.lane.b32.xlu0 %v2080, 69
      %v2089 = vpop.permute.xlu0 %2088
      %2090 = vrot.lane.b32.xlu0 %v2081, 69
      %v2091 = vpop.permute.xlu0 %2090
      %2092 = vrot.lane.b32.xlu0 %v2082, 69
      %v2093 = vpop.permute.xlu0 %2092
      %2094 = vrot.lane.b32.xlu0 %v2083, 69
      %v2095 = vpop.permute.xlu0 %2094
      %v2096 = vsel %vm827, %v2089, %v2091
      %v2097 = vsel %vm827, %v2091, %v2093
      %v2098 = vsel %vm827, %v2093, %v2095
      %v2104 = vsel %vm827, 0.0, %v2089
      %v2105 = vsel %vm827, %v2095, 0.0
      %v2108 = vrot.slane %v2104, 4
      %v2109 = vrot.slane %v2096, 4
      %v2110 = vrot.slane %v2097, 4
      %v2111 = vrot.slane %v2098, 4
      %v2112 = vrot.slane %v2105, 4
      %2113 = vrot.lane.b32.xlu0 %v2108, 127
      %v2114 = vpop.permute.xlu0 %2113
      %2115 = vrot.lane.b32.xlu0 %v2109, 127
      %v2116 = vpop.permute.xlu0 %2115
      %2117 = vrot.lane.b32.xlu0 %v2110, 127
      %v2118 = vpop.permute.xlu0 %2117
      %2119 = vrot.lane.b32.xlu0 %v2111, 127
      %v2120 = vpop.permute.xlu0 %2119
      %2121 = vrot.lane.b32.xlu0 %v2112, 127
      %v2122 = vpop.permute.xlu0 %2121
      %v2123 = vsel %vm866, %v2114, %v2116
      %v2124 = vsel %vm866, %v2116, %v2118
      %v2125 = vsel %vm866, %v2118, %v2120
      %v2126 = vsel %vm866, %v2120, %v2122
      %2132 = vrot.lane.b32.xlu0 %v2104, 126
      %v2133 = vpop.permute.xlu0 %2132
      %2134 = vrot.lane.b32.xlu0 %v2096, 126
      %v2135 = vpop.permute.xlu0 %2134
      %2136 = vrot.lane.b32.xlu0 %v2097, 126
      %v2137 = vpop.permute.xlu0 %2136
      %2138 = vrot.lane.b32.xlu0 %v2098, 126
      %v2139 = vpop.permute.xlu0 %2138
      %2140 = vrot.lane.b32.xlu0 %v2105, 126
      %v2141 = vpop.permute.xlu0 %2140
      %v2142 = vsel %vm895, %v2133, %v2135
      %v2143 = vsel %vm895, %v2135, %v2137
      %v2144 = vsel %vm895, %v2137, %v2139
      %v2145 = vsel %vm895, %v2139, %v2141
      %2151 = vrot.lane.b32.xlu0 %v2108, 125
      %v2152 = vpop.permute.xlu0 %2151
      %2153 = vrot.lane.b32.xlu0 %v2109, 125
      %v2154 = vpop.permute.xlu0 %2153
      %2155 = vrot.lane.b32.xlu0 %v2110, 125
      %v2156 = vpop.permute.xlu0 %2155
      %2157 = vrot.lane.b32.xlu0 %v2111, 125
      %v2158 = vpop.permute.xlu0 %2157
      %2159 = vrot.lane.b32.xlu0 %v2112, 125
      %v2160 = vpop.permute.xlu0 %2159
      %vm2161 = vcmask 1022976
      %v2162 = vsel %vm2161, %v2152, %v2154
      %v2163 = vsel %vm2161, %v2154, %v2156
      %v2164 = vsel %vm2161, %v2156, %v2158
      %v2165 = vsel %vm2161, %v2158, %v2160
      %2171 = vrot.lane.b32.xlu0 %v2104, 124
      %v2172 = vpop.permute.xlu0 %2171
      %2173 = vrot.lane.b32.xlu0 %v2096, 124
      %v2174 = vpop.permute.xlu0 %2173
      %2175 = vrot.lane.b32.xlu0 %v2097, 124
      %v2176 = vpop.permute.xlu0 %2175
      %2177 = vrot.lane.b32.xlu0 %v2098, 124
      %v2178 = vpop.permute.xlu0 %2177
      %2179 = vrot.lane.b32.xlu0 %v2105, 124
      %v2180 = vpop.permute.xlu0 %2179
      %vm2181 = vcmask 1014784
      %v2182 = vsel %vm2181, %v2172, %v2174
      %v2183 = vsel %vm2181, %v2174, %v2176
      %v2184 = vsel %vm2181, %v2176, %v2178
      %v2185 = vsel %vm2181, %v2178, %v2180
      %2191 = vrot.lane.b32.xlu0 %v2108, 106
      %v2192 = vpop.permute.xlu0 %2191
      %2193 = vrot.lane.b32.xlu0 %v2109, 106
      %v2194 = vpop.permute.xlu0 %2193
      %2195 = vrot.lane.b32.xlu0 %v2110, 106
      %v2196 = vpop.permute.xlu0 %2195
      %2197 = vrot.lane.b32.xlu0 %v2111, 106
      %v2198 = vpop.permute.xlu0 %2197
      %2199 = vrot.lane.b32.xlu0 %v2112, 106
      %v2200 = vpop.permute.xlu0 %2199
      %v2201 = vsel %vm924, %v2192, %v2194
      %v2202 = vsel %vm924, %v2194, %v2196
      %v2203 = vsel %vm924, %v2196, %v2198
      %v2204 = vsel %vm924, %v2198, %v2200
      %2210 = vrot.lane.b32.xlu0 %v2104, 105
      %v2211 = vpop.permute.xlu0 %2210
      %2212 = vrot.lane.b32.xlu0 %v2096, 105
      %v2213 = vpop.permute.xlu0 %2212
      %2214 = vrot.lane.b32.xlu0 %v2097, 105
      %v2215 = vpop.permute.xlu0 %2214
      %2216 = vrot.lane.b32.xlu0 %v2098, 105
      %v2217 = vpop.permute.xlu0 %2216
      %2218 = vrot.lane.b32.xlu0 %v2105, 105
      %v2219 = vpop.permute.xlu0 %2218
      %v2220 = vsel %vm953, %v2211, %v2213
      %v2221 = vsel %vm953, %v2213, %v2215
      %v2222 = vsel %vm953, %v2215, %v2217
      %v2223 = vsel %vm953, %v2217, %v2219
      %2229 = vrot.lane.b32.xlu0 %v2108, 104
      %v2230 = vpop.permute.xlu0 %2229
      %2231 = vrot.lane.b32.xlu0 %v2109, 104
      %v2232 = vpop.permute.xlu0 %2231
      %2233 = vrot.lane.b32.xlu0 %v2110, 104
      %v2234 = vpop.permute.xlu0 %2233
      %2235 = vrot.lane.b32.xlu0 %v2111, 104
      %v2236 = vpop.permute.xlu0 %2235
      %2237 = vrot.lane.b32.xlu0 %v2112, 104
      %v2238 = vpop.permute.xlu0 %2237
      %v2239 = vsel %vm982, %v2230, %v2232
      %v2240 = vsel %vm982, %v2232, %v2234
      %v2241 = vsel %vm982, %v2234, %v2236
      %v2242 = vsel %vm982, %v2236, %v2238
      %2248 = vrot.lane.b32.xlu0 %v2104, 103
      %v2249 = vpop.permute.xlu0 %2248
      %2250 = vrot.lane.b32.xlu0 %v2096, 103
      %v2251 = vpop.permute.xlu0 %2250
      %2252 = vrot.lane.b32.xlu0 %v2097, 103
      %v2253 = vpop.permute.xlu0 %2252
      %2254 = vrot.lane.b32.xlu0 %v2098, 103
      %v2255 = vpop.permute.xlu0 %2254
      %2256 = vrot.lane.b32.xlu0 %v2105, 103
      %v2257 = vpop.permute.xlu0 %2256
      %vm2258 = vcmask 842752
      %v2259 = vsel %vm2258, %v2249, %v2251
      %v2260 = vsel %vm2258, %v2251, %v2253
      %v2261 = vsel %vm2258, %v2253, %v2255
      %v2262 = vsel %vm2258, %v2255, %v2257
      %2268 = vrot.lane.b32.xlu0 %v2108, 102
      %v2269 = vpop.permute.xlu0 %2268
      %2270 = vrot.lane.b32.xlu0 %v2109, 102
      %v2271 = vpop.permute.xlu0 %2270
      %2272 = vrot.lane.b32.xlu0 %v2110, 102
      %v2273 = vpop.permute.xlu0 %2272
      %2274 = vrot.lane.b32.xlu0 %v2111, 102
      %v2275 = vpop.permute.xlu0 %2274
      %2276 = vrot.lane.b32.xlu0 %v2112, 102
      %v2277 = vpop.permute.xlu0 %2276
      %vm2278 = vcmask 834560
      %v2279 = vsel %vm2278, %v2269, %v2271
      %v2280 = vsel %vm2278, %v2271, %v2273
      %v2281 = vsel %vm2278, %v2273, %v2275
      %v2282 = vsel %vm2278, %v2275, %v2277
      %2288 = vrot.lane.b32.xlu0 %v2104, 84
      %v2289 = vpop.permute.xlu0 %2288
      %2290 = vrot.lane.b32.xlu0 %v2096, 84
      %v2291 = vpop.permute.xlu0 %2290
      %2292 = vrot.lane.b32.xlu0 %v2097, 84
      %v2293 = vpop.permute.xlu0 %2292
      %2294 = vrot.lane.b32.xlu0 %v2098, 84
      %v2295 = vpop.permute.xlu0 %2294
      %2296 = vrot.lane.b32.xlu0 %v2105, 84
      %v2297 = vpop.permute.xlu0 %2296
      %v2298 = vsel %vm1011, %v2289, %v2291
      %v2299 = vsel %vm1011, %v2291, %v2293
      %v2300 = vsel %vm1011, %v2293, %v2295
      %v2301 = vsel %vm1011, %v2295, %v2297
      %2307 = vrot.lane.b32.xlu0 %v2108, 83
      %v2308 = vpop.permute.xlu0 %2307
      %2309 = vrot.lane.b32.xlu0 %v2109, 83
      %v2310 = vpop.permute.xlu0 %2309
      %2311 = vrot.lane.b32.xlu0 %v2110, 83
      %v2312 = vpop.permute.xlu0 %2311
      %2313 = vrot.lane.b32.xlu0 %v2111, 83
      %v2314 = vpop.permute.xlu0 %2313
      %2315 = vrot.lane.b32.xlu0 %v2112, 83
      %v2316 = vpop.permute.xlu0 %2315
      %v2317 = vsel %vm1040, %v2308, %v2310
      %v2318 = vsel %vm1040, %v2310, %v2312
      %v2319 = vsel %vm1040, %v2312, %v2314
      %v2320 = vsel %vm1040, %v2314, %v2316
      %2326 = vrot.lane.b32.xlu0 %v2104, 82
      %v2327 = vpop.permute.xlu0 %2326
      %2328 = vrot.lane.b32.xlu0 %v2096, 82
      %v2329 = vpop.permute.xlu0 %2328
      %2330 = vrot.lane.b32.xlu0 %v2097, 82
      %v2331 = vpop.permute.xlu0 %2330
      %2332 = vrot.lane.b32.xlu0 %v2098, 82
      %v2333 = vpop.permute.xlu0 %2332
      %2334 = vrot.lane.b32.xlu0 %v2105, 82
      %v2335 = vpop.permute.xlu0 %2334
      %v2336 = vsel %vm1069, %v2327, %v2329
      %v2337 = vsel %vm1069, %v2329, %v2331
      %v2338 = vsel %vm1069, %v2331, %v2333
      %v2339 = vsel %vm1069, %v2333, %v2335
      %2345 = vrot.lane.b32.xlu0 %v2108, 81
      %v2346 = vpop.permute.xlu0 %2345
      %2347 = vrot.lane.b32.xlu0 %v2109, 81
      %v2348 = vpop.permute.xlu0 %2347
      %2349 = vrot.lane.b32.xlu0 %v2110, 81
      %v2350 = vpop.permute.xlu0 %2349
      %2351 = vrot.lane.b32.xlu0 %v2111, 81
      %v2352 = vpop.permute.xlu0 %2351
      %2353 = vrot.lane.b32.xlu0 %v2112, 81
      %v2354 = vpop.permute.xlu0 %2353
      %vm2355 = vcmask 662528
      %v2356 = vsel %vm2355, %v2346, %v2348
      %v2357 = vsel %vm2355, %v2348, %v2350
      %v2358 = vsel %vm2355, %v2350, %v2352
      %v2359 = vsel %vm2355, %v2352, %v2354
      %2365 = vrot.lane.b32.xlu0 %v2104, 80
      %v2366 = vpop.permute.xlu0 %2365
      %2367 = vrot.lane.b32.xlu0 %v2096, 80
      %v2368 = vpop.permute.xlu0 %2367
      %2369 = vrot.lane.b32.xlu0 %v2097, 80
      %v2370 = vpop.permute.xlu0 %2369
      %2371 = vrot.lane.b32.xlu0 %v2098, 80
      %v2372 = vpop.permute.xlu0 %2371
      %2373 = vrot.lane.b32.xlu0 %v2105, 80
      %v2374 = vpop.permute.xlu0 %2373
      %vm2375 = vcmask 654336
      %v2376 = vsel %vm2375, %v2366, %v2368
      %v2377 = vsel %vm2375, %v2368, %v2370
      %v2378 = vsel %vm2375, %v2370, %v2372
      %v2379 = vsel %vm2375, %v2372, %v2374
      %2385 = vrot.lane.b32.xlu0 %v2108, 62
      %v2386 = vpop.permute.xlu0 %2385
      %2387 = vrot.lane.b32.xlu0 %v2109, 62
      %v2388 = vpop.permute.xlu0 %2387
      %2389 = vrot.lane.b32.xlu0 %v2110, 62
      %v2390 = vpop.permute.xlu0 %2389
      %2391 = vrot.lane.b32.xlu0 %v2111, 62
      %v2392 = vpop.permute.xlu0 %2391
      %2393 = vrot.lane.b32.xlu0 %v2112, 62
      %v2394 = vpop.permute.xlu0 %2393
      %vm2395 = vcmask 506880
      %v2396 = vsel %vm2395, %v2386, %v2388
      %v2397 = vsel %vm2395, %v2388, %v2390
      %v2398 = vsel %vm2395, %v2390, %v2392
      %v2399 = vsel %vm2395, %v2392, %v2394
      %v2405 = vsel %vm1780, %v2104, %v2123
      %v2406 = vsel %vm1780, %v2096, %v2124
      %v2407 = vsel %vm1780, %v2097, %v2125
      %v2408 = vsel %vm1780, %v2098, %v2126
      %v2409 = vsel %vm1780, %v2105, %v2122
      %v2410 = vsel %vm1780, %v2142, %v2162
      %v2411 = vsel %vm1780, %v2143, %v2163
      %v2412 = vsel %vm1780, %v2144, %v2164
      %v2413 = vsel %vm1780, %v2145, %v2165
      %v2414 = vsel %vm1780, %v2141, %v2160
      %v2415 = vsel %vm1780, %v2182, %v2201
      %v2416 = vsel %vm1780, %v2183, %v2202
      %v2417 = vsel %vm1780, %v2184, %v2203
      %v2418 = vsel %vm1780, %v2185, %v2204
      %v2419 = vsel %vm1780, %v2180, %v2200
      %v2420 = vsel %vm1780, %v2220, %v2239
      %v2421 = vsel %vm1780, %v2221, %v2240
      %v2422 = vsel %vm1780, %v2222, %v2241
      %v2423 = vsel %vm1780, %v2223, %v2242
      %v2424 = vsel %vm1780, %v2219, %v2238
      %v2425 = vsel %vm1780, %v2259, %v2279
      %v2426 = vsel %vm1780, %v2260, %v2280
      %v2427 = vsel %vm1780, %v2261, %v2281
      %v2428 = vsel %vm1780, %v2262, %v2282
      %v2429 = vsel %vm1780, %v2257, %v2277
      %v2430 = vsel %vm1780, %v2298, %v2317
      %v2431 = vsel %vm1780, %v2299, %v2318
      %v2432 = vsel %vm1780, %v2300, %v2319
      %v2433 = vsel %vm1780, %v2301, %v2320
      %v2434 = vsel %vm1780, %v2297, %v2316
      %v2435 = vsel %vm1780, %v2336, %v2356
      %v2436 = vsel %vm1780, %v2337, %v2357
      %v2437 = vsel %vm1780, %v2338, %v2358
      %v2438 = vsel %vm1780, %v2339, %v2359
      %v2439 = vsel %vm1780, %v2335, %v2354
      %v2440 = vsel %vm1780, %v2376, %v2396
      %v2441 = vsel %vm1780, %v2377, %v2397
      %v2442 = vsel %vm1780, %v2378, %v2398
      %v2443 = vsel %vm1780, %v2379, %v2399
      %v2444 = vsel %vm1780, %v2374, %v2394
      %2445 = vrot.lane.b32.xlu0 %v2104, 107
      %v2446 = vpop.permute.xlu0 %2445
      %2447 = vrot.lane.b32.xlu0 %v2096, 107
      %v2448 = vpop.permute.xlu0 %2447
      %2449 = vrot.lane.b32.xlu0 %v2097, 107
      %v2450 = vpop.permute.xlu0 %2449
      %2451 = vrot.lane.b32.xlu0 %v2098, 107
      %v2452 = vpop.permute.xlu0 %2451
      %2453 = vrot.lane.b32.xlu0 %v2105, 107
      %v2454 = vpop.permute.xlu0 %2453
      %vm2455 = vcmask 875520
      %v2456 = vsel %vm2455, %v2446, %v2448
      %v2457 = vsel %vm2455, %v2448, %v2450
      %v2458 = vsel %vm2455, %v2450, %v2452
      %v2459 = vsel %vm2455, %v2452, %v2454
      %v2465 = vsel %vm1780, %v2456, %v2201
      %v2466 = vsel %vm1780, %v2457, %v2202
      %v2467 = vsel %vm1780, %v2458, %v2203
      %v2468 = vsel %vm1780, %v2459, %v2204
      %v2469 = vsel %vm1780, %v2454, %v2200
      %2490 = vrot.lane.b32.xlu0 %v2405, 61
      %v2491 = vpop.permute.xlu0 %2490
      %2492 = vrot.lane.b32.xlu0 %v2406, 61
      %v2493 = vpop.permute.xlu0 %2492
      %2494 = vrot.lane.b32.xlu0 %v2407, 61
      %v2495 = vpop.permute.xlu0 %2494
      %2496 = vrot.lane.b32.xlu0 %v2408, 61
      %v2497 = vpop.permute.xlu0 %2496
      %2498 = vrot.lane.b32.xlu0 %v2409, 61
      %v2499 = vpop.permute.xlu0 %2498
      %2500 = vrot.lane.b32.xlu0 %v2410, 61
      %v2501 = vpop.permute.xlu0 %2500
      %2502 = vrot.lane.b32.xlu0 %v2411, 61
      %v2503 = vpop.permute.xlu0 %2502
      %2504 = vrot.lane.b32.xlu0 %v2412, 61
      %v2505 = vpop.permute.xlu0 %2504
      %2506 = vrot.lane.b32.xlu0 %v2413, 61
      %v2507 = vpop.permute.xlu0 %2506
      %2508 = vrot.lane.b32.xlu0 %v2414, 61
      %v2509 = vpop.permute.xlu0 %2508
      %2510 = vrot.lane.b32.xlu0 %v2465, 61
      %v2511 = vpop.permute.xlu0 %2510
      %2512 = vrot.lane.b32.xlu0 %v2466, 61
      %v2513 = vpop.permute.xlu0 %2512
      %2514 = vrot.lane.b32.xlu0 %v2467, 61
      %v2515 = vpop.permute.xlu0 %2514
      %2516 = vrot.lane.b32.xlu0 %v2468, 61
      %v2517 = vpop.permute.xlu0 %2516
      %2518 = vrot.lane.b32.xlu0 %v2469, 61
      %v2519 = vpop.permute.xlu0 %2518
      %2520 = vrot.lane.b32.xlu0 %v2420, 61
      %v2521 = vpop.permute.xlu0 %2520
      %2522 = vrot.lane.b32.xlu0 %v2421, 61
      %v2523 = vpop.permute.xlu0 %2522
      %2524 = vrot.lane.b32.xlu0 %v2422, 61
      %v2525 = vpop.permute.xlu0 %2524
      %2526 = vrot.lane.b32.xlu0 %v2423, 61
      %v2527 = vpop.permute.xlu0 %2526
      %2528 = vrot.lane.b32.xlu0 %v2424, 61
      %v2529 = vpop.permute.xlu0 %2528
      %2530 = vrot.lane.b32.xlu0 %v2259, 61
      %v2531 = vpop.permute.xlu0 %2530
      %2532 = vrot.lane.b32.xlu0 %v2260, 61
      %v2533 = vpop.permute.xlu0 %2532
      %2534 = vrot.lane.b32.xlu0 %v2261, 61
      %v2535 = vpop.permute.xlu0 %2534
      %2536 = vrot.lane.b32.xlu0 %v2262, 61
      %v2537 = vpop.permute.xlu0 %2536
      %2538 = vrot.lane.b32.xlu0 %v2257, 61
      %v2539 = vpop.permute.xlu0 %2538
      %vm2540 = vcmask 498688
      %v2541 = vsel %vm2540, %v2491, %v2493
      %v2542 = vsel %vm2540, %v2493, %v2495
      %v2543 = vsel %vm2540, %v2495, %v2497
      %v2544 = vsel %vm2540, %v2497, %v2499
      %v2545 = vsel %vm2540, %v2501, %v2503
      %v2546 = vsel %vm2540, %v2503, %v2505
      %v2547 = vsel %vm2540, %v2505, %v2507
      %v2548 = vsel %vm2540, %v2507, %v2509
      %v2549 = vsel %vm2540, %v2511, %v2513
      %v2550 = vsel %vm2540, %v2513, %v2515
      %v2551 = vsel %vm2540, %v2515, %v2517
      %v2552 = vsel %vm2540, %v2517, %v2519
      %v2553 = vsel %vm2540, %v2521, %v2523
      %v2554 = vsel %vm2540, %v2523, %v2525
      %v2555 = vsel %vm2540, %v2525, %v2527
      %v2556 = vsel %vm2540, %v2527, %v2529
      %v2557 = vsel %vm2540, %v2531, %v2533
      %v2558 = vsel %vm2540, %v2533, %v2535
      %v2559 = vsel %vm2540, %v2535, %v2537
      %v2560 = vsel %vm2540, %v2537, %v2539
      %v2561 = vld [vmem:[%s6] sm:$0xf]
      %v2562 = vld [vmem:[%s7] sm:$0xf]
      %2564 = vset.pattern.permute.xlu0 0
      %2565 = vperm.xlu0 %2564, %v2562
      %v2566 = vpop.permute.xlu0 %2565
      %2593 = vrot.lane.b32.xlu0 %v2405, 105
      %v2594 = vpop.permute.xlu0 %2593
      %2595 = vrot.lane.b32.xlu0 %v2406, 105
      %v2596 = vpop.permute.xlu0 %2595
      %2597 = vrot.lane.b32.xlu0 %v2407, 105
      %v2598 = vpop.permute.xlu0 %2597
      %2599 = vrot.lane.b32.xlu0 %v2408, 105
      %v2600 = vpop.permute.xlu0 %2599
      %2601 = vrot.lane.b32.xlu0 %v2409, 105
      %v2602 = vpop.permute.xlu0 %2601
      %2603 = vrot.lane.b32.xlu0 %v2410, 105
      %v2604 = vpop.permute.xlu0 %2603
      %2605 = vrot.lane.b32.xlu0 %v2411, 105
      %v2606 = vpop.permute.xlu0 %2605
      %2607 = vrot.lane.b32.xlu0 %v2412, 105
      %v2608 = vpop.permute.xlu0 %2607
      %2609 = vrot.lane.b32.xlu0 %v2413, 105
      %v2610 = vpop.permute.xlu0 %2609
      %2611 = vrot.lane.b32.xlu0 %v2414, 105
      %v2612 = vpop.permute.xlu0 %2611
      %2613 = vrot.lane.b32.xlu0 %v2415, 105
      %v2614 = vpop.permute.xlu0 %2613
      %2615 = vrot.lane.b32.xlu0 %v2416, 105
      %v2616 = vpop.permute.xlu0 %2615
      %2617 = vrot.lane.b32.xlu0 %v2417, 105
      %v2618 = vpop.permute.xlu0 %2617
      %2619 = vrot.lane.b32.xlu0 %v2418, 105
      %v2620 = vpop.permute.xlu0 %2619
      %2621 = vrot.lane.b32.xlu0 %v2419, 105
      %v2622 = vpop.permute.xlu0 %2621
      %2623 = vrot.lane.b32.xlu0 %v2420, 105
      %v2624 = vpop.permute.xlu0 %2623
      %2625 = vrot.lane.b32.xlu0 %v2421, 105
      %v2626 = vpop.permute.xlu0 %2625
      %2627 = vrot.lane.b32.xlu0 %v2422, 105
      %v2628 = vpop.permute.xlu0 %2627
      %2629 = vrot.lane.b32.xlu0 %v2423, 105
      %v2630 = vpop.permute.xlu0 %2629
      %2631 = vrot.lane.b32.xlu0 %v2424, 105
      %v2632 = vpop.permute.xlu0 %2631
      %2633 = vrot.lane.b32.xlu0 %v2425, 105
      %v2634 = vpop.permute.xlu0 %2633
      %2635 = vrot.lane.b32.xlu0 %v2426, 105
      %v2636 = vpop.permute.xlu0 %2635
      %2637 = vrot.lane.b32.xlu0 %v2427, 105
      %v2638 = vpop.permute.xlu0 %2637
      %2639 = vrot.lane.b32.xlu0 %v2428, 105
      %v2640 = vpop.permute.xlu0 %2639
      %2641 = vrot.lane.b32.xlu0 %v2429, 105
      %v2642 = vpop.permute.xlu0 %2641
      %2643 = vrot.lane.b32.xlu0 %v2430, 105
      %v2644 = vpop.permute.xlu0 %2643
      %2645 = vrot.lane.b32.xlu0 %v2431, 105
      %v2646 = vpop.permute.xlu0 %2645
      %2647 = vrot.lane.b32.xlu0 %v2432, 105
      %v2648 = vpop.permute.xlu0 %2647
      %2649 = vrot.lane.b32.xlu0 %v2433, 105
      %v2650 = vpop.permute.xlu0 %2649
      %2651 = vrot.lane.b32.xlu0 %v2434, 105
      %v2652 = vpop.permute.xlu0 %2651
      %2653 = vrot.lane.b32.xlu0 %v2435, 105
      %v2654 = vpop.permute.xlu0 %2653
      %2655 = vrot.lane.b32.xlu0 %v2436, 105
      %v2656 = vpop.permute.xlu0 %2655
      %2657 = vrot.lane.b32.xlu0 %v2437, 105
      %v2658 = vpop.permute.xlu0 %2657
      %2659 = vrot.lane.b32.xlu0 %v2438, 105
      %v2660 = vpop.permute.xlu0 %2659
      %2661 = vrot.lane.b32.xlu0 %v2439, 105
      %v2662 = vpop.permute.xlu0 %2661
      %2663 = vrot.lane.b32.xlu0 %v2440, 105
      %v2664 = vpop.permute.xlu0 %2663
      %2665 = vrot.lane.b32.xlu0 %v2441, 105
      %v2666 = vpop.permute.xlu0 %2665
      %2667 = vrot.lane.b32.xlu0 %v2442, 105
      %v2668 = vpop.permute.xlu0 %2667
      %2669 = vrot.lane.b32.xlu0 %v2443, 105
      %v2670 = vpop.permute.xlu0 %2669
      %2671 = vrot.lane.b32.xlu0 %v2444, 105
      %v2672 = vpop.permute.xlu0 %2671
      %2673 = vrot.lane.b32.xlu0 %v2541, 105
      %v2674 = vpop.permute.xlu0 %2673
      %2675 = vrot.lane.b32.xlu0 %v2542, 105
      %v2676 = vpop.permute.xlu0 %2675
      %2677 = vrot.lane.b32.xlu0 %v2543, 105
      %v2678 = vpop.permute.xlu0 %2677
      %2679 = vrot.lane.b32.xlu0 %v2544, 105
      %v2680 = vpop.permute.xlu0 %2679
      %2681 = vrot.lane.b32.xlu0 %v2499, 105
      %v2682 = vpop.permute.xlu0 %2681
      %2683 = vrot.lane.b32.xlu0 %v2545, 105
      %v2684 = vpop.permute.xlu0 %2683
      %2685 = vrot.lane.b32.xlu0 %v2546, 105
      %v2686 = vpop.permute.xlu0 %2685
      %2687 = vrot.lane.b32.xlu0 %v2547, 105
      %v2688 = vpop.permute.xlu0 %2687
      %2689 = vrot.lane.b32.xlu0 %v2548, 105
      %v2690 = vpop.permute.xlu0 %2689
      %2691 = vrot.lane.b32.xlu0 %v2509, 105
      %v2692 = vpop.permute.xlu0 %2691
      %2693 = vrot.lane.b32.xlu0 %v2549, 105
      %v2694 = vpop.permute.xlu0 %2693
      %2695 = vrot.lane.b32.xlu0 %v2550, 105
      %v2696 = vpop.permute.xlu0 %2695
      %2697 = vrot.lane.b32.xlu0 %v2551, 105
      %v2698 = vpop.permute.xlu0 %2697
      %2699 = vrot.lane.b32.xlu0 %v2552, 105
      %v2700 = vpop.permute.xlu0 %2699
      %2701 = vrot.lane.b32.xlu0 %v2519, 105
      %v2702 = vpop.permute.xlu0 %2701
      %2703 = vrot.lane.b32.xlu0 %v2553, 105
      %v2704 = vpop.permute.xlu0 %2703
      %2705 = vrot.lane.b32.xlu0 %v2554, 105
      %v2706 = vpop.permute.xlu0 %2705
      %2707 = vrot.lane.b32.xlu0 %v2555, 105
      %v2708 = vpop.permute.xlu0 %2707
      %2709 = vrot.lane.b32.xlu0 %v2556, 105
      %v2710 = vpop.permute.xlu0 %2709
      %2711 = vrot.lane.b32.xlu0 %v2529, 105
      %v2712 = vpop.permute.xlu0 %2711
      %2713 = vrot.lane.b32.xlu0 %v2557, 105
      %v2714 = vpop.permute.xlu0 %2713
      %2715 = vrot.lane.b32.xlu0 %v2558, 105
      %v2716 = vpop.permute.xlu0 %2715
      %2717 = vrot.lane.b32.xlu0 %v2559, 105
      %v2718 = vpop.permute.xlu0 %2717
      %2719 = vrot.lane.b32.xlu0 %v2560, 105
      %v2720 = vpop.permute.xlu0 %2719
      %2721 = vrot.lane.b32.xlu0 %v2539, 105
      %v2722 = vpop.permute.xlu0 %2721
      %v2723 = vsel %vm953, %v2594, %v2596
      %v2724 = vsel %vm953, %v2596, %v2598
      %v2725 = vsel %vm953, %v2598, %v2600
      %v2726 = vsel %vm953, %v2600, %v2602
      %v2727 = vsel %vm953, %v2604, %v2606
      %v2728 = vsel %vm953, %v2606, %v2608
      %v2729 = vsel %vm953, %v2608, %v2610
      %v2730 = vsel %vm953, %v2610, %v2612
      %v2731 = vsel %vm953, %v2614, %v2616
      %v2732 = vsel %vm953, %v2616, %v2618
      %v2733 = vsel %vm953, %v2618, %v2620
      %v2734 = vsel %vm953, %v2620, %v2622
      %v2735 = vsel %vm953, %v2624, %v2626
      %v2736 = vsel %vm953, %v2626, %v2628
      %v2737 = vsel %vm953, %v2628, %v2630
      %v2738 = vsel %vm953, %v2630, %v2632
      %v2739 = vsel %vm953, %v2634, %v2636
      %v2740 = vsel %vm953, %v2636, %v2638
      %v2741 = vsel %vm953, %v2638, %v2640
      %v2742 = vsel %vm953, %v2640, %v2642
      %v2743 = vsel %vm953, %v2644, %v2646
      %v2744 = vsel %vm953, %v2646, %v2648
      %v2745 = vsel %vm953, %v2648, %v2650
      %v2746 = vsel %vm953, %v2650, %v2652
      %v2747 = vsel %vm953, %v2654, %v2656
      %v2748 = vsel %vm953, %v2656, %v2658
      %v2749 = vsel %vm953, %v2658, %v2660
      %v2750 = vsel %vm953, %v2660, %v2662
      %v2751 = vsel %vm953, %v2664, %v2666
      %v2752 = vsel %vm953, %v2666, %v2668
      %v2753 = vsel %vm953, %v2668, %v2670
      %v2754 = vsel %vm953, %v2670, %v2672
      %v2755 = vsel %vm953, %v2674, %v2676
      %v2756 = vsel %vm953, %v2676, %v2678
      %v2757 = vsel %vm953, %v2678, %v2680
      %v2758 = vsel %vm953, %v2680, %v2682
      %v2759 = vsel %vm953, %v2684, %v2686
      %v2760 = vsel %vm953, %v2686, %v2688
      %v2761 = vsel %vm953, %v2688, %v2690
      %v2762 = vsel %vm953, %v2690, %v2692
      %v2763 = vsel %vm953, %v2694, %v2696
      %v2764 = vsel %vm953, %v2696, %v2698
      %v2765 = vsel %vm953, %v2698, %v2700
      %v2766 = vsel %vm953, %v2700, %v2702
      %v2767 = vsel %vm953, %v2704, %v2706
      %v2768 = vsel %vm953, %v2706, %v2708
      %v2769 = vsel %vm953, %v2708, %v2710
      %v2770 = vsel %vm953, %v2710, %v2712
      %v2771 = vsel %vm953, %v2714, %v2716
      %v2772 = vsel %vm953, %v2716, %v2718
      %v2773 = vsel %vm953, %v2718, %v2720
      %v2774 = vsel %vm953, %v2720, %v2722
      %vm2823 = vcmask 818176
      %v2825 = vsel %vm2823, %v2561, 0
      %v2827 = vsel %vm1780, %v2771, 0
      %v2829 = vsel %vm1780, %v2772, 0
      %v2831 = vsel %vm1780, %v2773, 0
      %v2833 = vsel %vm1780, %v2774, 0
      %2835 = vmatprep.subr.mxu0 %v2724
      %2836 = vmatpush1.msra.mxu0 %v2723
      %2837 = vmatprep.subr.mxu0 %v2728
      %2838 = vmatpush1.msra.mxu0 %v2727
      %2839 = vmatprep.subr.mxu0 %v2732
      %2840 = vmatpush1.msra.mxu0 %v2731
      %2841 = vmatprep.subr.mxu0 %v2736
      %2842 = vmatpush1.msra.mxu0 %v2735
      %2843 = vmatprep.subr.mxu0 %v2740
      %2844 = vmatpush1.msra.mxu0 %v2739
      %2845 = vmatprep.subr.mxu0 %v2744
      %2846 = vmatpush1.msra.mxu0 %v2743
      %2847 = vmatprep.subr.mxu0 %v2748
      %2848 = vmatpush1.msra.mxu0 %v2747
      %2849 = vmatprep.subr.mxu0 %v2752
      %2850 = vmatpush1.msra.mxu0 %v2751
      %2851 = vmatprep.subr.mxu0 %v2756
      %2852 = vmatpush1.msra.mxu0 %v2755
      %2853 = vmatprep.subr.mxu0 %v2760
      %2854 = vmatpush1.msra.mxu0 %v2759
      %2855 = vmatprep.subr.mxu0 %v2764
      %2856 = vmatpush1.msra.mxu0 %v2763
      %2857 = vmatprep.subr.mxu0 %v2768
      %2858 = vmatpush1.msra.mxu0 %v2767
      %2859 = vmatprep.subr.mxu0 %v2829
      %2860 = vmatpush1.msra.mxu0 %v2827
      %2861 = vmatprep.subr.mxu0 0.0
      %2862 = vmatpush1.msra.mxu0 0.0
      %2863 = vmatprep.subr.mxu0 0.0
      %2864 = vmatpush1.msra.mxu0 0.0
      %2865 = vmatprep.subr.mxu0 0.0
      %2866 = vmatpush1.msra.mxu0 0.0
      %2867 = vmatprep.subr.mxu0 0.0
      %2868 = vmatpush1.msra.mxu0 0.0
      %2869 = vmatprep.subr.mxu0 0.0
      %2870 = vmatpush1.msra.mxu0 0.0
      %2871 = vmatprep.subr.mxu0 0.0
      %2872 = vmatpush1.msra.mxu0 0.0
      %2873 = vmatprep.subr.mxu0 0.0
      %2874 = vmatpush1.msra.mxu0 0.0
      %2875 = vmatprep.subr.mxu0 0.0
      %2876 = vmatpush1.msra.mxu0 0.0
      %2877 = vmatprep.subr.mxu0 0.0
      %2878 = vmatpush1.msra.mxu0 0.0
      %2879 = vmatprep.subr.mxu0 0.0
      %2880 = vmatpush1.msra.mxu0 0.0
      %2881 = vmatprep.subr.mxu0 0.0
      %2882 = vmatpush1.msra.mxu0 0.0
      %2883 = vmatprep.subr.mxu0 0.0
      %2884 = vmatpush1.msra.mxu0 0.0
      %2885 = vmatprep.subr.mxu0 0.0
      %2886 = vmatpush1.msra.mxu0 0.0
      %2887 = vmatprep.subr.mxu0 0.0
      %2888 = vmatpush1.msra.mxu0 0.0
      %2889 = vmatprep.subr.mxu0 0.0
      %2890 = vmatpush1.msra.mxu0 0.0
      %2891 = vmatprep.subr.mxu0 0.0
      %2892 = vmatpush1.msra.mxu0 0.0
      %2893 = vmatprep.subr.mxu0 0.0
      %2894 = vmatpush1.msra.mxu0 0.0
      %2895 = vmatprep.subr.mxu0 0.0
      %2896 = vmatpush1.msra.mxu0 0.0
      %2897 = vmatprep.subr.mxu0 0.0
      %2898 = vmatpush1.msra.mxu0 0.0
      %2899 = vmatprep.mubr.f32.mxu0 0.0
      %2900 = vmatmul.mubr.f32.gmra.mrb[0].mxu0 %v2825
      %v2901 = vpop.f32.mrb[0].mxu0
      %v2902 = vadd.f32 %v2566, %v2901
      %v2903 = vpop.f32.mrb[0].mxu0
      %v2904 = vadd.f32 %v2566, %v2903
      %2905 = vdwg.mxu0
      %2906 = vmatprep.subr.mxu0 %v2726
      %2907 = vmatpush1.msra.mxu0 %v2725
      %2908 = vmatprep.subr.mxu0 %v2730
      %2909 = vmatpush1.msra.mxu0 %v2729
      %2910 = vmatprep.subr.mxu0 %v2734
      %2911 = vmatpush1.msra.mxu0 %v2733
      %2912 = vmatprep.subr.mxu0 %v2738
      %2913 = vmatpush1.msra.mxu0 %v2737
      %2914 = vmatprep.subr.mxu0 %v2742
      %2915 = vmatpush1.msra.mxu0 %v2741
      %2916 = vmatprep.subr.mxu0 %v2746
      %2917 = vmatpush1.msra.mxu0 %v2745
      %2918 = vmatprep.subr.mxu0 %v2750
      %2919 = vmatpush1.msra.mxu0 %v2749
      %2920 = vmatprep.subr.mxu0 %v2754
      %2921 = vmatpush1.msra.mxu0 %v2753
      %2922 = vmatprep.subr.mxu0 %v2758
      %2923 = vmatpush1.msra.mxu0 %v2757
      %2924 = vmatprep.subr.mxu0 %v2762
      %2925 = vmatpush1.msra.mxu0 %v2761
      %2926 = vmatprep.subr.mxu0 %v2766
      %2927 = vmatpush1.msra.mxu0 %v2765
      %2928 = vmatprep.subr.mxu0 %v2770
      %2929 = vmatpush1.msra.mxu0 %v2769
      %2930 = vmatprep.subr.mxu0 %v2833
      %2931 = vmatpush1.msra.mxu0 %v2831
      %2932 = vmatprep.subr.mxu0 0.0
      %2933 = vmatpush1.msra.mxu0 0.0
      %2934 = vmatprep.subr.mxu0 0.0
      %2935 = vmatpush1.msra.mxu0 0.0
      %2936 = vmatprep.subr.mxu0 0.0
      %2937 = vmatpush1.msra.mxu0 0.0
      %2938 = vmatprep.subr.mxu0 0.0
      %2939 = vmatpush1.msra.mxu0 0.0
      %2940 = vmatprep.subr.mxu0 0.0
      %2941 = vmatpush1.msra.mxu0 0.0
      %2942 = vmatprep.subr.mxu0 0.0
      %2943 = vmatpush1.msra.mxu0 0.0
      %2944 = vmatprep.subr.mxu0 0.0
      %2945 = vmatpush1.msra.mxu0 0.0
      %2946 = vmatprep.subr.mxu0 0.0
      %2947 = vmatpush1.msra.mxu0 0.0
      %2948 = vmatprep.subr.mxu0 0.0
      %2949 = vmatpush1.msra.mxu0 0.0
      %2950 = vmatprep.subr.mxu0 0.0
      %2951 = vmatpush1.msra.mxu0 0.0
      %2952 = vmatprep.subr.mxu0 0.0
      %2953 = vmatpush1.msra.mxu0 0.0
      %2954 = vmatprep.subr.mxu0 0.0
      %2955 = vmatpush1.msra.mxu0 0.0
      %2956 = vmatprep.subr.mxu0 0.0
      %2957 = vmatpush1.msra.mxu0 0.0
      %2958 = vmatprep.subr.mxu0 0.0
      %2959 = vmatpush1.msra.mxu0 0.0
      %2960 = vmatprep.subr.mxu0 0.0
      %2961 = vmatpush1.msra.mxu0 0.0
      %2962 = vmatprep.subr.mxu0 0.0
      %2963 = vmatpush1.msra.mxu0 0.0
      %2964 = vmatprep.subr.mxu0 0.0
      %2965 = vmatpush1.msra.mxu0 0.0
      %2966 = vmatprep.subr.mxu0 0.0
      %2967 = vmatpush1.msra.mxu0 0.0
      %2968 = vmatprep.subr.mxu0 0.0
      %2969 = vmatpush1.msra.mxu0 0.0
      %2970 = vmatprep.mubr.f32.mxu0 0.0
      %2971 = vmatmul.mubr.f32.gmra.mrb[0].mxu0 %v2825
      %v2972 = vpop.f32.mrb[0].mxu0
      %v2973 = vadd.f32 %v2566, %v2972
      %v2974 = vpop.f32.mrb[0].mxu0
      %v2975 = vadd.f32 %v2566, %v2974
      %2976 = vdwg.mxu0
      %vm2977 = vcmp.ge.f32.partialorder %v2902, 0.0
      %vm2978 = vcmp.ge.f32.partialorder %v2904, 0.0
      %vm2979 = vcmp.ge.f32.partialorder %v2973, 0.0
      %vm2980 = vcmp.ge.f32.partialorder %v2975, 0.0
      %v2981 = vmul.f32 %v2902, 0.1
      %v2982 = vmul.f32 %v2904, 0.1
      %v2983 = vmul.f32 %v2973, 0.1
      %v2984 = vmul.f32 %v2975, 0.1
      %v2985 = vsel %vm2977, %v2902, %v2981
      %v2986 = vsel %vm2978, %v2904, %v2982
      %v2987 = vsel %vm2979, %v2973, %v2983
      %v2988 = vsel %vm2980, %v2975, %v2984
      %v2989 = vmul.f32 %v2985, %v1579
      %v2990 = vmul.f32 %v2986, %v1583
      %v2991 = vmul.f32 %v2987, %v1587
      %v2992 = vmul.f32 %v2988, %v1591
      %v2997 = vrot.slane %v1596, 4
      %v2998 = vrot.slane %v1600, 4
      %v2999 = vsel %vm1780, %v2997, %v2998
      %v3000 = vrot.slane %v1597, 4
      %v3001 = vrot.slane %v1601, 4
      %v3002 = vsel %vm1780, %v3000, %v3001
      %v3003 = vrot.slane %v1598, 4
      %v3004 = vrot.slane %v1602, 4
      %v3005 = vsel %vm1780, %v3003, %v3004
      %v3006 = vrot.slane %v1599, 4
      %v3007 = vrot.slane %v1603, 4
      %v3008 = vsel %vm1780, %v3006, %v3007
      %3009 = vrot.lane.b32.xlu0 %v2999, 69
      %v3010 = vpop.permute.xlu0 %3009
      %3011 = vrot.lane.b32.xlu0 %v3002, 69
      %v3012 = vpop.permute.xlu0 %3011
      %3013 = vrot.lane.b32.xlu0 %v3005, 69
      %v3014 = vpop.permute.xlu0 %3013
      %3015 = vrot.lane.b32.xlu0 %v3008, 69
      %v3016 = vpop.permute.xlu0 %3015
      %3017 = vrot.lane.b32.xlu0 %v2998, 69
      %v3018 = vpop.permute.xlu0 %3017
      %3019 = vrot.lane.b32.xlu0 %v3001, 69
      %v3020 = vpop.permute.xlu0 %3019
      %3021 = vrot.lane.b32.xlu0 %v3004, 69
      %v3022 = vpop.permute.xlu0 %3021
      %3023 = vrot.lane.b32.xlu0 %v3007, 69
      %v3024 = vpop.permute.xlu0 %3023
      %v3025 = vsel %vm827, %v3010, %v3012
      %v3026 = vsel %vm827, %v3012, %v3014
      %v3027 = vsel %vm827, %v3014, %v3016
      %v3028 = vsel %vm827, %v3018, %v3020
      %v3029 = vsel %vm827, %v3020, %v3022
      %v3030 = vsel %vm827, %v3022, %v3024
      %v3038 = vsel %vm827, 0.0, %v3010
      %v3039 = vsel %vm827, 0.0, %v3018
      %v3040 = vsel %vm827, %v3016, 0.0
      %v3041 = vsel %vm827, %v3024, 0.0
      %v3046 = vrot.slane %v3038, 4
      %v3047 = vrot.slane %v3025, 4
      %v3048 = vrot.slane %v3026, 4
      %v3049 = vrot.slane %v3027, 4
      %v3050 = vrot.slane %v3040, 4
      %v3051 = vrot.slane %v3039, 4
      %v3052 = vsel %vm1780, %v3046, %v3051
      %v3053 = vrot.slane %v3028, 4
      %v3054 = vsel %vm1780, %v3047, %v3053
      %v3055 = vrot.slane %v3029, 4
      %v3056 = vsel %vm1780, %v3048, %v3055
      %v3057 = vrot.slane %v3030, 4
      %v3058 = vsel %vm1780, %v3049, %v3057
      %v3059 = vrot.slane %v3041, 4
      %v3060 = vsel %vm1780, %v3050, %v3059
      %3061 = vrot.lane.b32.xlu0 %v3046, 127
      %v3062 = vpop.permute.xlu0 %3061
      %3063 = vrot.lane.b32.xlu0 %v3047, 127
      %v3064 = vpop.permute.xlu0 %3063
      %3065 = vrot.lane.b32.xlu0 %v3048, 127
      %v3066 = vpop.permute.xlu0 %3065
      %3067 = vrot.lane.b32.xlu0 %v3049, 127
      %v3068 = vpop.permute.xlu0 %3067
      %3069 = vrot.lane.b32.xlu0 %v3050, 127
      %v3070 = vpop.permute.xlu0 %3069
      %3071 = vrot.lane.b32.xlu0 %v3052, 127
      %v3072 = vpop.permute.xlu0 %3071
      %3073 = vrot.lane.b32.xlu0 %v3054, 127
      %v3074 = vpop.permute.xlu0 %3073
      %3075 = vrot.lane.b32.xlu0 %v3056, 127
      %v3076 = vpop.permute.xlu0 %3075
      %3077 = vrot.lane.b32.xlu0 %v3058, 127
      %v3078 = vpop.permute.xlu0 %3077
      %3079 = vrot.lane.b32.xlu0 %v3060, 127
      %v3080 = vpop.permute.xlu0 %3079
      %v3081 = vsel %vm866, %v3062, %v3064
      %v3082 = vsel %vm866, %v3064, %v3066
      %v3083 = vsel %vm866, %v3066, %v3068
      %v3084 = vsel %vm866, %v3068, %v3070
      %v3085 = vsel %vm866, %v3072, %v3074
      %v3086 = vsel %vm866, %v3074, %v3076
      %v3087 = vsel %vm866, %v3076, %v3078
      %v3088 = vsel %vm866, %v3078, %v3080
      %3094 = vrot.lane.b32.xlu0 %v3038, 126
      %v3095 = vpop.permute.xlu0 %3094
      %3096 = vrot.lane.b32.xlu0 %v3025, 126
      %v3097 = vpop.permute.xlu0 %3096
      %3098 = vrot.lane.b32.xlu0 %v3026, 126
      %v3099 = vpop.permute.xlu0 %3098
      %3100 = vrot.lane.b32.xlu0 %v3027, 126
      %v3101 = vpop.permute.xlu0 %3100
      %3102 = vrot.lane.b32.xlu0 %v3040, 126
      %v3103 = vpop.permute.xlu0 %3102
      %3104 = vrot.lane.b32.xlu0 %v3039, 126
      %v3105 = vpop.permute.xlu0 %3104
      %3106 = vrot.lane.b32.xlu0 %v3028, 126
      %v3107 = vpop.permute.xlu0 %3106
      %3108 = vrot.lane.b32.xlu0 %v3029, 126
      %v3109 = vpop.permute.xlu0 %3108
      %3110 = vrot.lane.b32.xlu0 %v3030, 126
      %v3111 = vpop.permute.xlu0 %3110
      %3112 = vrot.lane.b32.xlu0 %v3041, 126
      %v3113 = vpop.permute.xlu0 %3112
      %v3114 = vsel %vm895, %v3095, %v3097
      %v3115 = vsel %vm895, %v3097, %v3099
      %v3116 = vsel %vm895, %v3099, %v3101
      %v3117 = vsel %vm895, %v3101, %v3103
      %v3118 = vsel %vm895, %v3105, %v3107
      %v3119 = vsel %vm895, %v3107, %v3109
      %v3120 = vsel %vm895, %v3109, %v3111
      %v3121 = vsel %vm895, %v3111, %v3113
      %3127 = vrot.lane.b32.xlu0 %v3046, 106
      %v3128 = vpop.permute.xlu0 %3127
      %3129 = vrot.lane.b32.xlu0 %v3047, 106
      %v3130 = vpop.permute.xlu0 %3129
      %3131 = vrot.lane.b32.xlu0 %v3048, 106
      %v3132 = vpop.permute.xlu0 %3131
      %3133 = vrot.lane.b32.xlu0 %v3049, 106
      %v3134 = vpop.permute.xlu0 %3133
      %3135 = vrot.lane.b32.xlu0 %v3050, 106
      %v3136 = vpop.permute.xlu0 %3135
      %3137 = vrot.lane.b32.xlu0 %v3052, 106
      %v3138 = vpop.permute.xlu0 %3137
      %3139 = vrot.lane.b32.xlu0 %v3054, 106
      %v3140 = vpop.permute.xlu0 %3139
      %3141 = vrot.lane.b32.xlu0 %v3056, 106
      %v3142 = vpop.permute.xlu0 %3141
      %3143 = vrot.lane.b32.xlu0 %v3058, 106
      %v3144 = vpop.permute.xlu0 %3143
      %3145 = vrot.lane.b32.xlu0 %v3060, 106
      %v3146 = vpop.permute.xlu0 %3145
      %v3147 = vsel %vm924, %v3128, %v3130
      %v3148 = vsel %vm924, %v3130, %v3132
      %v3149 = vsel %vm924, %v3132, %v3134
      %v3150 = vsel %vm924, %v3134, %v3136
      %v3151 = vsel %vm924, %v3138, %v3140
      %v3152 = vsel %vm924, %v3140, %v3142
      %v3153 = vsel %vm924, %v3142, %v3144
      %v3154 = vsel %vm924, %v3144, %v3146
      %3160 = vrot.lane.b32.xlu0 %v3038, 105
      %v3161 = vpop.permute.xlu0 %3160
      %3162 = vrot.lane.b32.xlu0 %v3025, 105
      %v3163 = vpop.permute.xlu0 %3162
      %3164 = vrot.lane.b32.xlu0 %v3026, 105
      %v3165 = vpop.permute.xlu0 %3164
      %3166 = vrot.lane.b32.xlu0 %v3027, 105
      %v3167 = vpop.permute.xlu0 %3166
      %3168 = vrot.lane.b32.xlu0 %v3040, 105
      %v3169 = vpop.permute.xlu0 %3168
      %3170 = vrot.lane.b32.xlu0 %v3039, 105
      %v3171 = vpop.permute.xlu0 %3170
      %3172 = vrot.lane.b32.xlu0 %v3028, 105
      %v3173 = vpop.permute.xlu0 %3172
      %3174 = vrot.lane.b32.xlu0 %v3029, 105
      %v3175 = vpop.permute.xlu0 %3174
      %3176 = vrot.lane.b32.xlu0 %v3030, 105
      %v3177 = vpop.permute.xlu0 %3176
      %3178 = vrot.lane.b32.xlu0 %v3041, 105
      %v3179 = vpop.permute.xlu0 %3178
      %v3180 = vsel %vm953, %v3161, %v3163
      %v3181 = vsel %vm953, %v3163, %v3165
      %v3182 = vsel %vm953, %v3165, %v3167
      %v3183 = vsel %vm953, %v3167, %v3169
      %v3184 = vsel %vm953, %v3171, %v3173
      %v3185 = vsel %vm953, %v3173, %v3175
      %v3186 = vsel %vm953, %v3175, %v3177
      %v3187 = vsel %vm953, %v3177, %v3179
      %3193 = vrot.lane.b32.xlu0 %v3046, 104
      %v3194 = vpop.permute.xlu0 %3193
      %3195 = vrot.lane.b32.xlu0 %v3047, 104
      %v3196 = vpop.permute.xlu0 %3195
      %3197 = vrot.lane.b32.xlu0 %v3048, 104
      %v3198 = vpop.permute.xlu0 %3197
      %3199 = vrot.lane.b32.xlu0 %v3049, 104
      %v3200 = vpop.permute.xlu0 %3199
      %3201 = vrot.lane.b32.xlu0 %v3050, 104
      %v3202 = vpop.permute.xlu0 %3201
      %3203 = vrot.lane.b32.xlu0 %v3052, 104
      %v3204 = vpop.permute.xlu0 %3203
      %3205 = vrot.lane.b32.xlu0 %v3054, 104
      %v3206 = vpop.permute.xlu0 %3205
      %3207 = vrot.lane.b32.xlu0 %v3056, 104
      %v3208 = vpop.permute.xlu0 %3207
      %3209 = vrot.lane.b32.xlu0 %v3058, 104
      %v3210 = vpop.permute.xlu0 %3209
      %3211 = vrot.lane.b32.xlu0 %v3060, 104
      %v3212 = vpop.permute.xlu0 %3211
      %v3213 = vsel %vm982, %v3194, %v3196
      %v3214 = vsel %vm982, %v3196, %v3198
      %v3215 = vsel %vm982, %v3198, %v3200
      %v3216 = vsel %vm982, %v3200, %v3202
      %v3217 = vsel %vm982, %v3204, %v3206
      %v3218 = vsel %vm982, %v3206, %v3208
      %v3219 = vsel %vm982, %v3208, %v3210
      %v3220 = vsel %vm982, %v3210, %v3212
      %3226 = vrot.lane.b32.xlu0 %v3038, 84
      %v3227 = vpop.permute.xlu0 %3226
      %3228 = vrot.lane.b32.xlu0 %v3025, 84
      %v3229 = vpop.permute.xlu0 %3228
      %3230 = vrot.lane.b32.xlu0 %v3026, 84
      %v3231 = vpop.permute.xlu0 %3230
      %3232 = vrot.lane.b32.xlu0 %v3027, 84
      %v3233 = vpop.permute.xlu0 %3232
      %3234 = vrot.lane.b32.xlu0 %v3040, 84
      %v3235 = vpop.permute.xlu0 %3234
      %3236 = vrot.lane.b32.xlu0 %v3039, 84
      %v3237 = vpop.permute.xlu0 %3236
      %3238 = vrot.lane.b32.xlu0 %v3028, 84
      %v3239 = vpop.permute.xlu0 %3238
      %3240 = vrot.lane.b32.xlu0 %v3029, 84
      %v3241 = vpop.permute.xlu0 %3240
      %3242 = vrot.lane.b32.xlu0 %v3030, 84
      %v3243 = vpop.permute.xlu0 %3242
      %3244 = vrot.lane.b32.xlu0 %v3041, 84
      %v3245 = vpop.permute.xlu0 %3244
      %v3246 = vsel %vm1011, %v3227, %v3229
      %v3247 = vsel %vm1011, %v3229, %v3231
      %v3248 = vsel %vm1011, %v3231, %v3233
      %v3249 = vsel %vm1011, %v3233, %v3235
      %v3250 = vsel %vm1011, %v3237, %v3239
      %v3251 = vsel %vm1011, %v3239, %v3241
      %v3252 = vsel %vm1011, %v3241, %v3243
      %v3253 = vsel %vm1011, %v3243, %v3245
      %3259 = vrot.lane.b32.xlu0 %v3046, 83
      %v3260 = vpop.permute.xlu0 %3259
      %3261 = vrot.lane.b32.xlu0 %v3047, 83
      %v3262 = vpop.permute.xlu0 %3261
      %3263 = vrot.lane.b32.xlu0 %v3048, 83
      %v3264 = vpop.permute.xlu0 %3263
      %3265 = vrot.lane.b32.xlu0 %v3049, 83
      %v3266 = vpop.permute.xlu0 %3265
      %3267 = vrot.lane.b32.xlu0 %v3050, 83
      %v3268 = vpop.permute.xlu0 %3267
      %3269 = vrot.lane.b32.xlu0 %v3052, 83
      %v3270 = vpop.permute.xlu0 %3269
      %3271 = vrot.lane.b32.xlu0 %v3054, 83
      %v3272 = vpop.permute.xlu0 %3271
      %3273 = vrot.lane.b32.xlu0 %v3056, 83
      %v3274 = vpop.permute.xlu0 %3273
      %3275 = vrot.lane.b32.xlu0 %v3058, 83
      %v3276 = vpop.permute.xlu0 %3275
      %3277 = vrot.lane.b32.xlu0 %v3060, 83
      %v3278 = vpop.permute.xlu0 %3277
      %v3279 = vsel %vm1040, %v3260, %v3262
      %v3280 = vsel %vm1040, %v3262, %v3264
      %v3281 = vsel %vm1040, %v3264, %v3266
      %v3282 = vsel %vm1040, %v3266, %v3268
      %v3283 = vsel %vm1040, %v3270, %v3272
      %v3284 = vsel %vm1040, %v3272, %v3274
      %v3285 = vsel %vm1040, %v3274, %v3276
      %v3286 = vsel %vm1040, %v3276, %v3278
      %3292 = vrot.lane.b32.xlu0 %v3038, 82
      %v3293 = vpop.permute.xlu0 %3292
      %3294 = vrot.lane.b32.xlu0 %v3025, 82
      %v3295 = vpop.permute.xlu0 %3294
      %3296 = vrot.lane.b32.xlu0 %v3026, 82
      %v3297 = vpop.permute.xlu0 %3296
      %3298 = vrot.lane.b32.xlu0 %v3027, 82
      %v3299 = vpop.permute.xlu0 %3298
      %3300 = vrot.lane.b32.xlu0 %v3040, 82
      %v3301 = vpop.permute.xlu0 %3300
      %3302 = vrot.lane.b32.xlu0 %v3039, 82
      %v3303 = vpop.permute.xlu0 %3302
      %3304 = vrot.lane.b32.xlu0 %v3028, 82
      %v3305 = vpop.permute.xlu0 %3304
      %3306 = vrot.lane.b32.xlu0 %v3029, 82
      %v3307 = vpop.permute.xlu0 %3306
      %3308 = vrot.lane.b32.xlu0 %v3030, 82
      %v3309 = vpop.permute.xlu0 %3308
      %3310 = vrot.lane.b32.xlu0 %v3041, 82
      %v3311 = vpop.permute.xlu0 %3310
      %v3312 = vsel %vm1069, %v3293, %v3295
      %v3313 = vsel %vm1069, %v3295, %v3297
      %v3314 = vsel %vm1069, %v3297, %v3299
      %v3315 = vsel %vm1069, %v3299, %v3301
      %v3316 = vsel %vm1069, %v3303, %v3305
      %v3317 = vsel %vm1069, %v3305, %v3307
      %v3318 = vsel %vm1069, %v3307, %v3309
      %v3319 = vsel %vm1069, %v3309, %v3311
      %v3320 = vsel %vm1780, %v3039, %v3081
      %v3321 = vsel %vm1780, %v3028, %v3082
      %v3322 = vsel %vm1780, %v3029, %v3083
      %v3323 = vsel %vm1780, %v3030, %v3084
      %v3324 = vsel %vm1780, %v3041, %v3070
      %v3325 = vsel %vm1780, %v3118, %v3147
      %v3326 = vsel %vm1780, %v3119, %v3148
      %v3327 = vsel %vm1780, %v3120, %v3149
      %v3328 = vsel %vm1780, %v3121, %v3150
      %v3329 = vsel %vm1780, %v3113, %v3136
      %v3330 = vsel %vm1780, %v3184, %v3213
      %v3331 = vsel %vm1780, %v3185, %v3214
      %v3332 = vsel %vm1780, %v3186, %v3215
      %v3333 = vsel %vm1780, %v3187, %v3216
      %v3334 = vsel %vm1780, %v3179, %v3202
      %v3335 = vsel %vm1780, %v3250, %v3279
      %v3336 = vsel %vm1780, %v3251, %v3280
      %v3337 = vsel %vm1780, %v3252, %v3281
      %v3338 = vsel %vm1780, %v3253, %v3282
      %v3339 = vsel %vm1780, %v3245, %v3268
      %v3340 = vld [vmem:[%s8] sm:$0xff]
      %v3341 = vld [vmem:[%s8 + $0x8] sm:$0xff]
      %v3342 = vld [vmem:[%s9] sm:$0xff]
      %v3343 = vld [vmem:[%s9 + $0x8] sm:$0xff]
      %3345 = vset.pattern.permute.xlu0 0
      %3346 = vperm.xlu0 %3345, %v3342
      %v3347 = vpop.permute.xlu0 %3346
      %3350 = vset.pattern.permute.xlu0 0
      %3351 = vperm.xlu0 %3350, %v3343
      %v3352 = vpop.permute.xlu0 %3351
      %3374 = vrot.lane.b32.xlu0 %v3320, 82
      %v3375 = vpop.permute.xlu0 %3374
      %3376 = vrot.lane.b32.xlu0 %v3321, 82
      %v3377 = vpop.permute.xlu0 %3376
      %3378 = vrot.lane.b32.xlu0 %v3322, 82
      %v3379 = vpop.permute.xlu0 %3378
      %3380 = vrot.lane.b32.xlu0 %v3323, 82
      %v3381 = vpop.permute.xlu0 %3380
      %3382 = vrot.lane.b32.xlu0 %v3324, 82
      %v3383 = vpop.permute.xlu0 %3382
      %3384 = vrot.lane.b32.xlu0 %v3085, 82
      %v3385 = vpop.permute.xlu0 %3384
      %3386 = vrot.lane.b32.xlu0 %v3086, 82
      %v3387 = vpop.permute.xlu0 %3386
      %3388 = vrot.lane.b32.xlu0 %v3087, 82
      %v3389 = vpop.permute.xlu0 %3388
      %3390 = vrot.lane.b32.xlu0 %v3088, 82
      %v3391 = vpop.permute.xlu0 %3390
      %3392 = vrot.lane.b32.xlu0 %v3080, 82
      %v3393 = vpop.permute.xlu0 %3392
      %3394 = vrot.lane.b32.xlu0 %v3114, 82
      %v3395 = vpop.permute.xlu0 %3394
      %3396 = vrot.lane.b32.xlu0 %v3115, 82
      %v3397 = vpop.permute.xlu0 %3396
      %3398 = vrot.lane.b32.xlu0 %v3116, 82
      %v3399 = vpop.permute.xlu0 %3398
      %3400 = vrot.lane.b32.xlu0 %v3117, 82
      %v3401 = vpop.permute.xlu0 %3400
      %3402 = vrot.lane.b32.xlu0 %v3103, 82
      %v3403 = vpop.permute.xlu0 %3402
      %3404 = vrot.lane.b32.xlu0 %v3325, 82
      %v3405 = vpop.permute.xlu0 %3404
      %3406 = vrot.lane.b32.xlu0 %v3326, 82
      %v3407 = vpop.permute.xlu0 %3406
      %3408 = vrot.lane.b32.xlu0 %v3327, 82
      %v3409 = vpop.permute.xlu0 %3408
      %3410 = vrot.lane.b32.xlu0 %v3328, 82
      %v3411 = vpop.permute.xlu0 %3410
      %3412 = vrot.lane.b32.xlu0 %v3329, 82
      %v3413 = vpop.permute.xlu0 %3412
      %3414 = vrot.lane.b32.xlu0 %v3151, 82
      %v3415 = vpop.permute.xlu0 %3414
      %3416 = vrot.lane.b32.xlu0 %v3152, 82
      %v3417 = vpop.permute.xlu0 %3416
      %3418 = vrot.lane.b32.xlu0 %v3153, 82
      %v3419 = vpop.permute.xlu0 %3418
      %3420 = vrot.lane.b32.xlu0 %v3154, 82
      %v3421 = vpop.permute.xlu0 %3420
      %3422 = vrot.lane.b32.xlu0 %v3146, 82
      %v3423 = vpop.permute.xlu0 %3422
      %3424 = vrot.lane.b32.xlu0 %v3180, 82
      %v3425 = vpop.permute.xlu0 %3424
      %3426 = vrot.lane.b32.xlu0 %v3181, 82
      %v3427 = vpop.permute.xlu0 %3426
      %3428 = vrot.lane.b32.xlu0 %v3182, 82
      %v3429 = vpop.permute.xlu0 %3428
      %3430 = vrot.lane.b32.xlu0 %v3183, 82
      %v3431 = vpop.permute.xlu0 %3430
      %3432 = vrot.lane.b32.xlu0 %v3169, 82
      %v3433 = vpop.permute.xlu0 %3432
      %3434 = vrot.lane.b32.xlu0 %v3330, 82
      %v3435 = vpop.permute.xlu0 %3434
      %3436 = vrot.lane.b32.xlu0 %v3331, 82
      %v3437 = vpop.permute.xlu0 %3436
      %3438 = vrot.lane.b32.xlu0 %v3332, 82
      %v3439 = vpop.permute.xlu0 %3438
      %3440 = vrot.lane.b32.xlu0 %v3333, 82
      %v3441 = vpop.permute.xlu0 %3440
      %3442 = vrot.lane.b32.xlu0 %v3334, 82
      %v3443 = vpop.permute.xlu0 %3442
      %3444 = vrot.lane.b32.xlu0 %v3217, 82
      %v3445 = vpop.permute.xlu0 %3444
      %3446 = vrot.lane.b32.xlu0 %v3218, 82
      %v3447 = vpop.permute.xlu0 %3446
      %3448 = vrot.lane.b32.xlu0 %v3219, 82
      %v3449 = vpop.permute.xlu0 %3448
      %3450 = vrot.lane.b32.xlu0 %v3220, 82
      %v3451 = vpop.permute.xlu0 %3450
      %3452 = vrot.lane.b32.xlu0 %v3212, 82
      %v3453 = vpop.permute.xlu0 %3452
      %3454 = vrot.lane.b32.xlu0 %v3246, 82
      %v3455 = vpop.permute.xlu0 %3454
      %3456 = vrot.lane.b32.xlu0 %v3247, 82
      %v3457 = vpop.permute.xlu0 %3456
      %3458 = vrot.lane.b32.xlu0 %v3248, 82
      %v3459 = vpop.permute.xlu0 %3458
      %3460 = vrot.lane.b32.xlu0 %v3249, 82
      %v3461 = vpop.permute.xlu0 %3460
      %3462 = vrot.lane.b32.xlu0 %v3235, 82
      %v3463 = vpop.permute.xlu0 %3462
      %3464 = vrot.lane.b32.xlu0 %v3335, 82
      %v3465 = vpop.permute.xlu0 %3464
      %3466 = vrot.lane.b32.xlu0 %v3336, 82
      %v3467 = vpop.permute.xlu0 %3466
      %3468 = vrot.lane.b32.xlu0 %v3337, 82
      %v3469 = vpop.permute.xlu0 %3468
      %3470 = vrot.lane.b32.xlu0 %v3338, 82
      %v3471 = vpop.permute.xlu0 %3470
      %3472 = vrot.lane.b32.xlu0 %v3339, 82
      %v3473 = vpop.permute.xlu0 %3472
      %3474 = vrot.lane.b32.xlu0 %v3283, 82
      %v3475 = vpop.permute.xlu0 %3474
      %3476 = vrot.lane.b32.xlu0 %v3284, 82
      %v3477 = vpop.permute.xlu0 %3476
      %3478 = vrot.lane.b32.xlu0 %v3285, 82
      %v3479 = vpop.permute.xlu0 %3478
      %3480 = vrot.lane.b32.xlu0 %v3286, 82
      %v3481 = vpop.permute.xlu0 %3480
      %3482 = vrot.lane.b32.xlu0 %v3278, 82
      %v3483 = vpop.permute.xlu0 %3482
      %3484 = vrot.lane.b32.xlu0 %v3312, 82
      %v3485 = vpop.permute.xlu0 %3484
      %3486 = vrot.lane.b32.xlu0 %v3313, 82
      %v3487 = vpop.permute.xlu0 %3486
      %3488 = vrot.lane.b32.xlu0 %v3314, 82
      %v3489 = vpop.permute.xlu0 %3488
      %3490 = vrot.lane.b32.xlu0 %v3315, 82
      %v3491 = vpop.permute.xlu0 %3490
      %3492 = vrot.lane.b32.xlu0 %v3301, 82
      %v3493 = vpop.permute.xlu0 %3492
      %3494 = vrot.lane.b32.xlu0 %v3316, 82
      %v3495 = vpop.permute.xlu0 %3494
      %3496 = vrot.lane.b32.xlu0 %v3317, 82
      %v3497 = vpop.permute.xlu0 %3496
      %3498 = vrot.lane.b32.xlu0 %v3318, 82
      %v3499 = vpop.permute.xlu0 %3498
      %3500 = vrot.lane.b32.xlu0 %v3319, 82
      %v3501 = vpop.permute.xlu0 %3500
      %3502 = vrot.lane.b32.xlu0 %v3311, 82
      %v3503 = vpop.permute.xlu0 %3502
      %v3504 = vsel %vm1069, %v3375, %v3377
      %v3505 = vsel %vm1069, %v3377, %v3379
      %v3506 = vsel %vm1069, %v3379, %v3381
      %v3507 = vsel %vm1069, %v3381, %v3383
      %v3508 = vsel %vm1069, %v3385, %v3387
      %v3509 = vsel %vm1069, %v3387, %v3389
      %v3510 = vsel %vm1069, %v3389, %v3391
      %v3511 = vsel %vm1069, %v3391, %v3393
      %v3512 = vsel %vm1069, %v3395, %v3397
      %v3513 = vsel %vm1069, %v3397, %v3399
      %v3514 = vsel %vm1069, %v3399, %v3401
      %v3515 = vsel %vm1069, %v3401, %v3403
      %v3516 = vsel %vm1069, %v3405, %v3407
      %v3517 = vsel %vm1069, %v3407, %v3409
      %v3518 = vsel %vm1069, %v3409, %v3411
      %v3519 = vsel %vm1069, %v3411, %v3413
      %v3520 = vsel %vm1069, %v3415, %v3417
      %v3521 = vsel %vm1069, %v3417, %v3419
      %v3522 = vsel %vm1069, %v3419, %v3421
      %v3523 = vsel %vm1069, %v3421, %v3423
      %v3524 = vsel %vm1069, %v3425, %v3427
      %v3525 = vsel %vm1069, %v3427, %v3429
      %v3526 = vsel %vm1069, %v3429, %v3431
      %v3527 = vsel %vm1069, %v3431, %v3433
      %v3528 = vsel %vm1069, %v3435, %v3437
      %v3529 = vsel %vm1069, %v3437, %v3439
      %v3530 = vsel %vm1069, %v3439, %v3441
      %v3531 = vsel %vm1069, %v3441, %v3443
      %v3532 = vsel %vm1069, %v3445, %v3447
      %v3533 = vsel %vm1069, %v3447, %v3449
      %v3534 = vsel %vm1069, %v3449, %v3451
      %v3535 = vsel %vm1069, %v3451, %v3453
      %v3536 = vsel %vm1069, %v3455, %v3457
      %v3537 = vsel %vm1069, %v3457, %v3459
      %v3538 = vsel %vm1069, %v3459, %v3461
      %v3539 = vsel %vm1069, %v3461, %v3463
      %v3540 = vsel %vm1069, %v3465, %v3467
      %v3541 = vsel %vm1069, %v3467, %v3469
      %v3542 = vsel %vm1069, %v3469, %v3471
      %v3543 = vsel %vm1069, %v3471, %v3473
      %v3544 = vsel %vm1069, %v3475, %v3477
      %v3545 = vsel %vm1069, %v3477, %v3479
      %v3546 = vsel %vm1069, %v3479, %v3481
      %v3547 = vsel %vm1069, %v3481, %v3483
      %v3548 = vsel %vm1069, %v3485, %v3487
      %v3549 = vsel %vm1069, %v3487, %v3489
      %v3550 = vsel %vm1069, %v3489, %v3491
      %v3551 = vsel %vm1069, %v3491, %v3493
      %v3552 = vsel %vm1069, %v3495, %v3497
      %v3553 = vsel %vm1069, %v3497, %v3499
      %v3554 = vsel %vm1069, %v3499, %v3501
      %v3555 = vsel %vm1069, %v3501, %v3503
      %vm3608 = vcmask 883712
      %v3610 = vsel %vm3608, %v3340, 0
      %v3613 = vsel %vm3608, %v3341, 0
      %v3615 = vsel %vm1780, %v3552, 0
      %v3617 = vsel %vm1780, %v3553, 0
      %v3619 = vsel %vm1780, %v3554, 0
      %v3621 = vsel %vm1780, %v3555, 0
      %3623 = vmatprep.subr.mxu0 %v3313
      %3624 = vmatpush1.msra.mxu0 %v3312
      %3625 = vmatprep.subr.mxu0 %v3505
      %3626 = vmatpush1.msra.mxu0 %v3504
      %3627 = vmatprep.subr.mxu0 %v3509
      %3628 = vmatpush1.msra.mxu0 %v3508
      %3629 = vmatprep.subr.mxu0 %v3513
      %3630 = vmatpush1.msra.mxu0 %v3512
      %3631 = vmatprep.subr.mxu0 %v3517
      %3632 = vmatpush1.msra.mxu0 %v3516
      %3633 = vmatprep.subr.mxu0 %v3521
      %3634 = vmatpush1.msra.mxu0 %v3520
      %3635 = vmatprep.subr.mxu0 %v3525
      %3636 = vmatpush1.msra.mxu0 %v3524
      %3637 = vmatprep.subr.mxu0 %v3529
      %3638 = vmatpush1.msra.mxu0 %v3528
      %3639 = vmatprep.subr.mxu0 %v3533
      %3640 = vmatpush1.msra.mxu0 %v3532
      %3641 = vmatprep.subr.mxu0 %v3537
      %3642 = vmatpush1.msra.mxu0 %v3536
      %3643 = vmatprep.subr.mxu0 %v3541
      %3644 = vmatpush1.msra.mxu0 %v3540
      %3645 = vmatprep.subr.mxu0 %v3545
      %3646 = vmatpush1.msra.mxu0 %v3544
      %3647 = vmatprep.subr.mxu0 %v3549
      %3648 = vmatpush1.msra.mxu0 %v3548
      %3649 = vmatprep.subr.mxu0 %v3617
      %3650 = vmatpush1.msra.mxu0 %v3615
      %3651 = vmatprep.subr.mxu0 0.0
      %3652 = vmatpush1.msra.mxu0 0.0
      %3653 = vmatprep.subr.mxu0 0.0
      %3654 = vmatpush1.msra.mxu0 0.0
      %3655 = vmatprep.subr.mxu0 0.0
      %3656 = vmatpush1.msra.mxu0 0.0
      %3657 = vmatprep.subr.mxu0 0.0
      %3658 = vmatpush1.msra.mxu0 0.0
      %3659 = vmatprep.subr.mxu0 0.0
      %3660 = vmatpush1.msra.mxu0 0.0
      %3661 = vmatprep.subr.mxu0 0.0
      %3662 = vmatpush1.msra.mxu0 0.0
      %3663 = vmatprep.subr.mxu0 0.0
      %3664 = vmatpush1.msra.mxu0 0.0
      %3665 = vmatprep.subr.mxu0 0.0
      %3666 = vmatpush1.msra.mxu0 0.0
      %3667 = vmatprep.subr.mxu0 0.0
      %3668 = vmatpush1.msra.mxu0 0.0
      %3669 = vmatprep.subr.mxu0 0.0
      %3670 = vmatpush1.msra.mxu0 0.0
      %3671 = vmatprep.subr.mxu0 0.0
      %3672 = vmatpush1.msra.mxu0 0.0
      %3673 = vmatprep.subr.mxu0 0.0
      %3674 = vmatpush1.msra.mxu0 0.0
      %3675 = vmatprep.subr.mxu0 0.0
      %3676 = vmatpush1.msra.mxu0 0.0
      %3677 = vmatprep.subr.mxu0 0.0
      %3678 = vmatpush1.msra.mxu0 0.0
      %3679 = vmatprep.subr.mxu0 0.0
      %3680 = vmatpush1.msra.mxu0 0.0
      %3681 = vmatprep.subr.mxu0 0.0
      %3682 = vmatpush1.msra.mxu0 0.0
      %3683 = vmatprep.subr.mxu0 0.0
      %3684 = vmatpush1.msra.mxu0 0.0
      %3685 = vmatprep.subr.mxu0 0.0
      %3686 = vmatpush1.msra.mxu0 0.0
      %3687 = vmatprep.mubr.f32.mxu0 0.0
      %3688 = vmatmul.mubr.f32.gmra.mrb[0].mxu0 %v3610
      %v3689 = vpop.f32.mrb[0].mxu0
      %v3690 = vadd.f32 %v3347, %v3689
      %v3691 = vpop.f32.mrb[0].mxu0
      %v3692 = vadd.f32 %v3347, %v3691
      %3693 = vmatprep.mubr.f32.mxu0 0.0
      %3694 = vmatmul.mubr.f32.gmra.mrb[0].mxu0 %v3613
      %v3695 = vpop.f32.mrb[0].mxu0
      %v3696 = vadd.f32 %v3352, %v3695
      %v3697 = vpop.f32.mrb[0].mxu0
      %v3698 = vadd.f32 %v3352, %v3697
      %3699 = vdwg.mxu0
      %3700 = vmatprep.subr.mxu0 %v3315
      %3701 = vmatpush1.msra.mxu0 %v3314
      %3702 = vmatprep.subr.mxu0 %v3507
      %3703 = vmatpush1.msra.mxu0 %v3506
      %3704 = vmatprep.subr.mxu0 %v3511
      %3705 = vmatpush1.msra.mxu0 %v3510
      %3706 = vmatprep.subr.mxu0 %v3515
      %3707 = vmatpush1.msra.mxu0 %v3514
      %3708 = vmatprep.subr.mxu0 %v3519
      %3709 = vmatpush1.msra.mxu0 %v3518
      %3710 = vmatprep.subr.mxu0 %v3523
      %3711 = vmatpush1.msra.mxu0 %v3522
      %3712 = vmatprep.subr.mxu0 %v3527
      %3713 = vmatpush1.msra.mxu0 %v3526
      %3714 = vmatprep.subr.mxu0 %v3531
      %3715 = vmatpush1.msra.mxu0 %v3530
      %3716 = vmatprep.subr.mxu0 %v3535
      %3717 = vmatpush1.msra.mxu0 %v3534
      %3718 = vmatprep.subr.mxu0 %v3539
      %3719 = vmatpush1.msra.mxu0 %v3538
      %3720 = vmatprep.subr.mxu0 %v3543
      %3721 = vmatpush1.msra.mxu0 %v3542
      %3722 = vmatprep.subr.mxu0 %v3547
      %3723 = vmatpush1.msra.mxu0 %v3546
      %3724 = vmatprep.subr.mxu0 %v3551
      %3725 = vmatpush1.msra.mxu0 %v3550
      %3726 = vmatprep.subr.mxu0 %v3621
      %3727 = vmatpush1.msra.mxu0 %v3619
      %3728 = vmatprep.subr.mxu0 0.0
      %3729 = vmatpush1.msra.mxu0 0.0
      %3730 = vmatprep.subr.mxu0 0.0
      %3731 = vmatpush1.msra.mxu0 0.0
      %3732 = vmatprep.subr.mxu0 0.0
      %3733 = vmatpush1.msra.mxu0 0.0
      %3734 = vmatprep.subr.mxu0 0.0
      %3735 = vmatpush1.msra.mxu0 0.0
      %3736 = vmatprep.subr.mxu0 0.0
      %3737 = vmatpush1.msra.mxu0 0.0
      %3738 = vmatprep.subr.mxu0 0.0
      %3739 = vmatpush1.msra.mxu0 0.0
      %3740 = vmatprep.subr.mxu0 0.0
      %3741 = vmatpush1.msra.mxu0 0.0
      %3742 = vmatprep.subr.mxu0 0.0
      %3743 = vmatpush1.msra.mxu0 0.0
      %3744 = vmatprep.subr.mxu0 0.0
      %3745 = vmatpush1.msra.mxu0 0.0
      %3746 = vmatprep.subr.mxu0 0.0
      %3747 = vmatpush1.msra.mxu0 0.0
      %3748 = vmatprep.subr.mxu0 0.0
      %3749 = vmatpush1.msra.mxu0 0.0
      %3750 = vmatprep.subr.mxu0 0.0
      %3751 = vmatpush1.msra.mxu0 0.0
      %3752 = vmatprep.subr.mxu0 0.0
      %3753 = vmatpush1.msra.mxu0 0.0
      %3754 = vmatprep.subr.mxu0 0.0
      %3755 = vmatpush1.msra.mxu0 0.0
      %3756 = vmatprep.subr.mxu0 0.0
      %3757 = vmatpush1.msra.mxu0 0.0
      %3758 = vmatprep.subr.mxu0 0.0
      %3759 = vmatpush1.msra.mxu0 0.0
      %3760 = vmatprep.subr.mxu0 0.0
      %3761 = vmatpush1.msra.mxu0 0.0
      %3762 = vmatprep.subr.mxu0 0.0
      %3763 = vmatpush1.msra.mxu0 0.0
      %3764 = vmatprep.mubr.f32.mxu0 0.0
      %3765 = vmatmul.mubr.f32.gmra.mrb[0].mxu0 %v3610
      %v3766 = vpop.f32.mrb[0].mxu0
      %v3767 = vadd.f32 %v3347, %v3766
      %v3768 = vpop.f32.mrb[0].mxu0
      %v3769 = vadd.f32 %v3347, %v3768
      %3770 = vmatprep.mubr.f32.mxu0 0.0
      %3771 = vmatmul.mubr.f32.gmra.mrb[0].mxu0 %v3613
      %v3772 = vpop.f32.mrb[0].mxu0
      %v3773 = vadd.f32 %v3352, %v3772
      %v3774 = vpop.f32.mrb[0].mxu0
      %v3775 = vadd.f32 %v3352, %v3774
      %3776 = vdwg.mxu0
      %vm3777 = vcmp.ge.f32.partialorder %v3690, 0.0
      %vm3778 = vcmp.ge.f32.partialorder %v3692, 0.0
      %vm3779 = vcmp.ge.f32.partialorder %v3767, 0.0
      %vm3780 = vcmp.ge.f32.partialorder %v3769, 0.0
      %vm3781 = vcmp.ge.f32.partialorder %v3696, 0.0
      %vm3782 = vcmp.ge.f32.partialorder %v3698, 0.0
      %vm3783 = vcmp.ge.f32.partialorder %v3773, 0.0
      %vm3784 = vcmp.ge.f32.partialorder %v3775, 0.0
      %v3785 = vmul.f32 %v3690, 0.05
      %v3786 = vmul.f32 %v3692, 0.05
      %v3787 = vmul.f32 %v3767, 0.05
      %v3788 = vmul.f32 %v3769, 0.05
      %v3789 = vmul.f32 %v3696, 0.05
      %v3790 = vmul.f32 %v3698, 0.05
      %v3791 = vmul.f32 %v3773, 0.05
      %v3792 = vmul.f32 %v3775, 0.05
      %v3793 = vsel %vm3777, %v3690, %v3785
      %v3794 = vsel %vm3778, %v3692, %v3786
      %v3795 = vsel %vm3779, %v3767, %v3787
      %v3796 = vsel %vm3780, %v3769, %v3788
      %v3797 = vsel %vm3781, %v3696, %v3789
      %v3798 = vsel %vm3782, %v3698, %v3790
      %v3799 = vsel %vm3783, %v3773, %v3791
      %v3800 = vsel %vm3784, %v3775, %v3792
      %v3801 = vmul.f32 %v3793, %v1579
      %v3802 = vmul.f32 %v3794, %v1583
      %v3803 = vmul.f32 %v3795, %v1587
      %v3804 = vmul.f32 %v3796, %v1591
      %v3805 = vmul.f32 %v3797, %v1579
      %v3806 = vmul.f32 %v3798, %v1583
      %v3807 = vmul.f32 %v3799, %v1587
      %v3808 = vmul.f32 %v3800, %v1591
      %3813 = vrot.lane.b32.xlu0 %v3801, 69
      %v3814 = vpop.permute.xlu0 %3813
      %3815 = vrot.lane.b32.xlu0 %v3802, 69
      %v3816 = vpop.permute.xlu0 %3815
      %3817 = vrot.lane.b32.xlu0 %v3803, 69
      %v3818 = vpop.permute.xlu0 %3817
      %3819 = vrot.lane.b32.xlu0 %v3804, 69
      %v3820 = vpop.permute.xlu0 %3819
      %v3821 = vsel %vm827, %v3814, %v3816
      %v3822 = vsel %vm827, %v3816, %v3818
      %v3823 = vsel %vm827, %v3818, %v3820
      %v3829 = vsel %vm827, 0.0, %v3814
      %v3830 = vsel %vm827, %v3820, 0.0
      %v3833 = vrot.slane %v3829, 4
      %v3834 = vrot.slane %v3821, 4
      %v3835 = vrot.slane %v3822, 4
      %v3836 = vrot.slane %v3823, 4
      %v3837 = vrot.slane %v3830, 4
      %3838 = vrot.lane.b32.xlu0 %v3833, 127
      %v3839 = vpop.permute.xlu0 %3838
      %3840 = vrot.lane.b32.xlu0 %v3834, 127
      %v3841 = vpop.permute.xlu0 %3840
      %3842 = vrot.lane.b32.xlu0 %v3835, 127
      %v3843 = vpop.permute.xlu0 %3842
      %3844 = vrot.lane.b32.xlu0 %v3836, 127
      %v3845 = vpop.permute.xlu0 %3844
      %3846 = vrot.lane.b32.xlu0 %v3837, 127
      %v3847 = vpop.permute.xlu0 %3846
      %v3848 = vsel %vm866, %v3839, %v3841
      %v3849 = vsel %vm866, %v3841, %v3843
      %v3850 = vsel %vm866, %v3843, %v3845
      %v3851 = vsel %vm866, %v3845, %v3847
      %3857 = vrot.lane.b32.xlu0 %v3829, 126
      %v3858 = vpop.permute.xlu0 %3857
      %3859 = vrot.lane.b32.xlu0 %v3821, 126
      %v3860 = vpop.permute.xlu0 %3859
      %3861 = vrot.lane.b32.xlu0 %v3822, 126
      %v3862 = vpop.permute.xlu0 %3861
      %3863 = vrot.lane.b32.xlu0 %v3823, 126
      %v3864 = vpop.permute.xlu0 %3863
      %3865 = vrot.lane.b32.xlu0 %v3830, 126
      %v3866 = vpop.permute.xlu0 %3865
      %v3867 = vsel %vm895, %v3858, %v3860
      %v3868 = vsel %vm895, %v3860, %v3862
      %v3869 = vsel %vm895, %v3862, %v3864
      %v3870 = vsel %vm895, %v3864, %v3866
      %3876 = vrot.lane.b32.xlu0 %v3833, 125
      %v3877 = vpop.permute.xlu0 %3876
      %3878 = vrot.lane.b32.xlu0 %v3834, 125
      %v3879 = vpop.permute.xlu0 %3878
      %3880 = vrot.lane.b32.xlu0 %v3835, 125
      %v3881 = vpop.permute.xlu0 %3880
      %3882 = vrot.lane.b32.xlu0 %v3836, 125
      %v3883 = vpop.permute.xlu0 %3882
      %3884 = vrot.lane.b32.xlu0 %v3837, 125
      %v3885 = vpop.permute.xlu0 %3884
      %v3886 = vsel %vm2161, %v3877, %v3879
      %v3887 = vsel %vm2161, %v3879, %v3881
      %v3888 = vsel %vm2161, %v3881, %v3883
      %v3889 = vsel %vm2161, %v3883, %v3885
      %3895 = vrot.lane.b32.xlu0 %v3829, 124
      %v3896 = vpop.permute.xlu0 %3895
      %3897 = vrot.lane.b32.xlu0 %v3821, 124
      %v3898 = vpop.permute.xlu0 %3897
      %3899 = vrot.lane.b32.xlu0 %v3822, 124
      %v3900 = vpop.permute.xlu0 %3899
      %3901 = vrot.lane.b32.xlu0 %v3823, 124
      %v3902 = vpop.permute.xlu0 %3901
      %3903 = vrot.lane.b32.xlu0 %v3830, 124
      %v3904 = vpop.permute.xlu0 %3903
      %v3905 = vsel %vm2181, %v3896, %v3898
      %v3906 = vsel %vm2181, %v3898, %v3900
      %v3907 = vsel %vm2181, %v3900, %v3902
      %v3908 = vsel %vm2181, %v3902, %v3904
      %3914 = vrot.lane.b32.xlu0 %v3833, 106
      %v3915 = vpop.permute.xlu0 %3914
      %3916 = vrot.lane.b32.xlu0 %v3834, 106
      %v3917 = vpop.permute.xlu0 %3916
      %3918 = vrot.lane.b32.xlu0 %v3835, 106
      %v3919 = vpop.permute.xlu0 %3918
      %3920 = vrot.lane.b32.xlu0 %v3836, 106
      %v3921 = vpop.permute.xlu0 %3920
      %3922 = vrot.lane.b32.xlu0 %v3837, 106
      %v3923 = vpop.permute.xlu0 %3922
      %v3924 = vsel %vm924, %v3915, %v3917
      %v3925 = vsel %vm924, %v3917, %v3919
      %v3926 = vsel %vm924, %v3919, %v3921
      %v3927 = vsel %vm924, %v3921, %v3923
      %3933 = vrot.lane.b32.xlu0 %v3829, 105
      %v3934 = vpop.permute.xlu0 %3933
      %3935 = vrot.lane.b32.xlu0 %v3821, 105
      %v3936 = vpop.permute.xlu0 %3935
      %3937 = vrot.lane.b32.xlu0 %v3822, 105
      %v3938 = vpop.permute.xlu0 %3937
      %3939 = vrot.lane.b32.xlu0 %v3823, 105
      %v3940 = vpop.permute.xlu0 %3939
      %3941 = vrot.lane.b32.xlu0 %v3830, 105
      %v3942 = vpop.permute.xlu0 %3941
      %v3943 = vsel %vm953, %v3934, %v3936
      %v3944 = vsel %vm953, %v3936, %v3938
      %v3945 = vsel %vm953, %v3938, %v3940
      %v3946 = vsel %vm953, %v3940, %v3942
      %3952 = vrot.lane.b32.xlu0 %v3833, 104
      %v3953 = vpop.permute.xlu0 %3952
      %3954 = vrot.lane.b32.xlu0 %v3834, 104
      %v3955 = vpop.permute.xlu0 %3954
      %3956 = vrot.lane.b32.xlu0 %v3835, 104
      %v3957 = vpop.permute.xlu0 %3956
      %3958 = vrot.lane.b32.xlu0 %v3836, 104
      %v3959 = vpop.permute.xlu0 %3958
      %3960 = vrot.lane.b32.xlu0 %v3837, 104
      %v3961 = vpop.permute.xlu0 %3960
      %v3962 = vsel %vm982, %v3953, %v3955
      %v3963 = vsel %vm982, %v3955, %v3957
      %v3964 = vsel %vm982, %v3957, %v3959
      %v3965 = vsel %vm982, %v3959, %v3961
      %3971 = vrot.lane.b32.xlu0 %v3829, 103
      %v3972 = vpop.permute.xlu0 %3971
      %3973 = vrot.lane.b32.xlu0 %v3821, 103
      %v3974 = vpop.permute.xlu0 %3973
      %3975 = vrot.lane.b32.xlu0 %v3822, 103
      %v3976 = vpop.permute.xlu0 %3975
      %3977 = vrot.lane.b32.xlu0 %v3823, 103
      %v3978 = vpop.permute.xlu0 %3977
      %3979 = vrot.lane.b32.xlu0 %v3830, 103
      %v3980 = vpop.permute.xlu0 %3979
      %v3981 = vsel %vm2258, %v3972, %v3974
      %v3982 = vsel %vm2258, %v3974, %v3976
      %v3983 = vsel %vm2258, %v3976, %v3978
      %v3984 = vsel %vm2258, %v3978, %v3980
      %3990 = vrot.lane.b32.xlu0 %v3833, 102
      %v3991 = vpop.permute.xlu0 %3990
      %3992 = vrot.lane.b32.xlu0 %v3834, 102
      %v3993 = vpop.permute.xlu0 %3992
      %3994 = vrot.lane.b32.xlu0 %v3835, 102
      %v3995 = vpop.permute.xlu0 %3994
      %3996 = vrot.lane.b32.xlu0 %v3836, 102
      %v3997 = vpop.permute.xlu0 %3996
      %3998 = vrot.lane.b32.xlu0 %v3837, 102
      %v3999 = vpop.permute.xlu0 %3998
      %v4000 = vsel %vm2278, %v3991, %v3993
      %v4001 = vsel %vm2278, %v3993, %v3995
      %v4002 = vsel %vm2278, %v3995, %v3997
      %v4003 = vsel %vm2278, %v3997, %v3999
      %4009 = vrot.lane.b32.xlu0 %v3829, 84
      %v4010 = vpop.permute.xlu0 %4009
      %4011 = vrot.lane.b32.xlu0 %v3821, 84
      %v4012 = vpop.permute.xlu0 %4011
      %4013 = vrot.lane.b32.xlu0 %v3822, 84
      %v4014 = vpop.permute.xlu0 %4013
      %4015 = vrot.lane.b32.xlu0 %v3823, 84
      %v4016 = vpop.permute.xlu0 %4015
      %4017 = vrot.lane.b32.xlu0 %v3830, 84
      %v4018 = vpop.permute.xlu0 %4017
      %v4019 = vsel %vm1011, %v4010, %v4012
      %v4020 = vsel %vm1011, %v4012, %v4014
      %v4021 = vsel %vm1011, %v4014, %v4016
      %v4022 = vsel %vm1011, %v4016, %v4018
      %4028 = vrot.lane.b32.xlu0 %v3833, 83
      %v4029 = vpop.permute.xlu0 %4028
      %4030 = vrot.lane.b32.xlu0 %v3834, 83
      %v4031 = vpop.permute.xlu0 %4030
      %4032 = vrot.lane.b32.xlu0 %v3835, 83
      %v4033 = vpop.permute.xlu0 %4032
      %4034 = vrot.lane.b32.xlu0 %v3836, 83
      %v4035 = vpop.permute.xlu0 %4034
      %4036 = vrot.lane.b32.xlu0 %v3837, 83
      %v4037 = vpop.permute.xlu0 %4036
      %v4038 = vsel %vm1040, %v4029, %v4031
      %v4039 = vsel %vm1040, %v4031, %v4033
      %v4040 = vsel %vm1040, %v4033, %v4035
      %v4041 = vsel %vm1040, %v4035, %v4037
      %4047 = vrot.lane.b32.xlu0 %v3829, 82
      %v4048 = vpop.permute.xlu0 %4047
      %4049 = vrot.lane.b32.xlu0 %v3821, 82
      %v4050 = vpop.permute.xlu0 %4049
      %4051 = vrot.lane.b32.xlu0 %v3822, 82
      %v4052 = vpop.permute.xlu0 %4051
      %4053 = vrot.lane.b32.xlu0 %v3823, 82
      %v4054 = vpop.permute.xlu0 %4053
      %4055 = vrot.lane.b32.xlu0 %v3830, 82
      %v4056 = vpop.permute.xlu0 %4055
      %v4057 = vsel %vm1069, %v4048, %v4050
      %v4058 = vsel %vm1069, %v4050, %v4052
      %v4059 = vsel %vm1069, %v4052, %v4054
      %v4060 = vsel %vm1069, %v4054, %v4056
      %4066 = vrot.lane.b32.xlu0 %v3833, 81
      %v4067 = vpop.permute.xlu0 %4066
      %4068 = vrot.lane.b32.xlu0 %v3834, 81
      %v4069 = vpop.permute.xlu0 %4068
      %4070 = vrot.lane.b32.xlu0 %v3835, 81
      %v4071 = vpop.permute.xlu0 %4070
      %4072 = vrot.lane.b32.xlu0 %v3836, 81
      %v4073 = vpop.permute.xlu0 %4072
      %4074 = vrot.lane.b32.xlu0 %v3837, 81
      %v4075 = vpop.permute.xlu0 %4074
      %v4076 = vsel %vm2355, %v4067, %v4069
      %v4077 = vsel %vm2355, %v4069, %v4071
      %v4078 = vsel %vm2355, %v4071, %v4073
      %v4079 = vsel %vm2355, %v4073, %v4075
      %4085 = vrot.lane.b32.xlu0 %v3829, 80
      %v4086 = vpop.permute.xlu0 %4085
      %4087 = vrot.lane.b32.xlu0 %v3821, 80
      %v4088 = vpop.permute.xlu0 %4087
      %4089 = vrot.lane.b32.xlu0 %v3822, 80
      %v4090 = vpop.permute.xlu0 %4089
      %4091 = vrot.lane.b32.xlu0 %v3823, 80
      %v4092 = vpop.permute.xlu0 %4091
      %4093 = vrot.lane.b32.xlu0 %v3830, 80
      %v4094 = vpop.permute.xlu0 %4093
      %v4095 = vsel %vm2375, %v4086, %v4088
      %v4096 = vsel %vm2375, %v4088, %v4090
      %v4097 = vsel %vm2375, %v4090, %v4092
      %v4098 = vsel %vm2375, %v4092, %v4094
      %4104 = vrot.lane.b32.xlu0 %v3833, 62
      %v4105 = vpop.permute.xlu0 %4104
      %4106 = vrot.lane.b32.xlu0 %v3834, 62
      %v4107 = vpop.permute.xlu0 %4106
      %4108 = vrot.lane.b32.xlu0 %v3835, 62
      %v4109 = vpop.permute.xlu0 %4108
      %4110 = vrot.lane.b32.xlu0 %v3836, 62
      %v4111 = vpop.permute.xlu0 %4110
      %4112 = vrot.lane.b32.xlu0 %v3837, 62
      %v4113 = vpop.permute.xlu0 %4112
      %v4114 = vsel %vm2395, %v4105, %v4107
      %v4115 = vsel %vm2395, %v4107, %v4109
      %v4116 = vsel %vm2395, %v4109, %v4111
      %v4117 = vsel %vm2395, %v4111, %v4113
      %v4123 = vsel %vm1780, %v3829, %v3848
      %v4124 = vsel %vm1780, %v3821, %v3849
      %v4125 = vsel %vm1780, %v3822, %v3850
      %v4126 = vsel %vm1780, %v3823, %v3851
      %v4127 = vsel %vm1780, %v3830, %v3847
      %v4128 = vsel %vm1780, %v3867, %v3886
      %v4129 = vsel %vm1780, %v3868, %v3887
      %v4130 = vsel %vm1780, %v3869, %v3888
      %v4131 = vsel %vm1780, %v3870, %v3889
      %v4132 = vsel %vm1780, %v3866, %v3885
      %v4133 = vsel %vm1780, %v3905, %v3924
      %v4134 = vsel %vm1780, %v3906, %v3925
      %v4135 = vsel %vm1780, %v3907, %v3926
      %v4136 = vsel %vm1780, %v3908, %v3927
      %v4137 = vsel %vm1780, %v3904, %v3923
      %v4138 = vsel %vm1780, %v3943, %v3962
      %v4139 = vsel %vm1780, %v3944, %v3963
      %v4140 = vsel %vm1780, %v3945, %v3964
      %v4141 = vsel %vm1780, %v3946, %v3965
      %v4142 = vsel %vm1780, %v3942, %v3961
      %v4143 = vsel %vm1780, %v3981, %v4000
      %v4144 = vsel %vm1780, %v3982, %v4001
      %v4145 = vsel %vm1780, %v3983, %v4002
      %v4146 = vsel %vm1780, %v3984, %v4003
      %v4147 = vsel %vm1780, %v3980, %v3999
      %v4148 = vsel %vm1780, %v4019, %v4038
      %v4149 = vsel %vm1780, %v4020, %v4039
      %v4150 = vsel %vm1780, %v4021, %v4040
      %v4151 = vsel %vm1780, %v4022, %v4041
      %v4152 = vsel %vm1780, %v4018, %v4037
      %v4153 = vsel %vm1780, %v4057, %v4076
      %v4154 = vsel %vm1780, %v4058, %v4077
      %v4155 = vsel %vm1780, %v4059, %v4078
      %v4156 = vsel %vm1780, %v4060, %v4079
      %v4157 = vsel %vm1780, %v4056, %v4075
      %v4158 = vsel %vm1780, %v4095, %v4114
      %v4159 = vsel %vm1780, %v4096, %v4115
      %v4160 = vsel %vm1780, %v4097, %v4116
      %v4161 = vsel %vm1780, %v4098, %v4117
      %v4162 = vsel %vm1780, %v4094, %v4113
      %4163 = vrot.lane.b32.xlu0 %v3829, 107
      %v4164 = vpop.permute.xlu0 %4163
      %4165 = vrot.lane.b32.xlu0 %v3821, 107
      %v4166 = vpop.permute.xlu0 %4165
      %4167 = vrot.lane.b32.xlu0 %v3822, 107
      %v4168 = vpop.permute.xlu0 %4167
      %4169 = vrot.lane.b32.xlu0 %v3823, 107
      %v4170 = vpop.permute.xlu0 %4169
      %4171 = vrot.lane.b32.xlu0 %v3830, 107
      %v4172 = vpop.permute.xlu0 %4171
      %v4173 = vsel %vm2455, %v4164, %v4166
      %v4174 = vsel %vm2455, %v4166, %v4168
      %v4175 = vsel %vm2455, %v4168, %v4170
      %v4176 = vsel %vm2455, %v4170, %v4172
      %v4182 = vsel %vm1780, %v4173, %v3924
      %v4183 = vsel %vm1780, %v4174, %v3925
      %v4184 = vsel %vm1780, %v4175, %v3926
      %v4185 = vsel %vm1780, %v4176, %v3927
      %v4186 = vsel %vm1780, %v4172, %v3923
      %4207 = vrot.lane.b32.xlu0 %v4123, 61
      %v4208 = vpop.permute.xlu0 %4207
      %4209 = vrot.lane.b32.xlu0 %v4124, 61
      %v4210 = vpop.permute.xlu0 %4209
      %4211 = vrot.lane.b32.xlu0 %v4125, 61
      %v4212 = vpop.permute.xlu0 %4211
      %4213 = vrot.lane.b32.xlu0 %v4126, 61
      %v4214 = vpop.permute.xlu0 %4213
      %4215 = vrot.lane.b32.xlu0 %v4127, 61
      %v4216 = vpop.permute.xlu0 %4215
      %4217 = vrot.lane.b32.xlu0 %v4128, 61
      %v4218 = vpop.permute.xlu0 %4217
      %4219 = vrot.lane.b32.xlu0 %v4129, 61
      %v4220 = vpop.permute.xlu0 %4219
      %4221 = vrot.lane.b32.xlu0 %v4130, 61
      %v4222 = vpop.permute.xlu0 %4221
      %4223 = vrot.lane.b32.xlu0 %v4131, 61
      %v4224 = vpop.permute.xlu0 %4223
      %4225 = vrot.lane.b32.xlu0 %v4132, 61
      %v4226 = vpop.permute.xlu0 %4225
      %4227 = vrot.lane.b32.xlu0 %v4182, 61
      %v4228 = vpop.permute.xlu0 %4227
      %4229 = vrot.lane.b32.xlu0 %v4183, 61
      %v4230 = vpop.permute.xlu0 %4229
      %4231 = vrot.lane.b32.xlu0 %v4184, 61
      %v4232 = vpop.permute.xlu0 %4231
      %4233 = vrot.lane.b32.xlu0 %v4185, 61
      %v4234 = vpop.permute.xlu0 %4233
      %4235 = vrot.lane.b32.xlu0 %v4186, 61
      %v4236 = vpop.permute.xlu0 %4235
      %4237 = vrot.lane.b32.xlu0 %v4138, 61
      %v4238 = vpop.permute.xlu0 %4237
      %4239 = vrot.lane.b32.xlu0 %v4139, 61
      %v4240 = vpop.permute.xlu0 %4239
      %4241 = vrot.lane.b32.xlu0 %v4140, 61
      %v4242 = vpop.permute.xlu0 %4241
      %4243 = vrot.lane.b32.xlu0 %v4141, 61
      %v4244 = vpop.permute.xlu0 %4243
      %4245 = vrot.lane.b32.xlu0 %v4142, 61
      %v4246 = vpop.permute.xlu0 %4245
      %4247 = vrot.lane.b32.xlu0 %v3981, 61
      %v4248 = vpop.permute.xlu0 %4247
      %4249 = vrot.lane.b32.xlu0 %v3982, 61
      %v4250 = vpop.permute.xlu0 %4249
      %4251 = vrot.lane.b32.xlu0 %v3983, 61
      %v4252 = vpop.permute.xlu0 %4251
      %4253 = vrot.lane.b32.xlu0 %v3984, 61
      %v4254 = vpop.permute.xlu0 %4253
      %4255 = vrot.lane.b32.xlu0 %v3980, 61
      %v4256 = vpop.permute.xlu0 %4255
      %v4257 = vsel %vm2540, %v4208, %v4210
      %v4258 = vsel %vm2540, %v4210, %v4212
      %v4259 = vsel %vm2540, %v4212, %v4214
      %v4260 = vsel %vm2540, %v4214, %v4216
      %v4261 = vsel %vm2540, %v4218, %v4220
      %v4262 = vsel %vm2540, %v4220, %v4222
      %v4263 = vsel %vm2540, %v4222, %v4224
      %v4264 = vsel %vm2540, %v4224, %v4226
      %v4265 = vsel %vm2540, %v4228, %v4230
      %v4266 = vsel %vm2540, %v4230, %v4232
      %v4267 = vsel %vm2540, %v4232, %v4234
      %v4268 = vsel %vm2540, %v4234, %v4236
      %v4269 = vsel %vm2540, %v4238, %v4240
      %v4270 = vsel %vm2540, %v4240, %v4242
      %v4271 = vsel %vm2540, %v4242, %v4244
      %v4272 = vsel %vm2540, %v4244, %v4246
      %v4273 = vsel %vm2540, %v4248, %v4250
      %v4274 = vsel %vm2540, %v4250, %v4252
      %v4275 = vsel %vm2540, %v4252, %v4254
      %v4276 = vsel %vm2540, %v4254, %v4256
      %v4277 = vld [vmem:[%s10] sm:$0xf]
      %v4278 = vld [vmem:[%s11] sm:$0xf]
      %4280 = vset.pattern.permute.xlu0 0
      %4281 = vperm.xlu0 %4280, %v4278
      %v4282 = vpop.permute.xlu0 %4281
      %4309 = vrot.lane.b32.xlu0 %v4123, 105
      %v4310 = vpop.permute.xlu0 %4309
      %4311 = vrot.lane.b32.xlu0 %v4124, 105
      %v4312 = vpop.permute.xlu0 %4311
      %4313 = vrot.lane.b32.xlu0 %v4125, 105
      %v4314 = vpop.permute.xlu0 %4313
      %4315 = vrot.lane.b32.xlu0 %v4126, 105
      %v4316 = vpop.permute.xlu0 %4315
      %4317 = vrot.lane.b32.xlu0 %v4127, 105
      %v4318 = vpop.permute.xlu0 %4317
      %4319 = vrot.lane.b32.xlu0 %v4128, 105
      %v4320 = vpop.permute.xlu0 %4319
      %4321 = vrot.lane.b32.xlu0 %v4129, 105
      %v4322 = vpop.permute.xlu0 %4321
      %4323 = vrot.lane.b32.xlu0 %v4130, 105
      %v4324 = vpop.permute.xlu0 %4323
      %4325 = vrot.lane.b32.xlu0 %v4131, 105
      %v4326 = vpop.permute.xlu0 %4325
      %4327 = vrot.lane.b32.xlu0 %v4132, 105
      %v4328 = vpop.permute.xlu0 %4327
      %4329 = vrot.lane.b32.xlu0 %v4133, 105
      %v4330 = vpop.permute.xlu0 %4329
      %4331 = vrot.lane.b32.xlu0 %v4134, 105
      %v4332 = vpop.permute.xlu0 %4331
      %4333 = vrot.lane.b32.xlu0 %v4135, 105
      %v4334 = vpop.permute.xlu0 %4333
      %4335 = vrot.lane.b32.xlu0 %v4136, 105
      %v4336 = vpop.permute.xlu0 %4335
      %4337 = vrot.lane.b32.xlu0 %v4137, 105
      %v4338 = vpop.permute.xlu0 %4337
      %4339 = vrot.lane.b32.xlu0 %v4138, 105
      %v4340 = vpop.permute.xlu0 %4339
      %4341 = vrot.lane.b32.xlu0 %v4139, 105
      %v4342 = vpop.permute.xlu0 %4341
      %4343 = vrot.lane.b32.xlu0 %v4140, 105
      %v4344 = vpop.permute.xlu0 %4343
      %4345 = vrot.lane.b32.xlu0 %v4141, 105
      %v4346 = vpop.permute.xlu0 %4345
      %4347 = vrot.lane.b32.xlu0 %v4142, 105
      %v4348 = vpop.permute.xlu0 %4347
      %4349 = vrot.lane.b32.xlu0 %v4143, 105
      %v4350 = vpop.permute.xlu0 %4349
      %4351 = vrot.lane.b32.xlu0 %v4144, 105
      %v4352 = vpop.permute.xlu0 %4351
      %4353 = vrot.lane.b32.xlu0 %v4145, 105
      %v4354 = vpop.permute.xlu0 %4353
      %4355 = vrot.lane.b32.xlu0 %v4146, 105
      %v4356 = vpop.permute.xlu0 %4355
      %4357 = vrot.lane.b32.xlu0 %v4147, 105
      %v4358 = vpop.permute.xlu0 %4357
      %4359 = vrot.lane.b32.xlu0 %v4148, 105
      %v4360 = vpop.permute.xlu0 %4359
      %4361 = vrot.lane.b32.xlu0 %v4149, 105
      %v4362 = vpop.permute.xlu0 %4361
      %4363 = vrot.lane.b32.xlu0 %v4150, 105
      %v4364 = vpop.permute.xlu0 %4363
      %4365 = vrot.lane.b32.xlu0 %v4151, 105
      %v4366 = vpop.permute.xlu0 %4365
      %4367 = vrot.lane.b32.xlu0 %v4152, 105
      %v4368 = vpop.permute.xlu0 %4367
      %4369 = vrot.lane.b32.xlu0 %v4153, 105
      %v4370 = vpop.permute.xlu0 %4369
      %4371 = vrot.lane.b32.xlu0 %v4154, 105
      %v4372 = vpop.permute.xlu0 %4371
      %4373 = vrot.lane.b32.xlu0 %v4155, 105
      %v4374 = vpop.permute.xlu0 %4373
      %4375 = vrot.lane.b32.xlu0 %v4156, 105
      %v4376 = vpop.permute.xlu0 %4375
      %4377 = vrot.lane.b32.xlu0 %v4157, 105
      %v4378 = vpop.permute.xlu0 %4377
      %4379 = vrot.lane.b32.xlu0 %v4158, 105
      %v4380 = vpop.permute.xlu0 %4379
      %4381 = vrot.lane.b32.xlu0 %v4159, 105
      %v4382 = vpop.permute.xlu0 %4381
      %4383 = vrot.lane.b32.xlu0 %v4160, 105
      %v4384 = vpop.permute.xlu0 %4383
      %4385 = vrot.lane.b32.xlu0 %v4161, 105
      %v4386 = vpop.permute.xlu0 %4385
      %4387 = vrot.lane.b32.xlu0 %v4162, 105
      %v4388 = vpop.permute.xlu0 %4387
      %4389 = vrot.lane.b32.xlu0 %v4257, 105
      %v4390 = vpop.permute.xlu0 %4389
      %4391 = vrot.lane.b32.xlu0 %v4258, 105
      %v4392 = vpop.permute.xlu0 %4391
      %4393 = vrot.lane.b32.xlu0 %v4259, 105
      %v4394 = vpop.permute.xlu0 %4393
      %4395 = vrot.lane.b32.xlu0 %v4260, 105
      %v4396 = vpop.permute.xlu0 %4395
      %4397 = vrot.lane.b32.xlu0 %v4216, 105
      %v4398 = vpop.permute.xlu0 %4397
      %4399 = vrot.lane.b32.xlu0 %v4261, 105
      %v4400 = vpop.permute.xlu0 %4399
      %4401 = vrot.lane.b32.xlu0 %v4262, 105
      %v4402 = vpop.permute.xlu0 %4401
      %4403 = vrot.lane.b32.xlu0 %v4263, 105
      %v4404 = vpop.permute.xlu0 %4403
      %4405 = vrot.lane.b32.xlu0 %v4264, 105
      %v4406 = vpop.permute.xlu0 %4405
      %4407 = vrot.lane.b32.xlu0 %v4226, 105
      %v4408 = vpop.permute.xlu0 %4407
      %4409 = vrot.lane.b32.xlu0 %v4265, 105
      %v4410 = vpop.permute.xlu0 %4409
      %4411 = vrot.lane.b32.xlu0 %v4266, 105
      %v4412 = vpop.permute.xlu0 %4411
      %4413 = vrot.lane.b32.xlu0 %v4267, 105
      %v4414 = vpop.permute.xlu0 %4413
      %4415 = vrot.lane.b32.xlu0 %v4268, 105
      %v4416 = vpop.permute.xlu0 %4415
      %4417 = vrot.lane.b32.xlu0 %v4236, 105
      %v4418 = vpop.permute.xlu0 %4417
      %4419 = vrot.lane.b32.xlu0 %v4269, 105
      %v4420 = vpop.permute.xlu0 %4419
      %4421 = vrot.lane.b32.xlu0 %v4270, 105
      %v4422 = vpop.permute.xlu0 %4421
      %4423 = vrot.lane.b32.xlu0 %v4271, 105
      %v4424 = vpop.permute.xlu0 %4423
      %4425 = vrot.lane.b32.xlu0 %v4272, 105
      %v4426 = vpop.permute.xlu0 %4425
      %4427 = vrot.lane.b32.xlu0 %v4246, 105
      %v4428 = vpop.permute.xlu0 %4427
      %4429 = vrot.lane.b32.xlu0 %v4273, 105
      %v4430 = vpop.permute.xlu0 %4429
      %4431 = vrot.lane.b32.xlu0 %v4274, 105
      %v4432 = vpop.permute.xlu0 %4431
      %4433 = vrot.lane.b32.xlu0 %v4275, 105
      %v4434 = vpop.permute.xlu0 %4433
      %4435 = vrot.lane.b32.xlu0 %v4276, 105
      %v4436 = vpop.permute.xlu0 %4435
      %4437 = vrot.lane.b32.xlu0 %v4256, 105
      %v4438 = vpop.permute.xlu0 %4437
      %v4439 = vsel %vm953, %v4310, %v4312
      %v4440 = vsel %vm953, %v4312, %v4314
      %v4441 = vsel %vm953, %v4314, %v4316
      %v4442 = vsel %vm953, %v4316, %v4318
      %v4443 = vsel %vm953, %v4320, %v4322
      %v4444 = vsel %vm953, %v4322, %v4324
      %v4445 = vsel %vm953, %v4324, %v4326
      %v4446 = vsel %vm953, %v4326, %v4328
      %v4447 = vsel %vm953, %v4330, %v4332
      %v4448 = vsel %vm953, %v4332, %v4334
      %v4449 = vsel %vm953, %v4334, %v4336
      %v4450 = vsel %vm953, %v4336, %v4338
      %v4451 = vsel %vm953, %v4340, %v4342
      %v4452 = vsel %vm953, %v4342, %v4344
      %v4453 = vsel %vm953, %v4344, %v4346
      %v4454 = vsel %vm953, %v4346, %v4348
      %v4455 = vsel %vm953, %v4350, %v4352
      %v4456 = vsel %vm953, %v4352, %v4354
      %v4457 = vsel %vm953, %v4354, %v4356
      %v4458 = vsel %vm953, %v4356, %v4358
      %v4459 = vsel %vm953, %v4360, %v4362
      %v4460 = vsel %vm953, %v4362, %v4364
      %v4461 = vsel %vm953, %v4364, %v4366
      %v4462 = vsel %vm953, %v4366, %v4368
      %v4463 = vsel %vm953, %v4370, %v4372
      %v4464 = vsel %vm953, %v4372, %v4374
      %v4465 = vsel %vm953, %v4374, %v4376
      %v4466 = vsel %vm953, %v4376, %v4378
      %v4467 = vsel %vm953, %v4380, %v4382
      %v4468 = vsel %vm953, %v4382, %v4384
      %v4469 = vsel %vm953, %v4384, %v4386
      %v4470 = vsel %vm953, %v4386, %v4388
      %v4471 = vsel %vm953, %v4390, %v4392
      %v4472 = vsel %vm953, %v4392, %v4394
      %v4473 = vsel %vm953, %v4394, %v4396
      %v4474 = vsel %vm953, %v4396, %v4398
      %v4475 = vsel %vm953, %v4400, %v4402
      %v4476 = vsel %vm953, %v4402, %v4404
      %v4477 = vsel %vm953, %v4404, %v4406
      %v4478 = vsel %vm953, %v4406, %v4408
      %v4479 = vsel %vm953, %v4410, %v4412
      %v4480 = vsel %vm953, %v4412, %v4414
      %v4481 = vsel %vm953, %v4414, %v4416
      %v4482 = vsel %vm953, %v4416, %v4418
      %v4483 = vsel %vm953, %v4420, %v4422
      %v4484 = vsel %vm953, %v4422, %v4424
      %v4485 = vsel %vm953, %v4424, %v4426
      %v4486 = vsel %vm953, %v4426, %v4428
      %v4487 = vsel %vm953, %v4430, %v4432
      %v4488 = vsel %vm953, %v4432, %v4434
      %v4489 = vsel %vm953, %v4434, %v4436
      %v4490 = vsel %vm953, %v4436, %v4438
      %v4540 = vsel %vm2823, %v4277, 0
      %v4542 = vsel %vm1780, %v4487, 0
      %v4544 = vsel %vm1780, %v4488, 0
      %v4546 = vsel %vm1780, %v4489, 0
      %v4548 = vsel %vm1780, %v4490, 0
      %4550 = vmatprep.subr.mxu0 %v4440
      %4551 = vmatpush1.msra.mxu0 %v4439
      %4552 = vmatprep.subr.mxu0 %v4444
      %4553 = vmatpush1.msra.mxu0 %v4443
      %4554 = vmatprep.subr.mxu0 %v4448
      %4555 = vmatpush1.msra.mxu0 %v4447
      %4556 = vmatprep.subr.mxu0 %v4452
      %4557 = vmatpush1.msra.mxu0 %v4451
      %4558 = vmatprep.subr.mxu0 %v4456
      %4559 = vmatpush1.msra.mxu0 %v4455
      %4560 = vmatprep.subr.mxu0 %v4460
      %4561 = vmatpush1.msra.mxu0 %v4459
      %4562 = vmatprep.subr.mxu0 %v4464
      %4563 = vmatpush1.msra.mxu0 %v4463
      %4564 = vmatprep.subr.mxu0 %v4468
      %4565 = vmatpush1.msra.mxu0 %v4467
      %4566 = vmatprep.subr.mxu0 %v4472
      %4567 = vmatpush1.msra.mxu0 %v4471
      %4568 = vmatprep.subr.mxu0 %v4476
      %4569 = vmatpush1.msra.mxu0 %v4475
      %4570 = vmatprep.subr.mxu0 %v4480
      %4571 = vmatpush1.msra.mxu0 %v4479
      %4572 = vmatprep.subr.mxu0 %v4484
      %4573 = vmatpush1.msra.mxu0 %v4483
      %4574 = vmatprep.subr.mxu0 %v4544
      %4575 = vmatpush1.msra.mxu0 %v4542
      %4576 = vmatprep.subr.mxu0 0.0
      %4577 = vmatpush1.msra.mxu0 0.0
      %4578 = vmatprep.subr.mxu0 0.0
      %4579 = vmatpush1.msra.mxu0 0.0
      %4580 = vmatprep.subr.mxu0 0.0
      %4581 = vmatpush1.msra.mxu0 0.0
      %4582 = vmatprep.subr.mxu0 0.0
      %4583 = vmatpush1.msra.mxu0 0.0
      %4584 = vmatprep.subr.mxu0 0.0
      %4585 = vmatpush1.msra.mxu0 0.0
      %4586 = vmatprep.subr.mxu0 0.0
      %4587 = vmatpush1.msra.mxu0 0.0
      %4588 = vmatprep.subr.mxu0 0.0
      %4589 = vmatpush1.msra.mxu0 0.0
      %4590 = vmatprep.subr.mxu0 0.0
      %4591 = vmatpush1.msra.mxu0 0.0
      %4592 = vmatprep.subr.mxu0 0.0
      %4593 = vmatpush1.msra.mxu0 0.0
      %4594 = vmatprep.subr.mxu0 0.0
      %4595 = vmatpush1.msra.mxu0 0.0
      %4596 = vmatprep.subr.mxu0 0.0
      %4597 = vmatpush1.msra.mxu0 0.0
      %4598 = vmatprep.subr.mxu0 0.0
      %4599 = vmatpush1.msra.mxu0 0.0
      %4600 = vmatprep.subr.mxu0 0.0
      %4601 = vmatpush1.msra.mxu0 0.0
      %4602 = vmatprep.subr.mxu0 0.0
      %4603 = vmatpush1.msra.mxu0 0.0
      %4604 = vmatprep.subr.mxu0 0.0
      %4605 = vmatpush1.msra.mxu0 0.0
      %4606 = vmatprep.subr.mxu0 0.0
      %4607 = vmatpush1.msra.mxu0 0.0
      %4608 = vmatprep.subr.mxu0 0.0
      %4609 = vmatpush1.msra.mxu0 0.0
      %4610 = vmatprep.subr.mxu0 0.0
      %4611 = vmatpush1.msra.mxu0 0.0
      %4612 = vmatprep.subr.mxu0 0.0
      %4613 = vmatpush1.msra.mxu0 0.0
      %4614 = vmatprep.mubr.f32.mxu0 0.0
      %4615 = vmatmul.mubr.f32.gmra.mrb[0].mxu0 %v4540
      %v4616 = vpop.f32.mrb[0].mxu0
      %v4617 = vadd.f32 %v4282, %v4616
      %v4618 = vpop.f32.mrb[0].mxu0
      %v4619 = vadd.f32 %v4282, %v4618
      %4620 = vdwg.mxu0
      %4621 = vmatprep.subr.mxu0 %v4442
      %4622 = vmatpush1.msra.mxu0 %v4441
      %4623 = vmatprep.subr.mxu0 %v4446
      %4624 = vmatpush1.msra.mxu0 %v4445
      %4625 = vmatprep.subr.mxu0 %v4450
      %4626 = vmatpush1.msra.mxu0 %v4449
      %4627 = vmatprep.subr.mxu0 %v4454
      %4628 = vmatpush1.msra.mxu0 %v4453
      %4629 = vmatprep.subr.mxu0 %v4458
      %4630 = vmatpush1.msra.mxu0 %v4457
      %4631 = vmatprep.subr.mxu0 %v4462
      %4632 = vmatpush1.msra.mxu0 %v4461
      %4633 = vmatprep.subr.mxu0 %v4466
      %4634 = vmatpush1.msra.mxu0 %v4465
      %4635 = vmatprep.subr.mxu0 %v4470
      %4636 = vmatpush1.msra.mxu0 %v4469
      %4637 = vmatprep.subr.mxu0 %v4474
      %4638 = vmatpush1.msra.mxu0 %v4473
      %4639 = vmatprep.subr.mxu0 %v4478
      %4640 = vmatpush1.msra.mxu0 %v4477
      %4641 = vmatprep.subr.mxu0 %v4482
      %4642 = vmatpush1.msra.mxu0 %v4481
      %4643 = vmatprep.subr.mxu0 %v4486
      %4644 = vmatpush1.msra.mxu0 %v4485
      %4645 = vmatprep.subr.mxu0 %v4548
      %4646 = vmatpush1.msra.mxu0 %v4546
      %4647 = vmatprep.subr.mxu0 0.0
      %4648 = vmatpush1.msra.mxu0 0.0
      %4649 = vmatprep.subr.mxu0 0.0
      %4650 = vmatpush1.msra.mxu0 0.0
      %4651 = vmatprep.subr.mxu0 0.0
      %4652 = vmatpush1.msra.mxu0 0.0
      %4653 = vmatprep.subr.mxu0 0.0
      %4654 = vmatpush1.msra.mxu0 0.0
      %4655 = vmatprep.subr.mxu0 0.0
      %4656 = vmatpush1.msra.mxu0 0.0
      %4657 = vmatprep.subr.mxu0 0.0
      %4658 = vmatpush1.msra.mxu0 0.0
      %4659 = vmatprep.subr.mxu0 0.0
      %4660 = vmatpush1.msra.mxu0 0.0
      %4661 = vmatprep.subr.mxu0 0.0
      %4662 = vmatpush1.msra.mxu0 0.0
      %4663 = vmatprep.subr.mxu0 0.0
      %4664 = vmatpush1.msra.mxu0 0.0
      %4665 = vmatprep.subr.mxu0 0.0
      %4666 = vmatpush1.msra.mxu0 0.0
      %4667 = vmatprep.subr.mxu0 0.0
      %4668 = vmatpush1.msra.mxu0 0.0
      %4669 = vmatprep.subr.mxu0 0.0
      %4670 = vmatpush1.msra.mxu0 0.0
      %4671 = vmatprep.subr.mxu0 0.0
      %4672 = vmatpush1.msra.mxu0 0.0
      %4673 = vmatprep.subr.mxu0 0.0
      %4674 = vmatpush1.msra.mxu0 0.0
      %4675 = vmatprep.subr.mxu0 0.0
      %4676 = vmatpush1.msra.mxu0 0.0
      %4677 = vmatprep.subr.mxu0 0.0
      %4678 = vmatpush1.msra.mxu0 0.0
      %4679 = vmatprep.subr.mxu0 0.0
      %4680 = vmatpush1.msra.mxu0 0.0
      %4681 = vmatprep.subr.mxu0 0.0
      %4682 = vmatpush1.msra.mxu0 0.0
      %4683 = vmatprep.subr.mxu0 0.0
      %4684 = vmatpush1.msra.mxu0 0.0
      %4685 = vmatprep.mubr.f32.mxu0 0.0
      %4686 = vmatmul.mubr.f32.gmra.mrb[0].mxu0 %v4540
      %v4687 = vpop.f32.mrb[0].mxu0
      %v4688 = vadd.f32 %v4282, %v4687
      %v4689 = vpop.f32.mrb[0].mxu0
      %v4690 = vadd.f32 %v4282, %v4689
      %4691 = vdwg.mxu0
      %vm4692 = vcmp.ge.f32.partialorder %v4617, 0.0
      %vm4693 = vcmp.ge.f32.partialorder %v4619, 0.0
      %vm4694 = vcmp.ge.f32.partialorder %v4688, 0.0
      %vm4695 = vcmp.ge.f32.partialorder %v4690, 0.0
      %v4696 = vmul.f32 %v4617, 0.1
      %v4697 = vmul.f32 %v4619, 0.1
      %v4698 = vmul.f32 %v4688, 0.1
      %v4699 = vmul.f32 %v4690, 0.1
      %v4700 = vsel %vm4692, %v4617, %v4696
      %v4701 = vsel %vm4693, %v4619, %v4697
      %v4702 = vsel %vm4694, %v4688, %v4698
      %v4703 = vsel %vm4695, %v4690, %v4699
      %v4704 = vmul.f32 %v4700, %v1579
      %v4705 = vmul.f32 %v4701, %v1583
      %v4706 = vmul.f32 %v4702, %v1587
      %v4707 = vmul.f32 %v4703, %v1591
      %v4712 = vrot.slane %v3801, 4
      %v4713 = vrot.slane %v3805, 4
      %v4714 = vsel %vm1780, %v4712, %v4713
      %v4715 = vrot.slane %v3802, 4
      %v4716 = vrot.slane %v3806, 4
      %v4717 = vsel %vm1780, %v4715, %v4716
      %v4718 = vrot.slane %v3803, 4
      %v4719 = vrot.slane %v3807, 4
      %v4720 = vsel %vm1780, %v4718, %v4719
      %v4721 = vrot.slane %v3804, 4
      %v4722 = vrot.slane %v3808, 4
      %v4723 = vsel %vm1780, %v4721, %v4722
      %4724 = vrot.lane.b32.xlu0 %v4714, 69
      %v4725 = vpop.permute.xlu0 %4724
      %4726 = vrot.lane.b32.xlu0 %v4717, 69
      %v4727 = vpop.permute.xlu0 %4726
      %4728 = vrot.lane.b32.xlu0 %v4720, 69
      %v4729 = vpop.permute.xlu0 %4728
      %4730 = vrot.lane.b32.xlu0 %v4723, 69
      %v4731 = vpop.permute.xlu0 %4730
      %4732 = vrot.lane.b32.xlu0 %v4713, 69
      %v4733 = vpop.permute.xlu0 %4732
      %4734 = vrot.lane.b32.xlu0 %v4716, 69
      %v4735 = vpop.permute.xlu0 %4734
      %4736 = vrot.lane.b32.xlu0 %v4719, 69
      %v4737 = vpop.permute.xlu0 %4736
      %4738 = vrot.lane.b32.xlu0 %v4722, 69
      %v4739 = vpop.permute.xlu0 %4738
      %v4740 = vsel %vm827, %v4725, %v4727
      %v4741 = vsel %vm827, %v4727, %v4729
      %v4742 = vsel %vm827, %v4729, %v4731
      %v4743 = vsel %vm827, %v4733, %v4735
      %v4744 = vsel %vm827, %v4735, %v4737
      %v4745 = vsel %vm827, %v4737, %v4739
      %v4753 = vsel %vm827, 0.0, %v4725
      %v4754 = vsel %vm827, 0.0, %v4733
      %v4755 = vsel %vm827, %v4731, 0.0
      %v4756 = vsel %vm827, %v4739, 0.0
      %v4761 = vrot.slane %v4753, 4
      %v4762 = vrot.slane %v4740, 4
      %v4763 = vrot.slane %v4741, 4
      %v4764 = vrot.slane %v4742, 4
      %v4765 = vrot.slane %v4755, 4
      %v4766 = vrot.slane %v4754, 4
      %v4767 = vsel %vm1780, %v4761, %v4766
      %v4768 = vrot.slane %v4743, 4
      %v4769 = vsel %vm1780, %v4762, %v4768
      %v4770 = vrot.slane %v4744, 4
      %v4771 = vsel %vm1780, %v4763, %v4770
      %v4772 = vrot.slane %v4745, 4
      %v4773 = vsel %vm1780, %v4764, %v4772
      %v4774 = vrot.slane %v4756, 4
      %v4775 = vsel %vm1780, %v4765, %v4774
      %4776 = vrot.lane.b32.xlu0 %v4761, 127
      %v4777 = vpop.permute.xlu0 %4776
      %4778 = vrot.lane.b32.xlu0 %v4762, 127
      %v4779 = vpop.permute.xlu0 %4778
      %4780 = vrot.lane.b32.xlu0 %v4763, 127
      %v4781 = vpop.permute.xlu0 %4780
      %4782 = vrot.lane.b32.xlu0 %v4764, 127
      %v4783 = vpop.permute.xlu0 %4782
      %4784 = vrot.lane.b32.xlu0 %v4765, 127
      %v4785 = vpop.permute.xlu0 %4784
      %4786 = vrot.lane.b32.xlu0 %v4767, 127
      %v4787 = vpop.permute.xlu0 %4786
      %4788 = vrot.lane.b32.xlu0 %v4769, 127
      %v4789 = vpop.permute.xlu0 %4788
      %4790 = vrot.lane.b32.xlu0 %v4771, 127
      %v4791 = vpop.permute.xlu0 %4790
      %4792 = vrot.lane.b32.xlu0 %v4773, 127
      %v4793 = vpop.permute.xlu0 %4792
      %4794 = vrot.lane.b32.xlu0 %v4775, 127
      %v4795 = vpop.permute.xlu0 %4794
      %v4796 = vsel %vm866, %v4777, %v4779
      %v4797 = vsel %vm866, %v4779, %v4781
      %v4798 = vsel %vm866, %v4781, %v4783
      %v4799 = vsel %vm866, %v4783, %v4785
      %v4800 = vsel %vm866, %v4787, %v4789
      %v4801 = vsel %vm866, %v4789, %v4791
      %v4802 = vsel %vm866, %v4791, %v4793
      %v4803 = vsel %vm866, %v4793, %v4795
      %4809 = vrot.lane.b32.xlu0 %v4753, 126
      %v4810 = vpop.permute.xlu0 %4809
      %4811 = vrot.lane.b32.xlu0 %v4740, 126
      %v4812 = vpop.permute.xlu0 %4811
      %4813 = vrot.lane.b32.xlu0 %v4741, 126
      %v4814 = vpop.permute.xlu0 %4813
      %4815 = vrot.lane.b32.xlu0 %v4742, 126
      %v4816 = vpop.permute.xlu0 %4815
      %4817 = vrot.lane.b32.xlu0 %v4755, 126
      %v4818 = vpop.permute.xlu0 %4817
      %4819 = vrot.lane.b32.xlu0 %v4754, 126
      %v4820 = vpop.permute.xlu0 %4819
      %4821 = vrot.lane.b32.xlu0 %v4743, 126
      %v4822 = vpop.permute.xlu0 %4821
      %4823 = vrot.lane.b32.xlu0 %v4744, 126
      %v4824 = vpop.permute.xlu0 %4823
      %4825 = vrot.lane.b32.xlu0 %v4745, 126
      %v4826 = vpop.permute.xlu0 %4825
      %4827 = vrot.lane.b32.xlu0 %v4756, 126
      %v4828 = vpop.permute.xlu0 %4827
      %v4829 = vsel %vm895, %v4810, %v4812
      %v4830 = vsel %vm895, %v4812, %v4814
      %v4831 = vsel %vm895, %v4814, %v4816
      %v4832 = vsel %vm895, %v4816, %v4818
      %v4833 = vsel %vm895, %v4820, %v4822
      %v4834 = vsel %vm895, %v4822, %v4824
      %v4835 = vsel %vm895, %v4824, %v4826
      %v4836 = vsel %vm895, %v4826, %v4828
      %4842 = vrot.lane.b32.xlu0 %v4761, 106
      %v4843 = vpop.permute.xlu0 %4842
      %4844 = vrot.lane.b32.xlu0 %v4762, 106
      %v4845 = vpop.permute.xlu0 %4844
      %4846 = vrot.lane.b32.xlu0 %v4763, 106
      %v4847 = vpop.permute.xlu0 %4846
      %4848 = vrot.lane.b32.xlu0 %v4764, 106
      %v4849 = vpop.permute.xlu0 %4848
      %4850 = vrot.lane.b32.xlu0 %v4765, 106
      %v4851 = vpop.permute.xlu0 %4850
      %4852 = vrot.lane.b32.xlu0 %v4767, 106
      %v4853 = vpop.permute.xlu0 %4852
      %4854 = vrot.lane.b32.xlu0 %v4769, 106
      %v4855 = vpop.permute.xlu0 %4854
      %4856 = vrot.lane.b32.xlu0 %v4771, 106
      %v4857 = vpop.permute.xlu0 %4856
      %4858 = vrot.lane.b32.xlu0 %v4773, 106
      %v4859 = vpop.permute.xlu0 %4858
      %4860 = vrot.lane.b32.xlu0 %v4775, 106
      %v4861 = vpop.permute.xlu0 %4860
      %v4862 = vsel %vm924, %v4843, %v4845
      %v4863 = vsel %vm924, %v4845, %v4847
      %v4864 = vsel %vm924, %v4847, %v4849
      %v4865 = vsel %vm924, %v4849, %v4851
      %v4866 = vsel %vm924, %v4853, %v4855
      %v4867 = vsel %vm924, %v4855, %v4857
      %v4868 = vsel %vm924, %v4857, %v4859
      %v4869 = vsel %vm924, %v4859, %v4861
      %4875 = vrot.lane.b32.xlu0 %v4753, 105
      %v4876 = vpop.permute.xlu0 %4875
      %4877 = vrot.lane.b32.xlu0 %v4740, 105
      %v4878 = vpop.permute.xlu0 %4877
      %4879 = vrot.lane.b32.xlu0 %v4741, 105
      %v4880 = vpop.permute.xlu0 %4879
      %4881 = vrot.lane.b32.xlu0 %v4742, 105
      %v4882 = vpop.permute.xlu0 %4881
      %4883 = vrot.lane.b32.xlu0 %v4755, 105
      %v4884 = vpop.permute.xlu0 %4883
      %4885 = vrot.lane.b32.xlu0 %v4754, 105
      %v4886 = vpop.permute.xlu0 %4885
      %4887 = vrot.lane.b32.xlu0 %v4743, 105
      %v4888 = vpop.permute.xlu0 %4887
      %4889 = vrot.lane.b32.xlu0 %v4744, 105
      %v4890 = vpop.permute.xlu0 %4889
      %4891 = vrot.lane.b32.xlu0 %v4745, 105
      %v4892 = vpop.permute.xlu0 %4891
      %4893 = vrot.lane.b32.xlu0 %v4756, 105
      %v4894 = vpop.permute.xlu0 %4893
      %v4895 = vsel %vm953, %v4876, %v4878
      %v4896 = vsel %vm953, %v4878, %v4880
      %v4897 = vsel %vm953, %v4880, %v4882
      %v4898 = vsel %vm953, %v4882, %v4884
      %v4899 = vsel %vm953, %v4886, %v4888
      %v4900 = vsel %vm953, %v4888, %v4890
      %v4901 = vsel %vm953, %v4890, %v4892
      %v4902 = vsel %vm953, %v4892, %v4894
      %4908 = vrot.lane.b32.xlu0 %v4761, 104
      %v4909 = vpop.permute.xlu0 %4908
      %4910 = vrot.lane.b32.xlu0 %v4762, 104
      %v4911 = vpop.permute.xlu0 %4910
      %4912 = vrot.lane.b32.xlu0 %v4763, 104
      %v4913 = vpop.permute.xlu0 %4912
      %4914 = vrot.lane.b32.xlu0 %v4764, 104
      %v4915 = vpop.permute.xlu0 %4914
      %4916 = vrot.lane.b32.xlu0 %v4765, 104
      %v4917 = vpop.permute.xlu0 %4916
      %4918 = vrot.lane.b32.xlu0 %v4767, 104
      %v4919 = vpop.permute.xlu0 %4918
      %4920 = vrot.lane.b32.xlu0 %v4769, 104
      %v4921 = vpop.permute.xlu0 %4920
      %4922 = vrot.lane.b32.xlu0 %v4771, 104
      %v4923 = vpop.permute.xlu0 %4922
      %4924 = vrot.lane.b32.xlu0 %v4773, 104
      %v4925 = vpop.permute.xlu0 %4924
      %4926 = vrot.lane.b32.xlu0 %v4775, 104
      %v4927 = vpop.permute.xlu0 %4926
      %v4928 = vsel %vm982, %v4909, %v4911
      %v4929 = vsel %vm982, %v4911, %v4913
      %v4930 = vsel %vm982, %v4913, %v4915
      %v4931 = vsel %vm982, %v4915, %v4917
      %v4932 = vsel %vm982, %v4919, %v4921
      %v4933 = vsel %vm982, %v4921, %v4923
      %v4934 = vsel %vm982, %v4923, %v4925
      %v4935 = vsel %vm982, %v4925, %v4927
      %4941 = vrot.lane.b32.xlu0 %v4753, 84
      %v4942 = vpop.permute.xlu0 %4941
      %4943 = vrot.lane.b32.xlu0 %v4740, 84
      %v4944 = vpop.permute.xlu0 %4943
      %4945 = vrot.lane.b32.xlu0 %v4741, 84
      %v4946 = vpop.permute.xlu0 %4945
      %4947 = vrot.lane.b32.xlu0 %v4742, 84
      %v4948 = vpop.permute.xlu0 %4947
      %4949 = vrot.lane.b32.xlu0 %v4755, 84
      %v4950 = vpop.permute.xlu0 %4949
      %4951 = vrot.lane.b32.xlu0 %v4754, 84
      %v4952 = vpop.permute.xlu0 %4951
      %4953 = vrot.lane.b32.xlu0 %v4743, 84
      %v4954 = vpop.permute.xlu0 %4953
      %4955 = vrot.lane.b32.xlu0 %v4744, 84
      %v4956 = vpop.permute.xlu0 %4955
      %4957 = vrot.lane.b32.xlu0 %v4745, 84
      %v4958 = vpop.permute.xlu0 %4957
      %4959 = vrot.lane.b32.xlu0 %v4756, 84
      %v4960 = vpop.permute.xlu0 %4959
      %v4961 = vsel %vm1011, %v4942, %v4944
      %v4962 = vsel %vm1011, %v4944, %v4946
      %v4963 = vsel %vm1011, %v4946, %v4948
      %v4964 = vsel %vm1011, %v4948, %v4950
      %v4965 = vsel %vm1011, %v4952, %v4954
      %v4966 = vsel %vm1011, %v4954, %v4956
      %v4967 = vsel %vm1011, %v4956, %v4958
      %v4968 = vsel %vm1011, %v4958, %v4960
      %4974 = vrot.lane.b32.xlu0 %v4761, 83
      %v4975 = vpop.permute.xlu0 %4974
      %4976 = vrot.lane.b32.xlu0 %v4762, 83
      %v4977 = vpop.permute.xlu0 %4976
      %4978 = vrot.lane.b32.xlu0 %v4763, 83
      %v4979 = vpop.permute.xlu0 %4978
      %4980 = vrot.lane.b32.xlu0 %v4764, 83
      %v4981 = vpop.permute.xlu0 %4980
      %4982 = vrot.lane.b32.xlu0 %v4765, 83
      %v4983 = vpop.permute.xlu0 %4982
      %4984 = vrot.lane.b32.xlu0 %v4767, 83
      %v4985 = vpop.permute.xlu0 %4984
      %4986 = vrot.lane.b32.xlu0 %v4769, 83
      %v4987 = vpop.permute.xlu0 %4986
      %4988 = vrot.lane.b32.xlu0 %v4771, 83
      %v4989 = vpop.permute.xlu0 %4988
      %4990 = vrot.lane.b32.xlu0 %v4773, 83
      %v4991 = vpop.permute.xlu0 %4990
      %4992 = vrot.lane.b32.xlu0 %v4775, 83
      %v4993 = vpop.permute.xlu0 %4992
      %v4994 = vsel %vm1040, %v4975, %v4977
      %v4995 = vsel %vm1040, %v4977, %v4979
      %v4996 = vsel %vm1040, %v4979, %v4981
      %v4997 = vsel %vm1040, %v4981, %v4983
      %v4998 = vsel %vm1040, %v4985, %v4987
      %v4999 = vsel %vm1040, %v4987, %v4989
      %v5000 = vsel %vm1040, %v4989, %v4991
      %v5001 = vsel %vm1040, %v4991, %v4993
      %5007 = vrot.lane.b32.xlu0 %v4753, 82
      %v5008 = vpop.permute.xlu0 %5007
      %5009 = vrot.lane.b32.xlu0 %v4740, 82
      %v5010 = vpop.permute.xlu0 %5009
      %5011 = vrot.lane.b32.xlu0 %v4741, 82
      %v5012 = vpop.permute.xlu0 %5011
      %5013 = vrot.lane.b32.xlu0 %v4742, 82
      %v5014 = vpop.permute.xlu0 %5013
      %5015 = vrot.lane.b32.xlu0 %v4755, 82
      %v5016 = vpop.permute.xlu0 %5015
      %5017 = vrot.lane.b32.xlu0 %v4754, 82
      %v5018 = vpop.permute.xlu0 %5017
      %5019 = vrot.lane.b32.xlu0 %v4743, 82
      %v5020 = vpop.permute.xlu0 %5019
      %5021 = vrot.lane.b32.xlu0 %v4744, 82
      %v5022 = vpop.permute.xlu0 %5021
      %5023 = vrot.lane.b32.xlu0 %v4745, 82
      %v5024 = vpop.permute.xlu0 %5023
      %5025 = vrot.lane.b32.xlu0 %v4756, 82
      %v5026 = vpop.permute.xlu0 %5025
      %v5027 = vsel %vm1069, %v5008, %v5010
      %v5028 = vsel %vm1069, %v5010, %v5012
      %v5029 = vsel %vm1069, %v5012, %v5014
      %v5030 = vsel %vm1069, %v5014, %v5016
      %v5031 = vsel %vm1069, %v5018, %v5020
      %v5032 = vsel %vm1069, %v5020, %v5022
      %v5033 = vsel %vm1069, %v5022, %v5024
      %v5034 = vsel %vm1069, %v5024, %v5026
      %v5035 = vsel %vm1780, %v4754, %v4796
      %v5036 = vsel %vm1780, %v4743, %v4797
      %v5037 = vsel %vm1780, %v4744, %v4798
      %v5038 = vsel %vm1780, %v4745, %v4799
      %v5039 = vsel %vm1780, %v4756, %v4785
      %v5040 = vsel %vm1780, %v4833, %v4862
      %v5041 = vsel %vm1780, %v4834, %v4863
      %v5042 = vsel %vm1780, %v4835, %v4864
      %v5043 = vsel %vm1780, %v4836, %v4865
      %v5044 = vsel %vm1780, %v4828, %v4851
      %v5045 = vsel %vm1780, %v4899, %v4928
      %v5046 = vsel %vm1780, %v4900, %v4929
      %v5047 = vsel %vm1780, %v4901, %v4930
      %v5048 = vsel %vm1780, %v4902, %v4931
      %v5049 = vsel %vm1780, %v4894, %v4917
      %v5050 = vsel %vm1780, %v4965, %v4994
      %v5051 = vsel %vm1780, %v4966, %v4995
      %v5052 = vsel %vm1780, %v4967, %v4996
      %v5053 = vsel %vm1780, %v4968, %v4997
      %v5054 = vsel %vm1780, %v4960, %v4983
      %v5055 = vld [vmem:[%s12] sm:$0xff]
      %v5056 = vld [vmem:[%s12 + $0x8] sm:$0xff]
      %v5057 = vld [vmem:[%s13] sm:$0xff]
      %v5058 = vld [vmem:[%s13 + $0x8] sm:$0xff]
      %5060 = vset.pattern.permute.xlu0 0
      %5061 = vperm.xlu0 %5060, %v5057
      %v5062 = vpop.permute.xlu0 %5061
      %5065 = vset.pattern.permute.xlu0 0
      %5066 = vperm.xlu0 %5065, %v5058
      %v5067 = vpop.permute.xlu0 %5066
      %5089 = vrot.lane.b32.xlu0 %v5035, 82
      %v5090 = vpop.permute.xlu0 %5089
      %5091 = vrot.lane.b32.xlu0 %v5036, 82
      %v5092 = vpop.permute.xlu0 %5091
      %5093 = vrot.lane.b32.xlu0 %v5037, 82
      %v5094 = vpop.permute.xlu0 %5093
      %5095 = vrot.lane.b32.xlu0 %v5038, 82
      %v5096 = vpop.permute.xlu0 %5095
      %5097 = vrot.lane.b32.xlu0 %v5039, 82
      %v5098 = vpop.permute.xlu0 %5097
      %5099 = vrot.lane.b32.xlu0 %v4800, 82
      %v5100 = vpop.permute.xlu0 %5099
      %5101 = vrot.lane.b32.xlu0 %v4801, 82
      %v5102 = vpop.permute.xlu0 %5101
      %5103 = vrot.lane.b32.xlu0 %v4802, 82
      %v5104 = vpop.permute.xlu0 %5103
      %5105 = vrot.lane.b32.xlu0 %v4803, 82
      %v5106 = vpop.permute.xlu0 %5105
      %5107 = vrot.lane.b32.xlu0 %v4795, 82
      %v5108 = vpop.permute.xlu0 %5107
      %5109 = vrot.lane.b32.xlu0 %v4829, 82
      %v5110 = vpop.permute.xlu0 %5109
      %5111 = vrot.lane.b32.xlu0 %v4830, 82
      %v5112 = vpop.permute.xlu0 %5111
      %5113 = vrot.lane.b32.xlu0 %v4831, 82
      %v5114 = vpop.permute.xlu0 %5113
      %5115 = vrot.lane.b32.xlu0 %v4832, 82
      %v5116 = vpop.permute.xlu0 %5115
      %5117 = vrot.lane.b32.xlu0 %v4818, 82
      %v5118 = vpop.permute.xlu0 %5117
      %5119 = vrot.lane.b32.xlu0 %v5040, 82
      %v5120 = vpop.permute.xlu0 %5119
      %5121 = vrot.lane.b32.xlu0 %v5041, 82
      %v5122 = vpop.permute.xlu0 %5121
      %5123 = vrot.lane.b32.xlu0 %v5042, 82
      %v5124 = vpop.permute.xlu0 %5123
      %5125 = vrot.lane.b32.xlu0 %v5043, 82
      %v5126 = vpop.permute.xlu0 %5125
      %5127 = vrot.lane.b32.xlu0 %v5044, 82
      %v5128 = vpop.permute.xlu0 %5127
      %5129 = vrot.lane.b32.xlu0 %v4866, 82
      %v5130 = vpop.permute.xlu0 %5129
      %5131 = vrot.lane.b32.xlu0 %v4867, 82
      %v5132 = vpop.permute.xlu0 %5131
      %5133 = vrot.lane.b32.xlu0 %v4868, 82
      %v5134 = vpop.permute.xlu0 %5133
      %5135 = vrot.lane.b32.xlu0 %v4869, 82
      %v5136 = vpop.permute.xlu0 %5135
      %5137 = vrot.lane.b32.xlu0 %v4861, 82
      %v5138 = vpop.permute.xlu0 %5137
      %5139 = vrot.lane.b32.xlu0 %v4895, 82
      %v5140 = vpop.permute.xlu0 %5139
      %5141 = vrot.lane.b32.xlu0 %v4896, 82
      %v5142 = vpop.permute.xlu0 %5141
      %5143 = vrot.lane.b32.xlu0 %v4897, 82
      %v5144 = vpop.permute.xlu0 %5143
      %5145 = vrot.lane.b32.xlu0 %v4898, 82
      %v5146 = vpop.permute.xlu0 %5145
      %5147 = vrot.lane.b32.xlu0 %v4884, 82
      %v5148 = vpop.permute.xlu0 %5147
      %5149 = vrot.lane.b32.xlu0 %v5045, 82
      %v5150 = vpop.permute.xlu0 %5149
      %5151 = vrot.lane.b32.xlu0 %v5046, 82
      %v5152 = vpop.permute.xlu0 %5151
      %5153 = vrot.lane.b32.xlu0 %v5047, 82
      %v5154 = vpop.permute.xlu0 %5153
      %5155 = vrot.lane.b32.xlu0 %v5048, 82
      %v5156 = vpop.permute.xlu0 %5155
      %5157 = vrot.lane.b32.xlu0 %v5049, 82
      %v5158 = vpop.permute.xlu0 %5157
      %5159 = vrot.lane.b32.xlu0 %v4932, 82
      %v5160 = vpop.permute.xlu0 %5159
      %5161 = vrot.lane.b32.xlu0 %v4933, 82
      %v5162 = vpop.permute.xlu0 %5161
      %5163 = vrot.lane.b32.xlu0 %v4934, 82
      %v5164 = vpop.permute.xlu0 %5163
      %5165 = vrot.lane.b32.xlu0 %v4935, 82
      %v5166 = vpop.permute.xlu0 %5165
      %5167 = vrot.lane.b32.xlu0 %v4927, 82
      %v5168 = vpop.permute.xlu0 %5167
      %5169 = vrot.lane.b32.xlu0 %v4961, 82
      %v5170 = vpop.permute.xlu0 %5169
      %5171 = vrot.lane.b32.xlu0 %v4962, 82
      %v5172 = vpop.permute.xlu0 %5171
      %5173 = vrot.lane.b32.xlu0 %v4963, 82
      %v5174 = vpop.permute.xlu0 %5173
      %5175 = vrot.lane.b32.xlu0 %v4964, 82
      %v5176 = vpop.permute.xlu0 %5175
      %5177 = vrot.lane.b32.xlu0 %v4950, 82
      %v5178 = vpop.permute.xlu0 %5177
      %5179 = vrot.lane.b32.xlu0 %v5050, 82
      %v5180 = vpop.permute.xlu0 %5179
      %5181 = vrot.lane.b32.xlu0 %v5051, 82
      %v5182 = vpop.permute.xlu0 %5181
      %5183 = vrot.lane.b32.xlu0 %v5052, 82
      %v5184 = vpop.permute.xlu0 %5183
      %5185 = vrot.lane.b32.xlu0 %v5053, 82
      %v5186 = vpop.permute.xlu0 %5185
      %5187 = vrot.lane.b32.xlu0 %v5054, 82
      %v5188 = vpop.permute.xlu0 %5187
      %5189 = vrot.lane.b32.xlu0 %v4998, 82
      %v5190 = vpop.permute.xlu0 %5189
      %5191 = vrot.lane.b32.xlu0 %v4999, 82
      %v5192 = vpop.permute.xlu0 %5191
      %5193 = vrot.lane.b32.xlu0 %v5000, 82
      %v5194 = vpop.permute.xlu0 %5193
      %5195 = vrot.lane.b32.xlu0 %v5001, 82
      %v5196 = vpop.permute.xlu0 %5195
      %5197 = vrot.lane.b32.xlu0 %v4993, 82
      %v5198 = vpop.permute.xlu0 %5197
      %5199 = vrot.lane.b32.xlu0 %v5027, 82
      %v5200 = vpop.permute.xlu0 %5199
      %5201 = vrot.lane.b32.xlu0 %v5028, 82
      %v5202 = vpop.permute.xlu0 %5201
      %5203 = vrot.lane.b32.xlu0 %v5029, 82
      %v5204 = vpop.permute.xlu0 %5203
      %5205 = vrot.lane.b32.xlu0 %v5030, 82
      %v5206 = vpop.permute.xlu0 %5205
      %5207 = vrot.lane.b32.xlu0 %v5016, 82
      %v5208 = vpop.permute.xlu0 %5207
      %5209 = vrot.lane.b32.xlu0 %v5031, 82
      %v5210 = vpop.permute.xlu0 %5209
      %5211 = vrot.lane.b32.xlu0 %v5032, 82
      %v5212 = vpop.permute.xlu0 %5211
      %5213 = vrot.lane.b32.xlu0 %v5033, 82
      %v5214 = vpop.permute.xlu0 %5213
      %5215 = vrot.lane.b32.xlu0 %v5034, 82
      %v5216 = vpop.permute.xlu0 %5215
      %5217 = vrot.lane.b32.xlu0 %v5026, 82
      %v5218 = vpop.permute.xlu0 %5217
      %v5219 = vsel %vm1069, %v5090, %v5092
      %v5220 = vsel %vm1069, %v5092, %v5094
      %v5221 = vsel %vm1069, %v5094, %v5096
      %v5222 = vsel %vm1069, %v5096, %v5098
      %v5223 = vsel %vm1069, %v5100, %v5102
      %v5224 = vsel %vm1069, %v5102, %v5104
      %v5225 = vsel %vm1069, %v5104, %v5106
      %v5226 = vsel %vm1069, %v5106, %v5108
      %v5227 = vsel %vm1069, %v5110, %v5112
      %v5228 = vsel %vm1069, %v5112, %v5114
      %v5229 = vsel %vm1069, %v5114, %v5116
      %v5230 = vsel %vm1069, %v5116, %v5118
      %v5231 = vsel %vm1069, %v5120, %v5122
      %v5232 = vsel %vm1069, %v5122, %v5124
      %v5233 = vsel %vm1069, %v5124, %v5126
      %v5234 = vsel %vm1069, %v5126, %v5128
      %v5235 = vsel %vm1069, %v5130, %v5132
      %v5236 = vsel %vm1069, %v5132, %v5134
      %v5237 = vsel %vm1069, %v5134, %v5136
      %v5238 = vsel %vm1069, %v5136, %v5138
      %v5239 = vsel %vm1069, %v5140, %v5142
      %v5240 = vsel %vm1069, %v5142, %v5144
      %v5241 = vsel %vm1069, %v5144, %v5146
      %v5242 = vsel %vm1069, %v5146, %v5148
      %v5243 = vsel %vm1069, %v5150, %v5152
      %v5244 = vsel %vm1069, %v5152, %v5154
      %v5245 = vsel %vm1069, %v5154, %v5156
      %v5246 = vsel %vm1069, %v5156, %v5158
      %v5247 = vsel %vm1069, %v5160, %v5162
      %v5248 = vsel %vm1069, %v5162, %v5164
      %v5249 = vsel %vm1069, %v5164, %v5166
      %v5250 = vsel %vm1069, %v5166, %v5168
      %v5251 = vsel %vm1069, %v5170, %v5172
      %v5252 = vsel %vm1069, %v5172, %v5174
      %v5253 = vsel %vm1069, %v5174, %v5176
      %v5254 = vsel %vm1069, %v5176, %v5178
      %v5255 = vsel %vm1069, %v5180, %v5182
      %v5256 = vsel %vm1069, %v5182, %v5184
      %v5257 = vsel %vm1069, %v5184, %v5186
      %v5258 = vsel %vm1069, %v5186, %v5188
      %v5259 = vsel %vm1069, %v5190, %v5192
      %v5260 = vsel %vm1069, %v5192, %v5194
      %v5261 = vsel %vm1069, %v5194, %v5196
      %v5262 = vsel %vm1069, %v5196, %v5198
      %v5263 = vsel %vm1069, %v5200, %v5202
      %v5264 = vsel %vm1069, %v5202, %v5204
      %v5265 = vsel %vm1069, %v5204, %v5206
      %v5266 = vsel %vm1069, %v5206, %v5208
      %v5267 = vsel %vm1069, %v5210, %v5212
      %v5268 = vsel %vm1069, %v5212, %v5214
      %v5269 = vsel %vm1069, %v5214, %v5216
      %v5270 = vsel %vm1069, %v5216, %v5218
      %v5324 = vsel %vm3608, %v5055, 0
      %v5327 = vsel %vm3608, %v5056, 0
      %v5329 = vsel %vm1780, %v5267, 0
      %v5331 = vsel %vm1780, %v5268, 0
      %v5333 = vsel %vm1780, %v5269, 0
      %v5335 = vsel %vm1780, %v5270, 0
      %5337 = vmatprep.subr.mxu0 %v5028
      %5338 = vmatpush1.msra.mxu0 %v5027
      %5339 = vmatprep.subr.mxu0 %v5220
      %5340 = vmatpush1.msra.mxu0 %v5219
      %5341 = vmatprep.subr.mxu0 %v5224
      %5342 = vmatpush1.msra.mxu0 %v5223
      %5343 = vmatprep.subr.mxu0 %v5228
      %5344 = vmatpush1.msra.mxu0 %v5227
      %5345 = vmatprep.subr.mxu0 %v5232
      %5346 = vmatpush1.msra.mxu0 %v5231
      %5347 = vmatprep.subr.mxu0 %v5236
      %5348 = vmatpush1.msra.mxu0 %v5235
      %5349 = vmatprep.subr.mxu0 %v5240
      %5350 = vmatpush1.msra.mxu0 %v5239
      %5351 = vmatprep.subr.mxu0 %v5244
      %5352 = vmatpush1.msra.mxu0 %v5243
      %5353 = vmatprep.subr.mxu0 %v5248
      %5354 = vmatpush1.msra.mxu0 %v5247
      %5355 = vmatprep.subr.mxu0 %v5252
      %5356 = vmatpush1.msra.mxu0 %v5251
      %5357 = vmatprep.subr.mxu0 %v5256
      %5358 = vmatpush1.msra.mxu0 %v5255
      %5359 = vmatprep.subr.mxu0 %v5260
      %5360 = vmatpush1.msra.mxu0 %v5259
      %5361 = vmatprep.subr.mxu0 %v5264
      %5362 = vmatpush1.msra.mxu0 %v5263
      %5363 = vmatprep.subr.mxu0 %v5331
      %5364 = vmatpush1.msra.mxu0 %v5329
      %5365 = vmatprep.subr.mxu0 0.0
      %5366 = vmatpush1.msra.mxu0 0.0
      %5367 = vmatprep.subr.mxu0 0.0
      %5368 = vmatpush1.msra.mxu0 0.0
      %5369 = vmatprep.subr.mxu0 0.0
      %5370 = vmatpush1.msra.mxu0 0.0
      %5371 = vmatprep.subr.mxu0 0.0
      %5372 = vmatpush1.msra.mxu0 0.0
      %5373 = vmatprep.subr.mxu0 0.0
      %5374 = vmatpush1.msra.mxu0 0.0
      %5375 = vmatprep.subr.mxu0 0.0
      %5376 = vmatpush1.msra.mxu0 0.0
      %5377 = vmatprep.subr.mxu0 0.0
      %5378 = vmatpush1.msra.mxu0 0.0
      %5379 = vmatprep.subr.mxu0 0.0
      %5380 = vmatpush1.msra.mxu0 0.0
      %5381 = vmatprep.subr.mxu0 0.0
      %5382 = vmatpush1.msra.mxu0 0.0
      %5383 = vmatprep.subr.mxu0 0.0
      %5384 = vmatpush1.msra.mxu0 0.0
      %5385 = vmatprep.subr.mxu0 0.0
      %5386 = vmatpush1.msra.mxu0 0.0
      %5387 = vmatprep.subr.mxu0 0.0
      %5388 = vmatpush1.msra.mxu0 0.0
      %5389 = vmatprep.subr.mxu0 0.0
      %5390 = vmatpush1.msra.mxu0 0.0
      %5391 = vmatprep.subr.mxu0 0.0
      %5392 = vmatpush1.msra.mxu0 0.0
      %5393 = vmatprep.subr.mxu0 0.0
      %5394 = vmatpush1.msra.mxu0 0.0
      %5395 = vmatprep.subr.mxu0 0.0
      %5396 = vmatpush1.msra.mxu0 0.0
      %5397 = vmatprep.subr.mxu0 0.0
      %5398 = vmatpush1.msra.mxu0 0.0
      %5399 = vmatprep.subr.mxu0 0.0
      %5400 = vmatpush1.msra.mxu0 0.0
      %5401 = vmatprep.mubr.f32.mxu0 0.0
      %5402 = vmatmul.mubr.f32.gmra.mrb[0].mxu0 %v5324
      %v5403 = vpop.f32.mrb[0].mxu0
      %v5404 = vadd.f32 %v5062, %v5403
      %v5405 = vpop.f32.mrb[0].mxu0
      %v5406 = vadd.f32 %v5062, %v5405
      %5407 = vmatprep.mubr.f32.mxu0 0.0
      %5408 = vmatmul.mubr.f32.gmra.mrb[0].mxu0 %v5327
      %v5409 = vpop.f32.mrb[0].mxu0
      %v5410 = vadd.f32 %v5067, %v5409
      %v5411 = vpop.f32.mrb[0].mxu0
      %v5412 = vadd.f32 %v5067, %v5411
      %5413 = vdwg.mxu0
      %5414 = vmatprep.subr.mxu0 %v5030
      %5415 = vmatpush1.msra.mxu0 %v5029
      %5416 = vmatprep.subr.mxu0 %v5222
      %5417 = vmatpush1.msra.mxu0 %v5221
      %5418 = vmatprep.subr.mxu0 %v5226
      %5419 = vmatpush1.msra.mxu0 %v5225
      %5420 = vmatprep.subr.mxu0 %v5230
      %5421 = vmatpush1.msra.mxu0 %v5229
      %5422 = vmatprep.subr.mxu0 %v5234
      %5423 = vmatpush1.msra.mxu0 %v5233
      %5424 = vmatprep.subr.mxu0 %v5238
      %5425 = vmatpush1.msra.mxu0 %v5237
      %5426 = vmatprep.subr.mxu0 %v5242
      %5427 = vmatpush1.msra.mxu0 %v5241
      %5428 = vmatprep.subr.mxu0 %v5246
      %5429 = vmatpush1.msra.mxu0 %v5245
      %5430 = vmatprep.subr.mxu0 %v5250
      %5431 = vmatpush1.msra.mxu0 %v5249
      %5432 = vmatprep.subr.mxu0 %v5254
      %5433 = vmatpush1.msra.mxu0 %v5253
      %5434 = vmatprep.subr.mxu0 %v5258
      %5435 = vmatpush1.msra.mxu0 %v5257
      %5436 = vmatprep.subr.mxu0 %v5262
      %5437 = vmatpush1.msra.mxu0 %v5261
      %5438 = vmatprep.subr.mxu0 %v5266
      %5439 = vmatpush1.msra.mxu0 %v5265
      %5440 = vmatprep.subr.mxu0 %v5335
      %5441 = vmatpush1.msra.mxu0 %v5333
      %5442 = vmatprep.subr.mxu0 0.0
      %5443 = vmatpush1.msra.mxu0 0.0
      %5444 = vmatprep.subr.mxu0 0.0
      %5445 = vmatpush1.msra.mxu0 0.0
      %5446 = vmatprep.subr.mxu0 0.0
      %5447 = vmatpush1.msra.mxu0 0.0
      %5448 = vmatprep.subr.mxu0 0.0
      %5449 = vmatpush1.msra.mxu0 0.0
      %5450 = vmatprep.subr.mxu0 0.0
      %5451 = vmatpush1.msra.mxu0 0.0
      %5452 = vmatprep.subr.mxu0 0.0
      %5453 = vmatpush1.msra.mxu0 0.0
      %5454 = vmatprep.subr.mxu0 0.0
      %5455 = vmatpush1.msra.mxu0 0.0
      %5456 = vmatprep.subr.mxu0 0.0
      %5457 = vmatpush1.msra.mxu0 0.0
      %5458 = vmatprep.subr.mxu0 0.0
      %5459 = vmatpush1.msra.mxu0 0.0
      %5460 = vmatprep.subr.mxu0 0.0
      %5461 = vmatpush1.msra.mxu0 0.0
      %5462 = vmatprep.subr.mxu0 0.0
      %5463 = vmatpush1.msra.mxu0 0.0
      %5464 = vmatprep.subr.mxu0 0.0
      %5465 = vmatpush1.msra.mxu0 0.0
      %5466 = vmatprep.subr.mxu0 0.0
      %5467 = vmatpush1.msra.mxu0 0.0
      %5468 = vmatprep.subr.mxu0 0.0
      %5469 = vmatpush1.msra.mxu0 0.0
      %5470 = vmatprep.subr.mxu0 0.0
      %5471 = vmatpush1.msra.mxu0 0.0
      %5472 = vmatprep.subr.mxu0 0.0
      %5473 = vmatpush1.msra.mxu0 0.0
      %5474 = vmatprep.subr.mxu0 0.0
      %5475 = vmatpush1.msra.mxu0 0.0
      %5476 = vmatprep.subr.mxu0 0.0
      %5477 = vmatpush1.msra.mxu0 0.0
      %5478 = vmatprep.mubr.f32.mxu0 0.0
      %5479 = vmatmul.mubr.f32.gmra.mrb[0].mxu0 %v5324
      %v5480 = vpop.f32.mrb[0].mxu0
      %v5481 = vadd.f32 %v5062, %v5480
      %v5482 = vpop.f32.mrb[0].mxu0
      %v5483 = vadd.f32 %v5062, %v5482
      %5484 = vmatprep.mubr.f32.mxu0 0.0
      %5485 = vmatmul.mubr.f32.gmra.mrb[0].mxu0 %v5327
      %v5486 = vpop.f32.mrb[0].mxu0
      %v5487 = vadd.f32 %v5067, %v5486
      %v5488 = vpop.f32.mrb[0].mxu0
      %v5489 = vadd.f32 %v5067, %v5488
      %5490 = vdwg.mxu0
      %vm5491 = vcmp.ge.f32.partialorder %v5404, 0.0
      %vm5492 = vcmp.ge.f32.partialorder %v5406, 0.0
      %vm5493 = vcmp.ge.f32.partialorder %v5481, 0.0
      %vm5494 = vcmp.ge.f32.partialorder %v5483, 0.0
      %vm5495 = vcmp.ge.f32.partialorder %v5410, 0.0
      %vm5496 = vcmp.ge.f32.partialorder %v5412, 0.0
      %vm5497 = vcmp.ge.f32.partialorder %v5487, 0.0
      %vm5498 = vcmp.ge.f32.partialorder %v5489, 0.0
      %v5499 = vmul.f32 %v5404, 0.05
      %v5500 = vmul.f32 %v5406, 0.05
      %v5501 = vmul.f32 %v5481, 0.05
      %v5502 = vmul.f32 %v5483, 0.05
      %v5503 = vmul.f32 %v5410, 0.05
      %v5504 = vmul.f32 %v5412, 0.05
      %v5505 = vmul.f32 %v5487, 0.05
      %v5506 = vmul.f32 %v5489, 0.05
      %v5507 = vsel %vm5491, %v5404, %v5499
      %v5508 = vsel %vm5492, %v5406, %v5500
      %v5509 = vsel %vm5493, %v5481, %v5501
      %v5510 = vsel %vm5494, %v5483, %v5502
      %v5511 = vsel %vm5495, %v5410, %v5503
      %v5512 = vsel %vm5496, %v5412, %v5504
      %v5513 = vsel %vm5497, %v5487, %v5505
      %v5514 = vsel %vm5498, %v5489, %v5506
      %v5515 = vmul.f32 %v5507, %v1579
      %v5516 = vmul.f32 %v5508, %v1583
      %v5517 = vmul.f32 %v5509, %v1587
      %v5518 = vmul.f32 %v5510, %v1591
      %v5519 = vmul.f32 %v5511, %v1579
      %v5520 = vmul.f32 %v5512, %v1583
      %v5521 = vmul.f32 %v5513, %v1587
      %v5522 = vmul.f32 %v5514, %v1591
      %5527 = vrot.lane.b32.xlu0 %v5515, 69
      %v5528 = vpop.permute.xlu0 %5527
      %5529 = vrot.lane.b32.xlu0 %v5516, 69
      %v5530 = vpop.permute.xlu0 %5529
      %5531 = vrot.lane.b32.xlu0 %v5517, 69
      %v5532 = vpop.permute.xlu0 %5531
      %5533 = vrot.lane.b32.xlu0 %v5518, 69
      %v5534 = vpop.permute.xlu0 %5533
      %v5535 = vsel %vm827, %v5528, %v5530
      %v5536 = vsel %vm827, %v5530, %v5532
      %v5537 = vsel %vm827, %v5532, %v5534
      %v5543 = vsel %vm827, 0.0, %v5528
      %v5544 = vsel %vm827, %v5534, 0.0
      %v5547 = vrot.slane %v5543, 4
      %v5548 = vrot.slane %v5535, 4
      %v5549 = vrot.slane %v5536, 4
      %v5550 = vrot.slane %v5537, 4
      %v5551 = vrot.slane %v5544, 4
      %5552 = vrot.lane.b32.xlu0 %v5547, 127
      %v5553 = vpop.permute.xlu0 %5552
      %5554 = vrot.lane.b32.xlu0 %v5548, 127
      %v5555 = vpop.permute.xlu0 %5554
      %5556 = vrot.lane.b32.xlu0 %v5549, 127
      %v5557 = vpop.permute.xlu0 %5556
      %5558 = vrot.lane.b32.xlu0 %v5550, 127
      %v5559 = vpop.permute.xlu0 %5558
      %5560 = vrot.lane.b32.xlu0 %v5551, 127
      %v5561 = vpop.permute.xlu0 %5560
      %v5562 = vsel %vm866, %v5553, %v5555
      %v5563 = vsel %vm866, %v5555, %v5557
      %v5564 = vsel %vm866, %v5557, %v5559
      %v5565 = vsel %vm866, %v5559, %v5561
      %5571 = vrot.lane.b32.xlu0 %v5543, 126
      %v5572 = vpop.permute.xlu0 %5571
      %5573 = vrot.lane.b32.xlu0 %v5535, 126
      %v5574 = vpop.permute.xlu0 %5573
      %5575 = vrot.lane.b32.xlu0 %v5536, 126
      %v5576 = vpop.permute.xlu0 %5575
      %5577 = vrot.lane.b32.xlu0 %v5537, 126
      %v5578 = vpop.permute.xlu0 %5577
      %5579 = vrot.lane.b32.xlu0 %v5544, 126
      %v5580 = vpop.permute.xlu0 %5579
      %v5581 = vsel %vm895, %v5572, %v5574
      %v5582 = vsel %vm895, %v5574, %v5576
      %v5583 = vsel %vm895, %v5576, %v5578
      %v5584 = vsel %vm895, %v5578, %v5580
      %5590 = vrot.lane.b32.xlu0 %v5547, 106
      %v5591 = vpop.permute.xlu0 %5590
      %5592 = vrot.lane.b32.xlu0 %v5548, 106
      %v5593 = vpop.permute.xlu0 %5592
      %5594 = vrot.lane.b32.xlu0 %v5549, 106
      %v5595 = vpop.permute.xlu0 %5594
      %5596 = vrot.lane.b32.xlu0 %v5550, 106
      %v5597 = vpop.permute.xlu0 %5596
      %5598 = vrot.lane.b32.xlu0 %v5551, 106
      %v5599 = vpop.permute.xlu0 %5598
      %v5600 = vsel %vm924, %v5591, %v5593
      %v5601 = vsel %vm924, %v5593, %v5595
      %v5602 = vsel %vm924, %v5595, %v5597
      %v5603 = vsel %vm924, %v5597, %v5599
      %5609 = vrot.lane.b32.xlu0 %v5543, 105
      %v5610 = vpop.permute.xlu0 %5609
      %5611 = vrot.lane.b32.xlu0 %v5535, 105
      %v5612 = vpop.permute.xlu0 %5611
      %5613 = vrot.lane.b32.xlu0 %v5536, 105
      %v5614 = vpop.permute.xlu0 %5613
      %5615 = vrot.lane.b32.xlu0 %v5537, 105
      %v5616 = vpop.permute.xlu0 %5615
      %5617 = vrot.lane.b32.xlu0 %v5544, 105
      %v5618 = vpop.permute.xlu0 %5617
      %v5619 = vsel %vm953, %v5610, %v5612
      %v5620 = vsel %vm953, %v5612, %v5614
      %v5621 = vsel %vm953, %v5614, %v5616
      %v5622 = vsel %vm953, %v5616, %v5618
      %5628 = vrot.lane.b32.xlu0 %v5547, 104
      %v5629 = vpop.permute.xlu0 %5628
      %5630 = vrot.lane.b32.xlu0 %v5548, 104
      %v5631 = vpop.permute.xlu0 %5630
      %5632 = vrot.lane.b32.xlu0 %v5549, 104
      %v5633 = vpop.permute.xlu0 %5632
      %5634 = vrot.lane.b32.xlu0 %v5550, 104
      %v5635 = vpop.permute.xlu0 %5634
      %5636 = vrot.lane.b32.xlu0 %v5551, 104
      %v5637 = vpop.permute.xlu0 %5636
      %v5638 = vsel %vm982, %v5629, %v5631
      %v5639 = vsel %vm982, %v5631, %v5633
      %v5640 = vsel %vm982, %v5633, %v5635
      %v5641 = vsel %vm982, %v5635, %v5637
      %5647 = vrot.lane.b32.xlu0 %v5543, 84
      %v5648 = vpop.permute.xlu0 %5647
      %5649 = vrot.lane.b32.xlu0 %v5535, 84
      %v5650 = vpop.permute.xlu0 %5649
      %5651 = vrot.lane.b32.xlu0 %v5536, 84
      %v5652 = vpop.permute.xlu0 %5651
      %5653 = vrot.lane.b32.xlu0 %v5537, 84
      %v5654 = vpop.permute.xlu0 %5653
      %5655 = vrot.lane.b32.xlu0 %v5544, 84
      %v5656 = vpop.permute.xlu0 %5655
      %v5657 = vsel %vm1011, %v5648, %v5650
      %v5658 = vsel %vm1011, %v5650, %v5652
      %v5659 = vsel %vm1011, %v5652, %v5654
      %v5660 = vsel %vm1011, %v5654, %v5656
      %5666 = vrot.lane.b32.xlu0 %v5547, 83
      %v5667 = vpop.permute.xlu0 %5666
      %5668 = vrot.lane.b32.xlu0 %v5548, 83
      %v5669 = vpop.permute.xlu0 %5668
      %5670 = vrot.lane.b32.xlu0 %v5549, 83
      %v5671 = vpop.permute.xlu0 %5670
      %5672 = vrot.lane.b32.xlu0 %v5550, 83
      %v5673 = vpop.permute.xlu0 %5672
      %5674 = vrot.lane.b32.xlu0 %v5551, 83
      %v5675 = vpop.permute.xlu0 %5674
      %v5676 = vsel %vm1040, %v5667, %v5669
      %v5677 = vsel %vm1040, %v5669, %v5671
      %v5678 = vsel %vm1040, %v5671, %v5673
      %v5679 = vsel %vm1040, %v5673, %v5675
      %5685 = vrot.lane.b32.xlu0 %v5543, 82
      %v5686 = vpop.permute.xlu0 %5685
      %5687 = vrot.lane.b32.xlu0 %v5535, 82
      %v5688 = vpop.permute.xlu0 %5687
      %5689 = vrot.lane.b32.xlu0 %v5536, 82
      %v5690 = vpop.permute.xlu0 %5689
      %5691 = vrot.lane.b32.xlu0 %v5537, 82
      %v5692 = vpop.permute.xlu0 %5691
      %5693 = vrot.lane.b32.xlu0 %v5544, 82
      %v5694 = vpop.permute.xlu0 %5693
      %v5695 = vsel %vm1069, %v5686, %v5688
      %v5696 = vsel %vm1069, %v5688, %v5690
      %v5697 = vsel %vm1069, %v5690, %v5692
      %v5698 = vsel %vm1069, %v5692, %v5694
      %v5699 = vsel %vm1780, %v5543, %v5562
      %v5700 = vsel %vm1780, %v5535, %v5563
      %v5701 = vsel %vm1780, %v5536, %v5564
      %v5702 = vsel %vm1780, %v5537, %v5565
      %v5703 = vsel %vm1780, %v5544, %v5561
      %v5704 = vsel %vm1780, %v5581, %v5600
      %v5705 = vsel %vm1780, %v5582, %v5601
      %v5706 = vsel %vm1780, %v5583, %v5602
      %v5707 = vsel %vm1780, %v5584, %v5603
      %v5708 = vsel %vm1780, %v5580, %v5599
      %v5709 = vsel %vm1780, %v5619, %v5638
      %v5710 = vsel %vm1780, %v5620, %v5639
      %v5711 = vsel %vm1780, %v5621, %v5640
      %v5712 = vsel %vm1780, %v5622, %v5641
      %v5713 = vsel %vm1780, %v5618, %v5637
      %v5714 = vsel %vm1780, %v5657, %v5676
      %v5715 = vsel %vm1780, %v5658, %v5677
      %v5716 = vsel %vm1780, %v5659, %v5678
      %v5717 = vsel %vm1780, %v5660, %v5679
      %v5718 = vsel %vm1780, %v5656, %v5675
      %v5719 = vld [vmem:[%s14] sm:$0xf]
      %v5720 = vld [vmem:[%s15] sm:$0xf]
      %5722 = vset.pattern.permute.xlu0 0
      %5723 = vperm.xlu0 %5722, %v5720
      %v5724 = vpop.permute.xlu0 %5723
      %5746 = vrot.lane.b32.xlu0 %v5699, 82
      %v5747 = vpop.permute.xlu0 %5746
      %5748 = vrot.lane.b32.xlu0 %v5700, 82
      %v5749 = vpop.permute.xlu0 %5748
      %5750 = vrot.lane.b32.xlu0 %v5701, 82
      %v5751 = vpop.permute.xlu0 %5750
      %5752 = vrot.lane.b32.xlu0 %v5702, 82
      %v5753 = vpop.permute.xlu0 %5752
      %5754 = vrot.lane.b32.xlu0 %v5703, 82
      %v5755 = vpop.permute.xlu0 %5754
      %5756 = vrot.lane.b32.xlu0 %v5704, 82
      %v5757 = vpop.permute.xlu0 %5756
      %5758 = vrot.lane.b32.xlu0 %v5705, 82
      %v5759 = vpop.permute.xlu0 %5758
      %5760 = vrot.lane.b32.xlu0 %v5706, 82
      %v5761 = vpop.permute.xlu0 %5760
      %5762 = vrot.lane.b32.xlu0 %v5707, 82
      %v5763 = vpop.permute.xlu0 %5762
      %5764 = vrot.lane.b32.xlu0 %v5708, 82
      %v5765 = vpop.permute.xlu0 %5764
      %5766 = vrot.lane.b32.xlu0 %v5709, 82
      %v5767 = vpop.permute.xlu0 %5766
      %5768 = vrot.lane.b32.xlu0 %v5710, 82
      %v5769 = vpop.permute.xlu0 %5768
      %5770 = vrot.lane.b32.xlu0 %v5711, 82
      %v5771 = vpop.permute.xlu0 %5770
      %5772 = vrot.lane.b32.xlu0 %v5712, 82
      %v5773 = vpop.permute.xlu0 %5772
      %5774 = vrot.lane.b32.xlu0 %v5713, 82
      %v5775 = vpop.permute.xlu0 %5774
      %5776 = vrot.lane.b32.xlu0 %v5714, 82
      %v5777 = vpop.permute.xlu0 %5776
      %5778 = vrot.lane.b32.xlu0 %v5715, 82
      %v5779 = vpop.permute.xlu0 %5778
      %5780 = vrot.lane.b32.xlu0 %v5716, 82
      %v5781 = vpop.permute.xlu0 %5780
      %5782 = vrot.lane.b32.xlu0 %v5717, 82
      %v5783 = vpop.permute.xlu0 %5782
      %5784 = vrot.lane.b32.xlu0 %v5718, 82
      %v5785 = vpop.permute.xlu0 %5784
      %5786 = vrot.lane.b32.xlu0 %v5695, 82
      %v5787 = vpop.permute.xlu0 %5786
      %5788 = vrot.lane.b32.xlu0 %v5696, 82
      %v5789 = vpop.permute.xlu0 %5788
      %5790 = vrot.lane.b32.xlu0 %v5697, 82
      %v5791 = vpop.permute.xlu0 %5790
      %5792 = vrot.lane.b32.xlu0 %v5698, 82
      %v5793 = vpop.permute.xlu0 %5792
      %5794 = vrot.lane.b32.xlu0 %v5694, 82
      %v5795 = vpop.permute.xlu0 %5794
      %v5796 = vsel %vm1069, %v5747, %v5749
      %v5797 = vsel %vm1069, %v5749, %v5751
      %v5798 = vsel %vm1069, %v5751, %v5753
      %v5799 = vsel %vm1069, %v5753, %v5755
      %v5800 = vsel %vm1069, %v5757, %v5759
      %v5801 = vsel %vm1069, %v5759, %v5761
      %v5802 = vsel %vm1069, %v5761, %v5763
      %v5803 = vsel %vm1069, %v5763, %v5765
      %v5804 = vsel %vm1069, %v5767, %v5769
      %v5805 = vsel %vm1069, %v5769, %v5771
      %v5806 = vsel %vm1069, %v5771, %v5773
      %v5807 = vsel %vm1069, %v5773, %v5775
      %v5808 = vsel %vm1069, %v5777, %v5779
      %v5809 = vsel %vm1069, %v5779, %v5781
      %v5810 = vsel %vm1069, %v5781, %v5783
      %v5811 = vsel %vm1069, %v5783, %v5785
      %v5812 = vsel %vm1069, %v5787, %v5789
      %v5813 = vsel %vm1069, %v5789, %v5791
      %v5814 = vsel %vm1069, %v5791, %v5793
      %v5815 = vsel %vm1069, %v5793, %v5795
      %v5833 = vsel %vm1914, %v5719, 0
      %v5835 = vsel %vm1780, %v5812, 0
      %v5837 = vsel %vm1780, %v5813, 0
      %v5839 = vsel %vm1780, %v5814, 0
      %v5841 = vsel %vm1780, %v5815, 0
      %5843 = vmatprep.subr.mxu0 %v5797
      %5844 = vmatpush1.msra.mxu0 %v5796
      %5845 = vmatprep.subr.mxu0 %v5801
      %5846 = vmatpush1.msra.mxu0 %v5800
      %5847 = vmatprep.subr.mxu0 %v5805
      %5848 = vmatpush1.msra.mxu0 %v5804
      %5849 = vmatprep.subr.mxu0 %v5809
      %5850 = vmatpush1.msra.mxu0 %v5808
      %5851 = vmatprep.subr.mxu0 %v5837
      %5852 = vmatpush1.msra.mxu0 %v5835
      %5853 = vmatprep.subr.mxu0 0.0
      %5854 = vmatpush1.msra.mxu0 0.0
      %5855 = vmatprep.subr.mxu0 0.0
      %5856 = vmatpush1.msra.mxu0 0.0
      %5857 = vmatprep.subr.mxu0 0.0
      %5858 = vmatpush1.msra.mxu0 0.0
      %5859 = vmatprep.subr.mxu0 0.0
      %5860 = vmatpush1.msra.mxu0 0.0
      %5861 = vmatprep.subr.mxu0 0.0
      %5862 = vmatpush1.msra.mxu0 0.0
      %5863 = vmatprep.subr.mxu0 0.0
      %5864 = vmatpush1.msra.mxu0 0.0
      %5865 = vmatprep.subr.mxu0 0.0
      %5866 = vmatpush1.msra.mxu0 0.0
      %5867 = vmatprep.subr.mxu0 0.0
      %5868 = vmatpush1.msra.mxu0 0.0
      %5869 = vmatprep.subr.mxu0 0.0
      %5870 = vmatpush1.msra.mxu0 0.0
      %5871 = vmatprep.subr.mxu0 0.0
      %5872 = vmatpush1.msra.mxu0 0.0
      %5873 = vmatprep.subr.mxu0 0.0
      %5874 = vmatpush1.msra.mxu0 0.0
      %5875 = vmatprep.subr.mxu0 0.0
      %5876 = vmatpush1.msra.mxu0 0.0
      %5877 = vmatprep.subr.mxu0 0.0
      %5878 = vmatpush1.msra.mxu0 0.0
      %5879 = vmatprep.subr.mxu0 0.0
      %5880 = vmatpush1.msra.mxu0 0.0
      %5881 = vmatprep.subr.mxu0 0.0
      %5882 = vmatpush1.msra.mxu0 0.0
      %5883 = vmatprep.subr.mxu0 0.0
      %5884 = vmatpush1.msra.mxu0 0.0
      %5885 = vmatprep.subr.mxu0 0.0
      %5886 = vmatpush1.msra.mxu0 0.0
      %5887 = vmatprep.subr.mxu0 0.0
      %5888 = vmatpush1.msra.mxu0 0.0
      %5889 = vmatprep.subr.mxu0 0.0
      %5890 = vmatpush1.msra.mxu0 0.0
      %5891 = vmatprep.subr.mxu0 0.0
      %5892 = vmatpush1.msra.mxu0 0.0
      %5893 = vmatprep.subr.mxu0 0.0
      %5894 = vmatpush1.msra.mxu0 0.0
      %5895 = vmatprep.subr.mxu0 0.0
      %5896 = vmatpush1.msra.mxu0 0.0
      %5897 = vmatprep.subr.mxu0 0.0
      %5898 = vmatpush1.msra.mxu0 0.0
      %5899 = vmatprep.subr.mxu0 0.0
      %5900 = vmatpush1.msra.mxu0 0.0
      %5901 = vmatprep.subr.mxu0 0.0
      %5902 = vmatpush1.msra.mxu0 0.0
      %5903 = vmatprep.subr.mxu0 0.0
      %5904 = vmatpush1.msra.mxu0 0.0
      %5905 = vmatprep.subr.mxu0 0.0
      %5906 = vmatpush1.msra.mxu0 0.0
      %5907 = vmatprep.mubr.f32.mxu0 0.0
      %5908 = vmatmul.mubr.f32.gmra.mrb[0].mxu0 %v5833
      %v5909 = vpop.f32.mrb[0].mxu0
      %v5910 = vadd.f32 %v5724, %v5909
      %v5911 = vpop.f32.mrb[0].mxu0
      %v5912 = vadd.f32 %v5724, %v5911
      %5913 = vdwg.mxu0
      %5914 = vmatprep.subr.mxu0 %v5799
      %5915 = vmatpush1.msra.mxu0 %v5798
      %5916 = vmatprep.subr.mxu0 %v5803
      %5917 = vmatpush1.msra.mxu0 %v5802
      %5918 = vmatprep.subr.mxu0 %v5807
      %5919 = vmatpush1.msra.mxu0 %v5806
      %5920 = vmatprep.subr.mxu0 %v5811
      %5921 = vmatpush1.msra.mxu0 %v5810
      %5922 = vmatprep.subr.mxu0 %v5841
      %5923 = vmatpush1.msra.mxu0 %v5839
      %5924 = vmatprep.subr.mxu0 0.0
      %5925 = vmatpush1.msra.mxu0 0.0
      %5926 = vmatprep.subr.mxu0 0.0
      %5927 = vmatpush1.msra.mxu0 0.0
      %5928 = vmatprep.subr.mxu0 0.0
      %5929 = vmatpush1.msra.mxu0 0.0
      %5930 = vmatprep.subr.mxu0 0.0
      %5931 = vmatpush1.msra.mxu0 0.0
      %5932 = vmatprep.subr.mxu0 0.0
      %5933 = vmatpush1.msra.mxu0 0.0
      %5934 = vmatprep.subr.mxu0 0.0
      %5935 = vmatpush1.msra.mxu0 0.0
      %5936 = vmatprep.subr.mxu0 0.0
      %5937 = vmatpush1.msra.mxu0 0.0
      %5938 = vmatprep.subr.mxu0 0.0
      %5939 = vmatpush1.msra.mxu0 0.0
      %5940 = vmatprep.subr.mxu0 0.0
      %5941 = vmatpush1.msra.mxu0 0.0
      %5942 = vmatprep.subr.mxu0 0.0
      %5943 = vmatpush1.msra.mxu0 0.0
      %5944 = vmatprep.subr.mxu0 0.0
      %5945 = vmatpush1.msra.mxu0 0.0
      %5946 = vmatprep.subr.mxu0 0.0
      %5947 = vmatpush1.msra.mxu0 0.0
      %5948 = vmatprep.subr.mxu0 0.0
      %5949 = vmatpush1.msra.mxu0 0.0
      %5950 = vmatprep.subr.mxu0 0.0
      %5951 = vmatpush1.msra.mxu0 0.0
      %5952 = vmatprep.subr.mxu0 0.0
      %5953 = vmatpush1.msra.mxu0 0.0
      %5954 = vmatprep.subr.mxu0 0.0
      %5955 = vmatpush1.msra.mxu0 0.0
      %5956 = vmatprep.subr.mxu0 0.0
      %5957 = vmatpush1.msra.mxu0 0.0
      %5958 = vmatprep.subr.mxu0 0.0
      %5959 = vmatpush1.msra.mxu0 0.0
      %5960 = vmatprep.subr.mxu0 0.0
      %5961 = vmatpush1.msra.mxu0 0.0
      %5962 = vmatprep.subr.mxu0 0.0
      %5963 = vmatpush1.msra.mxu0 0.0
      %5964 = vmatprep.subr.mxu0 0.0
      %5965 = vmatpush1.msra.mxu0 0.0
      %5966 = vmatprep.subr.mxu0 0.0
      %5967 = vmatpush1.msra.mxu0 0.0
      %5968 = vmatprep.subr.mxu0 0.0
      %5969 = vmatpush1.msra.mxu0 0.0
      %5970 = vmatprep.subr.mxu0 0.0
      %5971 = vmatpush1.msra.mxu0 0.0
      %5972 = vmatprep.subr.mxu0 0.0
      %5973 = vmatpush1.msra.mxu0 0.0
      %5974 = vmatprep.subr.mxu0 0.0
      %5975 = vmatpush1.msra.mxu0 0.0
      %5976 = vmatprep.subr.mxu0 0.0
      %5977 = vmatpush1.msra.mxu0 0.0
      %5978 = vmatprep.mubr.f32.mxu0 0.0
      %5979 = vmatmul.mubr.f32.gmra.mrb[0].mxu0 %v5833
      %v5980 = vpop.f32.mrb[0].mxu0
      %v5981 = vadd.f32 %v5724, %v5980
      %v5982 = vpop.f32.mrb[0].mxu0
      %v5983 = vadd.f32 %v5724, %v5982
      %5984 = vdwg.mxu0
      %vm5985 = vcmp.ge.f32.partialorder %v5910, 0.0
      %vm5986 = vcmp.ge.f32.partialorder %v5912, 0.0
      %vm5987 = vcmp.ge.f32.partialorder %v5981, 0.0
      %vm5988 = vcmp.ge.f32.partialorder %v5983, 0.0
      %v5989 = vmul.f32 %v5910, 0.1
      %v5990 = vmul.f32 %v5912, 0.1
      %v5991 = vmul.f32 %v5981, 0.1
      %v5992 = vmul.f32 %v5983, 0.1
      %v5993 = vsel %vm5985, %v5910, %v5989
      %v5994 = vsel %vm5986, %v5912, %v5990
      %v5995 = vsel %vm5987, %v5981, %v5991
      %v5996 = vsel %vm5988, %v5983, %v5992
      %v5997 = vmul.f32 %v5993, %v1579
      %v5998 = vmul.f32 %v5994, %v1583
      %v5999 = vmul.f32 %v5995, %v1587
      %v6000 = vmul.f32 %v5996, %v1591
      %v6005 = vrot.slane %v5515, 4
      %v6006 = vrot.slane %v5519, 4
      %v6007 = vsel %vm1780, %v6005, %v6006
      %v6008 = vrot.slane %v5516, 4
      %v6009 = vrot.slane %v5520, 4
      %v6010 = vsel %vm1780, %v6008, %v6009
      %v6011 = vrot.slane %v5517, 4
      %v6012 = vrot.slane %v5521, 4
      %v6013 = vsel %vm1780, %v6011, %v6012
      %v6014 = vrot.slane %v5518, 4
      %v6015 = vrot.slane %v5522, 4
      %v6016 = vsel %vm1780, %v6014, %v6015
      %6017 = vrot.lane.b32.xlu0 %v6007, 69
      %v6018 = vpop.permute.xlu0 %6017
      %6019 = vrot.lane.b32.xlu0 %v6010, 69
      %v6020 = vpop.permute.xlu0 %6019
      %6021 = vrot.lane.b32.xlu0 %v6013, 69
      %v6022 = vpop.permute.xlu0 %6021
      %6023 = vrot.lane.b32.xlu0 %v6016, 69
      %v6024 = vpop.permute.xlu0 %6023
      %6025 = vrot.lane.b32.xlu0 %v6006, 69
      %v6026 = vpop.permute.xlu0 %6025
      %6027 = vrot.lane.b32.xlu0 %v6009, 69
      %v6028 = vpop.permute.xlu0 %6027
      %6029 = vrot.lane.b32.xlu0 %v6012, 69
      %v6030 = vpop.permute.xlu0 %6029
      %6031 = vrot.lane.b32.xlu0 %v6015, 69
      %v6032 = vpop.permute.xlu0 %6031
      %v6033 = vsel %vm827, %v6018, %v6020
      %v6034 = vsel %vm827, %v6020, %v6022
      %v6035 = vsel %vm827, %v6022, %v6024
      %v6036 = vsel %vm827, %v6026, %v6028
      %v6037 = vsel %vm827, %v6028, %v6030
      %v6038 = vsel %vm827, %v6030, %v6032
      %v6046 = vsel %vm827, 0.0, %v6018
      %v6047 = vsel %vm827, 0.0, %v6026
      %v6048 = vsel %vm827, %v6024, 0.0
      %v6049 = vsel %vm827, %v6032, 0.0
      %v6054 = vrot.slane %v6046, 4
      %v6055 = vrot.slane %v6033, 4
      %v6056 = vrot.slane %v6034, 4
      %v6057 = vrot.slane %v6035, 4
      %v6058 = vrot.slane %v6048, 4
      %v6059 = vrot.slane %v6047, 4
      %v6060 = vsel %vm1780, %v6054, %v6059
      %v6061 = vrot.slane %v6036, 4
      %v6062 = vsel %vm1780, %v6055, %v6061
      %v6063 = vrot.slane %v6037, 4
      %v6064 = vsel %vm1780, %v6056, %v6063
      %v6065 = vrot.slane %v6038, 4
      %v6066 = vsel %vm1780, %v6057, %v6065
      %v6067 = vrot.slane %v6049, 4
      %v6068 = vsel %vm1780, %v6058, %v6067
      %6069 = vrot.lane.b32.xlu0 %v6054, 127
      %v6070 = vpop.permute.xlu0 %6069
      %6071 = vrot.lane.b32.xlu0 %v6055, 127
      %v6072 = vpop.permute.xlu0 %6071
      %6073 = vrot.lane.b32.xlu0 %v6056, 127
      %v6074 = vpop.permute.xlu0 %6073
      %6075 = vrot.lane.b32.xlu0 %v6057, 127
      %v6076 = vpop.permute.xlu0 %6075
      %6077 = vrot.lane.b32.xlu0 %v6058, 127
      %v6078 = vpop.permute.xlu0 %6077
      %6079 = vrot.lane.b32.xlu0 %v6060, 127
      %v6080 = vpop.permute.xlu0 %6079
      %6081 = vrot.lane.b32.xlu0 %v6062, 127
      %v6082 = vpop.permute.xlu0 %6081
      %6083 = vrot.lane.b32.xlu0 %v6064, 127
      %v6084 = vpop.permute.xlu0 %6083
      %6085 = vrot.lane.b32.xlu0 %v6066, 127
      %v6086 = vpop.permute.xlu0 %6085
      %6087 = vrot.lane.b32.xlu0 %v6068, 127
      %v6088 = vpop.permute.xlu0 %6087
      %v6089 = vsel %vm866, %v6070, %v6072
      %v6090 = vsel %vm866, %v6072, %v6074
      %v6091 = vsel %vm866, %v6074, %v6076
      %v6092 = vsel %vm866, %v6076, %v6078
      %v6093 = vsel %vm866, %v6080, %v6082
      %v6094 = vsel %vm866, %v6082, %v6084
      %v6095 = vsel %vm866, %v6084, %v6086
      %v6096 = vsel %vm866, %v6086, %v6088
      %6102 = vrot.lane.b32.xlu0 %v6046, 126
      %v6103 = vpop.permute.xlu0 %6102
      %6104 = vrot.lane.b32.xlu0 %v6033, 126
      %v6105 = vpop.permute.xlu0 %6104
      %6106 = vrot.lane.b32.xlu0 %v6034, 126
      %v6107 = vpop.permute.xlu0 %6106
      %6108 = vrot.lane.b32.xlu0 %v6035, 126
      %v6109 = vpop.permute.xlu0 %6108
      %6110 = vrot.lane.b32.xlu0 %v6048, 126
      %v6111 = vpop.permute.xlu0 %6110
      %6112 = vrot.lane.b32.xlu0 %v6047, 126
      %v6113 = vpop.permute.xlu0 %6112
      %6114 = vrot.lane.b32.xlu0 %v6036, 126
      %v6115 = vpop.permute.xlu0 %6114
      %6116 = vrot.lane.b32.xlu0 %v6037, 126
      %v6117 = vpop.permute.xlu0 %6116
      %6118 = vrot.lane.b32.xlu0 %v6038, 126
      %v6119 = vpop.permute.xlu0 %6118
      %6120 = vrot.lane.b32.xlu0 %v6049, 126
      %v6121 = vpop.permute.xlu0 %6120
      %v6122 = vsel %vm895, %v6103, %v6105
      %v6123 = vsel %vm895, %v6105, %v6107
      %v6124 = vsel %vm895, %v6107, %v6109
      %v6125 = vsel %vm895, %v6109, %v6111
      %v6126 = vsel %vm895, %v6113, %v6115
      %v6127 = vsel %vm895, %v6115, %v6117
      %v6128 = vsel %vm895, %v6117, %v6119
      %v6129 = vsel %vm895, %v6119, %v6121
      %6135 = vrot.lane.b32.xlu0 %v6054, 106
      %v6136 = vpop.permute.xlu0 %6135
      %6137 = vrot.lane.b32.xlu0 %v6055, 106
      %v6138 = vpop.permute.xlu0 %6137
      %6139 = vrot.lane.b32.xlu0 %v6056, 106
      %v6140 = vpop.permute.xlu0 %6139
      %6141 = vrot.lane.b32.xlu0 %v6057, 106
      %v6142 = vpop.permute.xlu0 %6141
      %6143 = vrot.lane.b32.xlu0 %v6058, 106
      %v6144 = vpop.permute.xlu0 %6143
      %6145 = vrot.lane.b32.xlu0 %v6060, 106
      %v6146 = vpop.permute.xlu0 %6145
      %6147 = vrot.lane.b32.xlu0 %v6062, 106
      %v6148 = vpop.permute.xlu0 %6147
      %6149 = vrot.lane.b32.xlu0 %v6064, 106
      %v6150 = vpop.permute.xlu0 %6149
      %6151 = vrot.lane.b32.xlu0 %v6066, 106
      %v6152 = vpop.permute.xlu0 %6151
      %6153 = vrot.lane.b32.xlu0 %v6068, 106
      %v6154 = vpop.permute.xlu0 %6153
      %v6155 = vsel %vm924, %v6136, %v6138
      %v6156 = vsel %vm924, %v6138, %v6140
      %v6157 = vsel %vm924, %v6140, %v6142
      %v6158 = vsel %vm924, %v6142, %v6144
      %v6159 = vsel %vm924, %v6146, %v6148
      %v6160 = vsel %vm924, %v6148, %v6150
      %v6161 = vsel %vm924, %v6150, %v6152
      %v6162 = vsel %vm924, %v6152, %v6154
      %6168 = vrot.lane.b32.xlu0 %v6046, 105
      %v6169 = vpop.permute.xlu0 %6168
      %6170 = vrot.lane.b32.xlu0 %v6033, 105
      %v6171 = vpop.permute.xlu0 %6170
      %6172 = vrot.lane.b32.xlu0 %v6034, 105
      %v6173 = vpop.permute.xlu0 %6172
      %6174 = vrot.lane.b32.xlu0 %v6035, 105
      %v6175 = vpop.permute.xlu0 %6174
      %6176 = vrot.lane.b32.xlu0 %v6048, 105
      %v6177 = vpop.permute.xlu0 %6176
      %6178 = vrot.lane.b32.xlu0 %v6047, 105
      %v6179 = vpop.permute.xlu0 %6178
      %6180 = vrot.lane.b32.xlu0 %v6036, 105
      %v6181 = vpop.permute.xlu0 %6180
      %6182 = vrot.lane.b32.xlu0 %v6037, 105
      %v6183 = vpop.permute.xlu0 %6182
      %6184 = vrot.lane.b32.xlu0 %v6038, 105
      %v6185 = vpop.permute.xlu0 %6184
      %6186 = vrot.lane.b32.xlu0 %v6049, 105
      %v6187 = vpop.permute.xlu0 %6186
      %v6188 = vsel %vm953, %v6169, %v6171
      %v6189 = vsel %vm953, %v6171, %v6173
      %v6190 = vsel %vm953, %v6173, %v6175
      %v6191 = vsel %vm953, %v6175, %v6177
      %v6192 = vsel %vm953, %v6179, %v6181
      %v6193 = vsel %vm953, %v6181, %v6183
      %v6194 = vsel %vm953, %v6183, %v6185
      %v6195 = vsel %vm953, %v6185, %v6187
      %6201 = vrot.lane.b32.xlu0 %v6054, 104
      %v6202 = vpop.permute.xlu0 %6201
      %6203 = vrot.lane.b32.xlu0 %v6055, 104
      %v6204 = vpop.permute.xlu0 %6203
      %6205 = vrot.lane.b32.xlu0 %v6056, 104
      %v6206 = vpop.permute.xlu0 %6205
      %6207 = vrot.lane.b32.xlu0 %v6057, 104
      %v6208 = vpop.permute.xlu0 %6207
      %6209 = vrot.lane.b32.xlu0 %v6058, 104
      %v6210 = vpop.permute.xlu0 %6209
      %6211 = vrot.lane.b32.xlu0 %v6060, 104
      %v6212 = vpop.permute.xlu0 %6211
      %6213 = vrot.lane.b32.xlu0 %v6062, 104
      %v6214 = vpop.permute.xlu0 %6213
      %6215 = vrot.lane.b32.xlu0 %v6064, 104
      %v6216 = vpop.permute.xlu0 %6215
      %6217 = vrot.lane.b32.xlu0 %v6066, 104
      %v6218 = vpop.permute.xlu0 %6217
      %6219 = vrot.lane.b32.xlu0 %v6068, 104
      %v6220 = vpop.permute.xlu0 %6219
      %v6221 = vsel %vm982, %v6202, %v6204
      %v6222 = vsel %vm982, %v6204, %v6206
      %v6223 = vsel %vm982, %v6206, %v6208
      %v6224 = vsel %vm982, %v6208, %v6210
      %v6225 = vsel %vm982, %v6212, %v6214
      %v6226 = vsel %vm982, %v6214, %v6216
      %v6227 = vsel %vm982, %v6216, %v6218
      %v6228 = vsel %vm982, %v6218, %v6220
      %6234 = vrot.lane.b32.xlu0 %v6046, 84
      %v6235 = vpop.permute.xlu0 %6234
      %6236 = vrot.lane.b32.xlu0 %v6033, 84
      %v6237 = vpop.permute.xlu0 %6236
      %6238 = vrot.lane.b32.xlu0 %v6034, 84
      %v6239 = vpop.permute.xlu0 %6238
      %6240 = vrot.lane.b32.xlu0 %v6035, 84
      %v6241 = vpop.permute.xlu0 %6240
      %6242 = vrot.lane.b32.xlu0 %v6048, 84
      %v6243 = vpop.permute.xlu0 %6242
      %6244 = vrot.lane.b32.xlu0 %v6047, 84
      %v6245 = vpop.permute.xlu0 %6244
      %6246 = vrot.lane.b32.xlu0 %v6036, 84
      %v6247 = vpop.permute.xlu0 %6246
      %6248 = vrot.lane.b32.xlu0 %v6037, 84
      %v6249 = vpop.permute.xlu0 %6248
      %6250 = vrot.lane.b32.xlu0 %v6038, 84
      %v6251 = vpop.permute.xlu0 %6250
      %6252 = vrot.lane.b32.xlu0 %v6049, 84
      %v6253 = vpop.permute.xlu0 %6252
      %v6254 = vsel %vm1011, %v6235, %v6237
      %v6255 = vsel %vm1011, %v6237, %v6239
      %v6256 = vsel %vm1011, %v6239, %v6241
      %v6257 = vsel %vm1011, %v6241, %v6243
      %v6258 = vsel %vm1011, %v6245, %v6247
      %v6259 = vsel %vm1011, %v6247, %v6249
      %v6260 = vsel %vm1011, %v6249, %v6251
      %v6261 = vsel %vm1011, %v6251, %v6253
      %6267 = vrot.lane.b32.xlu0 %v6054, 83
      %v6268 = vpop.permute.xlu0 %6267
      %6269 = vrot.lane.b32.xlu0 %v6055, 83
      %v6270 = vpop.permute.xlu0 %6269
      %6271 = vrot.lane.b32.xlu0 %v6056, 83
      %v6272 = vpop.permute.xlu0 %6271
      %6273 = vrot.lane.b32.xlu0 %v6057, 83
      %v6274 = vpop.permute.xlu0 %6273
      %6275 = vrot.lane.b32.xlu0 %v6058, 83
      %v6276 = vpop.permute.xlu0 %6275
      %6277 = vrot.lane.b32.xlu0 %v6060, 83
      %v6278 = vpop.permute.xlu0 %6277
      %6279 = vrot.lane.b32.xlu0 %v6062, 83
      %v6280 = vpop.permute.xlu0 %6279
      %6281 = vrot.lane.b32.xlu0 %v6064, 83
      %v6282 = vpop.permute.xlu0 %6281
      %6283 = vrot.lane.b32.xlu0 %v6066, 83
      %v6284 = vpop.permute.xlu0 %6283
      %6285 = vrot.lane.b32.xlu0 %v6068, 83
      %v6286 = vpop.permute.xlu0 %6285
      %v6287 = vsel %vm1040, %v6268, %v6270
      %v6288 = vsel %vm1040, %v6270, %v6272
      %v6289 = vsel %vm1040, %v6272, %v6274
      %v6290 = vsel %vm1040, %v6274, %v6276
      %v6291 = vsel %vm1040, %v6278, %v6280
      %v6292 = vsel %vm1040, %v6280, %v6282
      %v6293 = vsel %vm1040, %v6282, %v6284
      %v6294 = vsel %vm1040, %v6284, %v6286
      %6300 = vrot.lane.b32.xlu0 %v6046, 82
      %v6301 = vpop.permute.xlu0 %6300
      %6302 = vrot.lane.b32.xlu0 %v6033, 82
      %v6303 = vpop.permute.xlu0 %6302
      %6304 = vrot.lane.b32.xlu0 %v6034, 82
      %v6305 = vpop.permute.xlu0 %6304
      %6306 = vrot.lane.b32.xlu0 %v6035, 82
      %v6307 = vpop.permute.xlu0 %6306
      %6308 = vrot.lane.b32.xlu0 %v6048, 82
      %v6309 = vpop.permute.xlu0 %6308
      %6310 = vrot.lane.b32.xlu0 %v6047, 82
      %v6311 = vpop.permute.xlu0 %6310
      %6312 = vrot.lane.b32.xlu0 %v6036, 82
      %v6313 = vpop.permute.xlu0 %6312
      %6314 = vrot.lane.b32.xlu0 %v6037, 82
      %v6315 = vpop.permute.xlu0 %6314
      %6316 = vrot.lane.b32.xlu0 %v6038, 82
      %v6317 = vpop.permute.xlu0 %6316
      %6318 = vrot.lane.b32.xlu0 %v6049, 82
      %v6319 = vpop.permute.xlu0 %6318
      %v6320 = vsel %vm1069, %v6301, %v6303
      %v6321 = vsel %vm1069, %v6303, %v6305
      %v6322 = vsel %vm1069, %v6305, %v6307
      %v6323 = vsel %vm1069, %v6307, %v6309
      %v6324 = vsel %vm1069, %v6311, %v6313
      %v6325 = vsel %vm1069, %v6313, %v6315
      %v6326 = vsel %vm1069, %v6315, %v6317
      %v6327 = vsel %vm1069, %v6317, %v6319
      %v6328 = vsel %vm1780, %v6047, %v6089
      %v6329 = vsel %vm1780, %v6036, %v6090
      %v6330 = vsel %vm1780, %v6037, %v6091
      %v6331 = vsel %vm1780, %v6038, %v6092
      %v6332 = vsel %vm1780, %v6049, %v6078
      %v6333 = vsel %vm1780, %v6126, %v6155
      %v6334 = vsel %vm1780, %v6127, %v6156
      %v6335 = vsel %vm1780, %v6128, %v6157
      %v6336 = vsel %vm1780, %v6129, %v6158
      %v6337 = vsel %vm1780, %v6121, %v6144
      %v6338 = vsel %vm1780, %v6192, %v6221
      %v6339 = vsel %vm1780, %v6193, %v6222
      %v6340 = vsel %vm1780, %v6194, %v6223
      %v6341 = vsel %vm1780, %v6195, %v6224
      %v6342 = vsel %vm1780, %v6187, %v6210
      %v6343 = vsel %vm1780, %v6258, %v6287
      %v6344 = vsel %vm1780, %v6259, %v6288
      %v6345 = vsel %vm1780, %v6260, %v6289
      %v6346 = vsel %vm1780, %v6261, %v6290
      %v6347 = vsel %vm1780, %v6253, %v6276
      %v6348 = vld [vmem:[%s16] sm:$0xf]
      %v6349 = vld [vmem:[%s17] sm:$0xf]
      %6351 = vset.pattern.permute.xlu0 0
      %6352 = vperm.xlu0 %6351, %v6349
      %v6353 = vpop.permute.xlu0 %6352
      %6375 = vrot.lane.b32.xlu0 %v6328, 82
      %v6376 = vpop.permute.xlu0 %6375
      %6377 = vrot.lane.b32.xlu0 %v6329, 82
      %v6378 = vpop.permute.xlu0 %6377
      %6379 = vrot.lane.b32.xlu0 %v6330, 82
      %v6380 = vpop.permute.xlu0 %6379
      %6381 = vrot.lane.b32.xlu0 %v6331, 82
      %v6382 = vpop.permute.xlu0 %6381
      %6383 = vrot.lane.b32.xlu0 %v6332, 82
      %v6384 = vpop.permute.xlu0 %6383
      %6385 = vrot.lane.b32.xlu0 %v6093, 82
      %v6386 = vpop.permute.xlu0 %6385
      %6387 = vrot.lane.b32.xlu0 %v6094, 82
      %v6388 = vpop.permute.xlu0 %6387
      %6389 = vrot.lane.b32.xlu0 %v6095, 82
      %v6390 = vpop.permute.xlu0 %6389
      %6391 = vrot.lane.b32.xlu0 %v6096, 82
      %v6392 = vpop.permute.xlu0 %6391
      %6393 = vrot.lane.b32.xlu0 %v6088, 82
      %v6394 = vpop.permute.xlu0 %6393
      %6395 = vrot.lane.b32.xlu0 %v6122, 82
      %v6396 = vpop.permute.xlu0 %6395
      %6397 = vrot.lane.b32.xlu0 %v6123, 82
      %v6398 = vpop.permute.xlu0 %6397
      %6399 = vrot.lane.b32.xlu0 %v6124, 82
      %v6400 = vpop.permute.xlu0 %6399
      %6401 = vrot.lane.b32.xlu0 %v6125, 82
      %v6402 = vpop.permute.xlu0 %6401
      %6403 = vrot.lane.b32.xlu0 %v6111, 82
      %v6404 = vpop.permute.xlu0 %6403
      %6405 = vrot.lane.b32.xlu0 %v6333, 82
      %v6406 = vpop.permute.xlu0 %6405
      %6407 = vrot.lane.b32.xlu0 %v6334, 82
      %v6408 = vpop.permute.xlu0 %6407
      %6409 = vrot.lane.b32.xlu0 %v6335, 82
      %v6410 = vpop.permute.xlu0 %6409
      %6411 = vrot.lane.b32.xlu0 %v6336, 82
      %v6412 = vpop.permute.xlu0 %6411
      %6413 = vrot.lane.b32.xlu0 %v6337, 82
      %v6414 = vpop.permute.xlu0 %6413
      %6415 = vrot.lane.b32.xlu0 %v6159, 82
      %v6416 = vpop.permute.xlu0 %6415
      %6417 = vrot.lane.b32.xlu0 %v6160, 82
      %v6418 = vpop.permute.xlu0 %6417
      %6419 = vrot.lane.b32.xlu0 %v6161, 82
      %v6420 = vpop.permute.xlu0 %6419
      %6421 = vrot.lane.b32.xlu0 %v6162, 82
      %v6422 = vpop.permute.xlu0 %6421
      %6423 = vrot.lane.b32.xlu0 %v6154, 82
      %v6424 = vpop.permute.xlu0 %6423
      %6425 = vrot.lane.b32.xlu0 %v6188, 82
      %v6426 = vpop.permute.xlu0 %6425
      %6427 = vrot.lane.b32.xlu0 %v6189, 82
      %v6428 = vpop.permute.xlu0 %6427
      %6429 = vrot.lane.b32.xlu0 %v6190, 82
      %v6430 = vpop.permute.xlu0 %6429
      %6431 = vrot.lane.b32.xlu0 %v6191, 82
      %v6432 = vpop.permute.xlu0 %6431
      %6433 = vrot.lane.b32.xlu0 %v6177, 82
      %v6434 = vpop.permute.xlu0 %6433
      %6435 = vrot.lane.b32.xlu0 %v6338, 82
      %v6436 = vpop.permute.xlu0 %6435
      %6437 = vrot.lane.b32.xlu0 %v6339, 82
      %v6438 = vpop.permute.xlu0 %6437
      %6439 = vrot.lane.b32.xlu0 %v6340, 82
      %v6440 = vpop.permute.xlu0 %6439
      %6441 = vrot.lane.b32.xlu0 %v6341, 82
      %v6442 = vpop.permute.xlu0 %6441
      %6443 = vrot.lane.b32.xlu0 %v6342, 82
      %v6444 = vpop.permute.xlu0 %6443
      %6445 = vrot.lane.b32.xlu0 %v6225, 82
      %v6446 = vpop.permute.xlu0 %6445
      %6447 = vrot.lane.b32.xlu0 %v6226, 82
      %v6448 = vpop.permute.xlu0 %6447
      %6449 = vrot.lane.b32.xlu0 %v6227, 82
      %v6450 = vpop.permute.xlu0 %6449
      %6451 = vrot.lane.b32.xlu0 %v6228, 82
      %v6452 = vpop.permute.xlu0 %6451
      %6453 = vrot.lane.b32.xlu0 %v6220, 82
      %v6454 = vpop.permute.xlu0 %6453
      %6455 = vrot.lane.b32.xlu0 %v6254, 82
      %v6456 = vpop.permute.xlu0 %6455
      %6457 = vrot.lane.b32.xlu0 %v6255, 82
      %v6458 = vpop.permute.xlu0 %6457
      %6459 = vrot.lane.b32.xlu0 %v6256, 82
      %v6460 = vpop.permute.xlu0 %6459
      %6461 = vrot.lane.b32.xlu0 %v6257, 82
      %v6462 = vpop.permute.xlu0 %6461
      %6463 = vrot.lane.b32.xlu0 %v6243, 82
      %v6464 = vpop.permute.xlu0 %6463
      %6465 = vrot.lane.b32.xlu0 %v6343, 82
      %v6466 = vpop.permute.xlu0 %6465
      %6467 = vrot.lane.b32.xlu0 %v6344, 82
      %v6468 = vpop.permute.xlu0 %6467
      %6469 = vrot.lane.b32.xlu0 %v6345, 82
      %v6470 = vpop.permute.xlu0 %6469
      %6471 = vrot.lane.b32.xlu0 %v6346, 82
      %v6472 = vpop.permute.xlu0 %6471
      %6473 = vrot.lane.b32.xlu0 %v6347, 82
      %v6474 = vpop.permute.xlu0 %6473
      %6475 = vrot.lane.b32.xlu0 %v6291, 82
      %v6476 = vpop.permute.xlu0 %6475
      %6477 = vrot.lane.b32.xlu0 %v6292, 82
      %v6478 = vpop.permute.xlu0 %6477
      %6479 = vrot.lane.b32.xlu0 %v6293, 82
      %v6480 = vpop.permute.xlu0 %6479
      %6481 = vrot.lane.b32.xlu0 %v6294, 82
      %v6482 = vpop.permute.xlu0 %6481
      %6483 = vrot.lane.b32.xlu0 %v6286, 82
      %v6484 = vpop.permute.xlu0 %6483
      %6485 = vrot.lane.b32.xlu0 %v6320, 82
      %v6486 = vpop.permute.xlu0 %6485
      %6487 = vrot.lane.b32.xlu0 %v6321, 82
      %v6488 = vpop.permute.xlu0 %6487
      %6489 = vrot.lane.b32.xlu0 %v6322, 82
      %v6490 = vpop.permute.xlu0 %6489
      %6491 = vrot.lane.b32.xlu0 %v6323, 82
      %v6492 = vpop.permute.xlu0 %6491
      %6493 = vrot.lane.b32.xlu0 %v6309, 82
      %v6494 = vpop.permute.xlu0 %6493
      %6495 = vrot.lane.b32.xlu0 %v6324, 82
      %v6496 = vpop.permute.xlu0 %6495
      %6497 = vrot.lane.b32.xlu0 %v6325, 82
      %v6498 = vpop.permute.xlu0 %6497
      %6499 = vrot.lane.b32.xlu0 %v6326, 82
      %v6500 = vpop.permute.xlu0 %6499
      %6501 = vrot.lane.b32.xlu0 %v6327, 82
      %v6502 = vpop.permute.xlu0 %6501
      %6503 = vrot.lane.b32.xlu0 %v6319, 82
      %v6504 = vpop.permute.xlu0 %6503
      %v6505 = vsel %vm1069, %v6376, %v6378
      %v6506 = vsel %vm1069, %v6378, %v6380
      %v6507 = vsel %vm1069, %v6380, %v6382
      %v6508 = vsel %vm1069, %v6382, %v6384
      %v6509 = vsel %vm1069, %v6386, %v6388
      %v6510 = vsel %vm1069, %v6388, %v6390
      %v6511 = vsel %vm1069, %v6390, %v6392
      %v6512 = vsel %vm1069, %v6392, %v6394
      %v6513 = vsel %vm1069, %v6396, %v6398
      %v6514 = vsel %vm1069, %v6398, %v6400
      %v6515 = vsel %vm1069, %v6400, %v6402
      %v6516 = vsel %vm1069, %v6402, %v6404
      %v6517 = vsel %vm1069, %v6406, %v6408
      %v6518 = vsel %vm1069, %v6408, %v6410
      %v6519 = vsel %vm1069, %v6410, %v6412
      %v6520 = vsel %vm1069, %v6412, %v6414
      %v6521 = vsel %vm1069, %v6416, %v6418
      %v6522 = vsel %vm1069, %v6418, %v6420
      %v6523 = vsel %vm1069, %v6420, %v6422
      %v6524 = vsel %vm1069, %v6422, %v6424
      %v6525 = vsel %vm1069, %v6426, %v6428
      %v6526 = vsel %vm1069, %v6428, %v6430
      %v6527 = vsel %vm1069, %v6430, %v6432
      %v6528 = vsel %vm1069, %v6432, %v6434
      %v6529 = vsel %vm1069, %v6436, %v6438
      %v6530 = vsel %vm1069, %v6438, %v6440
      %v6531 = vsel %vm1069, %v6440, %v6442
      %v6532 = vsel %vm1069, %v6442, %v6444
      %v6533 = vsel %vm1069, %v6446, %v6448
      %v6534 = vsel %vm1069, %v6448, %v6450
      %v6535 = vsel %vm1069, %v6450, %v6452
      %v6536 = vsel %vm1069, %v6452, %v6454
      %v6537 = vsel %vm1069, %v6456, %v6458
      %v6538 = vsel %vm1069, %v6458, %v6460
      %v6539 = vsel %vm1069, %v6460, %v6462
      %v6540 = vsel %vm1069, %v6462, %v6464
      %v6541 = vsel %vm1069, %v6466, %v6468
      %v6542 = vsel %vm1069, %v6468, %v6470
      %v6543 = vsel %vm1069, %v6470, %v6472
      %v6544 = vsel %vm1069, %v6472, %v6474
      %v6545 = vsel %vm1069, %v6476, %v6478
      %v6546 = vsel %vm1069, %v6478, %v6480
      %v6547 = vsel %vm1069, %v6480, %v6482
      %v6548 = vsel %vm1069, %v6482, %v6484
      %v6549 = vsel %vm1069, %v6486, %v6488
      %v6550 = vsel %vm1069, %v6488, %v6490
      %v6551 = vsel %vm1069, %v6490, %v6492
      %v6552 = vsel %vm1069, %v6492, %v6494
      %v6553 = vsel %vm1069, %v6496, %v6498
      %v6554 = vsel %vm1069, %v6498, %v6500
      %v6555 = vsel %vm1069, %v6500, %v6502
      %v6556 = vsel %vm1069, %v6502, %v6504
      %v6610 = vsel %vm3608, %v6348, 0
      %v6612 = vsel %vm1780, %v6553, 0
      %v6614 = vsel %vm1780, %v6554, 0
      %v6616 = vsel %vm1780, %v6555, 0
      %v6618 = vsel %vm1780, %v6556, 0
      %6620 = vmatprep.subr.mxu0 %v6321
      %6621 = vmatpush1.msra.mxu0 %v6320
      %6622 = vmatprep.subr.mxu0 %v6506
      %6623 = vmatpush1.msra.mxu0 %v6505
      %6624 = vmatprep.subr.mxu0 %v6510
      %6625 = vmatpush1.msra.mxu0 %v6509
      %6626 = vmatprep.subr.mxu0 %v6514
      %6627 = vmatpush1.msra.mxu0 %v6513
      %6628 = vmatprep.subr.mxu0 %v6518
      %6629 = vmatpush1.msra.mxu0 %v6517
      %6630 = vmatprep.subr.mxu0 %v6522
      %6631 = vmatpush1.msra.mxu0 %v6521
      %6632 = vmatprep.subr.mxu0 %v6526
      %6633 = vmatpush1.msra.mxu0 %v6525
      %6634 = vmatprep.subr.mxu0 %v6530
      %6635 = vmatpush1.msra.mxu0 %v6529
      %6636 = vmatprep.subr.mxu0 %v6534
      %6637 = vmatpush1.msra.mxu0 %v6533
      %6638 = vmatprep.subr.mxu0 %v6538
      %6639 = vmatpush1.msra.mxu0 %v6537
      %6640 = vmatprep.subr.mxu0 %v6542
      %6641 = vmatpush1.msra.mxu0 %v6541
      %6642 = vmatprep.subr.mxu0 %v6546
      %6643 = vmatpush1.msra.mxu0 %v6545
      %6644 = vmatprep.subr.mxu0 %v6550
      %6645 = vmatpush1.msra.mxu0 %v6549
      %6646 = vmatprep.subr.mxu0 %v6614
      %6647 = vmatpush1.msra.mxu0 %v6612
      %6648 = vmatprep.subr.mxu0 0.0
      %6649 = vmatpush1.msra.mxu0 0.0
      %6650 = vmatprep.subr.mxu0 0.0
      %6651 = vmatpush1.msra.mxu0 0.0
      %6652 = vmatprep.subr.mxu0 0.0
      %6653 = vmatpush1.msra.mxu0 0.0
      %6654 = vmatprep.subr.mxu0 0.0
      %6655 = vmatpush1.msra.mxu0 0.0
      %6656 = vmatprep.subr.mxu0 0.0
      %6657 = vmatpush1.msra.mxu0 0.0
      %6658 = vmatprep.subr.mxu0 0.0
      %6659 = vmatpush1.msra.mxu0 0.0
      %6660 = vmatprep.subr.mxu0 0.0
      %6661 = vmatpush1.msra.mxu0 0.0
      %6662 = vmatprep.subr.mxu0 0.0
      %6663 = vmatpush1.msra.mxu0 0.0
      %6664 = vmatprep.subr.mxu0 0.0
      %6665 = vmatpush1.msra.mxu0 0.0
      %6666 = vmatprep.subr.mxu0 0.0
      %6667 = vmatpush1.msra.mxu0 0.0
      %6668 = vmatprep.subr.mxu0 0.0
      %6669 = vmatpush1.msra.mxu0 0.0
      %6670 = vmatprep.subr.mxu0 0.0
      %6671 = vmatpush1.msra.mxu0 0.0
      %6672 = vmatprep.subr.mxu0 0.0
      %6673 = vmatpush1.msra.mxu0 0.0
      %6674 = vmatprep.subr.mxu0 0.0
      %6675 = vmatpush1.msra.mxu0 0.0
      %6676 = vmatprep.subr.mxu0 0.0
      %6677 = vmatpush1.msra.mxu0 0.0
      %6678 = vmatprep.subr.mxu0 0.0
      %6679 = vmatpush1.msra.mxu0 0.0
      %6680 = vmatprep.subr.mxu0 0.0
      %6681 = vmatpush1.msra.mxu0 0.0
      %6682 = vmatprep.subr.mxu0 0.0
      %6683 = vmatpush1.msra.mxu0 0.0
      %6684 = vmatprep.mubr.f32.mxu0 0.0
      %6685 = vmatmul.mubr.f32.gmra.mrb[0].mxu0 %v6610
      %v6686 = vpop.f32.mrb[0].mxu0
      %v6687 = vadd.f32 %v6353, %v6686
      %v6688 = vpop.f32.mrb[0].mxu0
      %v6689 = vadd.f32 %v6353, %v6688
      %6690 = vdwg.mxu0
      %6691 = vmatprep.subr.mxu0 %v6323
      %6692 = vmatpush1.msra.mxu0 %v6322
      %6693 = vmatprep.subr.mxu0 %v6508
      %6694 = vmatpush1.msra.mxu0 %v6507
      %6695 = vmatprep.subr.mxu0 %v6512
      %6696 = vmatpush1.msra.mxu0 %v6511
      %6697 = vmatprep.subr.mxu0 %v6516
      %6698 = vmatpush1.msra.mxu0 %v6515
      %6699 = vmatprep.subr.mxu0 %v6520
      %6700 = vmatpush1.msra.mxu0 %v6519
      %6701 = vmatprep.subr.mxu0 %v6524
      %6702 = vmatpush1.msra.mxu0 %v6523
      %6703 = vmatprep.subr.mxu0 %v6528
      %6704 = vmatpush1.msra.mxu0 %v6527
      %6705 = vmatprep.subr.mxu0 %v6532
      %6706 = vmatpush1.msra.mxu0 %v6531
      %6707 = vmatprep.subr.mxu0 %v6536
      %6708 = vmatpush1.msra.mxu0 %v6535
      %6709 = vmatprep.subr.mxu0 %v6540
      %6710 = vmatpush1.msra.mxu0 %v6539
      %6711 = vmatprep.subr.mxu0 %v6544
      %6712 = vmatpush1.msra.mxu0 %v6543
      %6713 = vmatprep.subr.mxu0 %v6548
      %6714 = vmatpush1.msra.mxu0 %v6547
      %6715 = vmatprep.subr.mxu0 %v6552
      %6716 = vmatpush1.msra.mxu0 %v6551
      %6717 = vmatprep.subr.mxu0 %v6618
      %6718 = vmatpush1.msra.mxu0 %v6616
      %6719 = vmatprep.subr.mxu0 0.0
      %6720 = vmatpush1.msra.mxu0 0.0
      %6721 = vmatprep.subr.mxu0 0.0
      %6722 = vmatpush1.msra.mxu0 0.0
      %6723 = vmatprep.subr.mxu0 0.0
      %6724 = vmatpush1.msra.mxu0 0.0
      %6725 = vmatprep.subr.mxu0 0.0
      %6726 = vmatpush1.msra.mxu0 0.0
      %6727 = vmatprep.subr.mxu0 0.0
      %6728 = vmatpush1.msra.mxu0 0.0
      %6729 = vmatprep.subr.mxu0 0.0
      %6730 = vmatpush1.msra.mxu0 0.0
      %6731 = vmatprep.subr.mxu0 0.0
      %6732 = vmatpush1.msra.mxu0 0.0
      %6733 = vmatprep.subr.mxu0 0.0
      %6734 = vmatpush1.msra.mxu0 0.0
      %6735 = vmatprep.subr.mxu0 0.0
      %6736 = vmatpush1.msra.mxu0 0.0
      %6737 = vmatprep.subr.mxu0 0.0
      %6738 = vmatpush1.msra.mxu0 0.0
      %6739 = vmatprep.subr.mxu0 0.0
      %6740 = vmatpush1.msra.mxu0 0.0
      %6741 = vmatprep.subr.mxu0 0.0
      %6742 = vmatpush1.msra.mxu0 0.0
      %6743 = vmatprep.subr.mxu0 0.0
      %6744 = vmatpush1.msra.mxu0 0.0
      %6745 = vmatprep.subr.mxu0 0.0
      %6746 = vmatpush1.msra.mxu0 0.0
      %6747 = vmatprep.subr.mxu0 0.0
      %6748 = vmatpush1.msra.mxu0 0.0
      %6749 = vmatprep.subr.mxu0 0.0
      %6750 = vmatpush1.msra.mxu0 0.0
      %6751 = vmatprep.subr.mxu0 0.0
      %6752 = vmatpush1.msra.mxu0 0.0
      %6753 = vmatprep.subr.mxu0 0.0
      %6754 = vmatpush1.msra.mxu0 0.0
      %6755 = vmatprep.mubr.f32.mxu0 0.0
      %6756 = vmatmul.mubr.f32.gmra.mrb[0].mxu0 %v6610
      %v6757 = vpop.f32.mrb[0].mxu0
      %v6758 = vadd.f32 %v6353, %v6757
      %v6759 = vpop.f32.mrb[0].mxu0
      %v6760 = vadd.f32 %v6353, %v6759
      %6761 = vdwg.mxu0
      %v6762 = vmul.f32 %v6687, %v1579
      %v6763 = vmul.f32 %v6689, %v1583
      %v6764 = vmul.f32 %v6758, %v1587
      %v6765 = vmul.f32 %v6760, %v1591
      %v6766 = vld [vmem:[%s18] sm:$0xf]
      %v6767 = vld [vmem:[%s19] sm:$0xf]
      %6769 = vset.pattern.permute.xlu0 0
      %6770 = vperm.xlu0 %6769, %v6767
      %v6771 = vpop.permute.xlu0 %6770
      %vm6773 = vcmask 31744
      %v6775 = vsel %vm6773, %v6766, 0
      %v6778 = vsel %vm1780, %v6762, 0
      %v6781 = vsel %vm1780, %v6763, 0
      %v6784 = vsel %vm1780, %v6764, 0
      %v6787 = vsel %vm1780, %v6765, 0
      %6789 = vmatprep.subr.mxu0 %v6781
      %6790 = vmatpush1.msra.mxu0 %v6778
      %6791 = vmatprep.subr.mxu0 0.0
      %6792 = vmatpush1.msra.mxu0 0.0
      %6793 = vmatprep.subr.mxu0 0.0
      %6794 = vmatpush1.msra.mxu0 0.0
      %6795 = vmatprep.subr.mxu0 0.0
      %6796 = vmatpush1.msra.mxu0 0.0
      %6797 = vmatprep.subr.mxu0 0.0
      %6798 = vmatpush1.msra.mxu0 0.0
      %6799 = vmatprep.subr.mxu0 0.0
      %6800 = vmatpush1.msra.mxu0 0.0
      %6801 = vmatprep.subr.mxu0 0.0
      %6802 = vmatpush1.msra.mxu0 0.0
      %6803 = vmatprep.subr.mxu0 0.0
      %6804 = vmatpush1.msra.mxu0 0.0
      %6805 = vmatprep.subr.mxu0 0.0
      %6806 = vmatpush1.msra.mxu0 0.0
      %6807 = vmatprep.subr.mxu0 0.0
      %6808 = vmatpush1.msra.mxu0 0.0
      %6809 = vmatprep.subr.mxu0 0.0
      %6810 = vmatpush1.msra.mxu0 0.0
      %6811 = vmatprep.subr.mxu0 0.0
      %6812 = vmatpush1.msra.mxu0 0.0
      %6813 = vmatprep.subr.mxu0 0.0
      %6814 = vmatpush1.msra.mxu0 0.0
      %6815 = vmatprep.subr.mxu0 0.0
      %6816 = vmatpush1.msra.mxu0 0.0
      %6817 = vmatprep.subr.mxu0 0.0
      %6818 = vmatpush1.msra.mxu0 0.0
      %6819 = vmatprep.subr.mxu0 0.0
      %6820 = vmatpush1.msra.mxu0 0.0
      %6821 = vmatprep.subr.mxu0 0.0
      %6822 = vmatpush1.msra.mxu0 0.0
      %6823 = vmatprep.subr.mxu0 0.0
      %6824 = vmatpush1.msra.mxu0 0.0
      %6825 = vmatprep.subr.mxu0 0.0
      %6826 = vmatpush1.msra.mxu0 0.0
      %6827 = vmatprep.subr.mxu0 0.0
      %6828 = vmatpush1.msra.mxu0 0.0
      %6829 = vmatprep.subr.mxu0 0.0
      %6830 = vmatpush1.msra.mxu0 0.0
      %6831 = vmatprep.subr.mxu0 0.0
      %6832 = vmatpush1.msra.mxu0 0.0
      %6833 = vmatprep.subr.mxu0 0.0
      %6834 = vmatpush1.msra.mxu0 0.0
      %6835 = vmatprep.subr.mxu0 0.0
      %6836 = vmatpush1.msra.mxu0 0.0
      %6837 = vmatprep.subr.mxu0 0.0
      %6838 = vmatpush1.msra.mxu0 0.0
      %6839 = vmatprep.subr.mxu0 0.0
      %6840 = vmatpush1.msra.mxu0 0.0
      %6841 = vmatprep.subr.mxu0 0.0
      %6842 = vmatpush1.msra.mxu0 0.0
      %6843 = vmatprep.subr.mxu0 0.0
      %6844 = vmatpush1.msra.mxu0 0.0
      %6845 = vmatprep.subr.mxu0 0.0
      %6846 = vmatpush1.msra.mxu0 0.0
      %6847 = vmatprep.subr.mxu0 0.0
      %6848 = vmatpush1.msra.mxu0 0.0
      %6849 = vmatprep.subr.mxu0 0.0
      %6850 = vmatpush1.msra.mxu0 0.0
      %6851 = vmatprep.subr.mxu0 0.0
      %6852 = vmatpush1.msra.mxu0 0.0
      %6853 = vmatprep.mubr.f32.mxu0 0.0
      %6854 = vmatmul.mubr.f32.gmra.mrb[0].mxu0 %v6775
      %v6855 = vpop.f32.mrb[0].mxu0
      %v6856 = vadd.f32 %v6771, %v6855
      %v6857 = vpop.f32.mrb[0].mxu0
      %v6858 = vadd.f32 %v6771, %v6857
      %6859 = vdwg.mxu0
      %6860 = vmatprep.subr.mxu0 %v6787
      %6861 = vmatpush1.msra.mxu0 %v6784
      %6862 = vmatprep.subr.mxu0 0.0
      %6863 = vmatpush1.msra.mxu0 0.0
      %6864 = vmatprep.subr.mxu0 0.0
      %6865 = vmatpush1.msra.mxu0 0.0
      %6866 = vmatprep.subr.mxu0 0.0
      %6867 = vmatpush1.msra.mxu0 0.0
      %6868 = vmatprep.subr.mxu0 0.0
      %6869 = vmatpush1.msra.mxu0 0.0
      %6870 = vmatprep.subr.mxu0 0.0
      %6871 = vmatpush1.msra.mxu0 0.0
      %6872 = vmatprep.subr.mxu0 0.0
      %6873 = vmatpush1.msra.mxu0 0.0
      %6874 = vmatprep.subr.mxu0 0.0
      %6875 = vmatpush1.msra.mxu0 0.0
      %6876 = vmatprep.subr.mxu0 0.0
      %6877 = vmatpush1.msra.mxu0 0.0
      %6878 = vmatprep.subr.mxu0 0.0
      %6879 = vmatpush1.msra.mxu0 0.0
      %6880 = vmatprep.subr.mxu0 0.0
      %6881 = vmatpush1.msra.mxu0 0.0
      %6882 = vmatprep.subr.mxu0 0.0
      %6883 = vmatpush1.msra.mxu0 0.0
      %6884 = vmatprep.subr.mxu0 0.0
      %6885 = vmatpush1.msra.mxu0 0.0
      %6886 = vmatprep.subr.mxu0 0.0
      %6887 = vmatpush1.msra.mxu0 0.0
      %6888 = vmatprep.subr.mxu0 0.0
      %6889 = vmatpush1.msra.mxu0 0.0
      %6890 = vmatprep.subr.mxu0 0.0
      %6891 = vmatpush1.msra.mxu0 0.0
      %6892 = vmatprep.subr.mxu0 0.0
      %6893 = vmatpush1.msra.mxu0 0.0
      %6894 = vmatprep.subr.mxu0 0.0
      %6895 = vmatpush1.msra.mxu0 0.0
      %6896 = vmatprep.subr.mxu0 0.0
      %6897 = vmatpush1.msra.mxu0 0.0
      %6898 = vmatprep.subr.mxu0 0.0
      %6899 = vmatpush1.msra.mxu0 0.0
      %6900 = vmatprep.subr.mxu0 0.0
      %6901 = vmatpush1.msra.mxu0 0.0
      %6902 = vmatprep.subr.mxu0 0.0
      %6903 = vmatpush1.msra.mxu0 0.0
      %6904 = vmatprep.subr.mxu0 0.0
      %6905 = vmatpush1.msra.mxu0 0.0
      %6906 = vmatprep.subr.mxu0 0.0
      %6907 = vmatpush1.msra.mxu0 0.0
      %6908 = vmatprep.subr.mxu0 0.0
      %6909 = vmatpush1.msra.mxu0 0.0
      %6910 = vmatprep.subr.mxu0 0.0
      %6911 = vmatpush1.msra.mxu0 0.0
      %6912 = vmatprep.subr.mxu0 0.0
      %6913 = vmatpush1.msra.mxu0 0.0
      %6914 = vmatprep.subr.mxu0 0.0
      %6915 = vmatpush1.msra.mxu0 0.0
      %6916 = vmatprep.subr.mxu0 0.0
      %6917 = vmatpush1.msra.mxu0 0.0
      %6918 = vmatprep.subr.mxu0 0.0
      %6919 = vmatpush1.msra.mxu0 0.0
      %6920 = vmatprep.subr.mxu0 0.0
      %6921 = vmatpush1.msra.mxu0 0.0
      %6922 = vmatprep.subr.mxu0 0.0
      %6923 = vmatpush1.msra.mxu0 0.0
      %6924 = vmatprep.mubr.f32.mxu0 0.0
      %6925 = vmatmul.mubr.f32.gmra.mrb[0].mxu0 %v6775
      %v6926 = vpop.f32.mrb[0].mxu0
      %v6927 = vadd.f32 %v6771, %v6926
      %v6928 = vpop.f32.mrb[0].mxu0
      %v6929 = vadd.f32 %v6771, %v6928
      %6930 = vdwg.mxu0
      %vm6931 = vcmp.ge.f32.partialorder %v6856, 0.0
      %vm6932 = vcmp.ge.f32.partialorder %v6858, 0.0
      %vm6933 = vcmp.ge.f32.partialorder %v6927, 0.0
      %vm6934 = vcmp.ge.f32.partialorder %v6929, 0.0
      %v6935 = vmul.f32 %v6856, 0.1
      %v6936 = vmul.f32 %v6858, 0.1
      %v6937 = vmul.f32 %v6927, 0.1
      %v6938 = vmul.f32 %v6929, 0.1
      %v6939 = vsel %vm6931, %v6856, %v6935
      %v6940 = vsel %vm6932, %v6858, %v6936
      %v6941 = vsel %vm6933, %v6927, %v6937
      %v6942 = vsel %vm6934, %v6929, %v6938
      %v6943 = vmul.f32 %v6939, %v1579
      %v6944 = vmul.f32 %v6940, %v1583
      %v6945 = vmul.f32 %v6941, %v1587
      %v6946 = vmul.f32 %v6942, %v1591
      %v6951 = vrot.slane %v4704, 4
      %v6952 = vrot.slane %v4705, 4
      %v6953 = vrot.slane %v4706, 4
      %v6954 = vrot.slane %v4707, 4
      %v6963 = vrot.slane %v6943, 4
      %v6964 = vrot.slane %v6944, 4
      %v6965 = vrot.slane %v6945, 4
      %v6966 = vrot.slane %v6946, 4
      %v6971 = vsel %vm1780, %v2989, %v6951
      %v6972 = vsel %vm1780, %v2990, %v6952
      %v6973 = vsel %vm1780, %v2991, %v6953
      %v6974 = vsel %vm1780, %v2992, %v6954
      %v6975 = vsel %vm1780, %v5997, %v6963
      %v6976 = vsel %vm1780, %v5998, %v6964
      %v6977 = vsel %vm1780, %v5999, %v6965
      %v6978 = vsel %vm1780, %v6000, %v6966
      %v6979 = vadd.f32 %v6971, %v6972
      %v6980 = vadd.f32 %v6979, %v6973
      %v6981 = vadd.f32 %v6980, %v6974
      %6982 = vadd.xlane.f32.xlu0 %v6981
      %v6983 = vpop.xlane.xlu0 %6982
      %v6984 = vadd.f32 %v6975, %v6976
      %v6985 = vadd.f32 %v6984, %v6977
      %v6986 = vadd.f32 %v6985, %v6978
      %6987 = vadd.xlane.f32.xlu0 %v6986
      %v6988 = vpop.xlane.xlu0 %6987
      %v6989 = vmul.f32 %v6983, 0.00390625
      %v6990 = vmul.f32 %v6988, 0.00390625
      %v6991 = vmul.f32 %v6971, %v6971
      %v6992 = vmul.f32 %v6972, %v6972
      %v6993 = vmul.f32 %v6973, %v6973
      %v6994 = vmul.f32 %v6974, %v6974
      %v6995 = vmul.f32 %v6975, %v6975
      %v6996 = vmul.f32 %v6976, %v6976
      %v6997 = vmul.f32 %v6977, %v6977
      %v6998 = vmul.f32 %v6978, %v6978
      %v6999 = vadd.f32 %v6991, %v6992
      %v7000 = vadd.f32 %v6999, %v6993
      %v7001 = vadd.f32 %v7000, %v6994
      %7002 = vadd.xlane.f32.xlu0 %v7001
      %v7003 = vpop.xlane.xlu0 %7002
      %v7004 = vadd.f32 %v6995, %v6996
      %v7005 = vadd.f32 %v7004, %v6997
      %v7006 = vadd.f32 %v7005, %v6998
      %7007 = vadd.xlane.f32.xlu0 %v7006
      %v7008 = vpop.xlane.xlu0 %7007
      %v7009 = vmul.f32 %v7003, 0.00390625
      %v7010 = vmul.f32 %v7008, 0.00390625
      %v7011 = vmul.f32 %v6989, %v6989
      %v7012 = vmul.f32 %v6990, %v6990
      %v7013 = vsub.f32 %v7009, %v7011
      %v7014 = vsub.f32 %v7010, %v7012
      %v7015 = vmax.f32 %v7013, 0.0
      %v7016 = vmax.f32 %v7014, 0.0
      %v7017 = vrsqrt.pop %v7015
      %v7018 = vmul.f32 %v7015, %v7017
      %vm7019 = vcmp.eq.f32.partialorder %v7015, inf
      %v7020 = vsel %vm7019, %v7015, %v7018
      %vm7021 = vcmp.eq.f32.partialorder %v7015, 0.0
      %v7022 = vand.u32 %v7015, 2147483648
      %v7023 = vsel %vm7021, %v7022, %v7020
      %v7024 = vrsqrt.pop %v7016
      %v7025 = vmul.f32 %v7016, %v7024
      %vm7026 = vcmp.eq.f32.partialorder %v7016, inf
      %v7027 = vsel %vm7026, %v7016, %v7025
      %vm7028 = vcmp.eq.f32.partialorder %v7016, 0.0
      %v7029 = vand.u32 %v7016, 2147483648
      %v7030 = vsel %vm7028, %v7029, %v7027
      %v7031 = vadd.f32 %v6989, %v7023
      %v7032 = vadd.f32 %v6990, %v7030
      %v7033 = vld [vmem:[%s20] sm:$0xff]
      %v7034 = vld [vmem:[%s20 + $0x8] sm:$0xff]
      %v7035 = vmul.f32 %v7033, %v7031
      %v7036 = vmul.f32 %v7034, %v7032
      %vm7037 = vcmask 7168
      %v7038 = vsel %vm7037, %v7035, 0.0
      %v7039 = vsel %vm7037, %v7036, 0.0
      %v7040 = vadd.f32 %v7038, %v7039
      %v7041 = vrot.slane %v7040, 4
      %v7042 = vadd.f32 %v7040, %v7041
      %v7043 = vrot.slane %v7042, 2
      %v7044 = vadd.f32 %v7042, %v7043
      %v7045 = vrot.slane %v7044, 1
      %v7046 = vadd.f32 %v7044, %v7045
      %v7047 = vmax.f32 %v7046, 0.0
      %v7048 = vld [vmem:[%s21] sm:$0xff]
      %v7049 = vld [vmem:[%s21 + $0x8] sm:$0xff]
      %v7050 = vmul.f32 %v7048, %v7047
      %v7051 = vmul.f32 %v7049, %v7047
      %v7052 = vadd.f32 %v7050, 0.0
      %v7053 = vadd.f32 %v7051, 0.0
      %v7054 = vxor.u32 %v7052, 2147483648
      %v7055 = vxor.u32 %v7053, 2147483648
      %v7056 = vmul.f32 %v7054, 1.442695
      %v7057 = vpow.pop %v7056
      %v7058 = vmul.f32 %v7055, 1.442695
      %v7059 = vpow.pop %v7058
      %v7060 = vadd.f32 %v7057, 1.0
      %v7061 = vadd.f32 %v7059, 1.0
      %v7062 = vrcp.pop %v7060
      %v7063 = vmul.f32 1.0, %v7062
      %v7064 = vrcp.pop %v7061
      %v7065 = vmul.f32 1.0, %v7064
      %7067 = vset.pattern.permute.xlu0 0
      %7068 = vperm.xlu0 %7067, %v7063
      %v7069 = vpop.permute.xlu0 %7068
      %7072 = vset.pattern.permute.xlu0 0
      %7073 = vperm.xlu0 %7072, %v7065
      %v7074 = vpop.permute.xlu0 %7073
      %v7076 = vmul.f32 %v6971, %v7069
      %v7077 = vmul.f32 %v6972, %v7069
      %v7078 = vmul.f32 %v6973, %v7069
      %v7079 = vmul.f32 %v6974, %v7069
      %v7080 = vmul.f32 %v6975, %v7074
      %v7081 = vmul.f32 %v6976, %v7074
      %v7082 = vmul.f32 %v6977, %v7074
      %v7083 = vmul.f32 %v6978, %v7074
      %v7084 = vmax.f32 %v7076, %v7080
      %v7085 = vrot.slane %v7084, 4
      %v7086 = vmax.f32 %v7084, %v7085
      %v7087 = vrot.slane %v7086, 2
      %v7088 = vmax.f32 %v7086, %v7087
      %v7089 = vrot.slane %v7088, 1
      %v7090 = vmax.f32 %v7088, %v7089
      %v7091 = vmax.f32 %v7077, %v7081
      %v7092 = vrot.slane %v7091, 4
      %v7093 = vmax.f32 %v7091, %v7092
      %v7094 = vrot.slane %v7093, 2
      %v7095 = vmax.f32 %v7093, %v7094
      %v7096 = vrot.slane %v7095, 1
      %v7097 = vmax.f32 %v7095, %v7096
      %v7098 = vmax.f32 %v7078, %v7082
      %v7099 = vrot.slane %v7098, 4
      %v7100 = vmax.f32 %v7098, %v7099
      %v7101 = vrot.slane %v7100, 2
      %v7102 = vmax.f32 %v7100, %v7101
      %v7103 = vrot.slane %v7102, 1
      %v7104 = vmax.f32 %v7102, %v7103
      %v7105 = vmax.f32 %v7079, %v7083
      %v7106 = vrot.slane %v7105, 4
      %v7107 = vmax.f32 %v7105, %v7106
      %v7108 = vrot.slane %v7107, 2
      %v7109 = vmax.f32 %v7107, %v7108
      %v7110 = vrot.slane %v7109, 1
      %v7111 = vmax.f32 %v7109, %v7110
      %v7112 = vadd.f32 %v7076, %v7080
      %v7113 = vrot.slane %v7112, 4
      %v7114 = vadd.f32 %v7112, %v7113
      %v7115 = vrot.slane %v7114, 2
      %v7116 = vadd.f32 %v7114, %v7115
      %v7117 = vrot.slane %v7116, 1
      %v7118 = vadd.f32 %v7116, %v7117
      %v7119 = vadd.f32 %v7077, %v7081
      %v7120 = vrot.slane %v7119, 4
      %v7121 = vadd.f32 %v7119, %v7120
      %v7122 = vrot.slane %v7121, 2
      %v7123 = vadd.f32 %v7121, %v7122
      %v7124 = vrot.slane %v7123, 1
      %v7125 = vadd.f32 %v7123, %v7124
      %v7126 = vadd.f32 %v7078, %v7082
      %v7127 = vrot.slane %v7126, 4
      %v7128 = vadd.f32 %v7126, %v7127
      %v7129 = vrot.slane %v7128, 2
      %v7130 = vadd.f32 %v7128, %v7129
      %v7131 = vrot.slane %v7130, 1
      %v7132 = vadd.f32 %v7130, %v7131
      %v7133 = vadd.f32 %v7079, %v7083
      %v7134 = vrot.slane %v7133, 4
      %v7135 = vadd.f32 %v7133, %v7134
      %v7136 = vrot.slane %v7135, 2
      %v7137 = vadd.f32 %v7135, %v7136
      %v7138 = vrot.slane %v7137, 1
      %v7139 = vadd.f32 %v7137, %v7138
      %v7140 = vmul.f32 %v7118, 0.0625
      %v7141 = vmul.f32 %v7125, 0.0625
      %v7142 = vmul.f32 %v7132, 0.0625
      %v7143 = vmul.f32 %v7139, 0.0625
      %vm7144 = vcmask 1040384
      %v7145 = vsel %vm7144, %v7090, %v7140
      %v7146 = vsel %vm7144, %v7097, %v7141
      %v7147 = vsel %vm7144, %v7104, %v7142
      %v7148 = vsel %vm7144, %v7111, %v7143
      %7153 = vrot.lane.b32.xlu0 %v7145, 69
      %v7154 = vpop.permute.xlu0 %7153
      %7155 = vrot.lane.b32.xlu0 %v7146, 69
      %v7156 = vpop.permute.xlu0 %7155
      %7157 = vrot.lane.b32.xlu0 %v7147, 69
      %v7158 = vpop.permute.xlu0 %7157
      %7159 = vrot.lane.b32.xlu0 %v7148, 69
      %v7160 = vpop.permute.xlu0 %7159
      %v7161 = vsel %vm827, %v7154, %v7156
      %v7162 = vsel %vm827, %v7156, %v7158
      %v7163 = vsel %vm827, %v7158, %v7160
      %v7169 = vsel %vm827, 0.0, %v7154
      %v7170 = vsel %vm827, %v7160, 0.0
      %v7173 = vrot.slane %v7169, 6
      %v7174 = vrot.slane %v7161, 6
      %v7175 = vrot.slane %v7162, 6
      %v7176 = vrot.slane %v7163, 6
      %v7177 = vrot.slane %v7170, 6
      %7178 = vrot.lane.b32.xlu0 %v7173, 127
      %v7179 = vpop.permute.xlu0 %7178
      %7180 = vrot.lane.b32.xlu0 %v7174, 127
      %v7181 = vpop.permute.xlu0 %7180
      %7182 = vrot.lane.b32.xlu0 %v7175, 127
      %v7183 = vpop.permute.xlu0 %7182
      %7184 = vrot.lane.b32.xlu0 %v7176, 127
      %v7185 = vpop.permute.xlu0 %7184
      %7186 = vrot.lane.b32.xlu0 %v7177, 127
      %v7187 = vpop.permute.xlu0 %7186
      %v7188 = vsel %vm866, %v7179, %v7181
      %v7189 = vsel %vm866, %v7181, %v7183
      %v7190 = vsel %vm866, %v7183, %v7185
      %v7191 = vsel %vm866, %v7185, %v7187
      %v7196 = vrot.slane %v7169, 4
      %v7197 = vrot.slane %v7161, 4
      %v7198 = vrot.slane %v7162, 4
      %v7199 = vrot.slane %v7163, 4
      %v7200 = vrot.slane %v7170, 4
      %7201 = vrot.lane.b32.xlu0 %v7196, 126
      %v7202 = vpop.permute.xlu0 %7201
      %7203 = vrot.lane.b32.xlu0 %v7197, 126
      %v7204 = vpop.permute.xlu0 %7203
      %7205 = vrot.lane.b32.xlu0 %v7198, 126
      %v7206 = vpop.permute.xlu0 %7205
      %7207 = vrot.lane.b32.xlu0 %v7199, 126
      %v7208 = vpop.permute.xlu0 %7207
      %7209 = vrot.lane.b32.xlu0 %v7200, 126
      %v7210 = vpop.permute.xlu0 %7209
      %v7211 = vsel %vm895, %v7202, %v7204
      %v7212 = vsel %vm895, %v7204, %v7206
      %v7213 = vsel %vm895, %v7206, %v7208
      %v7214 = vsel %vm895, %v7208, %v7210
      %v7219 = vrot.slane %v7169, 2
      %v7220 = vrot.slane %v7161, 2
      %v7221 = vrot.slane %v7162, 2
      %v7222 = vrot.slane %v7163, 2
      %v7223 = vrot.slane %v7170, 2
      %7224 = vrot.lane.b32.xlu0 %v7219, 125
      %v7225 = vpop.permute.xlu0 %7224
      %7226 = vrot.lane.b32.xlu0 %v7220, 125
      %v7227 = vpop.permute.xlu0 %7226
      %7228 = vrot.lane.b32.xlu0 %v7221, 125
      %v7229 = vpop.permute.xlu0 %7228
      %7230 = vrot.lane.b32.xlu0 %v7222, 125
      %v7231 = vpop.permute.xlu0 %7230
      %7232 = vrot.lane.b32.xlu0 %v7223, 125
      %v7233 = vpop.permute.xlu0 %7232
      %v7234 = vsel %vm2161, %v7225, %v7227
      %v7235 = vsel %vm2161, %v7227, %v7229
      %v7236 = vsel %vm2161, %v7229, %v7231
      %v7237 = vsel %vm2161, %v7231, %v7233
      %7242 = vrot.lane.b32.xlu0 %v7169, 124
      %v7243 = vpop.permute.xlu0 %7242
      %7244 = vrot.lane.b32.xlu0 %v7161, 124
      %v7245 = vpop.permute.xlu0 %7244
      %7246 = vrot.lane.b32.xlu0 %v7162, 124
      %v7247 = vpop.permute.xlu0 %7246
      %7248 = vrot.lane.b32.xlu0 %v7163, 124
      %v7249 = vpop.permute.xlu0 %7248
      %7250 = vrot.lane.b32.xlu0 %v7170, 124
      %v7251 = vpop.permute.xlu0 %7250
      %v7252 = vsel %vm2181, %v7243, %v7245
      %v7253 = vsel %vm2181, %v7245, %v7247
      %v7254 = vsel %vm2181, %v7247, %v7249
      %v7255 = vsel %vm2181, %v7249, %v7251
      %7260 = vrot.lane.b32.xlu0 %v7173, 123
      %v7261 = vpop.permute.xlu0 %7260
      %7262 = vrot.lane.b32.xlu0 %v7174, 123
      %v7263 = vpop.permute.xlu0 %7262
      %7264 = vrot.lane.b32.xlu0 %v7175, 123
      %v7265 = vpop.permute.xlu0 %7264
      %7266 = vrot.lane.b32.xlu0 %v7176, 123
      %v7267 = vpop.permute.xlu0 %7266
      %7268 = vrot.lane.b32.xlu0 %v7177, 123
      %v7269 = vpop.permute.xlu0 %7268
      %vm7270 = vcmask 1006592
      %v7271 = vsel %vm7270, %v7261, %v7263
      %v7272 = vsel %vm7270, %v7263, %v7265
      %v7273 = vsel %vm7270, %v7265, %v7267
      %v7274 = vsel %vm7270, %v7267, %v7269
      %7279 = vrot.lane.b32.xlu0 %v7196, 122
      %v7280 = vpop.permute.xlu0 %7279
      %7281 = vrot.lane.b32.xlu0 %v7197, 122
      %v7282 = vpop.permute.xlu0 %7281
      %7283 = vrot.lane.b32.xlu0 %v7198, 122
      %v7284 = vpop.permute.xlu0 %7283
      %7285 = vrot.lane.b32.xlu0 %v7199, 122
      %v7286 = vpop.permute.xlu0 %7285
      %7287 = vrot.lane.b32.xlu0 %v7200, 122
      %v7288 = vpop.permute.xlu0 %7287
      %vm7289 = vcmask 998400
      %v7290 = vsel %vm7289, %v7280, %v7282
      %v7291 = vsel %vm7289, %v7282, %v7284
      %v7292 = vsel %vm7289, %v7284, %v7286
      %v7293 = vsel %vm7289, %v7286, %v7288
      %7298 = vrot.lane.b32.xlu0 %v7219, 106
      %v7299 = vpop.permute.xlu0 %7298
      %7300 = vrot.lane.b32.xlu0 %v7220, 106
      %v7301 = vpop.permute.xlu0 %7300
      %7302 = vrot.lane.b32.xlu0 %v7221, 106
      %v7303 = vpop.permute.xlu0 %7302
      %7304 = vrot.lane.b32.xlu0 %v7222, 106
      %v7305 = vpop.permute.xlu0 %7304
      %7306 = vrot.lane.b32.xlu0 %v7223, 106
      %v7307 = vpop.permute.xlu0 %7306
      %v7308 = vsel %vm924, %v7299, %v7301
      %v7309 = vsel %vm924, %v7301, %v7303
      %v7310 = vsel %vm924, %v7303, %v7305
      %v7311 = vsel %vm924, %v7305, %v7307
      %7316 = vrot.lane.b32.xlu0 %v7169, 105
      %v7317 = vpop.permute.xlu0 %7316
      %7318 = vrot.lane.b32.xlu0 %v7161, 105
      %v7319 = vpop.permute.xlu0 %7318
      %7320 = vrot.lane.b32.xlu0 %v7162, 105
      %v7321 = vpop.permute.xlu0 %7320
      %7322 = vrot.lane.b32.xlu0 %v7163, 105
      %v7323 = vpop.permute.xlu0 %7322
      %7324 = vrot.lane.b32.xlu0 %v7170, 105
      %v7325 = vpop.permute.xlu0 %7324
      %v7326 = vsel %vm953, %v7317, %v7319
      %v7327 = vsel %vm953, %v7319, %v7321
      %v7328 = vsel %vm953, %v7321, %v7323
      %v7329 = vsel %vm953, %v7323, %v7325
      %7334 = vrot.lane.b32.xlu0 %v7173, 104
      %v7335 = vpop.permute.xlu0 %7334
      %7336 = vrot.lane.b32.xlu0 %v7174, 104
      %v7337 = vpop.permute.xlu0 %7336
      %7338 = vrot.lane.b32.xlu0 %v7175, 104
      %v7339 = vpop.permute.xlu0 %7338
      %7340 = vrot.lane.b32.xlu0 %v7176, 104
      %v7341 = vpop.permute.xlu0 %7340
      %7342 = vrot.lane.b32.xlu0 %v7177, 104
      %v7343 = vpop.permute.xlu0 %7342
      %v7344 = vsel %vm982, %v7335, %v7337
      %v7345 = vsel %vm982, %v7337, %v7339
      %v7346 = vsel %vm982, %v7339, %v7341
      %v7347 = vsel %vm982, %v7341, %v7343
      %7352 = vrot.lane.b32.xlu0 %v7196, 103
      %v7353 = vpop.permute.xlu0 %7352
      %7354 = vrot.lane.b32.xlu0 %v7197, 103
      %v7355 = vpop.permute.xlu0 %7354
      %7356 = vrot.lane.b32.xlu0 %v7198, 103
      %v7357 = vpop.permute.xlu0 %7356
      %7358 = vrot.lane.b32.xlu0 %v7199, 103
      %v7359 = vpop.permute.xlu0 %7358
      %7360 = vrot.lane.b32.xlu0 %v7200, 103
      %v7361 = vpop.permute.xlu0 %7360
      %v7362 = vsel %vm2258, %v7353, %v7355
      %v7363 = vsel %vm2258, %v7355, %v7357
      %v7364 = vsel %vm2258, %v7357, %v7359
      %v7365 = vsel %vm2258, %v7359, %v7361
      %7370 = vrot.lane.b32.xlu0 %v7219, 102
      %v7371 = vpop.permute.xlu0 %7370
      %7372 = vrot.lane.b32.xlu0 %v7220, 102
      %v7373 = vpop.permute.xlu0 %7372
      %7374 = vrot.lane.b32.xlu0 %v7221, 102
      %v7375 = vpop.permute.xlu0 %7374
      %7376 = vrot.lane.b32.xlu0 %v7222, 102
      %v7377 = vpop.permute.xlu0 %7376
      %7378 = vrot.lane.b32.xlu0 %v7223, 102
      %v7379 = vpop.permute.xlu0 %7378
      %v7380 = vsel %vm2278, %v7371, %v7373
      %v7381 = vsel %vm2278, %v7373, %v7375
      %v7382 = vsel %vm2278, %v7375, %v7377
      %v7383 = vsel %vm2278, %v7377, %v7379
      %7388 = vrot.lane.b32.xlu0 %v7169, 101
      %v7389 = vpop.permute.xlu0 %7388
      %7390 = vrot.lane.b32.xlu0 %v7161, 101
      %v7391 = vpop.permute.xlu0 %7390
      %7392 = vrot.lane.b32.xlu0 %v7162, 101
      %v7393 = vpop.permute.xlu0 %7392
      %7394 = vrot.lane.b32.xlu0 %v7163, 101
      %v7395 = vpop.permute.xlu0 %7394
      %7396 = vrot.lane.b32.xlu0 %v7170, 101
      %v7397 = vpop.permute.xlu0 %7396
      %vm7398 = vcmask 826368
      %v7399 = vsel %vm7398, %v7389, %v7391
      %v7400 = vsel %vm7398, %v7391, %v7393
      %v7401 = vsel %vm7398, %v7393, %v7395
      %v7402 = vsel %vm7398, %v7395, %v7397
      %7407 = vrot.lane.b32.xlu0 %v7173, 100
      %v7408 = vpop.permute.xlu0 %7407
      %7409 = vrot.lane.b32.xlu0 %v7174, 100
      %v7410 = vpop.permute.xlu0 %7409
      %7411 = vrot.lane.b32.xlu0 %v7175, 100
      %v7412 = vpop.permute.xlu0 %7411
      %7413 = vrot.lane.b32.xlu0 %v7176, 100
      %v7414 = vpop.permute.xlu0 %7413
      %7415 = vrot.lane.b32.xlu0 %v7177, 100
      %v7416 = vpop.permute.xlu0 %7415
      %v7417 = vsel %vm2823, %v7408, %v7410
      %v7418 = vsel %vm2823, %v7410, %v7412
      %v7419 = vsel %vm2823, %v7412, %v7414
      %v7420 = vsel %vm2823, %v7414, %v7416
      %7425 = vrot.lane.b32.xlu0 %v7196, 84
      %v7426 = vpop.permute.xlu0 %7425
      %7427 = vrot.lane.b32.xlu0 %v7197, 84
      %v7428 = vpop.permute.xlu0 %7427
      %7429 = vrot.lane.b32.xlu0 %v7198, 84
      %v7430 = vpop.permute.xlu0 %7429
      %7431 = vrot.lane.b32.xlu0 %v7199, 84
      %v7432 = vpop.permute.xlu0 %7431
      %7433 = vrot.lane.b32.xlu0 %v7200, 84
      %v7434 = vpop.permute.xlu0 %7433
      %v7435 = vsel %vm1011, %v7426, %v7428
      %v7436 = vsel %vm1011, %v7428, %v7430
      %v7437 = vsel %vm1011, %v7430, %v7432
      %v7438 = vsel %vm1011, %v7432, %v7434
      %7443 = vrot.lane.b32.xlu0 %v7219, 83
      %v7444 = vpop.permute.xlu0 %7443
      %7445 = vrot.lane.b32.xlu0 %v7220, 83
      %v7446 = vpop.permute.xlu0 %7445
      %7447 = vrot.lane.b32.xlu0 %v7221, 83
      %v7448 = vpop.permute.xlu0 %7447
      %7449 = vrot.lane.b32.xlu0 %v7222, 83
      %v7450 = vpop.permute.xlu0 %7449
      %7451 = vrot.lane.b32.xlu0 %v7223, 83
      %v7452 = vpop.permute.xlu0 %7451
      %v7453 = vsel %vm1040, %v7444, %v7446
      %v7454 = vsel %vm1040, %v7446, %v7448
      %v7455 = vsel %vm1040, %v7448, %v7450
      %v7456 = vsel %vm1040, %v7450, %v7452
      %vm7461 = vcmask 1041408
      %v7462 = vsel %vm7461, %v7169, %v7188
      %v7463 = vsel %vm7461, %v7161, %v7189
      %v7464 = vsel %vm7461, %v7162, %v7190
      %v7465 = vsel %vm7461, %v7163, %v7191
      %v7466 = vsel %vm1780, %v7462, %v7211
      %v7467 = vsel %vm1780, %v7463, %v7212
      %v7468 = vsel %vm1780, %v7464, %v7213
      %v7469 = vsel %vm1780, %v7465, %v7214
      %vm7470 = vcmask 1045504
      %v7471 = vsel %vm7470, %v7466, %v7234
      %v7472 = vsel %vm7470, %v7467, %v7235
      %v7473 = vsel %vm7470, %v7468, %v7236
      %v7474 = vsel %vm7470, %v7469, %v7237
      %v7475 = vsel %vm7461, %v7252, %v7271
      %v7476 = vsel %vm7461, %v7253, %v7272
      %v7477 = vsel %vm7461, %v7254, %v7273
      %v7478 = vsel %vm7461, %v7255, %v7274
      %v7479 = vsel %vm1780, %v7475, %v7290
      %v7480 = vsel %vm1780, %v7476, %v7291
      %v7481 = vsel %vm1780, %v7477, %v7292
      %v7482 = vsel %vm1780, %v7478, %v7293
      %v7483 = vsel %vm7470, %v7479, %v7308
      %v7484 = vsel %vm7470, %v7480, %v7309
      %v7485 = vsel %vm7470, %v7481, %v7310
      %v7486 = vsel %vm7470, %v7482, %v7311
      %v7487 = vsel %vm7461, %v7326, %v7344
      %v7488 = vsel %vm7461, %v7327, %v7345
      %v7489 = vsel %vm7461, %v7328, %v7346
      %v7490 = vsel %vm7461, %v7329, %v7347
      %v7491 = vsel %vm1780, %v7487, %v7362
      %v7492 = vsel %vm1780, %v7488, %v7363
      %v7493 = vsel %vm1780, %v7489, %v7364
      %v7494 = vsel %vm1780, %v7490, %v7365
      %v7495 = vsel %vm7470, %v7491, %v7380
      %v7496 = vsel %vm7470, %v7492, %v7381
      %v7497 = vsel %vm7470, %v7493, %v7382
      %v7498 = vsel %vm7470, %v7494, %v7383
      %v7499 = vsel %vm7461, %v7399, %v7417
      %v7500 = vsel %vm7461, %v7400, %v7418
      %v7501 = vsel %vm7461, %v7401, %v7419
      %v7502 = vsel %vm7461, %v7402, %v7420
      %v7503 = vsel %vm1780, %v7499, %v7435
      %v7504 = vsel %vm1780, %v7500, %v7436
      %v7505 = vsel %vm1780, %v7501, %v7437
      %v7506 = vsel %vm1780, %v7502, %v7438
      %v7507 = vsel %vm7470, %v7503, %v7453
      %v7508 = vsel %vm7470, %v7504, %v7454
      %v7509 = vsel %vm7470, %v7505, %v7455
      %v7510 = vsel %vm7470, %v7506, %v7456
      %7515 = vrot.lane.b32.xlu0 %v7173, 108
      %v7516 = vpop.permute.xlu0 %7515
      %7517 = vrot.lane.b32.xlu0 %v7174, 108
      %v7518 = vpop.permute.xlu0 %7517
      %7519 = vrot.lane.b32.xlu0 %v7175, 108
      %v7520 = vpop.permute.xlu0 %7519
      %7521 = vrot.lane.b32.xlu0 %v7176, 108
      %v7522 = vpop.permute.xlu0 %7521
      %7523 = vrot.lane.b32.xlu0 %v7177, 108
      %v7524 = vpop.permute.xlu0 %7523
      %v7525 = vsel %vm3608, %v7516, %v7518
      %v7526 = vsel %vm3608, %v7518, %v7520
      %v7527 = vsel %vm3608, %v7520, %v7522
      %v7528 = vsel %vm3608, %v7522, %v7524
      %7534 = vrot.lane.b32.xlu0 %v7196, 107
      %v7535 = vpop.permute.xlu0 %7534
      %7536 = vrot.lane.b32.xlu0 %v7197, 107
      %v7537 = vpop.permute.xlu0 %7536
      %7538 = vrot.lane.b32.xlu0 %v7198, 107
      %v7539 = vpop.permute.xlu0 %7538
      %7540 = vrot.lane.b32.xlu0 %v7199, 107
      %v7541 = vpop.permute.xlu0 %7540
      %7542 = vrot.lane.b32.xlu0 %v7200, 107
      %v7543 = vpop.permute.xlu0 %7542
      %v7544 = vsel %vm2455, %v7535, %v7537
      %v7545 = vsel %vm2455, %v7537, %v7539
      %v7546 = vsel %vm2455, %v7539, %v7541
      %v7547 = vsel %vm2455, %v7541, %v7543
      %7558 = vrot.lane.b32.xlu0 %v7169, 86
      %v7559 = vpop.permute.xlu0 %7558
      %7560 = vrot.lane.b32.xlu0 %v7161, 86
      %v7561 = vpop.permute.xlu0 %7560
      %7562 = vrot.lane.b32.xlu0 %v7162, 86
      %v7563 = vpop.permute.xlu0 %7562
      %7564 = vrot.lane.b32.xlu0 %v7163, 86
      %v7565 = vpop.permute.xlu0 %7564
      %7566 = vrot.lane.b32.xlu0 %v7170, 86
      %v7567 = vpop.permute.xlu0 %7566
      %vm7568 = vcmask 703488
      %v7569 = vsel %vm7568, %v7559, %v7561
      %v7570 = vsel %vm7568, %v7561, %v7563
      %v7571 = vsel %vm7568, %v7563, %v7565
      %v7572 = vsel %vm7568, %v7565, %v7567
      %7578 = vrot.lane.b32.xlu0 %v7173, 85
      %v7579 = vpop.permute.xlu0 %7578
      %7580 = vrot.lane.b32.xlu0 %v7174, 85
      %v7581 = vpop.permute.xlu0 %7580
      %7582 = vrot.lane.b32.xlu0 %v7175, 85
      %v7583 = vpop.permute.xlu0 %7582
      %7584 = vrot.lane.b32.xlu0 %v7176, 85
      %v7585 = vpop.permute.xlu0 %7584
      %7586 = vrot.lane.b32.xlu0 %v7177, 85
      %v7587 = vpop.permute.xlu0 %7586
      %vm7588 = vcmask 695296
      %v7589 = vsel %vm7588, %v7579, %v7581
      %v7590 = vsel %vm7588, %v7581, %v7583
      %v7591 = vsel %vm7588, %v7583, %v7585
      %v7592 = vsel %vm7588, %v7585, %v7587
      %v7600 = vsel %vm7461, %v7170, %v7187
      %v7601 = vsel %vm1780, %v7600, %v7210
      %v7602 = vsel %vm7470, %v7601, %v7233
      %v7603 = vsel %vm7461, %v7252, %v7525
      %v7604 = vsel %vm7461, %v7253, %v7526
      %v7605 = vsel %vm7461, %v7254, %v7527
      %v7606 = vsel %vm7461, %v7255, %v7528
      %v7607 = vsel %vm7461, %v7251, %v7524
      %v7608 = vsel %vm1780, %v7603, %v7544
      %v7609 = vsel %vm1780, %v7604, %v7545
      %v7610 = vsel %vm1780, %v7605, %v7546
      %v7611 = vsel %vm1780, %v7606, %v7547
      %v7612 = vsel %vm1780, %v7607, %v7543
      %v7613 = vsel %vm7470, %v7608, %v7308
      %v7614 = vsel %vm7470, %v7609, %v7309
      %v7615 = vsel %vm7470, %v7610, %v7310
      %v7616 = vsel %vm7470, %v7611, %v7311
      %v7617 = vsel %vm7470, %v7612, %v7307
      %v7618 = vsel %vm7461, %v7325, %v7343
      %v7619 = vsel %vm1780, %v7618, %v7361
      %v7620 = vsel %vm7470, %v7619, %v7379
      %v7621 = vsel %vm7461, %v7569, %v7589
      %v7622 = vsel %vm7461, %v7570, %v7590
      %v7623 = vsel %vm7461, %v7571, %v7591
      %v7624 = vsel %vm7461, %v7572, %v7592
      %v7625 = vsel %vm7461, %v7567, %v7587
      %v7626 = vsel %vm1780, %v7621, %v7435
      %v7627 = vsel %vm1780, %v7622, %v7436
      %v7628 = vsel %vm1780, %v7623, %v7437
      %v7629 = vsel %vm1780, %v7624, %v7438
      %v7630 = vsel %vm1780, %v7625, %v7434
      %v7631 = vsel %vm7470, %v7626, %v7453
      %v7632 = vsel %vm7470, %v7627, %v7454
      %v7633 = vsel %vm7470, %v7628, %v7455
      %v7634 = vsel %vm7470, %v7629, %v7456
      %v7635 = vsel %vm7470, %v7630, %v7452
      %7636 = vrot.lane.b32.xlu0 %v7219, 110
      %v7637 = vpop.permute.xlu0 %7636
      %7638 = vrot.lane.b32.xlu0 %v7220, 110
      %v7639 = vpop.permute.xlu0 %7638
      %7640 = vrot.lane.b32.xlu0 %v7221, 110
      %v7641 = vpop.permute.xlu0 %7640
      %7642 = vrot.lane.b32.xlu0 %v7222, 110
      %v7643 = vpop.permute.xlu0 %7642
      %7644 = vrot.lane.b32.xlu0 %v7223, 110
      %v7645 = vpop.permute.xlu0 %7644
      %vm7646 = vcmask 900096
      %v7647 = vsel %vm7646, %v7637, %v7639
      %v7648 = vsel %vm7646, %v7639, %v7641
      %v7649 = vsel %vm7646, %v7641, %v7643
      %v7650 = vsel %vm7646, %v7643, %v7645
      %7656 = vrot.lane.b32.xlu0 %v7169, 109
      %v7657 = vpop.permute.xlu0 %7656
      %7658 = vrot.lane.b32.xlu0 %v7161, 109
      %v7659 = vpop.permute.xlu0 %7658
      %7660 = vrot.lane.b32.xlu0 %v7162, 109
      %v7661 = vpop.permute.xlu0 %7660
      %7662 = vrot.lane.b32.xlu0 %v7163, 109
      %v7663 = vpop.permute.xlu0 %7662
      %7664 = vrot.lane.b32.xlu0 %v7170, 109
      %v7665 = vpop.permute.xlu0 %7664
      %vm7666 = vcmask 891904
      %v7667 = vsel %vm7666, %v7657, %v7659
      %v7668 = vsel %vm7666, %v7659, %v7661
      %v7669 = vsel %vm7666, %v7661, %v7663
      %v7670 = vsel %vm7666, %v7663, %v7665
      %v7677 = vrot.slane 0.0, 4
      %7678 = vrot.lane.b32.xlu0 %v7197, 88
      %v7679 = vpop.permute.xlu0 %7678
      %7680 = vrot.lane.b32.xlu0 %v7198, 88
      %v7681 = vpop.permute.xlu0 %7680
      %7682 = vrot.lane.b32.xlu0 %v7199, 88
      %v7683 = vpop.permute.xlu0 %7682
      %7684 = vrot.lane.b32.xlu0 %v7200, 88
      %v7685 = vpop.permute.xlu0 %7684
      %7686 = vrot.lane.b32.xlu0 %v7677, 88
      %v7687 = vpop.permute.xlu0 %7686
      %vm7688 = vcmask 719872
      %v7689 = vsel %vm7688, %v7679, %v7681
      %v7690 = vsel %vm7688, %v7681, %v7683
      %v7691 = vsel %vm7688, %v7683, %v7685
      %v7692 = vsel %vm7688, %v7685, %v7687
      %v7698 = vrot.slane 0.0, 2
      %7699 = vrot.lane.b32.xlu0 %v7220, 87
      %v7700 = vpop.permute.xlu0 %7699
      %7701 = vrot.lane.b32.xlu0 %v7221, 87
      %v7702 = vpop.permute.xlu0 %7701
      %7703 = vrot.lane.b32.xlu0 %v7222, 87
      %v7704 = vpop.permute.xlu0 %7703
      %7705 = vrot.lane.b32.xlu0 %v7223, 87
      %v7706 = vpop.permute.xlu0 %7705
      %7707 = vrot.lane.b32.xlu0 %v7698, 87
      %v7708 = vpop.permute.xlu0 %7707
      %vm7709 = vcmask 711680
      %v7710 = vsel %vm7709, %v7700, %v7702
      %v7711 = vsel %vm7709, %v7702, %v7704
      %v7712 = vsel %vm7709, %v7704, %v7706
      %v7713 = vsel %vm7709, %v7706, %v7708
      %7719 = vrot.lane.b32.xlu0 0.0, 86
      %v7720 = vpop.permute.xlu0 %7719
      %v7721 = vsel %vm7568, %v7567, %v7720
      %v7724 = vrot.slane 0.0, 6
      %7725 = vrot.lane.b32.xlu0 %v7724, 85
      %v7726 = vpop.permute.xlu0 %7725
      %v7727 = vsel %vm7588, %v7587, %v7726
      %7730 = vrot.lane.b32.xlu0 %v7677, 84
      %v7731 = vpop.permute.xlu0 %7730
      %v7732 = vsel %vm1011, %v7434, %v7731
      %7735 = vrot.lane.b32.xlu0 %v7698, 83
      %v7736 = vpop.permute.xlu0 %7735
      %v7737 = vsel %vm1040, %v7452, %v7736
      %v7740 = vsel %vm7470, %v7466, %v7647
      %v7741 = vsel %vm7470, %v7467, %v7648
      %v7742 = vsel %vm7470, %v7468, %v7649
      %v7743 = vsel %vm7470, %v7469, %v7650
      %v7744 = vsel %vm7470, %v7601, %v7645
      %v7745 = vsel %vm7461, %v7667, %v7525
      %v7746 = vsel %vm7461, %v7668, %v7526
      %v7747 = vsel %vm7461, %v7669, %v7527
      %v7748 = vsel %vm7461, %v7670, %v7528
      %v7749 = vsel %vm7461, %v7665, %v7524
      %v7750 = vsel %vm1780, %v7745, %v7544
      %v7751 = vsel %vm1780, %v7746, %v7545
      %v7752 = vsel %vm1780, %v7747, %v7546
      %v7753 = vsel %vm1780, %v7748, %v7547
      %v7754 = vsel %vm1780, %v7749, %v7543
      %v7755 = vsel %vm7470, %v7750, %v7308
      %v7756 = vsel %vm7470, %v7751, %v7309
      %v7757 = vsel %vm7470, %v7752, %v7310
      %v7758 = vsel %vm7470, %v7753, %v7311
      %v7759 = vsel %vm7470, %v7754, %v7307
      %v7760 = vsel %vm1780, %v7487, %v7679
      %v7761 = vsel %vm1780, %v7488, %v7689
      %v7762 = vsel %vm1780, %v7489, %v7690
      %v7763 = vsel %vm1780, %v7490, %v7691
      %v7764 = vsel %vm1780, %v7618, %v7692
      %v7765 = vsel %vm7470, %v7760, %v7700
      %v7766 = vsel %vm7470, %v7761, %v7710
      %v7767 = vsel %vm7470, %v7762, %v7711
      %v7768 = vsel %vm7470, %v7763, %v7712
      %v7769 = vsel %vm7470, %v7764, %v7713
      %v7770 = vsel %vm7461, %v7561, %v7581
      %v7771 = vsel %vm7461, %v7721, %v7727
      %v7772 = vsel %vm1780, %v7770, %v7428
      %v7773 = vsel %vm1780, %v7771, %v7732
      %v7774 = vsel %vm7470, %v7772, %v7446
      %v7775 = vsel %vm7470, %v7773, %v7737
      %7796 = vrot.lane.b32.xlu0 %v7471, 82
      %v7797 = vpop.permute.xlu0 %7796
      %7798 = vrot.lane.b32.xlu0 %v7472, 82
      %v7799 = vpop.permute.xlu0 %7798
      %7800 = vrot.lane.b32.xlu0 %v7473, 82
      %v7801 = vpop.permute.xlu0 %7800
      %7802 = vrot.lane.b32.xlu0 %v7474, 82
      %v7803 = vpop.permute.xlu0 %7802
      %7804 = vrot.lane.b32.xlu0 %v7602, 82
      %v7805 = vpop.permute.xlu0 %7804
      %7806 = vrot.lane.b32.xlu0 %v7613, 82
      %v7807 = vpop.permute.xlu0 %7806
      %7808 = vrot.lane.b32.xlu0 %v7614, 82
      %v7809 = vpop.permute.xlu0 %7808
      %7810 = vrot.lane.b32.xlu0 %v7615, 82
      %v7811 = vpop.permute.xlu0 %7810
      %7812 = vrot.lane.b32.xlu0 %v7616, 82
      %v7813 = vpop.permute.xlu0 %7812
      %7814 = vrot.lane.b32.xlu0 %v7617, 82
      %v7815 = vpop.permute.xlu0 %7814
      %7816 = vrot.lane.b32.xlu0 %v7495, 82
      %v7817 = vpop.permute.xlu0 %7816
      %7818 = vrot.lane.b32.xlu0 %v7496, 82
      %v7819 = vpop.permute.xlu0 %7818
      %7820 = vrot.lane.b32.xlu0 %v7497, 82
      %v7821 = vpop.permute.xlu0 %7820
      %7822 = vrot.lane.b32.xlu0 %v7498, 82
      %v7823 = vpop.permute.xlu0 %7822
      %7824 = vrot.lane.b32.xlu0 %v7620, 82
      %v7825 = vpop.permute.xlu0 %7824
      %7826 = vrot.lane.b32.xlu0 %v7631, 82
      %v7827 = vpop.permute.xlu0 %7826
      %7828 = vrot.lane.b32.xlu0 %v7632, 82
      %v7829 = vpop.permute.xlu0 %7828
      %7830 = vrot.lane.b32.xlu0 %v7633, 82
      %v7831 = vpop.permute.xlu0 %7830
      %7832 = vrot.lane.b32.xlu0 %v7634, 82
      %v7833 = vpop.permute.xlu0 %7832
      %7834 = vrot.lane.b32.xlu0 %v7635, 82
      %v7835 = vpop.permute.xlu0 %7834
      %v7836 = vsel %vm1069, %v7797, %v7799
      %v7837 = vsel %vm1069, %v7799, %v7801
      %v7838 = vsel %vm1069, %v7801, %v7803
      %v7839 = vsel %vm1069, %v7803, %v7805
      %v7840 = vsel %vm1069, %v7807, %v7809
      %v7841 = vsel %vm1069, %v7809, %v7811
      %v7842 = vsel %vm1069, %v7811, %v7813
      %v7843 = vsel %vm1069, %v7813, %v7815
      %v7844 = vsel %vm1069, %v7817, %v7819
      %v7845 = vsel %vm1069, %v7819, %v7821
      %v7846 = vsel %vm1069, %v7821, %v7823
      %v7847 = vsel %vm1069, %v7823, %v7825
      %v7848 = vsel %vm1069, %v7827, %v7829
      %v7849 = vsel %vm1069, %v7829, %v7831
      %v7850 = vsel %vm1069, %v7831, %v7833
      %v7851 = vsel %vm1069, %v7833, %v7835
      %7885 = vrot.lane.b32.xlu0 %v7740, 36
      %v7886 = vpop.permute.xlu0 %7885
      %7887 = vrot.lane.b32.xlu0 %v7741, 36
      %v7888 = vpop.permute.xlu0 %7887
      %7889 = vrot.lane.b32.xlu0 %v7742, 36
      %v7890 = vpop.permute.xlu0 %7889
      %7891 = vrot.lane.b32.xlu0 %v7743, 36
      %v7892 = vpop.permute.xlu0 %7891
      %7893 = vrot.lane.b32.xlu0 %v7744, 36
      %v7894 = vpop.permute.xlu0 %7893
      %7895 = vrot.lane.b32.xlu0 %v7755, 36
      %v7896 = vpop.permute.xlu0 %7895
      %7897 = vrot.lane.b32.xlu0 %v7756, 36
      %v7898 = vpop.permute.xlu0 %7897
      %7899 = vrot.lane.b32.xlu0 %v7757, 36
      %v7900 = vpop.permute.xlu0 %7899
      %7901 = vrot.lane.b32.xlu0 %v7758, 36
      %v7902 = vpop.permute.xlu0 %7901
      %7903 = vrot.lane.b32.xlu0 %v7759, 36
      %v7904 = vpop.permute.xlu0 %7903
      %7905 = vrot.lane.b32.xlu0 %v7765, 36
      %v7906 = vpop.permute.xlu0 %7905
      %7907 = vrot.lane.b32.xlu0 %v7766, 36
      %v7908 = vpop.permute.xlu0 %7907
      %7909 = vrot.lane.b32.xlu0 %v7767, 36
      %v7910 = vpop.permute.xlu0 %7909
      %7911 = vrot.lane.b32.xlu0 %v7768, 36
      %v7912 = vpop.permute.xlu0 %7911
      %7913 = vrot.lane.b32.xlu0 %v7769, 36
      %v7914 = vpop.permute.xlu0 %7913
      %7915 = vrot.lane.b32.xlu0 %v7774, 36
      %v7916 = vpop.permute.xlu0 %7915
      %7917 = vrot.lane.b32.xlu0 %v7632, 36
      %v7918 = vpop.permute.xlu0 %7917
      %7919 = vrot.lane.b32.xlu0 %v7633, 36
      %v7920 = vpop.permute.xlu0 %7919
      %7921 = vrot.lane.b32.xlu0 %v7634, 36
      %v7922 = vpop.permute.xlu0 %7921
      %7923 = vrot.lane.b32.xlu0 %v7775, 36
      %v7924 = vpop.permute.xlu0 %7923
      %v7925 = vsel %vm1914, %v7886, %v7888
      %v7926 = vsel %vm1914, %v7888, %v7890
      %v7927 = vsel %vm1914, %v7890, %v7892
      %v7928 = vsel %vm1914, %v7892, %v7894
      %v7929 = vsel %vm1914, %v7896, %v7898
      %v7930 = vsel %vm1914, %v7898, %v7900
      %v7931 = vsel %vm1914, %v7900, %v7902
      %v7932 = vsel %vm1914, %v7902, %v7904
      %v7933 = vsel %vm1914, %v7906, %v7908
      %v7934 = vsel %vm1914, %v7908, %v7910
      %v7935 = vsel %vm1914, %v7910, %v7912
      %v7936 = vsel %vm1914, %v7912, %v7914
      %v7937 = vsel %vm1914, %v7916, %v7918
      %v7938 = vsel %vm1914, %v7918, %v7920
      %v7939 = vsel %vm1914, %v7920, %v7922
      %v7940 = vsel %vm1914, %v7922, %v7924
      %7957 = vrot.lane.b32.xlu0 %v7161, 118
      %v7958 = vpop.permute.xlu0 %7957
      %7959 = vrot.lane.b32.xlu0 %v7162, 118
      %v7960 = vpop.permute.xlu0 %7959
      %7961 = vrot.lane.b32.xlu0 %v7163, 118
      %v7962 = vpop.permute.xlu0 %7961
      %7963 = vrot.lane.b32.xlu0 %v7170, 118
      %v7964 = vpop.permute.xlu0 %7963
      %7965 = vrot.lane.b32.xlu0 0.0, 118
      %v7966 = vpop.permute.xlu0 %7965
      %vm7967 = vcmask 965632
      %v7968 = vsel %vm7967, %v7958, %v7960
      %v7969 = vsel %vm7967, %v7960, %v7962
      %v7970 = vsel %vm7967, %v7962, %v7964
      %v7971 = vsel %vm7967, %v7964, %v7966
      %v7972 = vld [vmem:[%s22] sm:$0x1]
      %v7973 = vld [vmem:[#allocation2] sm:$0x1]
      %7975 = vset.pattern.permute.xlu0 0
      %7976 = vperm.xlu0 %7975, %v7973
      %v7977 = vpop.permute.xlu0 %7976
      %v7979 = vlaneseq
      %v7980 = vshrl.u32 %v7979, 7
      %v7981 = vsub.s32 0, %v7980
      %v7982 = vrot.slane %v7977, %v7981
      %vm7983 = vcmask 801792
      %v7985 = vsel %vm7983, %v7972, 0
      %v7987 = vsel %vm7461, %v7968, 0
      %v7989 = vsel %vm7461, %v7969, 0
      %v7991 = vsel %vm7461, %v7970, 0
      %v7993 = vsel %vm7461, %v7971, 0
      %7995 = vmatprep.subr.mxu0 %v7472
      %7996 = vmatpush1.msra.mxu0 %v7471
      %7997 = vmatprep.subr.mxu0 %v7484
      %7998 = vmatpush1.msra.mxu0 %v7483
      %7999 = vmatprep.subr.mxu0 %v7496
      %8000 = vmatpush1.msra.mxu0 %v7495
      %8001 = vmatprep.subr.mxu0 %v7508
      %8002 = vmatpush1.msra.mxu0 %v7507
      %8003 = vmatprep.subr.mxu0 %v7837
      %8004 = vmatpush1.msra.mxu0 %v7836
      %8005 = vmatprep.subr.mxu0 %v7841
      %8006 = vmatpush1.msra.mxu0 %v7840
      %8007 = vmatprep.subr.mxu0 %v7845
      %8008 = vmatpush1.msra.mxu0 %v7844
      %8009 = vmatprep.subr.mxu0 %v7849
      %8010 = vmatpush1.msra.mxu0 %v7848
      %8011 = vmatprep.subr.mxu0 %v7926
      %8012 = vmatpush1.msra.mxu0 %v7925
      %8013 = vmatprep.subr.mxu0 %v7930
      %8014 = vmatpush1.msra.mxu0 %v7929
      %8015 = vmatprep.subr.mxu0 %v7934
      %8016 = vmatpush1.msra.mxu0 %v7933
      %8017 = vmatprep.subr.mxu0 %v7938
      %8018 = vmatpush1.msra.mxu0 %v7937
      %8019 = vmatprep.subr.mxu0 %v7989
      %8020 = vmatpush1.msra.mxu0 %v7987
      %8021 = vmatprep.subr.mxu0 0.0
      %8022 = vmatpush1.msra.mxu0 0.0
      %8023 = vmatprep.subr.mxu0 0.0
      %8024 = vmatpush1.msra.mxu0 0.0
      %8025 = vmatprep.subr.mxu0 0.0
      %8026 = vmatpush1.msra.mxu0 0.0
      %8027 = vmatprep.subr.mxu0 0.0
      %8028 = vmatpush1.msra.mxu0 0.0
      %8029 = vmatprep.subr.mxu0 0.0
      %8030 = vmatpush1.msra.mxu0 0.0
      %8031 = vmatprep.subr.mxu0 0.0
      %8032 = vmatpush1.msra.mxu0 0.0
      %8033 = vmatprep.subr.mxu0 0.0
      %8034 = vmatpush1.msra.mxu0 0.0
      %8035 = vmatprep.subr.mxu0 0.0
      %8036 = vmatpush1.msra.mxu0 0.0
      %8037 = vmatprep.subr.mxu0 0.0
      %8038 = vmatpush1.msra.mxu0 0.0
      %8039 = vmatprep.subr.mxu0 0.0
      %8040 = vmatpush1.msra.mxu0 0.0
      %8041 = vmatprep.subr.mxu0 0.0
      %8042 = vmatpush1.msra.mxu0 0.0
      %8043 = vmatprep.subr.mxu0 0.0
      %8044 = vmatpush1.msra.mxu0 0.0
      %8045 = vmatprep.subr.mxu0 0.0
      %8046 = vmatpush1.msra.mxu0 0.0
      %8047 = vmatprep.subr.mxu0 0.0
      %8048 = vmatpush1.msra.mxu0 0.0
      %8049 = vmatprep.subr.mxu0 0.0
      %8050 = vmatpush1.msra.mxu0 0.0
      %8051 = vmatprep.subr.mxu0 0.0
      %8052 = vmatpush1.msra.mxu0 0.0
      %8053 = vmatprep.subr.mxu0 0.0
      %8054 = vmatpush1.msra.mxu0 0.0
      %8055 = vmatprep.subr.mxu0 0.0
      %8056 = vmatpush1.msra.mxu0 0.0
      %8057 = vmatprep.subr.mxu0 0.0
      %8058 = vmatpush1.msra.mxu0 0.0
      %8059 = vmatprep.mubr.f32.mxu0 0.0
      %8060 = vmatmul.mubr.f32.gmra.mrb[0].mxu0 %v7985
      %v8061 = vpop.f32.mrb[0].mxu0
      %v8062 = vadd.f32 %v7982, %v8061
      %v8063 = vpop.f32.mrb[0].mxu0
      %v8064 = vadd.f32 %v7982, %v8063
      %8065 = vdwg.mxu0
      %8066 = vmatprep.subr.mxu0 %v7474
      %8067 = vmatpush1.msra.mxu0 %v7473
      %8068 = vmatprep.subr.mxu0 %v7486
      %8069 = vmatpush1.msra.mxu0 %v7485
      %8070 = vmatprep.subr.mxu0 %v7498
      %8071 = vmatpush1.msra.mxu0 %v7497
      %8072 = vmatprep.subr.mxu0 %v7510
      %8073 = vmatpush1.msra.mxu0 %v7509
      %8074 = vmatprep.subr.mxu0 %v7839
      %8075 = vmatpush1.msra.mxu0 %v7838
      %8076 = vmatprep.subr.mxu0 %v7843
      %8077 = vmatpush1.msra.mxu0 %v7842
      %8078 = vmatprep.subr.mxu0 %v7847
      %8079 = vmatpush1.msra.mxu0 %v7846
      %8080 = vmatprep.subr.mxu0 %v7851
      %8081 = vmatpush1.msra.mxu0 %v7850
      %8082 = vmatprep.subr.mxu0 %v7928
      %8083 = vmatpush1.msra.mxu0 %v7927
      %8084 = vmatprep.subr.mxu0 %v7932
      %8085 = vmatpush1.msra.mxu0 %v7931
      %8086 = vmatprep.subr.mxu0 %v7936
      %8087 = vmatpush1.msra.mxu0 %v7935
      %8088 = vmatprep.subr.mxu0 %v7940
      %8089 = vmatpush1.msra.mxu0 %v7939
      %8090 = vmatprep.subr.mxu0 %v7993
      %8091 = vmatpush1.msra.mxu0 %v7991
      %8092 = vmatprep.subr.mxu0 0.0
      %8093 = vmatpush1.msra.mxu0 0.0
      %8094 = vmatprep.subr.mxu0 0.0
      %8095 = vmatpush1.msra.mxu0 0.0
      %8096 = vmatprep.subr.mxu0 0.0
      %8097 = vmatpush1.msra.mxu0 0.0
      %8098 = vmatprep.subr.mxu0 0.0
      %8099 = vmatpush1.msra.mxu0 0.0
      %8100 = vmatprep.subr.mxu0 0.0
      %8101 = vmatpush1.msra.mxu0 0.0
      %8102 = vmatprep.subr.mxu0 0.0
      %8103 = vmatpush1.msra.mxu0 0.0
      %8104 = vmatprep.subr.mxu0 0.0
      %8105 = vmatpush1.msra.mxu0 0.0
      %8106 = vmatprep.subr.mxu0 0.0
      %8107 = vmatpush1.msra.mxu0 0.0
      %8108 = vmatprep.subr.mxu0 0.0
      %8109 = vmatpush1.msra.mxu0 0.0
      %8110 = vmatprep.subr.mxu0 0.0
      %8111 = vmatpush1.msra.mxu0 0.0
      %8112 = vmatprep.subr.mxu0 0.0
      %8113 = vmatpush1.msra.mxu0 0.0
      %8114 = vmatprep.subr.mxu0 0.0
      %8115 = vmatpush1.msra.mxu0 0.0
      %8116 = vmatprep.subr.mxu0 0.0
      %8117 = vmatpush1.msra.mxu0 0.0
      %8118 = vmatprep.subr.mxu0 0.0
      %8119 = vmatpush1.msra.mxu0 0.0
      %8120 = vmatprep.subr.mxu0 0.0
      %8121 = vmatpush1.msra.mxu0 0.0
      %8122 = vmatprep.subr.mxu0 0.0
      %8123 = vmatpush1.msra.mxu0 0.0
      %8124 = vmatprep.subr.mxu0 0.0
      %8125 = vmatpush1.msra.mxu0 0.0
      %8126 = vmatprep.subr.mxu0 0.0
      %8127 = vmatpush1.msra.mxu0 0.0
      %8128 = vmatprep.subr.mxu0 0.0
      %8129 = vmatpush1.msra.mxu0 0.0
      %8130 = vmatprep.mubr.f32.mxu0 0.0
      %8131 = vmatmul.mubr.f32.gmra.mrb[0].mxu0 %v7985
      %v8132 = vpop.f32.mrb[0].mxu0
      %v8133 = vadd.f32 %v7982, %v8132
      %v8134 = vpop.f32.mrb[0].mxu0
      %v8135 = vadd.f32 %v7982, %v8134
      %8136 = vdwg.mxu0
      %v8137 = vmul.f32 %v8062, %v1579
      %v8138 = vmul.f32 %v8064, %v1583
      %v8139 = vmul.f32 %v8133, %v1587
      %v8140 = vmul.f32 %v8135, %v1591
      %v8141 = vxor.u32 %v8137, 2147483648
      %v8142 = vxor.u32 %v8138, 2147483648
      %v8143 = vxor.u32 %v8139, 2147483648
      %v8144 = vxor.u32 %v8140, 2147483648
      %v8145 = vmul.f32 %v8141, 1.442695
      %v8146 = vpow.pop %v8145
      %v8147 = vmul.f32 %v8142, 1.442695
      %v8148 = vpow.pop %v8147
      %v8149 = vmul.f32 %v8143, 1.442695
      %v8150 = vpow.pop %v8149
      %v8151 = vmul.f32 %v8144, 1.442695
      %v8152 = vpow.pop %v8151
      %v8153 = vadd.f32 %v8146, 1.0
      %v8154 = vadd.f32 %v8148, 1.0
      %v8155 = vadd.f32 %v8150, 1.0
      %v8156 = vadd.f32 %v8152, 1.0
      %v8157 = vrcp.pop %v8153
      %v8158 = vmul.f32 1.0, %v8157
      %v8159 = vrcp.pop %v8154
      %v8160 = vmul.f32 1.0, %v8159
      %v8161 = vrcp.pop %v8155
      %v8162 = vmul.f32 1.0, %v8161
      %v8163 = vrcp.pop %v8156
      %v8164 = vmul.f32 1.0, %v8163
      %v8165 = vlaneseq
      %v8166 = vshrl.u32 %v8165, 7
      %v8167 = vsub.s32 0, %v8166
      %v8168 = vrot.slane %v8158, %v8167
      %v8169 = vlaneseq
      %v8170 = vshrl.u32 %v8169, 7
      %v8171 = vsub.s32 0, %v8170
      %v8172 = vrot.slane %v8160, %v8171
      %v8173 = vlaneseq
      %v8174 = vshrl.u32 %v8173, 7
      %v8175 = vsub.s32 0, %v8174
      %v8176 = vrot.slane %v8162, %v8175
      %v8177 = vlaneseq
      %v8178 = vshrl.u32 %v8177, 7
      %v8179 = vsub.s32 0, %v8178
      %v8180 = vrot.slane %v8164, %v8179
      %v8181 = vmul.f32 %v7076, %v8168
      %v8182 = vmul.f32 %v7077, %v8172
      %v8183 = vmul.f32 %v7078, %v8176
      %v8184 = vmul.f32 %v7079, %v8180
      %v8185 = vmul.f32 %v7080, %v8168
      %v8186 = vmul.f32 %v7081, %v8172
      %v8187 = vmul.f32 %v7082, %v8176
      %v8188 = vmul.f32 %v7083, %v8180
      %v8189 = vld [vmem:[%s24] sm:$0xff]
      %v8190 = vld [vmem:[%s24 + $0x8] sm:$0xff]
      %v8191 = vld [vmem:[%s25] sm:$0xff]
      %v8192 = vld [vmem:[%s25 + $0x8] sm:$0xff]
      %8194 = vset.pattern.permute.xlu0 0
      %8195 = vperm.xlu0 %8194, %v8191
      %v8196 = vpop.permute.xlu0 %8195
      %8199 = vset.pattern.permute.xlu0 0
      %8200 = vperm.xlu0 %8199, %v8192
      %v8201 = vpop.permute.xlu0 %8200
      %v8204 = vsel %vm1390, %v8189, 0
      %v8207 = vsel %vm1390, %v8190, 0
      %8209 = vmatprep.subr.mxu0 %v8182
      %8210 = vmatpush1.msra.mxu0 %v8181
      %8211 = vmatprep.subr.mxu0 %v8186
      %8212 = vmatpush1.msra.mxu0 %v8185
      %8213 = vmatprep.subr.mxu0 0.0
      %8214 = vmatpush1.msra.mxu0 0.0
      %8215 = vmatprep.subr.mxu0 0.0
      %8216 = vmatpush1.msra.mxu0 0.0
      %8217 = vmatprep.subr.mxu0 0.0
      %8218 = vmatpush1.msra.mxu0 0.0
      %8219 = vmatprep.subr.mxu0 0.0
      %8220 = vmatpush1.msra.mxu0 0.0
      %8221 = vmatprep.subr.mxu0 0.0
      %8222 = vmatpush1.msra.mxu0 0.0
      %8223 = vmatprep.subr.mxu0 0.0
      %8224 = vmatpush1.msra.mxu0 0.0
      %8225 = vmatprep.subr.mxu0 0.0
      %8226 = vmatpush1.msra.mxu0 0.0
      %8227 = vmatprep.subr.mxu0 0.0
      %8228 = vmatpush1.msra.mxu0 0.0
      %8229 = vmatprep.subr.mxu0 0.0
      %8230 = vmatpush1.msra.mxu0 0.0
      %8231 = vmatprep.subr.mxu0 0.0
      %8232 = vmatpush1.msra.mxu0 0.0
      %8233 = vmatprep.subr.mxu0 0.0
      %8234 = vmatpush1.msra.mxu0 0.0
      %8235 = vmatprep.subr.mxu0 0.0
      %8236 = vmatpush1.msra.mxu0 0.0
      %8237 = vmatprep.subr.mxu0 0.0
      %8238 = vmatpush1.msra.mxu0 0.0
      %8239 = vmatprep.subr.mxu0 0.0
      %8240 = vmatpush1.msra.mxu0 0.0
      %8241 = vmatprep.subr.mxu0 0.0
      %8242 = vmatpush1.msra.mxu0 0.0
      %8243 = vmatprep.subr.mxu0 0.0
      %8244 = vmatpush1.msra.mxu0 0.0
      %8245 = vmatprep.subr.mxu0 0.0
      %8246 = vmatpush1.msra.mxu0 0.0
      %8247 = vmatprep.subr.mxu0 0.0
      %8248 = vmatpush1.msra.mxu0 0.0
      %8249 = vmatprep.subr.mxu0 0.0
      %8250 = vmatpush1.msra.mxu0 0.0
      %8251 = vmatprep.subr.mxu0 0.0
      %8252 = vmatpush1.msra.mxu0 0.0
      %8253 = vmatprep.subr.mxu0 0.0
      %8254 = vmatpush1.msra.mxu0 0.0
      %8255 = vmatprep.subr.mxu0 0.0
      %8256 = vmatpush1.msra.mxu0 0.0
      %8257 = vmatprep.subr.mxu0 0.0
      %8258 = vmatpush1.msra.mxu0 0.0
      %8259 = vmatprep.subr.mxu0 0.0
      %8260 = vmatpush1.msra.mxu0 0.0
      %8261 = vmatprep.subr.mxu0 0.0
      %8262 = vmatpush1.msra.mxu0 0.0
      %8263 = vmatprep.subr.mxu0 0.0
      %8264 = vmatpush1.msra.mxu0 0.0
      %8265 = vmatprep.subr.mxu0 0.0
      %8266 = vmatpush1.msra.mxu0 0.0
      %8267 = vmatprep.subr.mxu0 0.0
      %8268 = vmatpush1.msra.mxu0 0.0
      %8269 = vmatprep.subr.mxu0 0.0
      %8270 = vmatpush1.msra.mxu0 0.0
      %8271 = vmatprep.subr.mxu0 0.0
      %8272 = vmatpush1.msra.mxu0 0.0
      %8273 = vmatprep.mubr.f32.mxu0 0.0
      %8274 = vmatmul.mubr.f32.gmra.mrb[0].mxu0 %v8204
      %v8275 = vpop.f32.mrb[0].mxu0
      %v8276 = vadd.f32 %v8196, %v8275
      %v8277 = vpop.f32.mrb[0].mxu0
      %v8278 = vadd.f32 %v8196, %v8277
      %8279 = vmatprep.mubr.f32.mxu0 0.0
      %8280 = vmatmul.mubr.f32.gmra.mrb[0].mxu0 %v8207
      %v8281 = vpop.f32.mrb[0].mxu0
      %v8282 = vadd.f32 %v8201, %v8281
      %v8283 = vpop.f32.mrb[0].mxu0
      %v8284 = vadd.f32 %v8201, %v8283
      %8285 = vdwg.mxu0
      %8286 = vmatprep.subr.mxu0 %v8184
      %8287 = vmatpush1.msra.mxu0 %v8183
      %8288 = vmatprep.subr.mxu0 %v8188
      %8289 = vmatpush1.msra.mxu0 %v8187
      %8290 = vmatprep.subr.mxu0 0.0
      %8291 = vmatpush1.msra.mxu0 0.0
      %8292 = vmatprep.subr.mxu0 0.0
      %8293 = vmatpush1.msra.mxu0 0.0
      %8294 = vmatprep.subr.mxu0 0.0
      %8295 = vmatpush1.msra.mxu0 0.0
      %8296 = vmatprep.subr.mxu0 0.0
      %8297 = vmatpush1.msra.mxu0 0.0
      %8298 = vmatprep.subr.mxu0 0.0
      %8299 = vmatpush1.msra.mxu0 0.0
      %8300 = vmatprep.subr.mxu0 0.0
      %8301 = vmatpush1.msra.mxu0 0.0
      %8302 = vmatprep.subr.mxu0 0.0
      %8303 = vmatpush1.msra.mxu0 0.0
      %8304 = vmatprep.subr.mxu0 0.0
      %8305 = vmatpush1.msra.mxu0 0.0
      %8306 = vmatprep.subr.mxu0 0.0
      %8307 = vmatpush1.msra.mxu0 0.0
      %8308 = vmatprep.subr.mxu0 0.0
      %8309 = vmatpush1.msra.mxu0 0.0
      %8310 = vmatprep.subr.mxu0 0.0
      %8311 = vmatpush1.msra.mxu0 0.0
      %8312 = vmatprep.subr.mxu0 0.0
      %8313 = vmatpush1.msra.mxu0 0.0
      %8314 = vmatprep.subr.mxu0 0.0
      %8315 = vmatpush1.msra.mxu0 0.0
      %8316 = vmatprep.subr.mxu0 0.0
      %8317 = vmatpush1.msra.mxu0 0.0
      %8318 = vmatprep.subr.mxu0 0.0
      %8319 = vmatpush1.msra.mxu0 0.0
      %8320 = vmatprep.subr.mxu0 0.0
      %8321 = vmatpush1.msra.mxu0 0.0
      %8322 = vmatprep.subr.mxu0 0.0
      %8323 = vmatpush1.msra.mxu0 0.0
      %8324 = vmatprep.subr.mxu0 0.0
      %8325 = vmatpush1.msra.mxu0 0.0
      %8326 = vmatprep.subr.mxu0 0.0
      %8327 = vmatpush1.msra.mxu0 0.0
      %8328 = vmatprep.subr.mxu0 0.0
      %8329 = vmatpush1.msra.mxu0 0.0
      %8330 = vmatprep.subr.mxu0 0.0
      %8331 = vmatpush1.msra.mxu0 0.0
      %8332 = vmatprep.subr.mxu0 0.0
      %8333 = vmatpush1.msra.mxu0 0.0
      %8334 = vmatprep.subr.mxu0 0.0
      %8335 = vmatpush1.msra.mxu0 0.0
      %8336 = vmatprep.subr.mxu0 0.0
      %8337 = vmatpush1.msra.mxu0 0.0
      %8338 = vmatprep.subr.mxu0 0.0
      %8339 = vmatpush1.msra.mxu0 0.0
      %8340 = vmatprep.subr.mxu0 0.0
      %8341 = vmatpush1.msra.mxu0 0.0
      %8342 = vmatprep.subr.mxu0 0.0
      %8343 = vmatpush1.msra.mxu0 0.0
      %8344 = vmatprep.subr.mxu0 0.0
      %8345 = vmatpush1.msra.mxu0 0.0
      %8346 = vmatprep.subr.mxu0 0.0
      %8347 = vmatpush1.msra.mxu0 0.0
      %8348 = vmatprep.subr.mxu0 0.0
      %8349 = vmatpush1.msra.mxu0 0.0
      %8350 = vmatprep.mubr.f32.mxu0 0.0
      %8351 = vmatmul.mubr.f32.gmra.mrb[0].mxu0 %v8204
      %v8352 = vpop.f32.mrb[0].mxu0
      %v8353 = vadd.f32 %v8196, %v8352
      %v8354 = vpop.f32.mrb[0].mxu0
      %v8355 = vadd.f32 %v8196, %v8354
      %8356 = vmatprep.mubr.f32.mxu0 0.0
      %8357 = vmatmul.mubr.f32.gmra.mrb[0].mxu0 %v8207
      %v8358 = vpop.f32.mrb[0].mxu0
      %v8359 = vadd.f32 %v8201, %v8358
      %v8360 = vpop.f32.mrb[0].mxu0
      %v8361 = vadd.f32 %v8201, %v8360
      %8362 = vdwg.mxu0
      %v8363 = vadd.f32 %v8276, %v794
      %v8364 = vadd.f32 %v8278, %v795
      %v8365 = vadd.f32 %v8353, %v796
      %v8366 = vadd.f32 %v8355, %v797
      %v8367 = vadd.f32 %v8282, %v798
      %v8368 = vadd.f32 %v8284, %v799
      %v8369 = vadd.f32 %v8359, %v800
      %v8370 = vadd.f32 %v8361, %v801
      %8371 = vst [vmem:[%s793] sm:$0xff] %v8363
      %8372 = vst [vmem:[%s793 + $0x8] sm:$0xff] %v8364
      %8373 = vst [vmem:[%s793 + $0x10] sm:$0xff] %v8365
      %8374 = vst [vmem:[%s793 + $0x18] sm:$0xff] %v8366
      %8375 = vst [vmem:[%s793 + $0x20] sm:$0xff] %v8367
      %8376 = vst [vmem:[%s793 + $0x28] sm:$0xff] %v8368
      %8377 = vst [vmem:[%s793 + $0x30] sm:$0xff] %v8369
      %8378 = vst [vmem:[%s793 + $0x38] sm:$0xff] %v8370
      %p8379 = scmp.lt.s32.totalorder %s39, 1
      %s8380 = scalar_select %p8379, %s39, 1
      %s8381 = smul.addr %s8380, 8
      %s8382 = smul.addr %s8381, 8
      %s8383 = scalar_lea.vmem %s26, %s8382
      // Predicated region
      $region125: #{imd_forward.1} parent=123 // pred_check
        %p8384 = pneg %p608
      $region126: #{imd_forward.1} parent=123 // pred_check_branch
        %8386 = sbr.rel (%p8384) target = $region128
      $region127: #{imd_forward.1} parent=123 // pred_region
        _
      $region128: #{imd_forward.1} parent=123 // pred_fallthru
        _
    $region124: #{imd_forward.1} parent=5 // pred_fallthru
      _
    %p8387 = scmp.le.s32.totalorder 2, %s34
    // Predicated region
    $region129: #{imd_forward.1} parent=5 // pred_check
      %p8388 = pneg %p8387
    $region130: #{imd_forward.1} parent=5 // pred_check_branch
      %8390 = sbr.rel (%p8388) target = $region132
    $region131: #{imd_forward.1} parent=5 // pred_region
      %s8391 = ssub.s32 %s34, 2
      // Predicated region
      $region133: #{imd_forward.1} parent=131 // pred_check
        %p8392 = pneg %p614
      $region134: #{imd_forward.1} parent=131 // pred_check_branch
        %8394 = sbr.rel (%p8392) target = $region136
      $region135: #{imd_forward.1} parent=131 // pred_region
        %p8395 = scmp.lt.s32.totalorder %s40, 1
        %s8396 = scalar_select %p8395, %s40, 1
        %s8397 = smul.addr %s8396, 8
        %s8398 = smul.addr %s8397, 8
        %s8399 = scalar_lea.vmem %s26, %s8398
      $region136: #{imd_forward.1} parent=131 // pred_fallthru
        _
    $region132: #{imd_forward.1} parent=5 // pred_fallthru
      _
  $region6: #{imd_forward.1} parent=0 // loop_footer
    %s38 = sadd.s32 1, %s34
  $region7: #{imd_forward.1} parent=0 // loop_footer_branch
    %33 = sbr.rel target = $region3
  $region8: #{imd_forward.1} parent=0 // loop_exit
    _

</llo_original>
